<compile_context>
chip_gen: v7x
topology: tpu7x:2x2x1
jax: 0.10.0
libtpu: 0.0.40
codegen_flags: <defaults>
</compile_context>

<pallas_src>
import jax
import jax.numpy as jnp
from jax import lax
from jax.experimental import pallas as pl
from jax.experimental.pallas import tpu as pltpu

_HAS_BUFFERED = hasattr(pl, "Buffered")


def _round_up(x, m):
    return ((x + m - 1) // m) * m


def _vmem_cap_bytes():
    """3/4 of physical VMEM (compiler scratch headroom); 48 MiB fallback."""
    cap = 64 * 1024 * 1024
    try:
        info = pltpu.get_tpu_info()
        cap = int(getattr(info, "vmem_capacity_bytes", cap))
    except Exception:
        pass
    return (cap * 3) // 4


def _vmem_estimate(Tt, Bt, Din, Hp, w_item, x_item, y_item, weight_bufs):
    """Honest per-layer VMEM footprint (bytes) for the kernel below."""
    f32 = 4
    est = weight_bufs * ((Din + Hp) * 4 * Hp * w_item + 4 * Hp * f32)  # W,b
    est += 2 * 2 * Bt * Hp * f32          # h0 / c0 input blocks (2 buffers)
    est += 2 * 2 * Bt * Hp * f32          # h_final / c_final output blocks
    est += 2 * Tt * Bt * Din * x_item     # x block, double buffered
    est += 2 * Tt * Bt * Hp * y_item      # y block, double buffered
    est += Tt * Bt * 4 * Hp * f32         # staged gate projections (scratch)
    est += 2 * Bt * Hp * f32              # recurrent h / c scratch
    return est


def _pick_time_block(S, Bt, Din, Hp, w_item, x_item, y_item, cap):
    """Largest divisor of S (<= 64 steps) whose footprint fits the budget."""
    for tt in sorted({d for d in range(1, S + 1) if S % d == 0}, reverse=True):
        if tt > 64:                      # bound the unrolled recurrence length
            continue
        est = _vmem_estimate(tt, Bt, Din, Hp, w_item, x_item, y_item, 2)
        if 2 * est <= cap:
            return tt
    return 1


def _make_layer_kernel(time_block, batch_tile, hidden_pad, compute_dtype):
    Tt, Bt, Hp = time_block, batch_tile, hidden_pad
    compute_dtype = jnp.dtype(compute_dtype)

    def kernel(x_ref, h0_ref, c0_ref, wih_ref, whh_ref, b_ref,
               y_ref, hN_ref, cN_ref, h_scr, c_scr, g_scr):
        tb = pl.program_id(1)

        # Initialize recurrent state from the provided initial hidden at the
        # first time block of this batch shard.
        @pl.when(tb == 0)
        def _():
            h_scr[...] = h0_ref[...]
            c_scr[...] = c0_ref[...]

        # Hoisted, batched input projection for the whole time block, staged
        # into VMEM scratch so the (Tt*Bt, 4H) f32 intermediate is never held
        # in vregs across the recurrence.
        lhs = x_ref[...]
        if lhs.dtype != compute_dtype:
            lhs = lhs.astype(compute_dtype)
        g_scr[...] = (jnp.dot(lhs, wih_ref[...],
                              preferred_element_type=jnp.float32)
                      + b_ref[...])

        w_hh = whh_ref[...]
        # TODO(synk): latch W_hh across the Tt steps with
        # pltpu.matmul_push_rhs / matmul_acc_lhs / matmul_pop once validated;
        # jnp.dot re-streams the RHS every step.

        def step(tt, carry):
            h, c = carry
            row = pl.multiple_of(tt * Bt, 8)
            gx = g_scr[pl.ds(row, Bt), :]                     # (Bt, 4Hp) f32
            gh = jnp.dot(h.astype(compute_dtype), w_hh,
                         preferred_element_type=jnp.float32)
            g = gx + gh
            # Gate order (reordered in wrapper): [i, f, o, g]
            sig = jax.nn.sigmoid(g[:, 0:3 * Hp])
            i_gate = sig[:, 0 * Hp:1 * Hp]
            f_gate = sig[:, 1 * Hp:2 * Hp]
            o_gate = sig[:, 2 * Hp:3 * Hp]
            c_gate = jnp.tanh(g[:, 3 * Hp:4 * Hp])
            c_new = f_gate * c + i_gate * c_gate
            h_new = o_gate * jnp.tanh(c_new)
            y_ref[pl.ds(row, Bt), :] = h_new.astype(y_ref.dtype)
            return (h_new, c_new)

        h_fin, c_fin = lax.fori_loop(0, Tt, step,
                                     (h_scr[...], c_scr[...]), unroll=True)
        h_scr[...] = h_fin
        c_scr[...] = c_fin

        # Emit final (h, c) of this layer / batch shard at the last time block.
        @pl.when(tb == pl.num_programs(1) - 1)
        def _():
            hN_ref[...] = h_scr[...]
            cN_ref[...] = c_scr[...]

    return kernel


def _layer_pallas_call(x, h0, c0, w_ih_t, w_hh_t, bias, *, seq_len, batch_tile,
                       hidden_pad, time_block, out_dtype, vmem_cap,
                       single_buffer):
    S, Bt, Hp, Tt = seq_len, batch_tile, hidden_pad, time_block
    nbb, Din = x.shape[0], x.shape[2]
    ntb = S // Tt

    const_kwargs = {}
    if single_buffer:
        # Weights / bias never change across the grid -> one VMEM buffer.
        const_kwargs = dict(pipeline_mode=pl.Buffered(1))

    in_specs = [
        pl.BlockSpec((None, Tt * Bt, Din), lambda bb, tb: (bb, tb, 0)),      # x
        pl.BlockSpec((None, Bt, Hp), lambda bb, tb: (bb, 0, 0)),             # h0
        pl.BlockSpec((None, Bt, Hp), lambda bb, tb: (bb, 0, 0)),             # c0
        pl.BlockSpec((Din, 4 * Hp), lambda bb, tb: (0, 0), **const_kwargs),  # W_ih^T
        pl.BlockSpec((Hp, 4 * Hp), lambda bb, tb: (0, 0), **const_kwargs),   # W_hh^T
        pl.BlockSpec((1, 4 * Hp), lambda bb, tb: (0, 0), **const_kwargs),    # bias
    ]
    out_specs = [
        pl.BlockSpec((None, Tt * Bt, Hp), lambda bb, tb: (bb, tb, 0)),       # y
        pl.BlockSpec((None, Bt, Hp), lambda bb, tb: (bb, 0, 0)),             # h_final
        pl.BlockSpec((None, Bt, Hp), lambda bb, tb: (bb, 0, 0)),             # c_final
    ]
    out_shape = (
        jax.ShapeDtypeStruct((nbb, S * Bt, Hp), out_dtype),
        jax.ShapeDtypeStruct((nbb, Bt, Hp), jnp.float32),
        jax.ShapeDtypeStruct((nbb, Bt, Hp), jnp.float32),
    )

    est = _vmem_estimate(Tt, Bt, Din, Hp,
                         w_item=jnp.dtype(w_ih_t.dtype).itemsize,
                         x_item=jnp.dtype(x.dtype).itemsize,
                         y_item=jnp.dtype(out_dtype).itemsize,
                         weight_bufs=1 if single_buffer else 2)
    vmem_limit = int(min(vmem_cap, max(16 * 1024 * 1024, 2 * est)))

    kernel = _make_layer_kernel(Tt, Bt, Hp, w_ih_t.dtype)

    return pl.pallas_call(
        kernel,
        out_shape=out_shape,
        grid_spec=pltpu.PrefetchScalarGridSpec(
            num_scalar_prefetch=0,
            grid=(nbb, ntb),
            in_specs=in_specs,
            out_specs=out_specs,
            scratch_shapes=[
                pltpu.VMEM((Bt, Hp), jnp.float32),            # recurrent h
                pltpu.VMEM((Bt, Hp), jnp.float32),            # recurrent c
                pltpu.VMEM((Tt * Bt, 4 * Hp), jnp.float32),   # staged gates
            ],
        ),
        compiler_params=pltpu.CompilerParams(
            # batch shards are independent ("parallel", split across the two
            # v7x TensorCores); the time axis carries the serial recurrence.
            dimension_semantics=("parallel", "arbitrary"),
            vmem_limit_bytes=vmem_limit,
        ),
    )(x, h0, c0, w_ih_t, w_hh_t, bias)


def _run_layer(x, h0, c0, w_ih_t, w_hh_t, bias, **kw):
    if _HAS_BUFFERED:
        try:
            return _layer_pallas_call(x, h0, c0, w_ih_t, w_hh_t, bias,
                                      single_buffer=True, **kw)
        except Exception as first_err:
            # Retry without pl.Buffered(1). The only spec difference is the
            # pipeline_mode, so if the retry ALSO fails the error is genuine
            # (VMEM OOM / lowering bug) and the original error is re-raised.
            try:
                return _layer_pallas_call(x, h0, c0, w_ih_t, w_hh_t, bias,
                                          single_buffer=False, **kw)
            except Exception:
                raise first_err
    return _layer_pallas_call(x, h0, c0, w_ih_t, w_hh_t, bias,
                              single_buffer=False, **kw)


def _gates_reorder_pad(w, H, Hp):
    """Last axis: PyTorch [i,f,g,o] (each H) -> [i,f,o,g] (each padded to Hp)."""
    i = w[..., 0 * H:1 * H]
    f = w[..., 1 * H:2 * H]
    g = w[..., 2 * H:3 * H]
    o = w[..., 3 * H:4 * H]
    if Hp != H:
        pad = [(0, 0)] * (w.ndim - 1) + [(0, Hp - H)]
        i, f, g, o = (jnp.pad(a, pad) for a in (i, f, g, o))
    return jnp.concatenate([i, f, o, g], axis=-1)


def _prep_weight(w, H, Hp, rows_to):
    """nn.Linear weight (4H, in) -> transposed, gate-reordered, zero-padded."""
    wt = jnp.transpose(w).astype(jnp.float32)          # (in, 4H)
    wt = _gates_reorder_pad(wt, H, Hp)                  # (in, 4Hp)
    if wt.shape[0] != rows_to:
        wt = jnp.pad(wt, ((0, rows_to - wt.shape[0]), (0, 0)))
    return wt


def mylstm_forward(x, params, hidden=None, *, weight_dtype=jnp.float32,
                   time_block=None, batch_shards=1):
    """Pallas multi-layer LSTM forward matching PyTorch MYLSTM.forward.

    x:      (B, S, D) float32 (batch-first, like the PyTorch module)
    params: list of per-layer dicts with 'w_ih' (4H, D_l), 'b_ih' (4H,),
            'w_hh' (4H, H), 'b_hh' (4H,)  -- nn.Linear layout, gates [i,f,g,o].
    hidden: optional (h0, c0), each (L, B, H).
    weight_dtype: matmul operand dtype (f32 or bf16); accumulation and the
            gate/cell math are always f32.  bf16 also carries inter-layer
            activations in bf16.
    batch_shards: grid-level batch split (use 2 on v7x to occupy both TCs).

    Returns (outputs (B, S, H), (h_final (L, B, H), c_final (L, B, H))).
    """
    B, S, D = x.shape
    L = len(params)
    H = params[0]['w_hh'].shape[1]

    Hp = _round_up(H, 128)                 # lane-dense gate slices / stores
    Bp = _round_up(B, 8)                   # sublane-aligned row blocks

    nbb = int(batch_shards)
    if nbb < 1 or Bp % nbb != 0 or (Bp // nbb) % 8 != 0:
        nbb = 1
    Bt = Bp // nbb

    wdt = jnp.dtype(weight_dtype)
    act_dtype = (jnp.dtype(jnp.bfloat16) if wdt == jnp.dtype(jnp.bfloat16)
                 else jnp.dtype(jnp.float32))

    # Zero-padded initial state (padding is exact: padded h/c columns stay 0).
    h0p = jnp.zeros((L, Bp, Hp), jnp.float32)
    c0p = jnp.zeros((L, Bp, Hp), jnp.float32)
    if hidden is not None:
        h0, c0 = hidden
        h0p = h0p.at[:, :B, :H].set(h0.astype(jnp.float32))
        c0p = c0p.at[:, :B, :H].set(c0.astype(jnp.float32))

    # (B,S,D) -> time-major, batch padded & sharded: (nbb, S*Bt, D).
    x_f = x.astype(jnp.float32)
    if Bp != B:
        x_f = jnp.pad(x_f, ((0, Bp - B), (0, 0), (0, 0)))
    x_tm = jnp.transpose(x_f, (1, 0, 2))                       # (S, Bp, D)
    x_sh = jnp.transpose(x_tm.reshape(S, nbb, Bt, D),
                         (1, 0, 2, 3)).reshape(nbb, S * Bt, D)
    x_sh = x_sh.astype(act_dtype)      # HBM-side cast, off the in-kernel path

    cap = _vmem_cap_bytes()
    if time_block is None:
        Tt = _pick_time_block(S, Bt, max(D, Hp), Hp,
                              w_item=wdt.itemsize,
                              x_item=act_dtype.itemsize,
                              y_item=act_dtype.itemsize, cap=cap)
    else:
        Tt = int(time_block)
        if S % Tt != 0:
            raise ValueError("time_block must divide seq_len")

    cur = x_sh
    h_finals, c_finals = [], []
    for layer in range(L):
        p = params[layer]
        in_pad = D if layer == 0 else Hp
        w_ih_t = _prep_weight(p['w_ih'], H, Hp, rows_to=in_pad).astype(wdt)
        w_hh_t = _prep_weight(p['w_hh'], H, Hp, rows_to=Hp).astype(wdt)
        bias = _gates_reorder_pad(
            (p['b_ih'] + p['b_hh']).astype(jnp.float32), H, Hp
        ).reshape(1, 4 * Hp)

        out_dtype = act_dtype if layer < L - 1 else jnp.dtype(jnp.float32)

        y, h_n, c_n = _run_layer(
            cur,
            h0p[layer].reshape(nbb, Bt, Hp),
            c0p[layer].reshape(nbb, Bt, Hp),
            w_ih_t, w_hh_t, bias,
            seq_len=S, batch_tile=Bt, hidden_pad=Hp, time_block=Tt,
            out_dtype=out_dtype, vmem_cap=cap)

        h_finals.append(h_n.reshape(Bp, Hp)[:B, :H])
        c_finals.append(c_n.reshape(Bp, Hp)[:B, :H])
        cur = y                      # next layer input, same (nbb, S*Bt, Hp)

    out = cur.reshape(nbb, S, Bt, Hp)
    out = jnp.transpose(out, (1, 0, 2, 3)).reshape(S, Bp, Hp)
    out = jnp.transpose(out, (1, 0, 2))[:B, :, :H].astype(jnp.float32)
    return out, (jnp.stack(h_finals), jnp.stack(c_finals))


def _init_params(key, input_size, hidden_size, num_layers):
    """Deterministic init mimicking nn.Linear (uniform +/- 1/sqrt(fan_in))."""
    params = []
    for layer in range(num_layers):
        in_sz = input_size if layer == 0 else hidden_size
        key, k1, k2, k3, k4 = jax.random.split(key, 5)
        bound_i = 1.0 / jnp.sqrt(in_sz)
        bound_h = 1.0 / jnp.sqrt(hidden_size)
        params.append({
            'w_ih': jax.random.uniform(k1, (4 * hidden_size, in_sz),
                                       jnp.float32, -bound_i, bound_i),
            'b_ih': jax.random.uniform(k2, (4 * hidden_size,),
                                       jnp.float32, -bound_i, bound_i),
            'w_hh': jax.random.uniform(k3, (4 * hidden_size, hidden_size),
                                       jnp.float32, -bound_h, bound_h),
            'b_hh': jax.random.uniform(k4, (4 * hidden_size,),
                                       jnp.float32, -bound_h, bound_h),
        })
    return params


def _reference_forward(x, params, hidden=None):
    """Pure-JAX reference matching the PyTorch MYLSTM.forward semantics."""
    B, S, D = x.shape
    L = len(params)
    H = params[0]['w_hh'].shape[1]
    if hidden is None:
        h = jnp.zeros((L, B, H), jnp.float32)
        c = jnp.zeros((L, B, H), jnp.float32)
    else:
        h, c = hidden
    outs = []
    for t in range(S):
        x_t = x[:, t, :]
        h_out, c_out = [], []
        for layer in range(L):
            p = params[layer]
            combined = (x_t @ p['w_ih'].T + p['b_ih']
                        + h[layer] @ p['w_hh'].T + p['b_hh'])
            i_g = jax.nn.sigmoid(combined[:, 0 * H:1 * H])
            f_g = jax.nn.sigmoid(combined[:, 1 * H:2 * H])
            g_g = jnp.tanh(combined[:, 2 * H:3 * H])
            o_g = jax.nn.sigmoid(combined[:, 3 * H:4 * H])
            c_new = f_g * c[layer] + i_g * g_g
            h_new = o_g * jnp.tanh(c_new)
            x_t = h_new
            h_out.append(h_new)
            c_out.append(c_new)
        outs.append(x_t)
        h, c = jnp.stack(h_out), jnp.stack(c_out)
    return jnp.stack(outs, axis=1), (h, c)


if __name__ == "__main__":
    key = jax.random.PRNGKey(0)
    batch, seq_len, input_size, hidden_size, num_layers = 2, 16, 16, 32, 2

    k_x, k_p, k_h, k_c, k_x2, k_p2 = jax.random.split(key, 6)
    x = jax.random.normal(k_x, (batch, seq_len, input_size), jnp.float32)
    params = _init_params(k_p, input_size, hidden_size, num_layers)

    # 1) Zero initial hidden, f32 weights (strict check vs pure-JAX reference).
    out, (h_n, c_n) = mylstm_forward(x, params)
    jax.block_until_ready((out, h_n, c_n))
    ref_out, (ref_h, ref_c) = _reference_forward(x, params)
    assert out.shape == (batch, seq_len, hidden_size)
    assert h_n.shape == (num_layers, batch, hidden_size)
    assert c_n.shape == (num_layers, batch, hidden_size)
    assert jnp.allclose(out, ref_out, atol=1e-4, rtol=1e-4)
    assert jnp.allclose(h_n, ref_h, atol=1e-4, rtol=1e-4)
    assert jnp.allclose(c_n, ref_c, atol=1e-4, rtol=1e-4)

    # 2) Explicit initial hidden state.
    h0 = 0.1 * jax.random.normal(k_h, (num_layers, batch, hidden_size),
                                 jnp.float32)
    c0 = 0.1 * jax.random.normal(k_c, (num_layers, batch, hidden_size),
                                 jnp.float32)
    out2, (h_n2, c_n2) = mylstm_forward(x, params, hidden=(h0, c0))
    jax.block_until_ready((out2, h_n2, c_n2))
    ref_out2, (ref_h2, ref_c2) = _reference_forward(x, params, hidden=(h0, c0))
    assert jnp.allclose(out2, ref_out2, atol=1e-4, rtol=1e-4)
    assert jnp.allclose(h_n2, ref_h2, atol=1e-4, rtol=1e-4)
    assert jnp.allclose(c_n2, ref_c2, atol=1e-4, rtol=1e-4)

    # 3) bf16 matmul operands + bf16 inter-layer activations (loose tolerance).
    out3, (h_n3, c_n3) = mylstm_forward(x, params, weight_dtype=jnp.bfloat16)
    jax.block_until_ready((out3, h_n3, c_n3))
    assert jnp.allclose(out3, ref_out, atol=5e-2, rtol=5e-2)
    assert jnp.allclose(h_n3, ref_h, atol=5e-2, rtol=5e-2)

    # 4) Batch-sharded grid (2 "parallel" batch blocks; 2x on v7x megacore).
    x4 = jax.random.normal(k_x2, (16, 8, input_size), jnp.float32)
    params4 = _init_params(k_p2, input_size, hidden_size, 1)
    out4, (h_n4, c_n4) = mylstm_forward(x4, params4, batch_shards=2)
    jax.block_until_ready((out4, h_n4, c_n4))
    ref_out4, (ref_h4, ref_c4) = _reference_forward(x4, params4)
    assert jnp.allclose(out4, ref_out4, atol=1e-4, rtol=1e-4)
    assert jnp.allclose(h_n4, ref_h4, atol=1e-4, rtol=1e-4)
    assert jnp.allclose(c_n4, ref_c4, atol=1e-4, rtol=1e-4)

    print("KERNEL_OK")
</pallas_src>

<mosaic_0001>
module attributes {stable_mosaic.version = 11 : i64} {
  func.func @kernel(%arg0: i32, %arg1: i32, %arg2: memref<1x128x16xf32, #tpu.memory_space<vmem>>, %arg3: memref<1x8x128xf32, #tpu.memory_space<vmem>>, %arg4: memref<1x8x128xf32, #tpu.memory_space<vmem>>, %arg5: memref<16x512xf32, #tpu.memory_space<vmem>>, %arg6: memref<128x512xf32, #tpu.memory_space<vmem>>, %arg7: memref<1x512xf32, #tpu.memory_space<vmem>>, %arg8: memref<1x128x128xf32, #tpu.memory_space<vmem>>, %arg9: memref<1x8x128xf32, #tpu.memory_space<vmem>>, %arg10: memref<1x8x128xf32, #tpu.memory_space<vmem>>, %arg11: memref<8x128xf32, #tpu.memory_space<vmem>>, %arg12: memref<8x128xf32, #tpu.memory_space<vmem>>, %arg13: memref<128x512xf32, #tpu.memory_space<vmem>>) attributes {dimension_semantics = [#tpu.dimension_semantics<parallel>, #tpu.dimension_semantics<arbitrary>], iteration_bounds = array<i64: 1, 1>, scalar_prefetch = 0 : i64, scratch_operands = 3 : i64, tpu.core_type = #tpu.core_type<tc>, window_params = [{transform_indices = @transform_0, window_bounds = array<i64: 1, 128, 16>}, {transform_indices = @transform_1, window_bounds = array<i64: 1, 8, 128>}, {transform_indices = @transform_2, window_bounds = array<i64: 1, 8, 128>}, {pipeline_mode = #tpu.pipeline_mode<synchronous>, transform_indices = @transform_3, window_bounds = array<i64: 16, 512>}, {pipeline_mode = #tpu.pipeline_mode<synchronous>, transform_indices = @transform_4, window_bounds = array<i64: 128, 512>}, {pipeline_mode = #tpu.pipeline_mode<synchronous>, transform_indices = @transform_5, window_bounds = array<i64: 1, 512>}, {transform_indices = @transform_6, window_bounds = array<i64: 1, 128, 128>}, {transform_indices = @transform_7, window_bounds = array<i64: 1, 8, 128>}, {transform_indices = @transform_8, window_bounds = array<i64: 1, 8, 128>}]} {
    %c0_i32 = arith.constant 0 : i32
    %0 = arith.cmpi eq, %arg1, %c0_i32 : i32
    %1 = arith.extui %0 : i1 to i32
    %c0_i32_0 = arith.constant 0 : i32
    %2 = arith.cmpi ne, %1, %c0_i32_0 : i32
    scf.if %2 {
      %c0_118 = arith.constant 0 : index
      %c0_119 = arith.constant 0 : index
      %c0_120 = arith.constant 0 : index
      %435 = vector.load %arg3[%c0_118, %c0_119, %c0_120] : memref<1x8x128xf32, #tpu.memory_space<vmem>>, vector<1x8x128xf32>
      %436 = vector.shape_cast %435 : vector<1x8x128xf32> to vector<8x128xf32>
      %c0_121 = arith.constant 0 : index
      %c0_122 = arith.constant 0 : index
      %437 = vector.load %arg11[%c0_121, %c0_122] : memref<8x128xf32, #tpu.memory_space<vmem>>, vector<8x128xf32>
      tpu.vector_store %arg11[%c0_121, %c0_122], %436 {strides = array<i32>} : memref<8x128xf32, #tpu.memory_space<vmem>>, vector<8x128xf32>,
      %c0_123 = arith.constant 0 : index
      %c0_124 = arith.constant 0 : index
      %c0_125 = arith.constant 0 : index
      %438 = vector.load %arg4[%c0_123, %c0_124, %c0_125] : memref<1x8x128xf32, #tpu.memory_space<vmem>>, vector<1x8x128xf32>
      %439 = vector.shape_cast %438 : vector<1x8x128xf32> to vector<8x128xf32>
      %c0_126 = arith.constant 0 : index
      %c0_127 = arith.constant 0 : index
      %440 = vector.load %arg12[%c0_126, %c0_127] : memref<8x128xf32, #tpu.memory_space<vmem>>, vector<8x128xf32>
      tpu.vector_store %arg12[%c0_126, %c0_127], %439 {strides = array<i32>} : memref<8x128xf32, #tpu.memory_space<vmem>>, vector<8x128xf32>,
    } else {
    }
    %c0 = arith.constant 0 : index
    %c0_1 = arith.constant 0 : index
    %c0_2 = arith.constant 0 : index
    %3 = vector.load %arg2[%c0, %c0_1, %c0_2] : memref<1x128x16xf32, #tpu.memory_space<vmem>>, vector<1x128x16xf32>
    %4 = vector.shape_cast %3 : vector<1x128x16xf32> to vector<128x16xf32>
    %c0_3 = arith.constant 0 : index
    %c0_4 = arith.constant 0 : index
    %5 = vector.load %arg5[%c0_3, %c0_4] : memref<16x512xf32, #tpu.memory_space<vmem>>, vector<16x512xf32>
    %cst = arith.constant dense<0.000000e+00> : vector<128x512xf32>
    %6 = tpu.matmul %4, %5, %cst {dimension_numbers = #tpu.dot_dimension_numbers<[1], [0], [0], [1], [0, 0, 1, 1], [], []>} : vector<128x16xf32>, vector<16x512xf32>, vector<128x512xf32> -> vector<128x512xf32>
    %c0_5 = arith.constant 0 : index
    %c0_6 = arith.constant 0 : index
    %7 = vector.load %arg7[%c0_5, %c0_6] : memref<1x512xf32, #tpu.memory_space<vmem>>, vector<1x512xf32>
    %8 = vector.broadcast %7 : vector<1x512xf32> to vector<128x512xf32>
    %9 = arith.addf %6, %8 : vector<128x512xf32>
    %c0_7 = arith.constant 0 : index
    %c0_8 = arith.constant 0 : index
    %10 = vector.load %arg13[%c0_7, %c0_8] : memref<128x512xf32, #tpu.memory_space<vmem>>, vector<128x512xf32>
    tpu.vector_store %arg13[%c0_7, %c0_8], %9 {strides = array<i32>} : memref<128x512xf32, #tpu.memory_space<vmem>>, vector<128x512xf32>,
    %c0_9 = arith.constant 0 : index
    %c0_10 = arith.constant 0 : index
    %11 = vector.load %arg6[%c0_9, %c0_10] : memref<128x512xf32, #tpu.memory_space<vmem>>, vector<128x512xf32>
    %c0_11 = arith.constant 0 : index
    %c0_12 = arith.constant 0 : index
    %12 = vector.load %arg11[%c0_11, %c0_12] : memref<8x128xf32, #tpu.memory_space<vmem>>, vector<8x128xf32>
    %c0_13 = arith.constant 0 : index
    %c0_14 = arith.constant 0 : index
    %13 = vector.load %arg12[%c0_13, %c0_14] : memref<8x128xf32, #tpu.memory_space<vmem>>, vector<8x128xf32>
    %c0_i32_15 = arith.constant 0 : i32
    %c8_i32 = arith.constant 8 : i32
    %14 = arith.muli %c0_i32_15, %c8_i32 : i32
    %15 = tpu.assume_multiple %14, 8 : i32
    %16 = arith.index_cast %15 : i32 to index
    %c0_16 = arith.constant 0 : index
    %17 = vector.load %arg13[%16, %c0_16] : memref<128x512xf32, #tpu.memory_space<vmem>>, vector<8x512xf32>
    %cst_17 = arith.constant dense<0.000000e+00> : vector<8x512xf32>
    %18 = tpu.matmul %12, %11, %cst_17 {dimension_numbers = #tpu.dot_dimension_numbers<[1], [0], [0], [1], [0, 0, 1, 1], [], []>} : vector<8x128xf32>, vector<128x512xf32>, vector<8x512xf32> -> vector<8x512xf32>
    %19 = arith.addf %17, %18 : vector<8x512xf32>
    %20 = vector.extract_strided_slice %19 {offsets = [0, 0], sizes = [8, 384], strides = [1, 1]} : vector<8x512xf32> to vector<8x384xf32>
    %21 = arith.negf %20 : vector<8x384xf32>
    %22 = math.exp %21 : vector<8x384xf32>
    %cst_18 = arith.constant 1.000000e+00 : f32
    %23 = vector.broadcast %cst_18 : f32 to vector<8x384xf32>
    %24 = arith.addf %23, %22 : vector<8x384xf32>
    %25 = arith.divf %23, %24 : vector<8x384xf32>
    %26 = vector.extract_strided_slice %25 {offsets = [0, 0], sizes = [8, 128], strides = [1, 1]} : vector<8x384xf32> to vector<8x128xf32>
    %27 = vector.extract_strided_slice %25 {offsets = [0, 128], sizes = [8, 128], strides = [1, 1]} : vector<8x384xf32> to vector<8x128xf32>
    %28 = vector.extract_strided_slice %25 {offsets = [0, 256], sizes = [8, 128], strides = [1, 1]} : vector<8x384xf32> to vector<8x128xf32>
    %29 = vector.extract_strided_slice %19 {offsets = [0, 384], sizes = [8, 128], strides = [1, 1]} : vector<8x512xf32> to vector<8x128xf32>
    %30 = math.tanh %29 : vector<8x128xf32>
    %31 = arith.mulf %27, %13 : vector<8x128xf32>
    %32 = arith.mulf %26, %30 : vector<8x128xf32>
    %33 = arith.addf %31, %32 : vector<8x128xf32>
    %34 = math.tanh %33 : vector<8x128xf32>
    %35 = arith.mulf %28, %34 : vector<8x128xf32>
    %c0_19 = arith.constant 0 : index
    %36 = arith.index_cast %15 : i32 to index
    %c0_20 = arith.constant 0 : index
    %37 = vector.load %arg8[%c0_19, %36, %c0_20] : memref<1x128x128xf32, #tpu.memory_space<vmem>>, vector<1x8x128xf32>
    %38 = vector.shape_cast %37 : vector<1x8x128xf32> to vector<8x128xf32>
    %39 = vector.shape_cast %35 : vector<8x128xf32> to vector<1x8x128xf32>
    tpu.vector_store %arg8[%c0_19, %36, %c0_20], %39 {strides = array<i32>} : memref<1x128x128xf32, #tpu.memory_space<vmem>>, vector<1x8x128xf32>,
    %c1_i32 = arith.constant 1 : i32
    %c8_i32_21 = arith.constant 8 : i32
    %40 = arith.muli %c1_i32, %c8_i32_21 : i32
    %41 = tpu.assume_multiple %40, 8 : i32
    %42 = arith.index_cast %41 : i32 to index
    %c0_22 = arith.constant 0 : index
    %43 = vector.load %arg13[%42, %c0_22] : memref<128x512xf32, #tpu.memory_space<vmem>>, vector<8x512xf32>
    %cst_23 = arith.constant dense<0.000000e+00> : vector<8x512xf32>
    %44 = tpu.matmul %35, %11, %cst_23 {dimension_numbers = #tpu.dot_dimension_numbers<[1], [0], [0], [1], [0, 0, 1, 1], [], []>} : vector<8x128xf32>, vector<128x512xf32>, vector<8x512xf32> -> vector<8x512xf32>
    %45 = arith.addf %43, %44 : vector<8x512xf32>
    %46 = vector.extract_strided_slice %45 {offsets = [0, 0], sizes = [8, 384], strides = [1, 1]} : vector<8x512xf32> to vector<8x384xf32>
    %47 = arith.negf %46 : vector<8x384xf32>
    %48 = math.exp %47 : vector<8x384xf32>
    %cst_24 = arith.constant 1.000000e+00 : f32
    %49 = vector.broadcast %cst_24 : f32 to vector<8x384xf32>
    %50 = arith.addf %49, %48 : vector<8x384xf32>
    %51 = arith.divf %49, %50 : vector<8x384xf32>
    %52 = vector.extract_strided_slice %51 {offsets = [0, 0], sizes = [8, 128], strides = [1, 1]} : vector<8x384xf32> to vector<8x128xf32>
    %53 = vector.extract_strided_slice %51 {offsets = [0, 128], sizes = [8, 128], strides = [1, 1]} : vector<8x384xf32> to vector<8x128xf32>
    %54 = vector.extract_strided_slice %51 {offsets = [0, 256], sizes = [8, 128], strides = [1, 1]} : vector<8x384xf32> to vector<8x128xf32>
    %55 = vector.extract_strided_slice %45 {offsets = [0, 384], sizes = [8, 128], strides = [1, 1]} : vector<8x512xf32> to vector<8x128xf32>
    %56 = math.tanh %55 : vector<8x128xf32>
    %57 = arith.mulf %53, %33 : vector<8x128xf32>
    %58 = arith.mulf %52, %56 : vector<8x128xf32>
    %59 = arith.addf %57, %58 : vector<8x128xf32>
    %60 = math.tanh %59 : vector<8x128xf32>
    %61 = arith.mulf %54, %60 : vector<8x128xf32>
    %c0_25 = arith.constant 0 : index
    %62 = arith.index_cast %41 : i32 to index
    %c0_26 = arith.constant 0 : index
    %63 = vector.load %arg8[%c0_25, %62, %c0_26] : memref<1x128x128xf32, #tpu.memory_space<vmem>>, vector<1x8x128xf32>
    %64 = vector.shape_cast %63 : vector<1x8x128xf32> to vector<8x128xf32>
    %65 = vector.shape_cast %61 : vector<8x128xf32> to vector<1x8x128xf32>
    tpu.vector_store %arg8[%c0_25, %62, %c0_26], %65 {strides = array<i32>} : memref<1x128x128xf32, #tpu.memory_space<vmem>>, vector<1x8x128xf32>,
    %c2_i32 = arith.constant 2 : i32
    %c8_i32_27 = arith.constant 8 : i32
    %66 = arith.muli %c2_i32, %c8_i32_27 : i32
    %67 = tpu.assume_multiple %66, 8 : i32
    %68 = arith.index_cast %67 : i32 to index
    %c0_28 = arith.constant 0 : index
    %69 = vector.load %arg13[%68, %c0_28] : memref<128x512xf32, #tpu.memory_space<vmem>>, vector<8x512xf32>
    %cst_29 = arith.constant dense<0.000000e+00> : vector<8x512xf32>
    %70 = tpu.matmul %61, %11, %cst_29 {dimension_numbers = #tpu.dot_dimension_numbers<[1], [0], [0], [1], [0, 0, 1, 1], [], []>} : vector<8x128xf32>, vector<128x512xf32>, vector<8x512xf32> -> vector<8x512xf32>
    %71 = arith.addf %69, %70 : vector<8x512xf32>
    %72 = vector.extract_strided_slice %71 {offsets = [0, 0], sizes = [8, 384], strides = [1, 1]} : vector<8x512xf32> to vector<8x384xf32>
    %73 = arith.negf %72 : vector<8x384xf32>
    %74 = math.exp %73 : vector<8x384xf32>
    %cst_30 = arith.constant 1.000000e+00 : f32
    %75 = vector.broadcast %cst_30 : f32 to vector<8x384xf32>
    %76 = arith.addf %75, %74 : vector<8x384xf32>
    %77 = arith.divf %75, %76 : vector<8x384xf32>
    %78 = vector.extract_strided_slice %77 {offsets = [0, 0], sizes = [8, 128], strides = [1, 1]} : vector<8x384xf32> to vector<8x128xf32>
    %79 = vector.extract_strided_slice %77 {offsets = [0, 128], sizes = [8, 128], strides = [1, 1]} : vector<8x384xf32> to vector<8x128xf32>
    %80 = vector.extract_strided_slice %77 {offsets = [0, 256], sizes = [8, 128], strides = [1, 1]} : vector<8x384xf32> to vector<8x128xf32>
    %81 = vector.extract_strided_slice %71 {offsets = [0, 384], sizes = [8, 128], strides = [1, 1]} : vector<8x512xf32> to vector<8x128xf32>
    %82 = math.tanh %81 : vector<8x128xf32>
    %83 = arith.mulf %79, %59 : vector<8x128xf32>
    %84 = arith.mulf %78, %82 : vector<8x128xf32>
    %85 = arith.addf %83, %84 : vector<8x128xf32>
    %86 = math.tanh %85 : vector<8x128xf32>
    %87 = arith.mulf %80, %86 : vector<8x128xf32>
    %c0_31 = arith.constant 0 : index
    %88 = arith.index_cast %67 : i32 to index
    %c0_32 = arith.constant 0 : index
    %89 = vector.load %arg8[%c0_31, %88, %c0_32] : memref<1x128x128xf32, #tpu.memory_space<vmem>>, vector<1x8x128xf32>
    %90 = vector.shape_cast %89 : vector<1x8x128xf32> to vector<8x128xf32>
    %91 = vector.shape_cast %87 : vector<8x128xf32> to vector<1x8x128xf32>
    tpu.vector_store %arg8[%c0_31, %88, %c0_32], %91 {strides = array<i32>} : memref<1x128x128xf32, #tpu.memory_space<vmem>>, vector<1x8x128xf32>,
    %c3_i32 = arith.constant 3 : i32
    %c8_i32_33 = arith.constant 8 : i32
    %92 = arith.muli %c3_i32, %c8_i32_33 : i32
    %93 = tpu.assume_multiple %92, 8 : i32
    %94 = arith.index_cast %93 : i32 to index
    %c0_34 = arith.constant 0 : index
    %95 = vector.load %arg13[%94, %c0_34] : memref<128x512xf32, #tpu.memory_space<vmem>>, vector<8x512xf32>
    %cst_35 = arith.constant dense<0.000000e+00> : vector<8x512xf32>
    %96 = tpu.matmul %87, %11, %cst_35 {dimension_numbers = #tpu.dot_dimension_numbers<[1], [0], [0], [1], [0, 0, 1, 1], [], []>} : vector<8x128xf32>, vector<128x512xf32>, vector<8x512xf32> -> vector<8x512xf32>
    %97 = arith.addf %95, %96 : vector<8x512xf32>
    %98 = vector.extract_strided_slice %97 {offsets = [0, 0], sizes = [8, 384], strides = [1, 1]} : vector<8x512xf32> to vector<8x384xf32>
    %99 = arith.negf %98 : vector<8x384xf32>
    %100 = math.exp %99 : vector<8x384xf32>
    %cst_36 = arith.constant 1.000000e+00 : f32
    %101 = vector.broadcast %cst_36 : f32 to vector<8x384xf32>
    %102 = arith.addf %101, %100 : vector<8x384xf32>
    %103 = arith.divf %101, %102 : vector<8x384xf32>
    %104 = vector.extract_strided_slice %103 {offsets = [0, 0], sizes = [8, 128], strides = [1, 1]} : vector<8x384xf32> to vector<8x128xf32>
    %105 = vector.extract_strided_slice %103 {offsets = [0, 128], sizes = [8, 128], strides = [1, 1]} : vector<8x384xf32> to vector<8x128xf32>
    %106 = vector.extract_strided_slice %103 {offsets = [0, 256], sizes = [8, 128], strides = [1, 1]} : vector<8x384xf32> to vector<8x128xf32>
    %107 = vector.extract_strided_slice %97 {offsets = [0, 384], sizes = [8, 128], strides = [1, 1]} : vector<8x512xf32> to vector<8x128xf32>
    %108 = math.tanh %107 : vector<8x128xf32>
    %109 = arith.mulf %105, %85 : vector<8x128xf32>
    %110 = arith.mulf %104, %108 : vector<8x128xf32>
    %111 = arith.addf %109, %110 : vector<8x128xf32>
    %112 = math.tanh %111 : vector<8x128xf32>
    %113 = arith.mulf %106, %112 : vector<8x128xf32>
    %c0_37 = arith.constant 0 : index
    %114 = arith.index_cast %93 : i32 to index
    %c0_38 = arith.constant 0 : index
    %115 = vector.load %arg8[%c0_37, %114, %c0_38] : memref<1x128x128xf32, #tpu.memory_space<vmem>>, vector<1x8x128xf32>
    %116 = vector.shape_cast %115 : vector<1x8x128xf32> to vector<8x128xf32>
    %117 = vector.shape_cast %113 : vector<8x128xf32> to vector<1x8x128xf32>
    tpu.vector_store %arg8[%c0_37, %114, %c0_38], %117 {strides = array<i32>} : memref<1x128x128xf32, #tpu.memory_space<vmem>>, vector<1x8x128xf32>,
    %c4_i32 = arith.constant 4 : i32
    %c8_i32_39 = arith.constant 8 : i32
    %118 = arith.muli %c4_i32, %c8_i32_39 : i32
    %119 = tpu.assume_multiple %118, 8 : i32
    %120 = arith.index_cast %119 : i32 to index
    %c0_40 = arith.constant 0 : index
    %121 = vector.load %arg13[%120, %c0_40] : memref<128x512xf32, #tpu.memory_space<vmem>>, vector<8x512xf32>
    %cst_41 = arith.constant dense<0.000000e+00> : vector<8x512xf32>
    %122 = tpu.matmul %113, %11, %cst_41 {dimension_numbers = #tpu.dot_dimension_numbers<[1], [0], [0], [1], [0, 0, 1, 1], [], []>} : vector<8x128xf32>, vector<128x512xf32>, vector<8x512xf32> -> vector<8x512xf32>
    %123 = arith.addf %121, %122 : vector<8x512xf32>
    %124 = vector.extract_strided_slice %123 {offsets = [0, 0], sizes = [8, 384], strides = [1, 1]} : vector<8x512xf32> to vector<8x384xf32>
    %125 = arith.negf %124 : vector<8x384xf32>
    %126 = math.exp %125 : vector<8x384xf32>
    %cst_42 = arith.constant 1.000000e+00 : f32
    %127 = vector.broadcast %cst_42 : f32 to vector<8x384xf32>
    %128 = arith.addf %127, %126 : vector<8x384xf32>
    %129 = arith.divf %127, %128 : vector<8x384xf32>
    %130 = vector.extract_strided_slice %129 {offsets = [0, 0], sizes = [8, 128], strides = [1, 1]} : vector<8x384xf32> to vector<8x128xf32>
    %131 = vector.extract_strided_slice %129 {offsets = [0, 128], sizes = [8, 128], strides = [1, 1]} : vector<8x384xf32> to vector<8x128xf32>
    %132 = vector.extract_strided_slice %129 {offsets = [0, 256], sizes = [8, 128], strides = [1, 1]} : vector<8x384xf32> to vector<8x128xf32>
    %133 = vector.extract_strided_slice %123 {offsets = [0, 384], sizes = [8, 128], strides = [1, 1]} : vector<8x512xf32> to vector<8x128xf32>
    %134 = math.tanh %133 : vector<8x128xf32>
    %135 = arith.mulf %131, %111 : vector<8x128xf32>
    %136 = arith.mulf %130, %134 : vector<8x128xf32>
    %137 = arith.addf %135, %136 : vector<8x128xf32>
    %138 = math.tanh %137 : vector<8x128xf32>
    %139 = arith.mulf %132, %138 : vector<8x128xf32>
    %c0_43 = arith.constant 0 : index
    %140 = arith.index_cast %119 : i32 to index
    %c0_44 = arith.constant 0 : index
    %141 = vector.load %arg8[%c0_43, %140, %c0_44] : memref<1x128x128xf32, #tpu.memory_space<vmem>>, vector<1x8x128xf32>
    %142 = vector.shape_cast %141 : vector<1x8x128xf32> to vector<8x128xf32>
    %143 = vector.shape_cast %139 : vector<8x128xf32> to vector<1x8x128xf32>
    tpu.vector_store %arg8[%c0_43, %140, %c0_44], %143 {strides = array<i32>} : memref<1x128x128xf32, #tpu.memory_space<vmem>>, vector<1x8x128xf32>,
    %c5_i32 = arith.constant 5 : i32
    %c8_i32_45 = arith.constant 8 : i32
    %144 = arith.muli %c5_i32, %c8_i32_45 : i32
    %145 = tpu.assume_multiple %144, 8 : i32
    %146 = arith.index_cast %145 : i32 to index
    %c0_46 = arith.constant 0 : index
    %147 = vector.load %arg13[%146, %c0_46] : memref<128x512xf32, #tpu.memory_space<vmem>>, vector<8x512xf32>
    %cst_47 = arith.constant dense<0.000000e+00> : vector<8x512xf32>
    %148 = tpu.matmul %139, %11, %cst_47 {dimension_numbers = #tpu.dot_dimension_numbers<[1], [0], [0], [1], [0, 0, 1, 1], [], []>} : vector<8x128xf32>, vector<128x512xf32>, vector<8x512xf32> -> vector<8x512xf32>
    %149 = arith.addf %147, %148 : vector<8x512xf32>
    %150 = vector.extract_strided_slice %149 {offsets = [0, 0], sizes = [8, 384], strides = [1, 1]} : vector<8x512xf32> to vector<8x384xf32>
    %151 = arith.negf %150 : vector<8x384xf32>
    %152 = math.exp %151 : vector<8x384xf32>
    %cst_48 = arith.constant 1.000000e+00 : f32
    %153 = vector.broadcast %cst_48 : f32 to vector<8x384xf32>
    %154 = arith.addf %153, %152 : vector<8x384xf32>
    %155 = arith.divf %153, %154 : vector<8x384xf32>
    %156 = vector.extract_strided_slice %155 {offsets = [0, 0], sizes = [8, 128], strides = [1, 1]} : vector<8x384xf32> to vector<8x128xf32>
    %157 = vector.extract_strided_slice %155 {offsets = [0, 128], sizes = [8, 128], strides = [1, 1]} : vector<8x384xf32> to vector<8x128xf32>
    %158 = vector.extract_strided_slice %155 {offsets = [0, 256], sizes = [8, 128], strides = [1, 1]} : vector<8x384xf32> to vector<8x128xf32>
    %159 = vector.extract_strided_slice %149 {offsets = [0, 384], sizes = [8, 128], strides = [1, 1]} : vector<8x512xf32> to vector<8x128xf32>
    %160 = math.tanh %159 : vector<8x128xf32>
    %161 = arith.mulf %157, %137 : vector<8x128xf32>
    %162 = arith.mulf %156, %160 : vector<8x128xf32>
    %163 = arith.addf %161, %162 : vector<8x128xf32>
    %164 = math.tanh %163 : vector<8x128xf32>
    %165 = arith.mulf %158, %164 : vector<8x128xf32>
    %c0_49 = arith.constant 0 : index
    %166 = arith.index_cast %145 : i32 to index
    %c0_50 = arith.constant 0 : index
    %167 = vector.load %arg8[%c0_49, %166, %c0_50] : memref<1x128x128xf32, #tpu.memory_space<vmem>>, vector<1x8x128xf32>
    %168 = vector.shape_cast %167 : vector<1x8x128xf32> to vector<8x128xf32>
    %169 = vector.shape_cast %165 : vector<8x128xf32> to vector<1x8x128xf32>
    tpu.vector_store %arg8[%c0_49, %166, %c0_50], %169 {strides = array<i32>} : memref<1x128x128xf32, #tpu.memory_space<vmem>>, vector<1x8x128xf32>,
    %c6_i32 = arith.constant 6 : i32
    %c8_i32_51 = arith.constant 8 : i32
    %170 = arith.muli %c6_i32, %c8_i32_51 : i32
    %171 = tpu.assume_multiple %170, 8 : i32
    %172 = arith.index_cast %171 : i32 to index
    %c0_52 = arith.constant 0 : index
    %173 = vector.load %arg13[%172, %c0_52] : memref<128x512xf32, #tpu.memory_space<vmem>>, vector<8x512xf32>
    %cst_53 = arith.constant dense<0.000000e+00> : vector<8x512xf32>
    %174 = tpu.matmul %165, %11, %cst_53 {dimension_numbers = #tpu.dot_dimension_numbers<[1], [0], [0], [1], [0, 0, 1, 1], [], []>} : vector<8x128xf32>, vector<128x512xf32>, vector<8x512xf32> -> vector<8x512xf32>
    %175 = arith.addf %173, %174 : vector<8x512xf32>
    %176 = vector.extract_strided_slice %175 {offsets = [0, 0], sizes = [8, 384], strides = [1, 1]} : vector<8x512xf32> to vector<8x384xf32>
    %177 = arith.negf %176 : vector<8x384xf32>
    %178 = math.exp %177 : vector<8x384xf32>
    %cst_54 = arith.constant 1.000000e+00 : f32
    %179 = vector.broadcast %cst_54 : f32 to vector<8x384xf32>
    %180 = arith.addf %179, %178 : vector<8x384xf32>
    %181 = arith.divf %179, %180 : vector<8x384xf32>
    %182 = vector.extract_strided_slice %181 {offsets = [0, 0], sizes = [8, 128], strides = [1, 1]} : vector<8x384xf32> to vector<8x128xf32>
    %183 = vector.extract_strided_slice %181 {offsets = [0, 128], sizes = [8, 128], strides = [1, 1]} : vector<8x384xf32> to vector<8x128xf32>
    %184 = vector.extract_strided_slice %181 {offsets = [0, 256], sizes = [8, 128], strides = [1, 1]} : vector<8x384xf32> to vector<8x128xf32>
    %185 = vector.extract_strided_slice %175 {offsets = [0, 384], sizes = [8, 128], strides = [1, 1]} : vector<8x512xf32> to vector<8x128xf32>
    %186 = math.tanh %185 : vector<8x128xf32>
    %187 = arith.mulf %183, %163 : vector<8x128xf32>
    %188 = arith.mulf %182, %186 : vector<8x128xf32>
    %189 = arith.addf %187, %188 : vector<8x128xf32>
    %190 = math.tanh %189 : vector<8x128xf32>
    %191 = arith.mulf %184, %190 : vector<8x128xf32>
    %c0_55 = arith.constant 0 : index
    %192 = arith.index_cast %171 : i32 to index
    %c0_56 = arith.constant 0 : index
    %193 = vector.load %arg8[%c0_55, %192, %c0_56] : memref<1x128x128xf32, #tpu.memory_space<vmem>>, vector<1x8x128xf32>
    %194 = vector.shape_cast %193 : vector<1x8x128xf32> to vector<8x128xf32>
    %195 = vector.shape_cast %191 : vector<8x128xf32> to vector<1x8x128xf32>
    tpu.vector_store %arg8[%c0_55, %192, %c0_56], %195 {strides = array<i32>} : memref<1x128x128xf32, #tpu.memory_space<vmem>>, vector<1x8x128xf32>,
    %c7_i32 = arith.constant 7 : i32
    %c8_i32_57 = arith.constant 8 : i32
    %196 = arith.muli %c7_i32, %c8_i32_57 : i32
    %197 = tpu.assume_multiple %196, 8 : i32
    %198 = arith.index_cast %197 : i32 to index
    %c0_58 = arith.constant 0 : index
    %199 = vector.load %arg13[%198, %c0_58] : memref<128x512xf32, #tpu.memory_space<vmem>>, vector<8x512xf32>
    %cst_59 = arith.constant dense<0.000000e+00> : vector<8x512xf32>
    %200 = tpu.matmul %191, %11, %cst_59 {dimension_numbers = #tpu.dot_dimension_numbers<[1], [0], [0], [1], [0, 0, 1, 1], [], []>} : vector<8x128xf32>, vector<128x512xf32>, vector<8x512xf32> -> vector<8x512xf32>
    %201 = arith.addf %199, %200 : vector<8x512xf32>
    %202 = vector.extract_strided_slice %201 {offsets = [0, 0], sizes = [8, 384], strides = [1, 1]} : vector<8x512xf32> to vector<8x384xf32>
    %203 = arith.negf %202 : vector<8x384xf32>
    %204 = math.exp %203 : vector<8x384xf32>
    %cst_60 = arith.constant 1.000000e+00 : f32
    %205 = vector.broadcast %cst_60 : f32 to vector<8x384xf32>
    %206 = arith.addf %205, %204 : vector<8x384xf32>
    %207 = arith.divf %205, %206 : vector<8x384xf32>
    %208 = vector.extract_strided_slice %207 {offsets = [0, 0], sizes = [8, 128], strides = [1, 1]} : vector<8x384xf32> to vector<8x128xf32>
    %209 = vector.extract_strided_slice %207 {offsets = [0, 128], sizes = [8, 128], strides = [1, 1]} : vector<8x384xf32> to vector<8x128xf32>
    %210 = vector.extract_strided_slice %207 {offsets = [0, 256], sizes = [8, 128], strides = [1, 1]} : vector<8x384xf32> to vector<8x128xf32>
    %211 = vector.extract_strided_slice %201 {offsets = [0, 384], sizes = [8, 128], strides = [1, 1]} : vector<8x512xf32> to vector<8x128xf32>
    %212 = math.tanh %211 : vector<8x128xf32>
    %213 = arith.mulf %209, %189 : vector<8x128xf32>
    %214 = arith.mulf %208, %212 : vector<8x128xf32>
    %215 = arith.addf %213, %214 : vector<8x128xf32>
    %216 = math.tanh %215 : vector<8x128xf32>
    %217 = arith.mulf %210, %216 : vector<8x128xf32>
    %c0_61 = arith.constant 0 : index
    %218 = arith.index_cast %197 : i32 to index
    %c0_62 = arith.constant 0 : index
    %219 = vector.load %arg8[%c0_61, %218, %c0_62] : memref<1x128x128xf32, #tpu.memory_space<vmem>>, vector<1x8x128xf32>
    %220 = vector.shape_cast %219 : vector<1x8x128xf32> to vector<8x128xf32>
    %221 = vector.shape_cast %217 : vector<8x128xf32> to vector<1x8x128xf32>
    tpu.vector_store %arg8[%c0_61, %218, %c0_62], %221 {strides = array<i32>} : memref<1x128x128xf32, #tpu.memory_space<vmem>>, vector<1x8x128xf32>,
    %c8_i32_63 = arith.constant 8 : i32
    %c8_i32_64 = arith.constant 8 : i32
    %222 = arith.muli %c8_i32_63, %c8_i32_64 : i32
    %223 = tpu.assume_multiple %222, 8 : i32
    %224 = arith.index_cast %223 : i32 to index
    %c0_65 = arith.constant 0 : index
    %225 = vector.load %arg13[%224, %c0_65] : memref<128x512xf32, #tpu.memory_space<vmem>>, vector<8x512xf32>
    %cst_66 = arith.constant dense<0.000000e+00> : vector<8x512xf32>
    %226 = tpu.matmul %217, %11, %cst_66 {dimension_numbers = #tpu.dot_dimension_numbers<[1], [0], [0], [1], [0, 0, 1, 1], [], []>} : vector<8x128xf32>, vector<128x512xf32>, vector<8x512xf32> -> vector<8x512xf32>
    %227 = arith.addf %225, %226 : vector<8x512xf32>
    %228 = vector.extract_strided_slice %227 {offsets = [0, 0], sizes = [8, 384], strides = [1, 1]} : vector<8x512xf32> to vector<8x384xf32>
    %229 = arith.negf %228 : vector<8x384xf32>
    %230 = math.exp %229 : vector<8x384xf32>
    %cst_67 = arith.constant 1.000000e+00 : f32
    %231 = vector.broadcast %cst_67 : f32 to vector<8x384xf32>
    %232 = arith.addf %231, %230 : vector<8x384xf32>
    %233 = arith.divf %231, %232 : vector<8x384xf32>
    %234 = vector.extract_strided_slice %233 {offsets = [0, 0], sizes = [8, 128], strides = [1, 1]} : vector<8x384xf32> to vector<8x128xf32>
    %235 = vector.extract_strided_slice %233 {offsets = [0, 128], sizes = [8, 128], strides = [1, 1]} : vector<8x384xf32> to vector<8x128xf32>
    %236 = vector.extract_strided_slice %233 {offsets = [0, 256], sizes = [8, 128], strides = [1, 1]} : vector<8x384xf32> to vector<8x128xf32>
    %237 = vector.extract_strided_slice %227 {offsets = [0, 384], sizes = [8, 128], strides = [1, 1]} : vector<8x512xf32> to vector<8x128xf32>
    %238 = math.tanh %237 : vector<8x128xf32>
    %239 = arith.mulf %235, %215 : vector<8x128xf32>
    %240 = arith.mulf %234, %238 : vector<8x128xf32>
    %241 = arith.addf %239, %240 : vector<8x128xf32>
    %242 = math.tanh %241 : vector<8x128xf32>
    %243 = arith.mulf %236, %242 : vector<8x128xf32>
    %c0_68 = arith.constant 0 : index
    %244 = arith.index_cast %223 : i32 to index
    %c0_69 = arith.constant 0 : index
    %245 = vector.load %arg8[%c0_68, %244, %c0_69] : memref<1x128x128xf32, #tpu.memory_space<vmem>>, vector<1x8x128xf32>
    %246 = vector.shape_cast %245 : vector<1x8x128xf32> to vector<8x128xf32>
    %247 = vector.shape_cast %243 : vector<8x128xf32> to vector<1x8x128xf32>
    tpu.vector_store %arg8[%c0_68, %244, %c0_69], %247 {strides = array<i32>} : memref<1x128x128xf32, #tpu.memory_space<vmem>>, vector<1x8x128xf32>,
    %c9_i32 = arith.constant 9 : i32
    %c8_i32_70 = arith.constant 8 : i32
    %248 = arith.muli %c9_i32, %c8_i32_70 : i32
    %249 = tpu.assume_multiple %248, 8 : i32
    %250 = arith.index_cast %249 : i32 to index
    %c0_71 = arith.constant 0 : index
    %251 = vector.load %arg13[%250, %c0_71] : memref<128x512xf32, #tpu.memory_space<vmem>>, vector<8x512xf32>
    %cst_72 = arith.constant dense<0.000000e+00> : vector<8x512xf32>
    %252 = tpu.matmul %243, %11, %cst_72 {dimension_numbers = #tpu.dot_dimension_numbers<[1], [0], [0], [1], [0, 0, 1, 1], [], []>} : vector<8x128xf32>, vector<128x512xf32>, vector<8x512xf32> -> vector<8x512xf32>
    %253 = arith.addf %251, %252 : vector<8x512xf32>
    %254 = vector.extract_strided_slice %253 {offsets = [0, 0], sizes = [8, 384], strides = [1, 1]} : vector<8x512xf32> to vector<8x384xf32>
    %255 = arith.negf %254 : vector<8x384xf32>
    %256 = math.exp %255 : vector<8x384xf32>
    %cst_73 = arith.constant 1.000000e+00 : f32
    %257 = vector.broadcast %cst_73 : f32 to vector<8x384xf32>
    %258 = arith.addf %257, %256 : vector<8x384xf32>
    %259 = arith.divf %257, %258 : vector<8x384xf32>
    %260 = vector.extract_strided_slice %259 {offsets = [0, 0], sizes = [8, 128], strides = [1, 1]} : vector<8x384xf32> to vector<8x128xf32>
    %261 = vector.extract_strided_slice %259 {offsets = [0, 128], sizes = [8, 128], strides = [1, 1]} : vector<8x384xf32> to vector<8x128xf32>
    %262 = vector.extract_strided_slice %259 {offsets = [0, 256], sizes = [8, 128], strides = [1, 1]} : vector<8x384xf32> to vector<8x128xf32>
    %263 = vector.extract_strided_slice %253 {offsets = [0, 384], sizes = [8, 128], strides = [1, 1]} : vector<8x512xf32> to vector<8x128xf32>
    %264 = math.tanh %263 : vector<8x128xf32>
    %265 = arith.mulf %261, %241 : vector<8x128xf32>
    %266 = arith.mulf %260, %264 : vector<8x128xf32>
    %267 = arith.addf %265, %266 : vector<8x128xf32>
    %268 = math.tanh %267 : vector<8x128xf32>
    %269 = arith.mulf %262, %268 : vector<8x128xf32>
    %c0_74 = arith.constant 0 : index
    %270 = arith.index_cast %249 : i32 to index
    %c0_75 = arith.constant 0 : index
    %271 = vector.load %arg8[%c0_74, %270, %c0_75] : memref<1x128x128xf32, #tpu.memory_space<vmem>>, vector<1x8x128xf32>
    %272 = vector.shape_cast %271 : vector<1x8x128xf32> to vector<8x128xf32>
    %273 = vector.shape_cast %269 : vector<8x128xf32> to vector<1x8x128xf32>
    tpu.vector_store %arg8[%c0_74, %270, %c0_75], %273 {strides = array<i32>} : memref<1x128x128xf32, #tpu.memory_space<vmem>>, vector<1x8x128xf32>,
    %c10_i32 = arith.constant 10 : i32
    %c8_i32_76 = arith.constant 8 : i32
    %274 = arith.muli %c10_i32, %c8_i32_76 : i32
    %275 = tpu.assume_multiple %274, 8 : i32
    %276 = arith.index_cast %275 : i32 to index
    %c0_77 = arith.constant 0 : index
    %277 = vector.load %arg13[%276, %c0_77] : memref<128x512xf32, #tpu.memory_space<vmem>>, vector<8x512xf32>
    %cst_78 = arith.constant dense<0.000000e+00> : vector<8x512xf32>
    %278 = tpu.matmul %269, %11, %cst_78 {dimension_numbers = #tpu.dot_dimension_numbers<[1], [0], [0], [1], [0, 0, 1, 1], [], []>} : vector<8x128xf32>, vector<128x512xf32>, vector<8x512xf32> -> vector<8x512xf32>
    %279 = arith.addf %277, %278 : vector<8x512xf32>
    %280 = vector.extract_strided_slice %279 {offsets = [0, 0], sizes = [8, 384], strides = [1, 1]} : vector<8x512xf32> to vector<8x384xf32>
    %281 = arith.negf %280 : vector<8x384xf32>
    %282 = math.exp %281 : vector<8x384xf32>
    %cst_79 = arith.constant 1.000000e+00 : f32
    %283 = vector.broadcast %cst_79 : f32 to vector<8x384xf32>
    %284 = arith.addf %283, %282 : vector<8x384xf32>
    %285 = arith.divf %283, %284 : vector<8x384xf32>
    %286 = vector.extract_strided_slice %285 {offsets = [0, 0], sizes = [8, 128], strides = [1, 1]} : vector<8x384xf32> to vector<8x128xf32>
    %287 = vector.extract_strided_slice %285 {offsets = [0, 128], sizes = [8, 128], strides = [1, 1]} : vector<8x384xf32> to vector<8x128xf32>
    %288 = vector.extract_strided_slice %285 {offsets = [0, 256], sizes = [8, 128], strides = [1, 1]} : vector<8x384xf32> to vector<8x128xf32>
    %289 = vector.extract_strided_slice %279 {offsets = [0, 384], sizes = [8, 128], strides = [1, 1]} : vector<8x512xf32> to vector<8x128xf32>
    %290 = math.tanh %289 : vector<8x128xf32>
    %291 = arith.mulf %287, %267 : vector<8x128xf32>
    %292 = arith.mulf %286, %290 : vector<8x128xf32>
    %293 = arith.addf %291, %292 : vector<8x128xf32>
    %294 = math.tanh %293 : vector<8x128xf32>
    %295 = arith.mulf %288, %294 : vector<8x128xf32>
    %c0_80 = arith.constant 0 : index
    %296 = arith.index_cast %275 : i32 to index
    %c0_81 = arith.constant 0 : index
    %297 = vector.load %arg8[%c0_80, %296, %c0_81] : memref<1x128x128xf32, #tpu.memory_space<vmem>>, vector<1x8x128xf32>
    %298 = vector.shape_cast %297 : vector<1x8x128xf32> to vector<8x128xf32>
    %299 = vector.shape_cast %295 : vector<8x128xf32> to vector<1x8x128xf32>
    tpu.vector_store %arg8[%c0_80, %296, %c0_81], %299 {strides = array<i32>} : memref<1x128x128xf32, #tpu.memory_space<vmem>>, vector<1x8x128xf32>,
    %c11_i32 = arith.constant 11 : i32
    %c8_i32_82 = arith.constant 8 : i32
    %300 = arith.muli %c11_i32, %c8_i32_82 : i32
    %301 = tpu.assume_multiple %300, 8 : i32
    %302 = arith.index_cast %301 : i32 to index
    %c0_83 = arith.constant 0 : index
    %303 = vector.load %arg13[%302, %c0_83] : memref<128x512xf32, #tpu.memory_space<vmem>>, vector<8x512xf32>
    %cst_84 = arith.constant dense<0.000000e+00> : vector<8x512xf32>
    %304 = tpu.matmul %295, %11, %cst_84 {dimension_numbers = #tpu.dot_dimension_numbers<[1], [0], [0], [1], [0, 0, 1, 1], [], []>} : vector<8x128xf32>, vector<128x512xf32>, vector<8x512xf32> -> vector<8x512xf32>
    %305 = arith.addf %303, %304 : vector<8x512xf32>
    %306 = vector.extract_strided_slice %305 {offsets = [0, 0], sizes = [8, 384], strides = [1, 1]} : vector<8x512xf32> to vector<8x384xf32>
    %307 = arith.negf %306 : vector<8x384xf32>
    %308 = math.exp %307 : vector<8x384xf32>
    %cst_85 = arith.constant 1.000000e+00 : f32
    %309 = vector.broadcast %cst_85 : f32 to vector<8x384xf32>
    %310 = arith.addf %309, %308 : vector<8x384xf32>
    %311 = arith.divf %309, %310 : vector<8x384xf32>
    %312 = vector.extract_strided_slice %311 {offsets = [0, 0], sizes = [8, 128], strides = [1, 1]} : vector<8x384xf32> to vector<8x128xf32>
    %313 = vector.extract_strided_slice %311 {offsets = [0, 128], sizes = [8, 128], strides = [1, 1]} : vector<8x384xf32> to vector<8x128xf32>
    %314 = vector.extract_strided_slice %311 {offsets = [0, 256], sizes = [8, 128], strides = [1, 1]} : vector<8x384xf32> to vector<8x128xf32>
    %315 = vector.extract_strided_slice %305 {offsets = [0, 384], sizes = [8, 128], strides = [1, 1]} : vector<8x512xf32> to vector<8x128xf32>
    %316 = math.tanh %315 : vector<8x128xf32>
    %317 = arith.mulf %313, %293 : vector<8x128xf32>
    %318 = arith.mulf %312, %316 : vector<8x128xf32>
    %319 = arith.addf %317, %318 : vector<8x128xf32>
    %320 = math.tanh %319 : vector<8x128xf32>
    %321 = arith.mulf %314, %320 : vector<8x128xf32>
    %c0_86 = arith.constant 0 : index
    %322 = arith.index_cast %301 : i32 to index
    %c0_87 = arith.constant 0 : index
    %323 = vector.load %arg8[%c0_86, %322, %c0_87] : memref<1x128x128xf32, #tpu.memory_space<vmem>>, vector<1x8x128xf32>
    %324 = vector.shape_cast %323 : vector<1x8x128xf32> to vector<8x128xf32>
    %325 = vector.shape_cast %321 : vector<8x128xf32> to vector<1x8x128xf32>
    tpu.vector_store %arg8[%c0_86, %322, %c0_87], %325 {strides = array<i32>} : memref<1x128x128xf32, #tpu.memory_space<vmem>>, vector<1x8x128xf32>,
    %c12_i32 = arith.constant 12 : i32
    %c8_i32_88 = arith.constant 8 : i32
    %326 = arith.muli %c12_i32, %c8_i32_88 : i32
    %327 = tpu.assume_multiple %326, 8 : i32
    %328 = arith.index_cast %327 : i32 to index
    %c0_89 = arith.constant 0 : index
    %329 = vector.load %arg13[%328, %c0_89] : memref<128x512xf32, #tpu.memory_space<vmem>>, vector<8x512xf32>
    %cst_90 = arith.constant dense<0.000000e+00> : vector<8x512xf32>
    %330 = tpu.matmul %321, %11, %cst_90 {dimension_numbers = #tpu.dot_dimension_numbers<[1], [0], [0], [1], [0, 0, 1, 1], [], []>} : vector<8x128xf32>, vector<128x512xf32>, vector<8x512xf32> -> vector<8x512xf32>
    %331 = arith.addf %329, %330 : vector<8x512xf32>
    %332 = vector.extract_strided_slice %331 {offsets = [0, 0], sizes = [8, 384], strides = [1, 1]} : vector<8x512xf32> to vector<8x384xf32>
    %333 = arith.negf %332 : vector<8x384xf32>
    %334 = math.exp %333 : vector<8x384xf32>
    %cst_91 = arith.constant 1.000000e+00 : f32
    %335 = vector.broadcast %cst_91 : f32 to vector<8x384xf32>
    %336 = arith.addf %335, %334 : vector<8x384xf32>
    %337 = arith.divf %335, %336 : vector<8x384xf32>
    %338 = vector.extract_strided_slice %337 {offsets = [0, 0], sizes = [8, 128], strides = [1, 1]} : vector<8x384xf32> to vector<8x128xf32>
    %339 = vector.extract_strided_slice %337 {offsets = [0, 128], sizes = [8, 128], strides = [1, 1]} : vector<8x384xf32> to vector<8x128xf32>
    %340 = vector.extract_strided_slice %337 {offsets = [0, 256], sizes = [8, 128], strides = [1, 1]} : vector<8x384xf32> to vector<8x128xf32>
    %341 = vector.extract_strided_slice %331 {offsets = [0, 384], sizes = [8, 128], strides = [1, 1]} : vector<8x512xf32> to vector<8x128xf32>
    %342 = math.tanh %341 : vector<8x128xf32>
    %343 = arith.mulf %339, %319 : vector<8x128xf32>
    %344 = arith.mulf %338, %342 : vector<8x128xf32>
    %345 = arith.addf %343, %344 : vector<8x128xf32>
    %346 = math.tanh %345 : vector<8x128xf32>
    %347 = arith.mulf %340, %346 : vector<8x128xf32>
    %c0_92 = arith.constant 0 : index
    %348 = arith.index_cast %327 : i32 to index
    %c0_93 = arith.constant 0 : index
    %349 = vector.load %arg8[%c0_92, %348, %c0_93] : memref<1x128x128xf32, #tpu.memory_space<vmem>>, vector<1x8x128xf32>
    %350 = vector.shape_cast %349 : vector<1x8x128xf32> to vector<8x128xf32>
    %351 = vector.shape_cast %347 : vector<8x128xf32> to vector<1x8x128xf32>
    tpu.vector_store %arg8[%c0_92, %348, %c0_93], %351 {strides = array<i32>} : memref<1x128x128xf32, #tpu.memory_space<vmem>>, vector<1x8x128xf32>,
    %c13_i32 = arith.constant 13 : i32
    %c8_i32_94 = arith.constant 8 : i32
    %352 = arith.muli %c13_i32, %c8_i32_94 : i32
    %353 = tpu.assume_multiple %352, 8 : i32
    %354 = arith.index_cast %353 : i32 to index
    %c0_95 = arith.constant 0 : index
    %355 = vector.load %arg13[%354, %c0_95] : memref<128x512xf32, #tpu.memory_space<vmem>>, vector<8x512xf32>
    %cst_96 = arith.constant dense<0.000000e+00> : vector<8x512xf32>
    %356 = tpu.matmul %347, %11, %cst_96 {dimension_numbers = #tpu.dot_dimension_numbers<[1], [0], [0], [1], [0, 0, 1, 1], [], []>} : vector<8x128xf32>, vector<128x512xf32>, vector<8x512xf32> -> vector<8x512xf32>
    %357 = arith.addf %355, %356 : vector<8x512xf32>
    %358 = vector.extract_strided_slice %357 {offsets = [0, 0], sizes = [8, 384], strides = [1, 1]} : vector<8x512xf32> to vector<8x384xf32>
    %359 = arith.negf %358 : vector<8x384xf32>
    %360 = math.exp %359 : vector<8x384xf32>
    %cst_97 = arith.constant 1.000000e+00 : f32
    %361 = vector.broadcast %cst_97 : f32 to vector<8x384xf32>
    %362 = arith.addf %361, %360 : vector<8x384xf32>
    %363 = arith.divf %361, %362 : vector<8x384xf32>
    %364 = vector.extract_strided_slice %363 {offsets = [0, 0], sizes = [8, 128], strides = [1, 1]} : vector<8x384xf32> to vector<8x128xf32>
    %365 = vector.extract_strided_slice %363 {offsets = [0, 128], sizes = [8, 128], strides = [1, 1]} : vector<8x384xf32> to vector<8x128xf32>
    %366 = vector.extract_strided_slice %363 {offsets = [0, 256], sizes = [8, 128], strides = [1, 1]} : vector<8x384xf32> to vector<8x128xf32>
    %367 = vector.extract_strided_slice %357 {offsets = [0, 384], sizes = [8, 128], strides = [1, 1]} : vector<8x512xf32> to vector<8x128xf32>
    %368 = math.tanh %367 : vector<8x128xf32>
    %369 = arith.mulf %365, %345 : vector<8x128xf32>
    %370 = arith.mulf %364, %368 : vector<8x128xf32>
    %371 = arith.addf %369, %370 : vector<8x128xf32>
    %372 = math.tanh %371 : vector<8x128xf32>
    %373 = arith.mulf %366, %372 : vector<8x128xf32>
    %c0_98 = arith.constant 0 : index
    %374 = arith.index_cast %353 : i32 to index
    %c0_99 = arith.constant 0 : index
    %375 = vector.load %arg8[%c0_98, %374, %c0_99] : memref<1x128x128xf32, #tpu.memory_space<vmem>>, vector<1x8x128xf32>
    %376 = vector.shape_cast %375 : vector<1x8x128xf32> to vector<8x128xf32>
    %377 = vector.shape_cast %373 : vector<8x128xf32> to vector<1x8x128xf32>
    tpu.vector_store %arg8[%c0_98, %374, %c0_99], %377 {strides = array<i32>} : memref<1x128x128xf32, #tpu.memory_space<vmem>>, vector<1x8x128xf32>,
    %c14_i32 = arith.constant 14 : i32
    %c8_i32_100 = arith.constant 8 : i32
    %378 = arith.muli %c14_i32, %c8_i32_100 : i32
    %379 = tpu.assume_multiple %378, 8 : i32
    %380 = arith.index_cast %379 : i32 to index
    %c0_101 = arith.constant 0 : index
    %381 = vector.load %arg13[%380, %c0_101] : memref<128x512xf32, #tpu.memory_space<vmem>>, vector<8x512xf32>
    %cst_102 = arith.constant dense<0.000000e+00> : vector<8x512xf32>
    %382 = tpu.matmul %373, %11, %cst_102 {dimension_numbers = #tpu.dot_dimension_numbers<[1], [0], [0], [1], [0, 0, 1, 1], [], []>} : vector<8x128xf32>, vector<128x512xf32>, vector<8x512xf32> -> vector<8x512xf32>
    %383 = arith.addf %381, %382 : vector<8x512xf32>
    %384 = vector.extract_strided_slice %383 {offsets = [0, 0], sizes = [8, 384], strides = [1, 1]} : vector<8x512xf32> to vector<8x384xf32>
    %385 = arith.negf %384 : vector<8x384xf32>
    %386 = math.exp %385 : vector<8x384xf32>
    %cst_103 = arith.constant 1.000000e+00 : f32
    %387 = vector.broadcast %cst_103 : f32 to vector<8x384xf32>
    %388 = arith.addf %387, %386 : vector<8x384xf32>
    %389 = arith.divf %387, %388 : vector<8x384xf32>
    %390 = vector.extract_strided_slice %389 {offsets = [0, 0], sizes = [8, 128], strides = [1, 1]} : vector<8x384xf32> to vector<8x128xf32>
    %391 = vector.extract_strided_slice %389 {offsets = [0, 128], sizes = [8, 128], strides = [1, 1]} : vector<8x384xf32> to vector<8x128xf32>
    %392 = vector.extract_strided_slice %389 {offsets = [0, 256], sizes = [8, 128], strides = [1, 1]} : vector<8x384xf32> to vector<8x128xf32>
    %393 = vector.extract_strided_slice %383 {offsets = [0, 384], sizes = [8, 128], strides = [1, 1]} : vector<8x512xf32> to vector<8x128xf32>
    %394 = math.tanh %393 : vector<8x128xf32>
    %395 = arith.mulf %391, %371 : vector<8x128xf32>
    %396 = arith.mulf %390, %394 : vector<8x128xf32>
    %397 = arith.addf %395, %396 : vector<8x128xf32>
    %398 = math.tanh %397 : vector<8x128xf32>
    %399 = arith.mulf %392, %398 : vector<8x128xf32>
    %c0_104 = arith.constant 0 : index
    %400 = arith.index_cast %379 : i32 to index
    %c0_105 = arith.constant 0 : index
    %401 = vector.load %arg8[%c0_104, %400, %c0_105] : memref<1x128x128xf32, #tpu.memory_space<vmem>>, vector<1x8x128xf32>
    %402 = vector.shape_cast %401 : vector<1x8x128xf32> to vector<8x128xf32>
    %403 = vector.shape_cast %399 : vector<8x128xf32> to vector<1x8x128xf32>
    tpu.vector_store %arg8[%c0_104, %400, %c0_105], %403 {strides = array<i32>} : memref<1x128x128xf32, #tpu.memory_space<vmem>>, vector<1x8x128xf32>,
    %c15_i32 = arith.constant 15 : i32
    %c8_i32_106 = arith.constant 8 : i32
    %404 = arith.muli %c15_i32, %c8_i32_106 : i32
    %405 = tpu.assume_multiple %404, 8 : i32
    %406 = arith.index_cast %405 : i32 to index
    %c0_107 = arith.constant 0 : index
    %407 = vector.load %arg13[%406, %c0_107] : memref<128x512xf32, #tpu.memory_space<vmem>>, vector<8x512xf32>
    %cst_108 = arith.constant dense<0.000000e+00> : vector<8x512xf32>
    %408 = tpu.matmul %399, %11, %cst_108 {dimension_numbers = #tpu.dot_dimension_numbers<[1], [0], [0], [1], [0, 0, 1, 1], [], []>} : vector<8x128xf32>, vector<128x512xf32>, vector<8x512xf32> -> vector<8x512xf32>
    %409 = arith.addf %407, %408 : vector<8x512xf32>
    %410 = vector.extract_strided_slice %409 {offsets = [0, 0], sizes = [8, 384], strides = [1, 1]} : vector<8x512xf32> to vector<8x384xf32>
    %411 = arith.negf %410 : vector<8x384xf32>
    %412 = math.exp %411 : vector<8x384xf32>
    %cst_109 = arith.constant 1.000000e+00 : f32
    %413 = vector.broadcast %cst_109 : f32 to vector<8x384xf32>
    %414 = arith.addf %413, %412 : vector<8x384xf32>
    %415 = arith.divf %413, %414 : vector<8x384xf32>
    %416 = vector.extract_strided_slice %415 {offsets = [0, 0], sizes = [8, 128], strides = [1, 1]} : vector<8x384xf32> to vector<8x128xf32>
    %417 = vector.extract_strided_slice %415 {offsets = [0, 128], sizes = [8, 128], strides = [1, 1]} : vector<8x384xf32> to vector<8x128xf32>
    %418 = vector.extract_strided_slice %415 {offsets = [0, 256], sizes = [8, 128], strides = [1, 1]} : vector<8x384xf32> to vector<8x128xf32>
    %419 = vector.extract_strided_slice %409 {offsets = [0, 384], sizes = [8, 128], strides = [1, 1]} : vector<8x512xf32> to vector<8x128xf32>
    %420 = math.tanh %419 : vector<8x128xf32>
    %421 = arith.mulf %417, %397 : vector<8x128xf32>
    %422 = arith.mulf %416, %420 : vector<8x128xf32>
    %423 = arith.addf %421, %422 : vector<8x128xf32>
    %424 = math.tanh %423 : vector<8x128xf32>
    %425 = arith.mulf %418, %424 : vector<8x128xf32>
    %c0_110 = arith.constant 0 : index
    %426 = arith.index_cast %405 : i32 to index
    %c0_111 = arith.constant 0 : index
    %427 = vector.load %arg8[%c0_110, %426, %c0_111] : memref<1x128x128xf32, #tpu.memory_space<vmem>>, vector<1x8x128xf32>
    %428 = vector.shape_cast %427 : vector<1x8x128xf32> to vector<8x128xf32>
    %429 = vector.shape_cast %425 : vector<8x128xf32> to vector<1x8x128xf32>
    tpu.vector_store %arg8[%c0_110, %426, %c0_111], %429 {strides = array<i32>} : memref<1x128x128xf32, #tpu.memory_space<vmem>>, vector<1x8x128xf32>,
    %c16_i32 = arith.constant 16 : i32
    %c0_112 = arith.constant 0 : index
    %c0_113 = arith.constant 0 : index
    %430 = vector.load %arg11[%c0_112, %c0_113] : memref<8x128xf32, #tpu.memory_space<vmem>>, vector<8x128xf32>
    tpu.vector_store %arg11[%c0_112, %c0_113], %425 {strides = array<i32>} : memref<8x128xf32, #tpu.memory_space<vmem>>, vector<8x128xf32>,
    %c0_114 = arith.constant 0 : index
    %c0_115 = arith.constant 0 : index
    %431 = vector.load %arg12[%c0_114, %c0_115] : memref<8x128xf32, #tpu.memory_space<vmem>>, vector<8x128xf32>
    tpu.vector_store %arg12[%c0_114, %c0_115], %423 {strides = array<i32>} : memref<8x128xf32, #tpu.memory_space<vmem>>, vector<8x128xf32>,
    %c0_i32_116 = arith.constant 0 : i32
    %432 = arith.cmpi eq, %arg1, %c0_i32_116 : i32
    %433 = arith.extui %432 : i1 to i32
    %c0_i32_117 = arith.constant 0 : i32
    %434 = arith.cmpi ne, %433, %c0_i32_117 : i32
    scf.if %434 {
      %c0_118 = arith.constant 0 : index
      %c0_119 = arith.constant 0 : index
      %435 = vector.load %arg11[%c0_118, %c0_119] : memref<8x128xf32, #tpu.memory_space<vmem>>, vector<8x128xf32>
      %c0_120 = arith.constant 0 : index
      %c0_121 = arith.constant 0 : index
      %c0_122 = arith.constant 0 : index
      %436 = vector.load %arg9[%c0_120, %c0_121, %c0_122] : memref<1x8x128xf32, #tpu.memory_space<vmem>>, vector<1x8x128xf32>
      %437 = vector.shape_cast %436 : vector<1x8x128xf32> to vector<8x128xf32>
      %438 = vector.shape_cast %435 : vector<8x128xf32> to vector<1x8x128xf32>
      tpu.vector_store %arg9[%c0_120, %c0_121, %c0_122], %438 {strides = array<i32>} : memref<1x8x128xf32, #tpu.memory_space<vmem>>, vector<1x8x128xf32>,
      %c0_123 = arith.constant 0 : index
      %c0_124 = arith.constant 0 : index
      %439 = vector.load %arg12[%c0_123, %c0_124] : memref<8x128xf32, #tpu.memory_space<vmem>>, vector<8x128xf32>
      %c0_125 = arith.constant 0 : index
      %c0_126 = arith.constant 0 : index
      %c0_127 = arith.constant 0 : index
      %440 = vector.load %arg10[%c0_125, %c0_126, %c0_127] : memref<1x8x128xf32, #tpu.memory_space<vmem>>, vector<1x8x128xf32>
      %441 = vector.shape_cast %440 : vector<1x8x128xf32> to vector<8x128xf32>
      %442 = vector.shape_cast %439 : vector<8x128xf32> to vector<1x8x128xf32>
      tpu.vector_store %arg10[%c0_125, %c0_126, %c0_127], %442 {strides = array<i32>} : memref<1x8x128xf32, #tpu.memory_space<vmem>>, vector<1x8x128xf32>,
    } else {
    }
    return
  }
  func.func @transform_0(%arg0: i32, %arg1: i32) -> (i32, i32, i32) {
    %c0_i32 = arith.constant 0 : i32
    %c0_i32_0 = arith.constant 0 : i32
    return %arg0, %arg1, %c0_i32 : i32, i32, i32
  }
  func.func @transform_1(%arg0: i32, %arg1: i32) -> (i32, i32, i32) {
    %c0_i32 = arith.constant 0 : i32
    %c0_i32_0 = arith.constant 0 : i32
    %c0_i32_1 = arith.constant 0 : i32
    return %arg0, %c0_i32, %c0_i32_0 : i32, i32, i32
  }
  func.func @transform_2(%arg0: i32, %arg1: i32) -> (i32, i32, i32) {
    %c0_i32 = arith.constant 0 : i32
    %c0_i32_0 = arith.constant 0 : i32
    %c0_i32_1 = arith.constant 0 : i32
    return %arg0, %c0_i32, %c0_i32_0 : i32, i32, i32
  }
  func.func @transform_3(%arg0: i32, %arg1: i32) -> (i32, i32) {
    %c0_i32 = arith.constant 0 : i32
    %c0_i32_0 = arith.constant 0 : i32
    %c0_i32_1 = arith.constant 0 : i32
    return %c0_i32, %c0_i32_0 : i32, i32
  }
  func.func @transform_4(%arg0: i32, %arg1: i32) -> (i32, i32) {
    %c0_i32 = arith.constant 0 : i32
    %c0_i32_0 = arith.constant 0 : i32
    %c0_i32_1 = arith.constant 0 : i32
    return %c0_i32, %c0_i32_0 : i32, i32
  }
  func.func @transform_5(%arg0: i32, %arg1: i32) -> (i32, i32) {
    %c0_i32 = arith.constant 0 : i32
    %c0_i32_0 = arith.constant 0 : i32
    %c0_i32_1 = arith.constant 0 : i32
    return %c0_i32, %c0_i32_0 : i32, i32
  }
  func.func @transform_6(%arg0: i32, %arg1: i32) -> (i32, i32, i32) {
    %c0_i32 = arith.constant 0 : i32
    %c0_i32_0 = arith.constant 0 : i32
    return %arg0, %arg1, %c0_i32 : i32, i32, i32
  }
  func.func @transform_7(%arg0: i32, %arg1: i32) -> (i32, i32, i32) {
    %c0_i32 = arith.constant 0 : i32
    %c0_i32_0 = arith.constant 0 : i32
    %c0_i32_1 = arith.constant 0 : i32
    return %arg0, %c0_i32, %c0_i32_0 : i32, i32, i32
  }
  func.func @transform_8(%arg0: i32, %arg1: i32) -> (i32, i32, i32) {
    %c0_i32 = arith.constant 0 : i32
    %c0_i32_0 = arith.constant 0 : i32
    %c0_i32_1 = arith.constant 0 : i32
    return %arg0, %c0_i32, %c0_i32_0 : i32, i32, i32
  }
}

module attributes {stable_mosaic.version = 11 : i64} {
  func.func @kernel(%arg0: i32, %arg1: i32, %arg2: memref<1x128x16xf32, #tpu.memory_space<vmem>>, %arg3: memref<1x8x128xf32, #tpu.memory_space<vmem>>, %arg4: memref<1x8x128xf32, #tpu.memory_space<vmem>>, %arg5: memref<16x512xf32, #tpu.memory_space<vmem>>, %arg6: memref<128x512xf32, #tpu.memory_space<vmem>>, %arg7: memref<1x512xf32, #tpu.memory_space<vmem>>, %arg8: memref<1x128x128xf32, #tpu.memory_space<vmem>>, %arg9: memref<1x8x128xf32, #tpu.memory_space<vmem>>, %arg10: memref<1x8x128xf32, #tpu.memory_space<vmem>>, %arg11: memref<8x128xf32, #tpu.memory_space<vmem>>, %arg12: memref<8x128xf32, #tpu.memory_space<vmem>>, %arg13: memref<128x512xf32, #tpu.memory_space<vmem>>) attributes {dimension_semantics = [#tpu.dimension_semantics<parallel>, #tpu.dimension_semantics<arbitrary>], iteration_bounds = array<i64: 1, 1>, scalar_prefetch = 0 : i64, scratch_operands = 3 : i64, tpu.core_type = #tpu.core_type<tc>, window_params = [{transform_indices = @transform_0, window_bounds = array<i64: 1, 128, 16>}, {transform_indices = @transform_1, window_bounds = array<i64: 1, 8, 128>}, {transform_indices = @transform_2, window_bounds = array<i64: 1, 8, 128>}, {pipeline_mode = #tpu.pipeline_mode<synchronous>, transform_indices = @transform_3, window_bounds = array<i64: 16, 512>}, {pipeline_mode = #tpu.pipeline_mode<synchronous>, transform_indices = @transform_4, window_bounds = array<i64: 128, 512>}, {pipeline_mode = #tpu.pipeline_mode<synchronous>, transform_indices = @transform_5, window_bounds = array<i64: 1, 512>}, {transform_indices = @transform_6, window_bounds = array<i64: 1, 128, 128>}, {transform_indices = @transform_7, window_bounds = array<i64: 1, 8, 128>}, {transform_indices = @transform_8, window_bounds = array<i64: 1, 8, 128>}]} {
    %c0_i32 = arith.constant 0 : i32
    %0 = arith.cmpi eq, %arg1, %c0_i32 : i32
    %1 = arith.extui %0 : i1 to i32
    %c0_i32_0 = arith.constant 0 : i32
    %2 = arith.cmpi ne, %1, %c0_i32_0 : i32
    scf.if %2 {
      %c0_118 = arith.constant 0 : index
      %c0_119 = arith.constant 0 : index
      %c0_120 = arith.constant 0 : index
      %435 = vector.load %arg3[%c0_118, %c0_119, %c0_120] : memref<1x8x128xf32, #tpu.memory_space<vmem>>, vector<1x8x128xf32>
      %436 = vector.shape_cast %435 : vector<1x8x128xf32> to vector<8x128xf32>
      %c0_121 = arith.constant 0 : index
      %c0_122 = arith.constant 0 : index
      %437 = vector.load %arg11[%c0_121, %c0_122] : memref<8x128xf32, #tpu.memory_space<vmem>>, vector<8x128xf32>
      tpu.vector_store %arg11[%c0_121, %c0_122], %436 {strides = array<i32>} : memref<8x128xf32, #tpu.memory_space<vmem>>, vector<8x128xf32>,
      %c0_123 = arith.constant 0 : index
      %c0_124 = arith.constant 0 : index
      %c0_125 = arith.constant 0 : index
      %438 = vector.load %arg4[%c0_123, %c0_124, %c0_125] : memref<1x8x128xf32, #tpu.memory_space<vmem>>, vector<1x8x128xf32>
      %439 = vector.shape_cast %438 : vector<1x8x128xf32> to vector<8x128xf32>
      %c0_126 = arith.constant 0 : index
      %c0_127 = arith.constant 0 : index
      %440 = vector.load %arg12[%c0_126, %c0_127] : memref<8x128xf32, #tpu.memory_space<vmem>>, vector<8x128xf32>
      tpu.vector_store %arg12[%c0_126, %c0_127], %439 {strides = array<i32>} : memref<8x128xf32, #tpu.memory_space<vmem>>, vector<8x128xf32>,
    } else {
    }
    %c0 = arith.constant 0 : index
    %c0_1 = arith.constant 0 : index
    %c0_2 = arith.constant 0 : index
    %3 = vector.load %arg2[%c0, %c0_1, %c0_2] : memref<1x128x16xf32, #tpu.memory_space<vmem>>, vector<1x128x16xf32>
    %4 = vector.shape_cast %3 : vector<1x128x16xf32> to vector<128x16xf32>
    %c0_3 = arith.constant 0 : index
    %c0_4 = arith.constant 0 : index
    %5 = vector.load %arg5[%c0_3, %c0_4] : memref<16x512xf32, #tpu.memory_space<vmem>>, vector<16x512xf32>
    %cst = arith.constant dense<0.000000e+00> : vector<128x512xf32>
    %6 = tpu.matmul %4, %5, %cst {dimension_numbers = #tpu.dot_dimension_numbers<[1], [0], [0], [1], [0, 0, 1, 1], [], []>} : vector<128x16xf32>, vector<16x512xf32>, vector<128x512xf32> -> vector<128x512xf32>
    %c0_5 = arith.constant 0 : index
    %c0_6 = arith.constant 0 : index
    %7 = vector.load %arg7[%c0_5, %c0_6] : memref<1x512xf32, #tpu.memory_space<vmem>>, vector<1x512xf32>
    %8 = vector.broadcast %7 : vector<1x512xf32> to vector<128x512xf32>
    %9 = arith.addf %6, %8 : vector<128x512xf32>
    %c0_7 = arith.constant 0 : index
    %c0_8 = arith.constant 0 : index
    %10 = vector.load %arg13[%c0_7, %c0_8] : memref<128x512xf32, #tpu.memory_space<vmem>>, vector<128x512xf32>
    tpu.vector_store %arg13[%c0_7, %c0_8], %9 {strides = array<i32>} : memref<128x512xf32, #tpu.memory_space<vmem>>, vector<128x512xf32>,
    %c0_9 = arith.constant 0 : index
    %c0_10 = arith.constant 0 : index
    %11 = vector.load %arg6[%c0_9, %c0_10] : memref<128x512xf32, #tpu.memory_space<vmem>>, vector<128x512xf32>
    %c0_11 = arith.constant 0 : index
    %c0_12 = arith.constant 0 : index
    %12 = vector.load %arg11[%c0_11, %c0_12] : memref<8x128xf32, #tpu.memory_space<vmem>>, vector<8x128xf32>
    %c0_13 = arith.constant 0 : index
    %c0_14 = arith.constant 0 : index
    %13 = vector.load %arg12[%c0_13, %c0_14] : memref<8x128xf32, #tpu.memory_space<vmem>>, vector<8x128xf32>
    %c0_i32_15 = arith.constant 0 : i32
    %c8_i32 = arith.constant 8 : i32
    %14 = arith.muli %c0_i32_15, %c8_i32 : i32
    %15 = tpu.assume_multiple %14, 8 : i32
    %16 = arith.index_cast %15 : i32 to index
    %c0_16 = arith.constant 0 : index
    %17 = vector.load %arg13[%16, %c0_16] : memref<128x512xf32, #tpu.memory_space<vmem>>, vector<8x512xf32>
    %cst_17 = arith.constant dense<0.000000e+00> : vector<8x512xf32>
    %18 = tpu.matmul %12, %11, %cst_17 {dimension_numbers = #tpu.dot_dimension_numbers<[1], [0], [0], [1], [0, 0, 1, 1], [], []>} : vector<8x128xf32>, vector<128x512xf32>, vector<8x512xf32> -> vector<8x512xf32>
    %19 = arith.addf %17, %18 : vector<8x512xf32>
    %20 = vector.extract_strided_slice %19 {offsets = [0, 0], sizes = [8, 384], strides = [1, 1]} : vector<8x512xf32> to vector<8x384xf32>
    %21 = arith.negf %20 : vector<8x384xf32>
    %22 = math.exp %21 : vector<8x384xf32>
    %cst_18 = arith.constant 1.000000e+00 : f32
    %23 = vector.broadcast %cst_18 : f32 to vector<8x384xf32>
    %24 = arith.addf %23, %22 : vector<8x384xf32>
    %25 = arith.divf %23, %24 : vector<8x384xf32>
    %26 = vector.extract_strided_slice %25 {offsets = [0, 0], sizes = [8, 128], strides = [1, 1]} : vector<8x384xf32> to vector<8x128xf32>
    %27 = vector.extract_strided_slice %25 {offsets = [0, 128], sizes = [8, 128], strides = [1, 1]} : vector<8x384xf32> to vector<8x128xf32>
    %28 = vector.extract_strided_slice %25 {offsets = [0, 256], sizes = [8, 128], strides = [1, 1]} : vector<8x384xf32> to vector<8x128xf32>
    %29 = vector.extract_strided_slice %19 {offsets = [0, 384], sizes = [8, 128], strides = [1, 1]} : vector<8x512xf32> to vector<8x128xf32>
    %30 = math.tanh %29 : vector<8x128xf32>
    %31 = arith.mulf %27, %13 : vector<8x128xf32>
    %32 = arith.mulf %26, %30 : vector<8x128xf32>
    %33 = arith.addf %31, %32 : vector<8x128xf32>
    %34 = math.tanh %33 : vector<8x128xf32>
    %35 = arith.mulf %28, %34 : vector<8x128xf32>
    %c0_19 = arith.constant 0 : index
    %36 = arith.index_cast %15 : i32 to index
    %c0_20 = arith.constant 0 : index
    %37 = vector.load %arg8[%c0_19, %36, %c0_20] : memref<1x128x128xf32, #tpu.memory_space<vmem>>, vector<1x8x128xf32>
    %38 = vector.shape_cast %37 : vector<1x8x128xf32> to vector<8x128xf32>
    %39 = vector.shape_cast %35 : vector<8x128xf32> to vector<1x8x128xf32>
    tpu.vector_store %arg8[%c0_19, %36, %c0_20], %39 {strides = array<i32>} : memref<1x128x128xf32, #tpu.memory_space<vmem>>, vector<1x8x128xf32>,
    %c1_i32 = arith.constant 1 : i32
    %c8_i32_21 = arith.constant 8 : i32
    %40 = arith.muli %c1_i32, %c8_i32_21 : i32
    %41 = tpu.assume_multiple %40, 8 : i32
    %42 = arith.index_cast %41 : i32 to index
    %c0_22 = arith.constant 0 : index
    %43 = vector.load %arg13[%42, %c0_22] : memref<128x512xf32, #tpu.memory_space<vmem>>, vector<8x512xf32>
    %cst_23 = arith.constant dense<0.000000e+00> : vector<8x512xf32>
    %44 = tpu.matmul %35, %11, %cst_23 {dimension_numbers = #tpu.dot_dimension_numbers<[1], [0], [0], [1], [0, 0, 1, 1], [], []>} : vector<8x128xf32>, vector<128x512xf32>, vector<8x512xf32> -> vector<8x512xf32>
    %45 = arith.addf %43, %44 : vector<8x512xf32>
    %46 = vector.extract_strided_slice %45 {offsets = [0, 0], sizes = [8, 384], strides = [1, 1]} : vector<8x512xf32> to vector<8x384xf32>
    %47 = arith.negf %46 : vector<8x384xf32>
    %48 = math.exp %47 : vector<8x384xf32>
    %cst_24 = arith.constant 1.000000e+00 : f32
    %49 = vector.broadcast %cst_24 : f32 to vector<8x384xf32>
    %50 = arith.addf %49, %48 : vector<8x384xf32>
    %51 = arith.divf %49, %50 : vector<8x384xf32>
    %52 = vector.extract_strided_slice %51 {offsets = [0, 0], sizes = [8, 128], strides = [1, 1]} : vector<8x384xf32> to vector<8x128xf32>
    %53 = vector.extract_strided_slice %51 {offsets = [0, 128], sizes = [8, 128], strides = [1, 1]} : vector<8x384xf32> to vector<8x128xf32>
    %54 = vector.extract_strided_slice %51 {offsets = [0, 256], sizes = [8, 128], strides = [1, 1]} : vector<8x384xf32> to vector<8x128xf32>
    %55 = vector.extract_strided_slice %45 {offsets = [0, 384], sizes = [8, 128], strides = [1, 1]} : vector<8x512xf32> to vector<8x128xf32>
    %56 = math.tanh %55 : vector<8x128xf32>
    %57 = arith.mulf %53, %33 : vector<8x128xf32>
    %58 = arith.mulf %52, %56 : vector<8x128xf32>
    %59 = arith.addf %57, %58 : vector<8x128xf32>
    %60 = math.tanh %59 : vector<8x128xf32>
    %61 = arith.mulf %54, %60 : vector<8x128xf32>
    %c0_25 = arith.constant 0 : index
    %62 = arith.index_cast %41 : i32 to index
    %c0_26 = arith.constant 0 : index
    %63 = vector.load %arg8[%c0_25, %62, %c0_26] : memref<1x128x128xf32, #tpu.memory_space<vmem>>, vector<1x8x128xf32>
    %64 = vector.shape_cast %63 : vector<1x8x128xf32> to vector<8x128xf32>
    %65 = vector.shape_cast %61 : vector<8x128xf32> to vector<1x8x128xf32>
    tpu.vector_store %arg8[%c0_25, %62, %c0_26], %65 {strides = array<i32>} : memref<1x128x128xf32, #tpu.memory_space<vmem>>, vector<1x8x128xf32>,
    %c2_i32 = arith.constant 2 : i32
    %c8_i32_27 = arith.constant 8 : i32
    %66 = arith.muli %c2_i32, %c8_i32_27 : i32
    %67 = tpu.assume_multiple %66, 8 : i32
    %68 = arith.index_cast %67 : i32 to index
    %c0_28 = arith.constant 0 : index
    %69 = vector.load %arg13[%68, %c0_28] : memref<128x512xf32, #tpu.memory_space<vmem>>, vector<8x512xf32>
    %cst_29 = arith.constant dense<0.000000e+00> : vector<8x512xf32>
    %70 = tpu.matmul %61, %11, %cst_29 {dimension_numbers = #tpu.dot_dimension_numbers<[1], [0], [0], [1], [0, 0, 1, 1], [], []>} : vector<8x128xf32>, vector<128x512xf32>, vector<8x512xf32> -> vector<8x512xf32>
    %71 = arith.addf %69, %70 : vector<8x512xf32>
    %72 = vector.extract_strided_slice %71 {offsets = [0, 0], sizes = [8, 384], strides = [1, 1]} : vector<8x512xf32> to vector<8x384xf32>
    %73 = arith.negf %72 : vector<8x384xf32>
    %74 = math.exp %73 : vector<8x384xf32>
    %cst_30 = arith.constant 1.000000e+00 : f32
    %75 = vector.broadcast %cst_30 : f32 to vector<8x384xf32>
    %76 = arith.addf %75, %74 : vector<8x384xf32>
    %77 = arith.divf %75, %76 : vector<8x384xf32>
    %78 = vector.extract_strided_slice %77 {offsets = [0, 0], sizes = [8, 128], strides = [1, 1]} : vector<8x384xf32> to vector<8x128xf32>
    %79 = vector.extract_strided_slice %77 {offsets = [0, 128], sizes = [8, 128], strides = [1, 1]} : vector<8x384xf32> to vector<8x128xf32>
    %80 = vector.extract_strided_slice %77 {offsets = [0, 256], sizes = [8, 128], strides = [1, 1]} : vector<8x384xf32> to vector<8x128xf32>
    %81 = vector.extract_strided_slice %71 {offsets = [0, 384], sizes = [8, 128], strides = [1, 1]} : vector<8x512xf32> to vector<8x128xf32>
    %82 = math.tanh %81 : vector<8x128xf32>
    %83 = arith.mulf %79, %59 : vector<8x128xf32>
    %84 = arith.mulf %78, %82 : vector<8x128xf32>
    %85 = arith.addf %83, %84 : vector<8x128xf32>
    %86 = math.tanh %85 : vector<8x128xf32>
    %87 = arith.mulf %80, %86 : vector<8x128xf32>
    %c0_31 = arith.constant 0 : index
    %88 = arith.index_cast %67 : i32 to index
    %c0_32 = arith.constant 0 : index
    %89 = vector.load %arg8[%c0_31, %88, %c0_32] : memref<1x128x128xf32, #tpu.memory_space<vmem>>, vector<1x8x128xf32>
    %90 = vector.shape_cast %89 : vector<1x8x128xf32> to vector<8x128xf32>
    %91 = vector.shape_cast %87 : vector<8x128xf32> to vector<1x8x128xf32>
    tpu.vector_store %arg8[%c0_31, %88, %c0_32], %91 {strides = array<i32>} : memref<1x128x128xf32, #tpu.memory_space<vmem>>, vector<1x8x128xf32>,
    %c3_i32 = arith.constant 3 : i32
    %c8_i32_33 = arith.constant 8 : i32
    %92 = arith.muli %c3_i32, %c8_i32_33 : i32
    %93 = tpu.assume_multiple %92, 8 : i32
    %94 = arith.index_cast %93 : i32 to index
    %c0_34 = arith.constant 0 : index
    %95 = vector.load %arg13[%94, %c0_34] : memref<128x512xf32, #tpu.memory_space<vmem>>, vector<8x512xf32>
    %cst_35 = arith.constant dense<0.000000e+00> : vector<8x512xf32>
    %96 = tpu.matmul %87, %11, %cst_35 {dimension_numbers = #tpu.dot_dimension_numbers<[1], [0], [0], [1], [0, 0, 1, 1], [], []>} : vector<8x128xf32>, vector<128x512xf32>, vector<8x512xf32> -> vector<8x512xf32>
    %97 = arith.addf %95, %96 : vector<8x512xf32>
    %98 = vector.extract_strided_slice %97 {offsets = [0, 0], sizes = [8, 384], strides = [1, 1]} : vector<8x512xf32> to vector<8x384xf32>
    %99 = arith.negf %98 : vector<8x384xf32>
    %100 = math.exp %99 : vector<8x384xf32>
    %cst_36 = arith.constant 1.000000e+00 : f32
    %101 = vector.broadcast %cst_36 : f32 to vector<8x384xf32>
    %102 = arith.addf %101, %100 : vector<8x384xf32>
    %103 = arith.divf %101, %102 : vector<8x384xf32>
    %104 = vector.extract_strided_slice %103 {offsets = [0, 0], sizes = [8, 128], strides = [1, 1]} : vector<8x384xf32> to vector<8x128xf32>
    %105 = vector.extract_strided_slice %103 {offsets = [0, 128], sizes = [8, 128], strides = [1, 1]} : vector<8x384xf32> to vector<8x128xf32>
    %106 = vector.extract_strided_slice %103 {offsets = [0, 256], sizes = [8, 128], strides = [1, 1]} : vector<8x384xf32> to vector<8x128xf32>
    %107 = vector.extract_strided_slice %97 {offsets = [0, 384], sizes = [8, 128], strides = [1, 1]} : vector<8x512xf32> to vector<8x128xf32>
    %108 = math.tanh %107 : vector<8x128xf32>
    %109 = arith.mulf %105, %85 : vector<8x128xf32>
    %110 = arith.mulf %104, %108 : vector<8x128xf32>
    %111 = arith.addf %109, %110 : vector<8x128xf32>
    %112 = math.tanh %111 : vector<8x128xf32>
    %113 = arith.mulf %106, %112 : vector<8x128xf32>
    %c0_37 = arith.constant 0 : index
    %114 = arith.index_cast %93 : i32 to index
    %c0_38 = arith.constant 0 : index
    %115 = vector.load %arg8[%c0_37, %114, %c0_38] : memref<1x128x128xf32, #tpu.memory_space<vmem>>, vector<1x8x128xf32>
    %116 = vector.shape_cast %115 : vector<1x8x128xf32> to vector<8x128xf32>
    %117 = vector.shape_cast %113 : vector<8x128xf32> to vector<1x8x128xf32>
    tpu.vector_store %arg8[%c0_37, %114, %c0_38], %117 {strides = array<i32>} : memref<1x128x128xf32, #tpu.memory_space<vmem>>, vector<1x8x128xf32>,
    %c4_i32 = arith.constant 4 : i32
    %c8_i32_39 = arith.constant 8 : i32
    %118 = arith.muli %c4_i32, %c8_i32_39 : i32
    %119 = tpu.assume_multiple %118, 8 : i32
    %120 = arith.index_cast %119 : i32 to index
    %c0_40 = arith.constant 0 : index
    %121 = vector.load %arg13[%120, %c0_40] : memref<128x512xf32, #tpu.memory_space<vmem>>, vector<8x512xf32>
    %cst_41 = arith.constant dense<0.000000e+00> : vector<8x512xf32>
    %122 = tpu.matmul %113, %11, %cst_41 {dimension_numbers = #tpu.dot_dimension_numbers<[1], [0], [0], [1], [0, 0, 1, 1], [], []>} : vector<8x128xf32>, vector<128x512xf32>, vector<8x512xf32> -> vector<8x512xf32>
    %123 = arith.addf %121, %122 : vector<8x512xf32>
    %124 = vector.extract_strided_slice %123 {offsets = [0, 0], sizes = [8, 384], strides = [1, 1]} : vector<8x512xf32> to vector<8x384xf32>
    %125 = arith.negf %124 : vector<8x384xf32>
    %126 = math.exp %125 : vector<8x384xf32>
    %cst_42 = arith.constant 1.000000e+00 : f32
    %127 = vector.broadcast %cst_42 : f32 to vector<8x384xf32>
    %128 = arith.addf %127, %126 : vector<8x384xf32>
    %129 = arith.divf %127, %128 : vector<8x384xf32>
    %130 = vector.extract_strided_slice %129 {offsets = [0, 0], sizes = [8, 128], strides = [1, 1]} : vector<8x384xf32> to vector<8x128xf32>
    %131 = vector.extract_strided_slice %129 {offsets = [0, 128], sizes = [8, 128], strides = [1, 1]} : vector<8x384xf32> to vector<8x128xf32>
    %132 = vector.extract_strided_slice %129 {offsets = [0, 256], sizes = [8, 128], strides = [1, 1]} : vector<8x384xf32> to vector<8x128xf32>
    %133 = vector.extract_strided_slice %123 {offsets = [0, 384], sizes = [8, 128], strides = [1, 1]} : vector<8x512xf32> to vector<8x128xf32>
    %134 = math.tanh %133 : vector<8x128xf32>
    %135 = arith.mulf %131, %111 : vector<8x128xf32>
    %136 = arith.mulf %130, %134 : vector<8x128xf32>
    %137 = arith.addf %135, %136 : vector<8x128xf32>
    %138 = math.tanh %137 : vector<8x128xf32>
    %139 = arith.mulf %132, %138 : vector<8x128xf32>
    %c0_43 = arith.constant 0 : index
    %140 = arith.index_cast %119 : i32 to index
    %c0_44 = arith.constant 0 : index
    %141 = vector.load %arg8[%c0_43, %140, %c0_44] : memref<1x128x128xf32, #tpu.memory_space<vmem>>, vector<1x8x128xf32>
    %142 = vector.shape_cast %141 : vector<1x8x128xf32> to vector<8x128xf32>
    %143 = vector.shape_cast %139 : vector<8x128xf32> to vector<1x8x128xf32>
    tpu.vector_store %arg8[%c0_43, %140, %c0_44], %143 {strides = array<i32>} : memref<1x128x128xf32, #tpu.memory_space<vmem>>, vector<1x8x128xf32>,
    %c5_i32 = arith.constant 5 : i32
    %c8_i32_45 = arith.constant 8 : i32
    %144 = arith.muli %c5_i32, %c8_i32_45 : i32
    %145 = tpu.assume_multiple %144, 8 : i32
    %146 = arith.index_cast %145 : i32 to index
    %c0_46 = arith.constant 0 : index
    %147 = vector.load %arg13[%146, %c0_46] : memref<128x512xf32, #tpu.memory_space<vmem>>, vector<8x512xf32>
    %cst_47 = arith.constant dense<0.000000e+00> : vector<8x512xf32>
    %148 = tpu.matmul %139, %11, %cst_47 {dimension_numbers = #tpu.dot_dimension_numbers<[1], [0], [0], [1], [0, 0, 1, 1], [], []>} : vector<8x128xf32>, vector<128x512xf32>, vector<8x512xf32> -> vector<8x512xf32>
    %149 = arith.addf %147, %148 : vector<8x512xf32>
    %150 = vector.extract_strided_slice %149 {offsets = [0, 0], sizes = [8, 384], strides = [1, 1]} : vector<8x512xf32> to vector<8x384xf32>
    %151 = arith.negf %150 : vector<8x384xf32>
    %152 = math.exp %151 : vector<8x384xf32>
    %cst_48 = arith.constant 1.000000e+00 : f32
    %153 = vector.broadcast %cst_48 : f32 to vector<8x384xf32>
    %154 = arith.addf %153, %152 : vector<8x384xf32>
    %155 = arith.divf %153, %154 : vector<8x384xf32>
    %156 = vector.extract_strided_slice %155 {offsets = [0, 0], sizes = [8, 128], strides = [1, 1]} : vector<8x384xf32> to vector<8x128xf32>
    %157 = vector.extract_strided_slice %155 {offsets = [0, 128], sizes = [8, 128], strides = [1, 1]} : vector<8x384xf32> to vector<8x128xf32>
    %158 = vector.extract_strided_slice %155 {offsets = [0, 256], sizes = [8, 128], strides = [1, 1]} : vector<8x384xf32> to vector<8x128xf32>
    %159 = vector.extract_strided_slice %149 {offsets = [0, 384], sizes = [8, 128], strides = [1, 1]} : vector<8x512xf32> to vector<8x128xf32>
    %160 = math.tanh %159 : vector<8x128xf32>
    %161 = arith.mulf %157, %137 : vector<8x128xf32>
    %162 = arith.mulf %156, %160 : vector<8x128xf32>
    %163 = arith.addf %161, %162 : vector<8x128xf32>
    %164 = math.tanh %163 : vector<8x128xf32>
    %165 = arith.mulf %158, %164 : vector<8x128xf32>
    %c0_49 = arith.constant 0 : index
    %166 = arith.index_cast %145 : i32 to index
    %c0_50 = arith.constant 0 : index
    %167 = vector.load %arg8[%c0_49, %166, %c0_50] : memref<1x128x128xf32, #tpu.memory_space<vmem>>, vector<1x8x128xf32>
    %168 = vector.shape_cast %167 : vector<1x8x128xf32> to vector<8x128xf32>
    %169 = vector.shape_cast %165 : vector<8x128xf32> to vector<1x8x128xf32>
    tpu.vector_store %arg8[%c0_49, %166, %c0_50], %169 {strides = array<i32>} : memref<1x128x128xf32, #tpu.memory_space<vmem>>, vector<1x8x128xf32>,
    %c6_i32 = arith.constant 6 : i32
    %c8_i32_51 = arith.constant 8 : i32
    %170 = arith.muli %c6_i32, %c8_i32_51 : i32
    %171 = tpu.assume_multiple %170, 8 : i32
    %172 = arith.index_cast %171 : i32 to index
    %c0_52 = arith.constant 0 : index
    %173 = vector.load %arg13[%172, %c0_52] : memref<128x512xf32, #tpu.memory_space<vmem>>, vector<8x512xf32>
    %cst_53 = arith.constant dense<0.000000e+00> : vector<8x512xf32>
    %174 = tpu.matmul %165, %11, %cst_53 {dimension_numbers = #tpu.dot_dimension_numbers<[1], [0], [0], [1], [0, 0, 1, 1], [], []>} : vector<8x128xf32>, vector<128x512xf32>, vector<8x512xf32> -> vector<8x512xf32>
    %175 = arith.addf %173, %174 : vector<8x512xf32>
    %176 = vector.extract_strided_slice %175 {offsets = [0, 0], sizes = [8, 384], strides = [1, 1]} : vector<8x512xf32> to vector<8x384xf32>
    %177 = arith.negf %176 : vector<8x384xf32>
    %178 = math.exp %177 : vector<8x384xf32>
    %cst_54 = arith.constant 1.000000e+00 : f32
    %179 = vector.broadcast %cst_54 : f32 to vector<8x384xf32>
    %180 = arith.addf %179, %178 : vector<8x384xf32>
    %181 = arith.divf %179, %180 : vector<8x384xf32>
    %182 = vector.extract_strided_slice %181 {offsets = [0, 0], sizes = [8, 128], strides = [1, 1]} : vector<8x384xf32> to vector<8x128xf32>
    %183 = vector.extract_strided_slice %181 {offsets = [0, 128], sizes = [8, 128], strides = [1, 1]} : vector<8x384xf32> to vector<8x128xf32>
    %184 = vector.extract_strided_slice %181 {offsets = [0, 256], sizes = [8, 128], strides = [1, 1]} : vector<8x384xf32> to vector<8x128xf32>
    %185 = vector.extract_strided_slice %175 {offsets = [0, 384], sizes = [8, 128], strides = [1, 1]} : vector<8x512xf32> to vector<8x128xf32>
    %186 = math.tanh %185 : vector<8x128xf32>
    %187 = arith.mulf %183, %163 : vector<8x128xf32>
    %188 = arith.mulf %182, %186 : vector<8x128xf32>
    %189 = arith.addf %187, %188 : vector<8x128xf32>
    %190 = math.tanh %189 : vector<8x128xf32>
    %191 = arith.mulf %184, %190 : vector<8x128xf32>
    %c0_55 = arith.constant 0 : index
    %192 = arith.index_cast %171 : i32 to index
    %c0_56 = arith.constant 0 : index
    %193 = vector.load %arg8[%c0_55, %192, %c0_56] : memref<1x128x128xf32, #tpu.memory_space<vmem>>, vector<1x8x128xf32>
    %194 = vector.shape_cast %193 : vector<1x8x128xf32> to vector<8x128xf32>
    %195 = vector.shape_cast %191 : vector<8x128xf32> to vector<1x8x128xf32>
    tpu.vector_store %arg8[%c0_55, %192, %c0_56], %195 {strides = array<i32>} : memref<1x128x128xf32, #tpu.memory_space<vmem>>, vector<1x8x128xf32>,
    %c7_i32 = arith.constant 7 : i32
    %c8_i32_57 = arith.constant 8 : i32
    %196 = arith.muli %c7_i32, %c8_i32_57 : i32
    %197 = tpu.assume_multiple %196, 8 : i32
    %198 = arith.index_cast %197 : i32 to index
    %c0_58 = arith.constant 0 : index
    %199 = vector.load %arg13[%198, %c0_58] : memref<128x512xf32, #tpu.memory_space<vmem>>, vector<8x512xf32>
    %cst_59 = arith.constant dense<0.000000e+00> : vector<8x512xf32>
    %200 = tpu.matmul %191, %11, %cst_59 {dimension_numbers = #tpu.dot_dimension_numbers<[1], [0], [0], [1], [0, 0, 1, 1], [], []>} : vector<8x128xf32>, vector<128x512xf32>, vector<8x512xf32> -> vector<8x512xf32>
    %201 = arith.addf %199, %200 : vector<8x512xf32>
    %202 = vector.extract_strided_slice %201 {offsets = [0, 0], sizes = [8, 384], strides = [1, 1]} : vector<8x512xf32> to vector<8x384xf32>
    %203 = arith.negf %202 : vector<8x384xf32>
    %204 = math.exp %203 : vector<8x384xf32>
    %cst_60 = arith.constant 1.000000e+00 : f32
    %205 = vector.broadcast %cst_60 : f32 to vector<8x384xf32>
    %206 = arith.addf %205, %204 : vector<8x384xf32>
    %207 = arith.divf %205, %206 : vector<8x384xf32>
    %208 = vector.extract_strided_slice %207 {offsets = [0, 0], sizes = [8, 128], strides = [1, 1]} : vector<8x384xf32> to vector<8x128xf32>
    %209 = vector.extract_strided_slice %207 {offsets = [0, 128], sizes = [8, 128], strides = [1, 1]} : vector<8x384xf32> to vector<8x128xf32>
    %210 = vector.extract_strided_slice %207 {offsets = [0, 256], sizes = [8, 128], strides = [1, 1]} : vector<8x384xf32> to vector<8x128xf32>
    %211 = vector.extract_strided_slice %201 {offsets = [0, 384], sizes = [8, 128], strides = [1, 1]} : vector<8x512xf32> to vector<8x128xf32>
    %212 = math.tanh %211 : vector<8x128xf32>
    %213 = arith.mulf %209, %189 : vector<8x128xf32>
    %214 = arith.mulf %208, %212 : vector<8x128xf32>
    %215 = arith.addf %213, %214 : vector<8x128xf32>
    %216 = math.tanh %215 : vector<8x128xf32>
    %217 = arith.mulf %210, %216 : vector<8x128xf32>
    %c0_61 = arith.constant 0 : index
    %218 = arith.index_cast %197 : i32 to index
    %c0_62 = arith.constant 0 : index
    %219 = vector.load %arg8[%c0_61, %218, %c0_62] : memref<1x128x128xf32, #tpu.memory_space<vmem>>, vector<1x8x128xf32>
    %220 = vector.shape_cast %219 : vector<1x8x128xf32> to vector<8x128xf32>
    %221 = vector.shape_cast %217 : vector<8x128xf32> to vector<1x8x128xf32>
    tpu.vector_store %arg8[%c0_61, %218, %c0_62], %221 {strides = array<i32>} : memref<1x128x128xf32, #tpu.memory_space<vmem>>, vector<1x8x128xf32>,
    %c8_i32_63 = arith.constant 8 : i32
    %c8_i32_64 = arith.constant 8 : i32
    %222 = arith.muli %c8_i32_63, %c8_i32_64 : i32
    %223 = tpu.assume_multiple %222, 8 : i32
    %224 = arith.index_cast %223 : i32 to index
    %c0_65 = arith.constant 0 : index
    %225 = vector.load %arg13[%224, %c0_65] : memref<128x512xf32, #tpu.memory_space<vmem>>, vector<8x512xf32>
    %cst_66 = arith.constant dense<0.000000e+00> : vector<8x512xf32>
    %226 = tpu.matmul %217, %11, %cst_66 {dimension_numbers = #tpu.dot_dimension_numbers<[1], [0], [0], [1], [0, 0, 1, 1], [], []>} : vector<8x128xf32>, vector<128x512xf32>, vector<8x512xf32> -> vector<8x512xf32>
    %227 = arith.addf %225, %226 : vector<8x512xf32>
    %228 = vector.extract_strided_slice %227 {offsets = [0, 0], sizes = [8, 384], strides = [1, 1]} : vector<8x512xf32> to vector<8x384xf32>
    %229 = arith.negf %228 : vector<8x384xf32>
    %230 = math.exp %229 : vector<8x384xf32>
    %cst_67 = arith.constant 1.000000e+00 : f32
    %231 = vector.broadcast %cst_67 : f32 to vector<8x384xf32>
    %232 = arith.addf %231, %230 : vector<8x384xf32>
    %233 = arith.divf %231, %232 : vector<8x384xf32>
    %234 = vector.extract_strided_slice %233 {offsets = [0, 0], sizes = [8, 128], strides = [1, 1]} : vector<8x384xf32> to vector<8x128xf32>
    %235 = vector.extract_strided_slice %233 {offsets = [0, 128], sizes = [8, 128], strides = [1, 1]} : vector<8x384xf32> to vector<8x128xf32>
    %236 = vector.extract_strided_slice %233 {offsets = [0, 256], sizes = [8, 128], strides = [1, 1]} : vector<8x384xf32> to vector<8x128xf32>
    %237 = vector.extract_strided_slice %227 {offsets = [0, 384], sizes = [8, 128], strides = [1, 1]} : vector<8x512xf32> to vector<8x128xf32>
    %238 = math.tanh %237 : vector<8x128xf32>
    %239 = arith.mulf %235, %215 : vector<8x128xf32>
    %240 = arith.mulf %234, %238 : vector<8x128xf32>
    %241 = arith.addf %239, %240 : vector<8x128xf32>
    %242 = math.tanh %241 : vector<8x128xf32>
    %243 = arith.mulf %236, %242 : vector<8x128xf32>
    %c0_68 = arith.constant 0 : index
    %244 = arith.index_cast %223 : i32 to index
    %c0_69 = arith.constant 0 : index
    %245 = vector.load %arg8[%c0_68, %244, %c0_69] : memref<1x128x128xf32, #tpu.memory_space<vmem>>, vector<1x8x128xf32>
    %246 = vector.shape_cast %245 : vector<1x8x128xf32> to vector<8x128xf32>
    %247 = vector.shape_cast %243 : vector<8x128xf32> to vector<1x8x128xf32>
    tpu.vector_store %arg8[%c0_68, %244, %c0_69], %247 {strides = array<i32>} : memref<1x128x128xf32, #tpu.memory_space<vmem>>, vector<1x8x128xf32>,
    %c9_i32 = arith.constant 9 : i32
    %c8_i32_70 = arith.constant 8 : i32
    %248 = arith.muli %c9_i32, %c8_i32_70 : i32
    %249 = tpu.assume_multiple %248, 8 : i32
    %250 = arith.index_cast %249 : i32 to index
    %c0_71 = arith.constant 0 : index
    %251 = vector.load %arg13[%250, %c0_71] : memref<128x512xf32, #tpu.memory_space<vmem>>, vector<8x512xf32>
    %cst_72 = arith.constant dense<0.000000e+00> : vector<8x512xf32>
    %252 = tpu.matmul %243, %11, %cst_72 {dimension_numbers = #tpu.dot_dimension_numbers<[1], [0], [0], [1], [0, 0, 1, 1], [], []>} : vector<8x128xf32>, vector<128x512xf32>, vector<8x512xf32> -> vector<8x512xf32>
    %253 = arith.addf %251, %252 : vector<8x512xf32>
    %254 = vector.extract_strided_slice %253 {offsets = [0, 0], sizes = [8, 384], strides = [1, 1]} : vector<8x512xf32> to vector<8x384xf32>
    %255 = arith.negf %254 : vector<8x384xf32>
    %256 = math.exp %255 : vector<8x384xf32>
    %cst_73 = arith.constant 1.000000e+00 : f32
    %257 = vector.broadcast %cst_73 : f32 to vector<8x384xf32>
    %258 = arith.addf %257, %256 : vector<8x384xf32>
    %259 = arith.divf %257, %258 : vector<8x384xf32>
    %260 = vector.extract_strided_slice %259 {offsets = [0, 0], sizes = [8, 128], strides = [1, 1]} : vector<8x384xf32> to vector<8x128xf32>
    %261 = vector.extract_strided_slice %259 {offsets = [0, 128], sizes = [8, 128], strides = [1, 1]} : vector<8x384xf32> to vector<8x128xf32>
    %262 = vector.extract_strided_slice %259 {offsets = [0, 256], sizes = [8, 128], strides = [1, 1]} : vector<8x384xf32> to vector<8x128xf32>
    %263 = vector.extract_strided_slice %253 {offsets = [0, 384], sizes = [8, 128], strides = [1, 1]} : vector<8x512xf32> to vector<8x128xf32>
    %264 = math.tanh %263 : vector<8x128xf32>
    %265 = arith.mulf %261, %241 : vector<8x128xf32>
    %266 = arith.mulf %260, %264 : vector<8x128xf32>
    %267 = arith.addf %265, %266 : vector<8x128xf32>
    %268 = math.tanh %267 : vector<8x128xf32>
    %269 = arith.mulf %262, %268 : vector<8x128xf32>
    %c0_74 = arith.constant 0 : index
    %270 = arith.index_cast %249 : i32 to index
    %c0_75 = arith.constant 0 : index
    %271 = vector.load %arg8[%c0_74, %270, %c0_75] : memref<1x128x128xf32, #tpu.memory_space<vmem>>, vector<1x8x128xf32>
    %272 = vector.shape_cast %271 : vector<1x8x128xf32> to vector<8x128xf32>
    %273 = vector.shape_cast %269 : vector<8x128xf32> to vector<1x8x128xf32>
    tpu.vector_store %arg8[%c0_74, %270, %c0_75], %273 {strides = array<i32>} : memref<1x128x128xf32, #tpu.memory_space<vmem>>, vector<1x8x128xf32>,
    %c10_i32 = arith.constant 10 : i32
    %c8_i32_76 = arith.constant 8 : i32
    %274 = arith.muli %c10_i32, %c8_i32_76 : i32
    %275 = tpu.assume_multiple %274, 8 : i32
    %276 = arith.index_cast %275 : i32 to index
    %c0_77 = arith.constant 0 : index
    %277 = vector.load %arg13[%276, %c0_77] : memref<128x512xf32, #tpu.memory_space<vmem>>, vector<8x512xf32>
    %cst_78 = arith.constant dense<0.000000e+00> : vector<8x512xf32>
    %278 = tpu.matmul %269, %11, %cst_78 {dimension_numbers = #tpu.dot_dimension_numbers<[1], [0], [0], [1], [0, 0, 1, 1], [], []>} : vector<8x128xf32>, vector<128x512xf32>, vector<8x512xf32> -> vector<8x512xf32>
    %279 = arith.addf %277, %278 : vector<8x512xf32>
    %280 = vector.extract_strided_slice %279 {offsets = [0, 0], sizes = [8, 384], strides = [1, 1]} : vector<8x512xf32> to vector<8x384xf32>
    %281 = arith.negf %280 : vector<8x384xf32>
    %282 = math.exp %281 : vector<8x384xf32>
    %cst_79 = arith.constant 1.000000e+00 : f32
    %283 = vector.broadcast %cst_79 : f32 to vector<8x384xf32>
    %284 = arith.addf %283, %282 : vector<8x384xf32>
    %285 = arith.divf %283, %284 : vector<8x384xf32>
    %286 = vector.extract_strided_slice %285 {offsets = [0, 0], sizes = [8, 128], strides = [1, 1]} : vector<8x384xf32> to vector<8x128xf32>
    %287 = vector.extract_strided_slice %285 {offsets = [0, 128], sizes = [8, 128], strides = [1, 1]} : vector<8x384xf32> to vector<8x128xf32>
    %288 = vector.extract_strided_slice %285 {offsets = [0, 256], sizes = [8, 128], strides = [1, 1]} : vector<8x384xf32> to vector<8x128xf32>
    %289 = vector.extract_strided_slice %279 {offsets = [0, 384], sizes = [8, 128], strides = [1, 1]} : vector<8x512xf32> to vector<8x128xf32>
    %290 = math.tanh %289 : vector<8x128xf32>
    %291 = arith.mulf %287, %267 : vector<8x128xf32>
    %292 = arith.mulf %286, %290 : vector<8x128xf32>
    %293 = arith.addf %291, %292 : vector<8x128xf32>
    %294 = math.tanh %293 : vector<8x128xf32>
    %295 = arith.mulf %288, %294 : vector<8x128xf32>
    %c0_80 = arith.constant 0 : index
    %296 = arith.index_cast %275 : i32 to index
    %c0_81 = arith.constant 0 : index
    %297 = vector.load %arg8[%c0_80, %296, %c0_81] : memref<1x128x128xf32, #tpu.memory_space<vmem>>, vector<1x8x128xf32>
    %298 = vector.shape_cast %297 : vector<1x8x128xf32> to vector<8x128xf32>
    %299 = vector.shape_cast %295 : vector<8x128xf32> to vector<1x8x128xf32>
    tpu.vector_store %arg8[%c0_80, %296, %c0_81], %299 {strides = array<i32>} : memref<1x128x128xf32, #tpu.memory_space<vmem>>, vector<1x8x128xf32>,
    %c11_i32 = arith.constant 11 : i32
    %c8_i32_82 = arith.constant 8 : i32
    %300 = arith.muli %c11_i32, %c8_i32_82 : i32
    %301 = tpu.assume_multiple %300, 8 : i32
    %302 = arith.index_cast %301 : i32 to index
    %c0_83 = arith.constant 0 : index
    %303 = vector.load %arg13[%302, %c0_83] : memref<128x512xf32, #tpu.memory_space<vmem>>, vector<8x512xf32>
    %cst_84 = arith.constant dense<0.000000e+00> : vector<8x512xf32>
    %304 = tpu.matmul %295, %11, %cst_84 {dimension_numbers = #tpu.dot_dimension_numbers<[1], [0], [0], [1], [0, 0, 1, 1], [], []>} : vector<8x128xf32>, vector<128x512xf32>, vector<8x512xf32> -> vector<8x512xf32>
    %305 = arith.addf %303, %304 : vector<8x512xf32>
    %306 = vector.extract_strided_slice %305 {offsets = [0, 0], sizes = [8, 384], strides = [1, 1]} : vector<8x512xf32> to vector<8x384xf32>
    %307 = arith.negf %306 : vector<8x384xf32>
    %308 = math.exp %307 : vector<8x384xf32>
    %cst_85 = arith.constant 1.000000e+00 : f32
    %309 = vector.broadcast %cst_85 : f32 to vector<8x384xf32>
    %310 = arith.addf %309, %308 : vector<8x384xf32>
    %311 = arith.divf %309, %310 : vector<8x384xf32>
    %312 = vector.extract_strided_slice %311 {offsets = [0, 0], sizes = [8, 128], strides = [1, 1]} : vector<8x384xf32> to vector<8x128xf32>
    %313 = vector.extract_strided_slice %311 {offsets = [0, 128], sizes = [8, 128], strides = [1, 1]} : vector<8x384xf32> to vector<8x128xf32>
    %314 = vector.extract_strided_slice %311 {offsets = [0, 256], sizes = [8, 128], strides = [1, 1]} : vector<8x384xf32> to vector<8x128xf32>
    %315 = vector.extract_strided_slice %305 {offsets = [0, 384], sizes = [8, 128], strides = [1, 1]} : vector<8x512xf32> to vector<8x128xf32>
    %316 = math.tanh %315 : vector<8x128xf32>
    %317 = arith.mulf %313, %293 : vector<8x128xf32>
    %318 = arith.mulf %312, %316 : vector<8x128xf32>
    %319 = arith.addf %317, %318 : vector<8x128xf32>
    %320 = math.tanh %319 : vector<8x128xf32>
    %321 = arith.mulf %314, %320 : vector<8x128xf32>
    %c0_86 = arith.constant 0 : index
    %322 = arith.index_cast %301 : i32 to index
    %c0_87 = arith.constant 0 : index
    %323 = vector.load %arg8[%c0_86, %322, %c0_87] : memref<1x128x128xf32, #tpu.memory_space<vmem>>, vector<1x8x128xf32>
    %324 = vector.shape_cast %323 : vector<1x8x128xf32> to vector<8x128xf32>
    %325 = vector.shape_cast %321 : vector<8x128xf32> to vector<1x8x128xf32>
    tpu.vector_store %arg8[%c0_86, %322, %c0_87], %325 {strides = array<i32>} : memref<1x128x128xf32, #tpu.memory_space<vmem>>, vector<1x8x128xf32>,
    %c12_i32 = arith.constant 12 : i32
    %c8_i32_88 = arith.constant 8 : i32
    %326 = arith.muli %c12_i32, %c8_i32_88 : i32
    %327 = tpu.assume_multiple %326, 8 : i32
    %328 = arith.index_cast %327 : i32 to index
    %c0_89 = arith.constant 0 : index
    %329 = vector.load %arg13[%328, %c0_89] : memref<128x512xf32, #tpu.memory_space<vmem>>, vector<8x512xf32>
    %cst_90 = arith.constant dense<0.000000e+00> : vector<8x512xf32>
    %330 = tpu.matmul %321, %11, %cst_90 {dimension_numbers = #tpu.dot_dimension_numbers<[1], [0], [0], [1], [0, 0, 1, 1], [], []>} : vector<8x128xf32>, vector<128x512xf32>, vector<8x512xf32> -> vector<8x512xf32>
    %331 = arith.addf %329, %330 : vector<8x512xf32>
    %332 = vector.extract_strided_slice %331 {offsets = [0, 0], sizes = [8, 384], strides = [1, 1]} : vector<8x512xf32> to vector<8x384xf32>
    %333 = arith.negf %332 : vector<8x384xf32>
    %334 = math.exp %333 : vector<8x384xf32>
    %cst_91 = arith.constant 1.000000e+00 : f32
    %335 = vector.broadcast %cst_91 : f32 to vector<8x384xf32>
    %336 = arith.addf %335, %334 : vector<8x384xf32>
    %337 = arith.divf %335, %336 : vector<8x384xf32>
    %338 = vector.extract_strided_slice %337 {offsets = [0, 0], sizes = [8, 128], strides = [1, 1]} : vector<8x384xf32> to vector<8x128xf32>
    %339 = vector.extract_strided_slice %337 {offsets = [0, 128], sizes = [8, 128], strides = [1, 1]} : vector<8x384xf32> to vector<8x128xf32>
    %340 = vector.extract_strided_slice %337 {offsets = [0, 256], sizes = [8, 128], strides = [1, 1]} : vector<8x384xf32> to vector<8x128xf32>
    %341 = vector.extract_strided_slice %331 {offsets = [0, 384], sizes = [8, 128], strides = [1, 1]} : vector<8x512xf32> to vector<8x128xf32>
    %342 = math.tanh %341 : vector<8x128xf32>
    %343 = arith.mulf %339, %319 : vector<8x128xf32>
    %344 = arith.mulf %338, %342 : vector<8x128xf32>
    %345 = arith.addf %343, %344 : vector<8x128xf32>
    %346 = math.tanh %345 : vector<8x128xf32>
    %347 = arith.mulf %340, %346 : vector<8x128xf32>
    %c0_92 = arith.constant 0 : index
    %348 = arith.index_cast %327 : i32 to index
    %c0_93 = arith.constant 0 : index
    %349 = vector.load %arg8[%c0_92, %348, %c0_93] : memref<1x128x128xf32, #tpu.memory_space<vmem>>, vector<1x8x128xf32>
    %350 = vector.shape_cast %349 : vector<1x8x128xf32> to vector<8x128xf32>
    %351 = vector.shape_cast %347 : vector<8x128xf32> to vector<1x8x128xf32>
    tpu.vector_store %arg8[%c0_92, %348, %c0_93], %351 {strides = array<i32>} : memref<1x128x128xf32, #tpu.memory_space<vmem>>, vector<1x8x128xf32>,
    %c13_i32 = arith.constant 13 : i32
    %c8_i32_94 = arith.constant 8 : i32
    %352 = arith.muli %c13_i32, %c8_i32_94 : i32
    %353 = tpu.assume_multiple %352, 8 : i32
    %354 = arith.index_cast %353 : i32 to index
    %c0_95 = arith.constant 0 : index
    %355 = vector.load %arg13[%354, %c0_95] : memref<128x512xf32, #tpu.memory_space<vmem>>, vector<8x512xf32>
    %cst_96 = arith.constant dense<0.000000e+00> : vector<8x512xf32>
    %356 = tpu.matmul %347, %11, %cst_96 {dimension_numbers = #tpu.dot_dimension_numbers<[1], [0], [0], [1], [0, 0, 1, 1], [], []>} : vector<8x128xf32>, vector<128x512xf32>, vector<8x512xf32> -> vector<8x512xf32>
    %357 = arith.addf %355, %356 : vector<8x512xf32>
    %358 = vector.extract_strided_slice %357 {offsets = [0, 0], sizes = [8, 384], strides = [1, 1]} : vector<8x512xf32> to vector<8x384xf32>
    %359 = arith.negf %358 : vector<8x384xf32>
    %360 = math.exp %359 : vector<8x384xf32>
    %cst_97 = arith.constant 1.000000e+00 : f32
    %361 = vector.broadcast %cst_97 : f32 to vector<8x384xf32>
    %362 = arith.addf %361, %360 : vector<8x384xf32>
    %363 = arith.divf %361, %362 : vector<8x384xf32>
    %364 = vector.extract_strided_slice %363 {offsets = [0, 0], sizes = [8, 128], strides = [1, 1]} : vector<8x384xf32> to vector<8x128xf32>
    %365 = vector.extract_strided_slice %363 {offsets = [0, 128], sizes = [8, 128], strides = [1, 1]} : vector<8x384xf32> to vector<8x128xf32>
    %366 = vector.extract_strided_slice %363 {offsets = [0, 256], sizes = [8, 128], strides = [1, 1]} : vector<8x384xf32> to vector<8x128xf32>
    %367 = vector.extract_strided_slice %357 {offsets = [0, 384], sizes = [8, 128], strides = [1, 1]} : vector<8x512xf32> to vector<8x128xf32>
    %368 = math.tanh %367 : vector<8x128xf32>
    %369 = arith.mulf %365, %345 : vector<8x128xf32>
    %370 = arith.mulf %364, %368 : vector<8x128xf32>
    %371 = arith.addf %369, %370 : vector<8x128xf32>
    %372 = math.tanh %371 : vector<8x128xf32>
    %373 = arith.mulf %366, %372 : vector<8x128xf32>
    %c0_98 = arith.constant 0 : index
    %374 = arith.index_cast %353 : i32 to index
    %c0_99 = arith.constant 0 : index
    %375 = vector.load %arg8[%c0_98, %374, %c0_99] : memref<1x128x128xf32, #tpu.memory_space<vmem>>, vector<1x8x128xf32>
    %376 = vector.shape_cast %375 : vector<1x8x128xf32> to vector<8x128xf32>
    %377 = vector.shape_cast %373 : vector<8x128xf32> to vector<1x8x128xf32>
    tpu.vector_store %arg8[%c0_98, %374, %c0_99], %377 {strides = array<i32>} : memref<1x128x128xf32, #tpu.memory_space<vmem>>, vector<1x8x128xf32>,
    %c14_i32 = arith.constant 14 : i32
    %c8_i32_100 = arith.constant 8 : i32
    %378 = arith.muli %c14_i32, %c8_i32_100 : i32
    %379 = tpu.assume_multiple %378, 8 : i32
    %380 = arith.index_cast %379 : i32 to index
    %c0_101 = arith.constant 0 : index
    %381 = vector.load %arg13[%380, %c0_101] : memref<128x512xf32, #tpu.memory_space<vmem>>, vector<8x512xf32>
    %cst_102 = arith.constant dense<0.000000e+00> : vector<8x512xf32>
    %382 = tpu.matmul %373, %11, %cst_102 {dimension_numbers = #tpu.dot_dimension_numbers<[1], [0], [0], [1], [0, 0, 1, 1], [], []>} : vector<8x128xf32>, vector<128x512xf32>, vector<8x512xf32> -> vector<8x512xf32>
    %383 = arith.addf %381, %382 : vector<8x512xf32>
    %384 = vector.extract_strided_slice %383 {offsets = [0, 0], sizes = [8, 384], strides = [1, 1]} : vector<8x512xf32> to vector<8x384xf32>
    %385 = arith.negf %384 : vector<8x384xf32>
    %386 = math.exp %385 : vector<8x384xf32>
    %cst_103 = arith.constant 1.000000e+00 : f32
    %387 = vector.broadcast %cst_103 : f32 to vector<8x384xf32>
    %388 = arith.addf %387, %386 : vector<8x384xf32>
    %389 = arith.divf %387, %388 : vector<8x384xf32>
    %390 = vector.extract_strided_slice %389 {offsets = [0, 0], sizes = [8, 128], strides = [1, 1]} : vector<8x384xf32> to vector<8x128xf32>
    %391 = vector.extract_strided_slice %389 {offsets = [0, 128], sizes = [8, 128], strides = [1, 1]} : vector<8x384xf32> to vector<8x128xf32>
    %392 = vector.extract_strided_slice %389 {offsets = [0, 256], sizes = [8, 128], strides = [1, 1]} : vector<8x384xf32> to vector<8x128xf32>
    %393 = vector.extract_strided_slice %383 {offsets = [0, 384], sizes = [8, 128], strides = [1, 1]} : vector<8x512xf32> to vector<8x128xf32>
    %394 = math.tanh %393 : vector<8x128xf32>
    %395 = arith.mulf %391, %371 : vector<8x128xf32>
    %396 = arith.mulf %390, %394 : vector<8x128xf32>
    %397 = arith.addf %395, %396 : vector<8x128xf32>
    %398 = math.tanh %397 : vector<8x128xf32>
    %399 = arith.mulf %392, %398 : vector<8x128xf32>
    %c0_104 = arith.constant 0 : index
    %400 = arith.index_cast %379 : i32 to index
    %c0_105 = arith.constant 0 : index
    %401 = vector.load %arg8[%c0_104, %400, %c0_105] : memref<1x128x128xf32, #tpu.memory_space<vmem>>, vector<1x8x128xf32>
    %402 = vector.shape_cast %401 : vector<1x8x128xf32> to vector<8x128xf32>
    %403 = vector.shape_cast %399 : vector<8x128xf32> to vector<1x8x128xf32>
    tpu.vector_store %arg8[%c0_104, %400, %c0_105], %403 {strides = array<i32>} : memref<1x128x128xf32, #tpu.memory_space<vmem>>, vector<1x8x128xf32>,
    %c15_i32 = arith.constant 15 : i32
    %c8_i32_106 = arith.constant 8 : i32
    %404 = arith.muli %c15_i32, %c8_i32_106 : i32
    %405 = tpu.assume_multiple %404, 8 : i32
    %406 = arith.index_cast %405 : i32 to index
    %c0_107 = arith.constant 0 : index
    %407 = vector.load %arg13[%406, %c0_107] : memref<128x512xf32, #tpu.memory_space<vmem>>, vector<8x512xf32>
    %cst_108 = arith.constant dense<0.000000e+00> : vector<8x512xf32>
    %408 = tpu.matmul %399, %11, %cst_108 {dimension_numbers = #tpu.dot_dimension_numbers<[1], [0], [0], [1], [0, 0, 1, 1], [], []>} : vector<8x128xf32>, vector<128x512xf32>, vector<8x512xf32> -> vector<8x512xf32>
    %409 = arith.addf %407, %408 : vector<8x512xf32>
    %410 = vector.extract_strided_slice %409 {offsets = [0, 0], sizes = [8, 384], strides = [1, 1]} : vector<8x512xf32> to vector<8x384xf32>
    %411 = arith.negf %410 : vector<8x384xf32>
    %412 = math.exp %411 : vector<8x384xf32>
    %cst_109 = arith.constant 1.000000e+00 : f32
    %413 = vector.broadcast %cst_109 : f32 to vector<8x384xf32>
    %414 = arith.addf %413, %412 : vector<8x384xf32>
    %415 = arith.divf %413, %414 : vector<8x384xf32>
    %416 = vector.extract_strided_slice %415 {offsets = [0, 0], sizes = [8, 128], strides = [1, 1]} : vector<8x384xf32> to vector<8x128xf32>
    %417 = vector.extract_strided_slice %415 {offsets = [0, 128], sizes = [8, 128], strides = [1, 1]} : vector<8x384xf32> to vector<8x128xf32>
    %418 = vector.extract_strided_slice %415 {offsets = [0, 256], sizes = [8, 128], strides = [1, 1]} : vector<8x384xf32> to vector<8x128xf32>
    %419 = vector.extract_strided_slice %409 {offsets = [0, 384], sizes = [8, 128], strides = [1, 1]} : vector<8x512xf32> to vector<8x128xf32>
    %420 = math.tanh %419 : vector<8x128xf32>
    %421 = arith.mulf %417, %397 : vector<8x128xf32>
    %422 = arith.mulf %416, %420 : vector<8x128xf32>
    %423 = arith.addf %421, %422 : vector<8x128xf32>
    %424 = math.tanh %423 : vector<8x128xf32>
    %425 = arith.mulf %418, %424 : vector<8x128xf32>
    %c0_110 = arith.constant 0 : index
    %426 = arith.index_cast %405 : i32 to index
    %c0_111 = arith.constant 0 : index
    %427 = vector.load %arg8[%c0_110, %426, %c0_111] : memref<1x128x128xf32, #tpu.memory_space<vmem>>, vector<1x8x128xf32>
    %428 = vector.shape_cast %427 : vector<1x8x128xf32> to vector<8x128xf32>
    %429 = vector.shape_cast %425 : vector<8x128xf32> to vector<1x8x128xf32>
    tpu.vector_store %arg8[%c0_110, %426, %c0_111], %429 {strides = array<i32>} : memref<1x128x128xf32, #tpu.memory_space<vmem>>, vector<1x8x128xf32>,
    %c16_i32 = arith.constant 16 : i32
    %c0_112 = arith.constant 0 : index
    %c0_113 = arith.constant 0 : index
    %430 = vector.load %arg11[%c0_112, %c0_113] : memref<8x128xf32, #tpu.memory_space<vmem>>, vector<8x128xf32>
    tpu.vector_store %arg11[%c0_112, %c0_113], %425 {strides = array<i32>} : memref<8x128xf32, #tpu.memory_space<vmem>>, vector<8x128xf32>,
    %c0_114 = arith.constant 0 : index
    %c0_115 = arith.constant 0 : index
    %431 = vector.load %arg12[%c0_114, %c0_115] : memref<8x128xf32, #tpu.memory_space<vmem>>, vector<8x128xf32>
    tpu.vector_store %arg12[%c0_114, %c0_115], %423 {strides = array<i32>} : memref<8x128xf32, #tpu.memory_space<vmem>>, vector<8x128xf32>,
    %c0_i32_116 = arith.constant 0 : i32
    %432 = arith.cmpi eq, %arg1, %c0_i32_116 : i32
    %433 = arith.extui %432 : i1 to i32
    %c0_i32_117 = arith.constant 0 : i32
    %434 = arith.cmpi ne, %433, %c0_i32_117 : i32
    scf.if %434 {
      %c0_118 = arith.constant 0 : index
      %c0_119 = arith.constant 0 : index
      %435 = vector.load %arg11[%c0_118, %c0_119] : memref<8x128xf32, #tpu.memory_space<vmem>>, vector<8x128xf32>
      %c0_120 = arith.constant 0 : index
      %c0_121 = arith.constant 0 : index
      %c0_122 = arith.constant 0 : index
      %436 = vector.load %arg9[%c0_120, %c0_121, %c0_122] : memref<1x8x128xf32, #tpu.memory_space<vmem>>, vector<1x8x128xf32>
      %437 = vector.shape_cast %436 : vector<1x8x128xf32> to vector<8x128xf32>
      %438 = vector.shape_cast %435 : vector<8x128xf32> to vector<1x8x128xf32>
      tpu.vector_store %arg9[%c0_120, %c0_121, %c0_122], %438 {strides = array<i32>} : memref<1x8x128xf32, #tpu.memory_space<vmem>>, vector<1x8x128xf32>,
      %c0_123 = arith.constant 0 : index
      %c0_124 = arith.constant 0 : index
      %439 = vector.load %arg12[%c0_123, %c0_124] : memref<8x128xf32, #tpu.memory_space<vmem>>, vector<8x128xf32>
      %c0_125 = arith.constant 0 : index
      %c0_126 = arith.constant 0 : index
      %c0_127 = arith.constant 0 : index
      %440 = vector.load %arg10[%c0_125, %c0_126, %c0_127] : memref<1x8x128xf32, #tpu.memory_space<vmem>>, vector<1x8x128xf32>
      %441 = vector.shape_cast %440 : vector<1x8x128xf32> to vector<8x128xf32>
      %442 = vector.shape_cast %439 : vector<8x128xf32> to vector<1x8x128xf32>
      tpu.vector_store %arg10[%c0_125, %c0_126, %c0_127], %442 {strides = array<i32>} : memref<1x8x128xf32, #tpu.memory_space<vmem>>, vector<1x8x128xf32>,
    } else {
    }
    return
  }
  func.func @transform_0(%arg0: i32, %arg1: i32) -> (i32, i32, i32) {
    %c0_i32 = arith.constant 0 : i32
    %c0_i32_0 = arith.constant 0 : i32
    return %arg0, %arg1, %c0_i32 : i32, i32, i32
  }
  func.func @transform_1(%arg0: i32, %arg1: i32) -> (i32, i32, i32) {
    %c0_i32 = arith.constant 0 : i32
    %c0_i32_0 = arith.constant 0 : i32
    %c0_i32_1 = arith.constant 0 : i32
    return %arg0, %c0_i32, %c0_i32_0 : i32, i32, i32
  }
  func.func @transform_2(%arg0: i32, %arg1: i32) -> (i32, i32, i32) {
    %c0_i32 = arith.constant 0 : i32
    %c0_i32_0 = arith.constant 0 : i32
    %c0_i32_1 = arith.constant 0 : i32
    return %arg0, %c0_i32, %c0_i32_0 : i32, i32, i32
  }
  func.func @transform_3(%arg0: i32, %arg1: i32) -> (i32, i32) {
    %c0_i32 = arith.constant 0 : i32
    %c0_i32_0 = arith.constant 0 : i32
    %c0_i32_1 = arith.constant 0 : i32
    return %c0_i32, %c0_i32_0 : i32, i32
  }
  func.func @transform_4(%arg0: i32, %arg1: i32) -> (i32, i32) {
    %c0_i32 = arith.constant 0 : i32
    %c0_i32_0 = arith.constant 0 : i32
    %c0_i32_1 = arith.constant 0 : i32
    return %c0_i32, %c0_i32_0 : i32, i32
  }
  func.func @transform_5(%arg0: i32, %arg1: i32) -> (i32, i32) {
    %c0_i32 = arith.constant 0 : i32
    %c0_i32_0 = arith.constant 0 : i32
    %c0_i32_1 = arith.constant 0 : i32
    return %c0_i32, %c0_i32_0 : i32, i32
  }
  func.func @transform_6(%arg0: i32, %arg1: i32) -> (i32, i32, i32) {
    %c0_i32 = arith.constant 0 : i32
    %c0_i32_0 = arith.constant 0 : i32
    return %arg0, %arg1, %c0_i32 : i32, i32, i32
  }
  func.func @transform_7(%arg0: i32, %arg1: i32) -> (i32, i32, i32) {
    %c0_i32 = arith.constant 0 : i32
    %c0_i32_0 = arith.constant 0 : i32
    %c0_i32_1 = arith.constant 0 : i32
    return %arg0, %c0_i32, %c0_i32_0 : i32, i32, i32
  }
  func.func @transform_8(%arg0: i32, %arg1: i32) -> (i32, i32, i32) {
    %c0_i32 = arith.constant 0 : i32
    %c0_i32_0 = arith.constant 0 : i32
    %c0_i32_1 = arith.constant 0 : i32
    return %arg0, %c0_i32, %c0_i32_0 : i32, i32, i32
  }
}

</mosaic_0001>

<llo_original>
// kernel: tpu_custom_call.1
$region0: #{tpu_custom_call.1}
  #allocation0 [shape = 'u32[]', space=smem, size = 0x4, offset = 0x4, fixed_abs, tag = 'smem constant byte address 0x4 - core index']
  #allocation1 [shape = 'u32[144,128]{1,0:T(1,128)}', space=vmem, size = 0x12000, scoped, tag = 'internal scratch']
  #allocation2 [shape = 'f32[8,128]{1,0:T(8,128)}', space=vmem, size = 0x1000, scoped, tag = 'scratch operand']
  #allocation3 [shape = 'f32[8,128]{1,0:T(8,128)}', space=vmem, size = 0x1000, scoped, tag = 'scratch operand']
  #allocation4 [shape = 'f32[128,512]{1,0:T(8,128)}', space=vmem, size = 0x40000, scoped, tag = 'scratch operand']
  %s0 = inlined_call_operand.vmem [shape: f32[1,128,16], index: 0, kind: input, shape index: {}]
  %s1 = inlined_call_operand.vmem [shape: f32[1,8,128], index: 1, kind: input, shape index: {}]
  %s2 = inlined_call_operand.vmem [shape: f32[1,8,128], index: 2, kind: input, shape index: {}]
  %s3 = inlined_call_operand.vmem [shape: f32[16,512], index: 3, kind: input, shape index: {}]
  %s4 = inlined_call_operand.hbm [shape: f32[128,512], index: 4, kind: input, shape index: {}]
  %s5 = inlined_call_operand.vmem [shape: f32[1,512], index: 5, kind: input, shape index: {}]
  %s6 = inlined_call_operand.hbm [shape: f32[1,128,128], index: 6, kind: output, shape index: {0}]
  %s7 = inlined_call_operand.hbm [shape: f32[1,8,128], index: 7, kind: output, shape index: {1}]
  %s8 = inlined_call_operand.hbm [shape: f32[1,8,128], index: 8, kind: output, shape index: {2}]
  %9 = xla_tuple %s6, %s7, %s8
  %s10 = sld [smem:[#allocation0]]
  $region62: #{tpu_custom_call.1} parent=0
    _
  %s12 = ssub.s32 1, %s10
  %s13 = scalar_select 0, %s12, %s10
  $region1: #{tpu_custom_call.1} parent=0
    #allocation5 [shape = 'u8[262144]{0}', space=vmem, size = 0x40000, scoped, tag = 'input window, operand 4, single buffered']
    #allocation6 [shape = 's32[1]{0}', space=sflag, size = 0x4, scoped, tag = 'scoped memory for tpu_custom_call.1']
    #allocation7 [shape = 's32[1]{0}', space=sflag, size = 0x4, scoped, tag = 'scoped memory for tpu_custom_call.1']
    #allocation8 [shape = 'u8[65536]{0}', space=vmem, size = 0x10000, scoped, tag = 'output window, operand 0, single buffered']
    #allocation9 [shape = 'u8[4096]{0}', space=vmem, size = 0x1000, scoped, tag = 'output window, operand 1, single buffered']
    #allocation10 [shape = 's32[1]{0}', space=sflag, size = 0x4, scoped, tag = 'scoped memory for tpu_custom_call.1']
    #allocation11 [shape = 'u8[4096]{0}', space=vmem, size = 0x1000, scoped, tag = 'output window, operand 2, single buffered']
    %14 = vsyncpa [#allocation6], 0
    %15 = vsyncpa [#allocation7], 0
    %16 = vsyncpa [#allocation10], 0
    // Predicated region
    $region2: #{tpu_custom_call.1} parent=1 // pred_check
      _
    $region3: #{tpu_custom_call.1} parent=1 // pred_check_branch
      %18 = sbr.rel (0) target = $region5
    $region4: #{tpu_custom_call.1} parent=1 // pred_region
      _
    $region5: #{tpu_custom_call.1} parent=1 // pred_fallthru
      _
    // Predicated region
    $region6: #{tpu_custom_call.1} parent=1 // pred_check
      _
    $region7: #{tpu_custom_call.1} parent=1 // pred_check_branch
      %20 = sbr.rel (0) target = $region9
    $region8: #{tpu_custom_call.1} parent=1 // pred_region
      _
    $region9: #{tpu_custom_call.1} parent=1 // pred_fallthru
      _
    // Predicated region
    $region10: #{tpu_custom_call.1} parent=1 // pred_check
      _
    $region11: #{tpu_custom_call.1} parent=1 // pred_check_branch
      %22 = sbr.rel (0) target = $region13
    $region12: #{tpu_custom_call.1} parent=1 // pred_region
      _
    $region13: #{tpu_custom_call.1} parent=1 // pred_fallthru
      _
    // Predicated region
    $region14: #{tpu_custom_call.1} parent=1 // pred_check
      _
    $region15: #{tpu_custom_call.1} parent=1 // pred_check_branch
      %24 = sbr.rel (0) target = $region17
    $region16: #{tpu_custom_call.1} parent=1 // pred_region
      _
    $region17: #{tpu_custom_call.1} parent=1 // pred_fallthru
      _
    // Predicated region
    $region18: #{tpu_custom_call.1} parent=1 // pred_check
      _
    $region19: #{tpu_custom_call.1} parent=1 // pred_check_branch
      %26 = sbr.rel (0) target = $region21
    $region20: #{tpu_custom_call.1} parent=1 // pred_region
      %s28 = ssub.s32 8192, 8192
      %29 = vsyncadd [#allocation6], %s28
      %s30 = sshll.u32 [#allocation5], 4
      %s31 = int_to_ptr.vmem [resolvable:$true] %s30
      %36 = dma.hbm_to_vmem [thread:$0]  %s4, 8192, %s31, [#allocation6], 512, 512, 32
    $region21: #{tpu_custom_call.1} parent=1 // pred_fallthru
      _
    // Predicated region
    $region22: #{tpu_custom_call.1} parent=1 // pred_check
      _
    $region23: #{tpu_custom_call.1} parent=1 // pred_check_branch
      %38 = sbr.rel (0) target = $region25
    $region24: #{tpu_custom_call.1} parent=1 // pred_region
      _
    $region25: #{tpu_custom_call.1} parent=1 // pred_fallthru
      _
    // Predicated region
    $region26: #{tpu_custom_call.1} parent=1 // pred_check
      _
    $region27: #{tpu_custom_call.1} parent=1 // pred_check_branch
      %40 = sbr.rel (0) target = $region29
    $region28: #{tpu_custom_call.1} parent=1 // pred_region
      %41 = dma.done [#allocation6], 8192
    $region29: #{tpu_custom_call.1} parent=1 // pred_fallthru
      _
    %p42 = scmp.eq.s32.totalorder 0, 0
    // Predicated region
    $region30: #{tpu_custom_call.1} parent=1 // pred_check
      %p43 = pneg %p42
    $region31: #{tpu_custom_call.1} parent=1 // pred_check_branch
      %45 = sbr.rel (%p43) target = $region33
    $region32: #{tpu_custom_call.1} parent=1 // pred_region
      %v46 = vld [vmem:[%s1] sm:$0xff]
      %47 = vst [vmem:[#allocation2] sm:$0xff] %v46
      %v48 = vld [vmem:[%s2] sm:$0xff]
      %49 = vst [vmem:[#allocation3] sm:$0xff] %v48
    $region33: #{tpu_custom_call.1} parent=1 // pred_fallthru
      _
    %v50 = vld [vmem:[%s0] sm:$0xff]
    %v51 = vld [vmem:[%s0 + $0x8] sm:$0xff]
    %v52 = vld [vmem:[%s0 + $0x10] sm:$0xff]
    %v53 = vld [vmem:[%s0 + $0x18] sm:$0xff]
    %v54 = vld [vmem:[%s0 + $0x20] sm:$0xff]
    %v55 = vld [vmem:[%s0 + $0x28] sm:$0xff]
    %v56 = vld [vmem:[%s0 + $0x30] sm:$0xff]
    %v57 = vld [vmem:[%s0 + $0x38] sm:$0xff]
    %v58 = vld [vmem:[%s0 + $0x40] sm:$0xff]
    %v59 = vld [vmem:[%s0 + $0x48] sm:$0xff]
    %v60 = vld [vmem:[%s0 + $0x50] sm:$0xff]
    %v61 = vld [vmem:[%s0 + $0x58] sm:$0xff]
    %v62 = vld [vmem:[%s0 + $0x60] sm:$0xff]
    %v63 = vld [vmem:[%s0 + $0x68] sm:$0xff]
    %v64 = vld [vmem:[%s0 + $0x70] sm:$0xff]
    %v65 = vld [vmem:[%s0 + $0x78] sm:$0xff]
    %v66 = vld [vmem:[%s3] sm:$0xff]
    %v67 = vld [vmem:[%s3 + $0x8] sm:$0xff]
    %v68 = vld [vmem:[%s3 + $0x10] sm:$0xff]
    %v69 = vld [vmem:[%s3 + $0x18] sm:$0xff]
    %v70 = vld [vmem:[%s3 + $0x20] sm:$0xff]
    %v71 = vld [vmem:[%s3 + $0x28] sm:$0xff]
    %v72 = vld [vmem:[%s3 + $0x30] sm:$0xff]
    %v73 = vld [vmem:[%s3 + $0x38] sm:$0xff]
    %v74 = vld [vmem:[%s5] sm:$0xf]
    %v76 = vlaneseq
    %v77 = vshrl.u32 %v76, 7
    %v78 = vsub.s32 0, %v77
    %v79 = vrot.slane %v74, %v78
    %v80 = vlaneseq
    %v81 = vshrl.u32 %v80, 7
    %v82 = vsub.s32 1, %v81
    %v83 = vrot.slane %v74, %v82
    %v84 = vlaneseq
    %v85 = vshrl.u32 %v84, 7
    %v86 = vsub.s32 2, %v85
    %v87 = vrot.slane %v74, %v86
    %v88 = vlaneseq
    %v89 = vshrl.u32 %v88, 7
    %v90 = vsub.s32 3, %v89
    %v91 = vrot.slane %v74, %v90
    %vm96 = vcmask 130048
    %v98 = vsel %vm96, %v50, 0
    %v101 = vsel %vm96, %v51, 0
    %v104 = vsel %vm96, %v52, 0
    %v107 = vsel %vm96, %v53, 0
    %v110 = vsel %vm96, %v54, 0
    %v113 = vsel %vm96, %v55, 0
    %v116 = vsel %vm96, %v56, 0
    %v119 = vsel %vm96, %v57, 0
    %v122 = vsel %vm96, %v58, 0
    %v125 = vsel %vm96, %v59, 0
    %v128 = vsel %vm96, %v60, 0
    %v131 = vsel %vm96, %v61, 0
    %v134 = vsel %vm96, %v62, 0
    %v137 = vsel %vm96, %v63, 0
    %v140 = vsel %vm96, %v64, 0
    %v143 = vsel %vm96, %v65, 0
    %145 = vmatprep.subr.mxu0 %v67
    %146 = vmatpush1.msra.mxu0 %v66
    %147 = vmatprep.subr.mxu0 %v71
    %148 = vmatpush1.msra.mxu0 %v70
    %149 = vmatprep.subr.mxu0 0.0
    %150 = vmatpush1.msra.mxu0 0.0
    %151 = vmatprep.subr.mxu0 0.0
    %152 = vmatpush1.msra.mxu0 0.0
    %153 = vmatprep.subr.mxu0 0.0
    %154 = vmatpush1.msra.mxu0 0.0
    %155 = vmatprep.subr.mxu0 0.0
    %156 = vmatpush1.msra.mxu0 0.0
    %157 = vmatprep.subr.mxu0 0.0
    %158 = vmatpush1.msra.mxu0 0.0
    %159 = vmatprep.subr.mxu0 0.0
    %160 = vmatpush1.msra.mxu0 0.0
    %161 = vmatprep.subr.mxu0 0.0
    %162 = vmatpush1.msra.mxu0 0.0
    %163 = vmatprep.subr.mxu0 0.0
    %164 = vmatpush1.msra.mxu0 0.0
    %165 = vmatprep.subr.mxu0 0.0
    %166 = vmatpush1.msra.mxu0 0.0
    %167 = vmatprep.subr.mxu0 0.0
    %168 = vmatpush1.msra.mxu0 0.0
    %169 = vmatprep.subr.mxu0 0.0
    %170 = vmatpush1.msra.mxu0 0.0
    %171 = vmatprep.subr.mxu0 0.0
    %172 = vmatpush1.msra.mxu0 0.0
    %173 = vmatprep.subr.mxu0 0.0
    %174 = vmatpush1.msra.mxu0 0.0
    %175 = vmatprep.subr.mxu0 0.0
    %176 = vmatpush1.msra.mxu0 0.0
    %177 = vmatprep.subr.mxu0 0.0
    %178 = vmatpush1.msra.mxu0 0.0
    %179 = vmatprep.subr.mxu0 0.0
    %180 = vmatpush1.msra.mxu0 0.0
    %181 = vmatprep.subr.mxu0 0.0
    %182 = vmatpush1.msra.mxu0 0.0
    %183 = vmatprep.subr.mxu0 0.0
    %184 = vmatpush1.msra.mxu0 0.0
    %185 = vmatprep.subr.mxu0 0.0
    %186 = vmatpush1.msra.mxu0 0.0
    %187 = vmatprep.subr.mxu0 0.0
    %188 = vmatpush1.msra.mxu0 0.0
    %189 = vmatprep.subr.mxu0 0.0
    %190 = vmatpush1.msra.mxu0 0.0
    %191 = vmatprep.subr.mxu0 0.0
    %192 = vmatpush1.msra.mxu0 0.0
    %193 = vmatprep.subr.mxu0 0.0
    %194 = vmatpush1.msra.mxu0 0.0
    %195 = vmatprep.subr.mxu0 0.0
    %196 = vmatpush1.msra.mxu0 0.0
    %197 = vmatprep.subr.mxu0 0.0
    %198 = vmatpush1.msra.mxu0 0.0
    %199 = vmatprep.subr.mxu0 0.0
    %200 = vmatpush1.msra.mxu0 0.0
    %201 = vmatprep.subr.mxu0 0.0
    %202 = vmatpush1.msra.mxu0 0.0
    %203 = vmatprep.subr.mxu0 0.0
    %204 = vmatpush1.msra.mxu0 0.0
    %205 = vmatprep.subr.mxu0 0.0
    %206 = vmatpush1.msra.mxu0 0.0
    %207 = vmatprep.subr.mxu0 0.0
    %208 = vmatpush1.msra.mxu0 0.0
    %209 = vmatprep.mubr.f32.mxu0 0.0
    %210 = vmatmul.mubr.f32.gmra.mrb[0].mxu0 %v98
    %v211 = vpop.f32.mrb[0].mxu0
    %v212 = vadd.f32 %v79, %v211
    %v213 = vpop.f32.mrb[0].mxu0
    %v214 = vadd.f32 %v83, %v213
    %215 = vmatprep.mubr.f32.mxu0 0.0
    %216 = vmatmul.mubr.f32.gmra.mrb[0].mxu0 %v101
    %v217 = vpop.f32.mrb[0].mxu0
    %v218 = vadd.f32 %v79, %v217
    %v219 = vpop.f32.mrb[0].mxu0
    %v220 = vadd.f32 %v83, %v219
    %221 = vmatprep.mubr.f32.mxu0 0.0
    %222 = vmatmul.mubr.f32.gmra.mrb[0].mxu0 %v104
    %v223 = vpop.f32.mrb[0].mxu0
    %v224 = vadd.f32 %v79, %v223
    %v225 = vpop.f32.mrb[0].mxu0
    %v226 = vadd.f32 %v83, %v225
    %227 = vmatprep.mubr.f32.mxu0 0.0
    %228 = vmatmul.mubr.f32.gmra.mrb[0].mxu0 %v107
    %v229 = vpop.f32.mrb[0].mxu0
    %v230 = vadd.f32 %v79, %v229
    %v231 = vpop.f32.mrb[0].mxu0
    %v232 = vadd.f32 %v83, %v231
    %233 = vmatprep.mubr.f32.mxu0 0.0
    %234 = vmatmul.mubr.f32.gmra.mrb[0].mxu0 %v110
    %v235 = vpop.f32.mrb[0].mxu0
    %v236 = vadd.f32 %v79, %v235
    %v237 = vpop.f32.mrb[0].mxu0
    %v238 = vadd.f32 %v83, %v237
    %239 = vmatprep.mubr.f32.mxu0 0.0
    %240 = vmatmul.mubr.f32.gmra.mrb[0].mxu0 %v113
    %v241 = vpop.f32.mrb[0].mxu0
    %v242 = vadd.f32 %v79, %v241
    %v243 = vpop.f32.mrb[0].mxu0
    %v244 = vadd.f32 %v83, %v243
    %245 = vmatprep.mubr.f32.mxu0 0.0
    %246 = vmatmul.mubr.f32.gmra.mrb[0].mxu0 %v116
    %v247 = vpop.f32.mrb[0].mxu0
    %v248 = vadd.f32 %v79, %v247
    %v249 = vpop.f32.mrb[0].mxu0
    %v250 = vadd.f32 %v83, %v249
    %251 = vmatprep.mubr.f32.mxu0 0.0
    %252 = vmatmul.mubr.f32.gmra.mrb[0].mxu0 %v119
    %v253 = vpop.f32.mrb[0].mxu0
    %v254 = vadd.f32 %v79, %v253
    %v255 = vpop.f32.mrb[0].mxu0
    %v256 = vadd.f32 %v83, %v255
    %257 = vmatprep.mubr.f32.mxu0 0.0
    %258 = vmatmul.mubr.f32.gmra.mrb[0].mxu0 %v122
    %v259 = vpop.f32.mrb[0].mxu0
    %v260 = vadd.f32 %v79, %v259
    %v261 = vpop.f32.mrb[0].mxu0
    %v262 = vadd.f32 %v83, %v261
    %263 = vmatprep.mubr.f32.mxu0 0.0
    %264 = vmatmul.mubr.f32.gmra.mrb[0].mxu0 %v125
    %v265 = vpop.f32.mrb[0].mxu0
    %v266 = vadd.f32 %v79, %v265
    %v267 = vpop.f32.mrb[0].mxu0
    %v268 = vadd.f32 %v83, %v267
    %269 = vmatprep.mubr.f32.mxu0 0.0
    %270 = vmatmul.mubr.f32.gmra.mrb[0].mxu0 %v128
    %v271 = vpop.f32.mrb[0].mxu0
    %v272 = vadd.f32 %v79, %v271
    %v273 = vpop.f32.mrb[0].mxu0
    %v274 = vadd.f32 %v83, %v273
    %275 = vmatprep.mubr.f32.mxu0 0.0
    %276 = vmatmul.mubr.f32.gmra.mrb[0].mxu0 %v131
    %v277 = vpop.f32.mrb[0].mxu0
    %v278 = vadd.f32 %v79, %v277
    %v279 = vpop.f32.mrb[0].mxu0
    %v280 = vadd.f32 %v83, %v279
    %281 = vmatprep.mubr.f32.mxu0 0.0
    %282 = vmatmul.mubr.f32.gmra.mrb[0].mxu0 %v134
    %v283 = vpop.f32.mrb[0].mxu0
    %v284 = vadd.f32 %v79, %v283
    %v285 = vpop.f32.mrb[0].mxu0
    %v286 = vadd.f32 %v83, %v285
    %287 = vmatprep.mubr.f32.mxu0 0.0
    %288 = vmatmul.mubr.f32.gmra.mrb[0].mxu0 %v137
    %v289 = vpop.f32.mrb[0].mxu0
    %v290 = vadd.f32 %v79, %v289
    %v291 = vpop.f32.mrb[0].mxu0
    %v292 = vadd.f32 %v83, %v291
    %293 = vmatprep.mubr.f32.mxu0 0.0
    %294 = vmatmul.mubr.f32.gmra.mrb[0].mxu0 %v140
    %v295 = vpop.f32.mrb[0].mxu0
    %v296 = vadd.f32 %v79, %v295
    %v297 = vpop.f32.mrb[0].mxu0
    %v298 = vadd.f32 %v83, %v297
    %299 = vmatprep.mubr.f32.mxu0 0.0
    %300 = vmatmul.mubr.f32.gmra.mrb[0].mxu0 %v143
    %v301 = vpop.f32.mrb[0].mxu0
    %v302 = vadd.f32 %v79, %v301
    %v303 = vpop.f32.mrb[0].mxu0
    %v304 = vadd.f32 %v83, %v303
    %305 = vdwg.mxu0
    %306 = vmatprep.subr.mxu0 %v69
    %307 = vmatpush1.msra.mxu0 %v68
    %308 = vmatprep.subr.mxu0 %v73
    %309 = vmatpush1.msra.mxu0 %v72
    %310 = vmatprep.subr.mxu0 0.0
    %311 = vmatpush1.msra.mxu0 0.0
    %312 = vmatprep.subr.mxu0 0.0
    %313 = vmatpush1.msra.mxu0 0.0
    %314 = vmatprep.subr.mxu0 0.0
    %315 = vmatpush1.msra.mxu0 0.0
    %316 = vmatprep.subr.mxu0 0.0
    %317 = vmatpush1.msra.mxu0 0.0
    %318 = vmatprep.subr.mxu0 0.0
    %319 = vmatpush1.msra.mxu0 0.0
    %320 = vmatprep.subr.mxu0 0.0
    %321 = vmatpush1.msra.mxu0 0.0
    %322 = vmatprep.subr.mxu0 0.0
    %323 = vmatpush1.msra.mxu0 0.0
    %324 = vmatprep.subr.mxu0 0.0
    %325 = vmatpush1.msra.mxu0 0.0
    %326 = vmatprep.subr.mxu0 0.0
    %327 = vmatpush1.msra.mxu0 0.0
    %328 = vmatprep.subr.mxu0 0.0
    %329 = vmatpush1.msra.mxu0 0.0
    %330 = vmatprep.subr.mxu0 0.0
    %331 = vmatpush1.msra.mxu0 0.0
    %332 = vmatprep.subr.mxu0 0.0
    %333 = vmatpush1.msra.mxu0 0.0
    %334 = vmatprep.subr.mxu0 0.0
    %335 = vmatpush1.msra.mxu0 0.0
    %336 = vmatprep.subr.mxu0 0.0
    %337 = vmatpush1.msra.mxu0 0.0
    %338 = vmatprep.subr.mxu0 0.0
    %339 = vmatpush1.msra.mxu0 0.0
    %340 = vmatprep.subr.mxu0 0.0
    %341 = vmatpush1.msra.mxu0 0.0
    %342 = vmatprep.subr.mxu0 0.0
    %343 = vmatpush1.msra.mxu0 0.0
    %344 = vmatprep.subr.mxu0 0.0
    %345 = vmatpush1.msra.mxu0 0.0
    %346 = vmatprep.subr.mxu0 0.0
    %347 = vmatpush1.msra.mxu0 0.0
    %348 = vmatprep.subr.mxu0 0.0
    %349 = vmatpush1.msra.mxu0 0.0
    %350 = vmatprep.subr.mxu0 0.0
    %351 = vmatpush1.msra.mxu0 0.0
    %352 = vmatprep.subr.mxu0 0.0
    %353 = vmatpush1.msra.mxu0 0.0
    %354 = vmatprep.subr.mxu0 0.0
    %355 = vmatpush1.msra.mxu0 0.0
    %356 = vmatprep.subr.mxu0 0.0
    %357 = vmatpush1.msra.mxu0 0.0
    %358 = vmatprep.subr.mxu0 0.0
    %359 = vmatpush1.msra.mxu0 0.0
    %360 = vmatprep.subr.mxu0 0.0
    %361 = vmatpush1.msra.mxu0 0.0
    %362 = vmatprep.subr.mxu0 0.0
    %363 = vmatpush1.msra.mxu0 0.0
    %364 = vmatprep.subr.mxu0 0.0
    %365 = vmatpush1.msra.mxu0 0.0
    %366 = vmatprep.subr.mxu0 0.0
    %367 = vmatpush1.msra.mxu0 0.0
    %368 = vmatprep.subr.mxu0 0.0
    %369 = vmatpush1.msra.mxu0 0.0
    %370 = vmatprep.mubr.f32.mxu0 0.0
    %371 = vmatmul.mubr.f32.gmra.mrb[0].mxu0 %v98
    %v372 = vpop.f32.mrb[0].mxu0
    %v373 = vadd.f32 %v87, %v372
    %v374 = vpop.f32.mrb[0].mxu0
    %v375 = vadd.f32 %v91, %v374
    %376 = vmatprep.mubr.f32.mxu0 0.0
    %377 = vmatmul.mubr.f32.gmra.mrb[0].mxu0 %v101
    %v378 = vpop.f32.mrb[0].mxu0
    %v379 = vadd.f32 %v87, %v378
    %v380 = vpop.f32.mrb[0].mxu0
    %v381 = vadd.f32 %v91, %v380
    %382 = vmatprep.mubr.f32.mxu0 0.0
    %383 = vmatmul.mubr.f32.gmra.mrb[0].mxu0 %v104
    %v384 = vpop.f32.mrb[0].mxu0
    %v385 = vadd.f32 %v87, %v384
    %v386 = vpop.f32.mrb[0].mxu0
    %v387 = vadd.f32 %v91, %v386
    %388 = vmatprep.mubr.f32.mxu0 0.0
    %389 = vmatmul.mubr.f32.gmra.mrb[0].mxu0 %v107
    %v390 = vpop.f32.mrb[0].mxu0
    %v391 = vadd.f32 %v87, %v390
    %v392 = vpop.f32.mrb[0].mxu0
    %v393 = vadd.f32 %v91, %v392
    %394 = vmatprep.mubr.f32.mxu0 0.0
    %395 = vmatmul.mubr.f32.gmra.mrb[0].mxu0 %v110
    %v396 = vpop.f32.mrb[0].mxu0
    %v397 = vadd.f32 %v87, %v396
    %v398 = vpop.f32.mrb[0].mxu0
    %v399 = vadd.f32 %v91, %v398
    %400 = vmatprep.mubr.f32.mxu0 0.0
    %401 = vmatmul.mubr.f32.gmra.mrb[0].mxu0 %v113
    %v402 = vpop.f32.mrb[0].mxu0
    %v403 = vadd.f32 %v87, %v402
    %v404 = vpop.f32.mrb[0].mxu0
    %v405 = vadd.f32 %v91, %v404
    %406 = vmatprep.mubr.f32.mxu0 0.0
    %407 = vmatmul.mubr.f32.gmra.mrb[0].mxu0 %v116
    %v408 = vpop.f32.mrb[0].mxu0
    %v409 = vadd.f32 %v87, %v408
    %v410 = vpop.f32.mrb[0].mxu0
    %v411 = vadd.f32 %v91, %v410
    %412 = vmatprep.mubr.f32.mxu0 0.0
    %413 = vmatmul.mubr.f32.gmra.mrb[0].mxu0 %v119
    %v414 = vpop.f32.mrb[0].mxu0
    %v415 = vadd.f32 %v87, %v414
    %v416 = vpop.f32.mrb[0].mxu0
    %v417 = vadd.f32 %v91, %v416
    %418 = vmatprep.mubr.f32.mxu0 0.0
    %419 = vmatmul.mubr.f32.gmra.mrb[0].mxu0 %v122
    %v420 = vpop.f32.mrb[0].mxu0
    %v421 = vadd.f32 %v87, %v420
    %v422 = vpop.f32.mrb[0].mxu0
    %v423 = vadd.f32 %v91, %v422
    %424 = vmatprep.mubr.f32.mxu0 0.0
    %425 = vmatmul.mubr.f32.gmra.mrb[0].mxu0 %v125
    %v426 = vpop.f32.mrb[0].mxu0
    %v427 = vadd.f32 %v87, %v426
    %v428 = vpop.f32.mrb[0].mxu0
    %v429 = vadd.f32 %v91, %v428
    %430 = vmatprep.mubr.f32.mxu0 0.0
    %431 = vmatmul.mubr.f32.gmra.mrb[0].mxu0 %v128
    %v432 = vpop.f32.mrb[0].mxu0
    %v433 = vadd.f32 %v87, %v432
    %v434 = vpop.f32.mrb[0].mxu0
    %v435 = vadd.f32 %v91, %v434
    %436 = vmatprep.mubr.f32.mxu0 0.0
    %437 = vmatmul.mubr.f32.gmra.mrb[0].mxu0 %v131
    %v438 = vpop.f32.mrb[0].mxu0
    %v439 = vadd.f32 %v87, %v438
    %v440 = vpop.f32.mrb[0].mxu0
    %v441 = vadd.f32 %v91, %v440
    %442 = vmatprep.mubr.f32.mxu0 0.0
    %443 = vmatmul.mubr.f32.gmra.mrb[0].mxu0 %v134
    %v444 = vpop.f32.mrb[0].mxu0
    %v445 = vadd.f32 %v87, %v444
    %v446 = vpop.f32.mrb[0].mxu0
    %v447 = vadd.f32 %v91, %v446
    %448 = vmatprep.mubr.f32.mxu0 0.0
    %449 = vmatmul.mubr.f32.gmra.mrb[0].mxu0 %v137
    %v450 = vpop.f32.mrb[0].mxu0
    %v451 = vadd.f32 %v87, %v450
    %v452 = vpop.f32.mrb[0].mxu0
    %v453 = vadd.f32 %v91, %v452
    %454 = vmatprep.mubr.f32.mxu0 0.0
    %455 = vmatmul.mubr.f32.gmra.mrb[0].mxu0 %v140
    %v456 = vpop.f32.mrb[0].mxu0
    %v457 = vadd.f32 %v87, %v456
    %v458 = vpop.f32.mrb[0].mxu0
    %v459 = vadd.f32 %v91, %v458
    %460 = vmatprep.mubr.f32.mxu0 0.0
    %461 = vmatmul.mubr.f32.gmra.mrb[0].mxu0 %v143
    %v462 = vpop.f32.mrb[0].mxu0
    %v463 = vadd.f32 %v87, %v462
    %v464 = vpop.f32.mrb[0].mxu0
    %v465 = vadd.f32 %v91, %v464
    %466 = vdwg.mxu0
    %467 = vst [vmem:[#allocation4] sm:$0xff] %v212
    %468 = vst [vmem:[#allocation4 + $0x8] sm:$0xff] %v214
    %469 = vst [vmem:[#allocation4 + $0x10] sm:$0xff] %v373
    %470 = vst [vmem:[#allocation4 + $0x18] sm:$0xff] %v375
    %471 = vst [vmem:[#allocation4 + $0x20] sm:$0xff] %v218
    %472 = vst [vmem:[#allocation4 + $0x28] sm:$0xff] %v220
    %473 = vst [vmem:[#allocation4 + $0x30] sm:$0xff] %v379
    %474 = vst [vmem:[#allocation4 + $0x38] sm:$0xff] %v381
    %475 = vst [vmem:[#allocation4 + $0x40] sm:$0xff] %v224
    %476 = vst [vmem:[#allocation4 + $0x48] sm:$0xff] %v226
    %477 = vst [vmem:[#allocation4 + $0x50] sm:$0xff] %v385
    %478 = vst [vmem:[#allocation4 + $0x58] sm:$0xff] %v387
    %479 = vst [vmem:[#allocation4 + $0x60] sm:$0xff] %v230
    %480 = vst [vmem:[#allocation4 + $0x68] sm:$0xff] %v232
    %481 = vst [vmem:[#allocation4 + $0x70] sm:$0xff] %v391
    %482 = vst [vmem:[#allocation4 + $0x78] sm:$0xff] %v393
    %483 = vst [vmem:[#allocation4 + $0x80] sm:$0xff] %v236
    %484 = vst [vmem:[#allocation4 + $0x88] sm:$0xff] %v238
    %485 = vst [vmem:[#allocation4 + $0x90] sm:$0xff] %v397
    %486 = vst [vmem:[#allocation4 + $0x98] sm:$0xff] %v399
    %487 = vst [vmem:[#allocation4 + $0xa0] sm:$0xff] %v242
    %488 = vst [vmem:[#allocation4 + $0xa8] sm:$0xff] %v244
    %489 = vst [vmem:[#allocation4 + $0xb0] sm:$0xff] %v403
    %490 = vst [vmem:[#allocation4 + $0xb8] sm:$0xff] %v405
    %491 = vst [vmem:[#allocation4 + $0xc0] sm:$0xff] %v248
    %492 = vst [vmem:[#allocation4 + $0xc8] sm:$0xff] %v250
    %493 = vst [vmem:[#allocation4 + $0xd0] sm:$0xff] %v409
    %494 = vst [vmem:[#allocation4 + $0xd8] sm:$0xff] %v411
    %495 = vst [vmem:[#allocation4 + $0xe0] sm:$0xff] %v254
    %496 = vst [vmem:[#allocation4 + $0xe8] sm:$0xff] %v256
    %497 = vst [vmem:[#allocation4 + $0xf0] sm:$0xff] %v415
    %498 = vst [vmem:[#allocation4 + $0xf8] sm:$0xff] %v417
    %499 = vst [vmem:[#allocation4 + $0x100] sm:$0xff] %v260
    %500 = vst [vmem:[#allocation4 + $0x108] sm:$0xff] %v262
    %501 = vst [vmem:[#allocation4 + $0x110] sm:$0xff] %v421
    %502 = vst [vmem:[#allocation4 + $0x118] sm:$0xff] %v423
    %503 = vst [vmem:[#allocation4 + $0x120] sm:$0xff] %v266
    %504 = vst [vmem:[#allocation4 + $0x128] sm:$0xff] %v268
    %505 = vst [vmem:[#allocation4 + $0x130] sm:$0xff] %v427
    %506 = vst [vmem:[#allocation4 + $0x138] sm:$0xff] %v429
    %507 = vst [vmem:[#allocation4 + $0x140] sm:$0xff] %v272
    %508 = vst [vmem:[#allocation4 + $0x148] sm:$0xff] %v274
    %509 = vst [vmem:[#allocation4 + $0x150] sm:$0xff] %v433
    %510 = vst [vmem:[#allocation4 + $0x158] sm:$0xff] %v435
    %511 = vst [vmem:[#allocation4 + $0x160] sm:$0xff] %v278
    %512 = vst [vmem:[#allocation4 + $0x168] sm:$0xff] %v280
    %513 = vst [vmem:[#allocation4 + $0x170] sm:$0xff] %v439
    %514 = vst [vmem:[#allocation4 + $0x178] sm:$0xff] %v441
    %515 = vst [vmem:[#allocation4 + $0x180] sm:$0xff] %v284
    %516 = vst [vmem:[#allocation4 + $0x188] sm:$0xff] %v286
    %517 = vst [vmem:[#allocation4 + $0x190] sm:$0xff] %v445
    %518 = vst [vmem:[#allocation4 + $0x198] sm:$0xff] %v447
    %519 = vst [vmem:[#allocation4 + $0x1a0] sm:$0xff] %v290
    %520 = vst [vmem:[#allocation4 + $0x1a8] sm:$0xff] %v292
    %521 = vst [vmem:[#allocation4 + $0x1b0] sm:$0xff] %v451
    %522 = vst [vmem:[#allocation4 + $0x1b8] sm:$0xff] %v453
    %523 = vst [vmem:[#allocation4 + $0x1c0] sm:$0xff] %v296
    %524 = vst [vmem:[#allocation4 + $0x1c8] sm:$0xff] %v298
    %525 = vst [vmem:[#allocation4 + $0x1d0] sm:$0xff] %v457
    %526 = vst [vmem:[#allocation4 + $0x1d8] sm:$0xff] %v459
    %527 = vst [vmem:[#allocation4 + $0x1e0] sm:$0xff] %v302
    %528 = vst [vmem:[#allocation4 + $0x1e8] sm:$0xff] %v304
    %529 = vst [vmem:[#allocation4 + $0x1f0] sm:$0xff] %v463
    %530 = vst [vmem:[#allocation4 + $0x1f8] sm:$0xff] %v465
    %v531 = vld [vmem:[#allocation5] sm:$0xff]
    %v532 = vld [vmem:[#allocation5 + $0x8] sm:$0xff]
    %v533 = vld [vmem:[#allocation5 + $0x10] sm:$0xff]
    %v534 = vld [vmem:[#allocation5 + $0x18] sm:$0xff]
    %v535 = vld [vmem:[#allocation5 + $0x20] sm:$0xff]
    %v536 = vld [vmem:[#allocation5 + $0x28] sm:$0xff]
    %v537 = vld [vmem:[#allocation5 + $0x30] sm:$0xff]
    %v538 = vld [vmem:[#allocation5 + $0x38] sm:$0xff]
    %v539 = vld [vmem:[#allocation5 + $0x40] sm:$0xff]
    %v540 = vld [vmem:[#allocation5 + $0x48] sm:$0xff]
    %v541 = vld [vmem:[#allocation5 + $0x50] sm:$0xff]
    %v542 = vld [vmem:[#allocation5 + $0x58] sm:$0xff]
    %v543 = vld [vmem:[#allocation5 + $0x60] sm:$0xff]
    %v544 = vld [vmem:[#allocation5 + $0x68] sm:$0xff]
    %v545 = vld [vmem:[#allocation5 + $0x70] sm:$0xff]
    %v546 = vld [vmem:[#allocation5 + $0x78] sm:$0xff]
    %v547 = vld [vmem:[#allocation5 + $0x80] sm:$0xff]
    %v548 = vld [vmem:[#allocation5 + $0x88] sm:$0xff]
    %v549 = vld [vmem:[#allocation5 + $0x90] sm:$0xff]
    %v550 = vld [vmem:[#allocation5 + $0x98] sm:$0xff]
    %v551 = vld [vmem:[#allocation5 + $0xa0] sm:$0xff]
    %v552 = vld [vmem:[#allocation5 + $0xa8] sm:$0xff]
    %v553 = vld [vmem:[#allocation5 + $0xb0] sm:$0xff]
    %v554 = vld [vmem:[#allocation5 + $0xb8] sm:$0xff]
    %v555 = vld [vmem:[#allocation5 + $0xc0] sm:$0xff]
    %v556 = vld [vmem:[#allocation5 + $0xc8] sm:$0xff]
    %v557 = vld [vmem:[#allocation5 + $0xd0] sm:$0xff]
    %v558 = vld [vmem:[#allocation5 + $0xd8] sm:$0xff]
    %v559 = vld [vmem:[#allocation5 + $0xe0] sm:$0xff]
    %v560 = vld [vmem:[#allocation5 + $0xe8] sm:$0xff]
    %v561 = vld [vmem:[#allocation5 + $0xf0] sm:$0xff]
    %v562 = vld [vmem:[#allocation5 + $0xf8] sm:$0xff]
    %v563 = vld [vmem:[#allocation5 + $0x100] sm:$0xff]
    %v564 = vld [vmem:[#allocation5 + $0x108] sm:$0xff]
    %v565 = vld [vmem:[#allocation5 + $0x110] sm:$0xff]
    %v566 = vld [vmem:[#allocation5 + $0x118] sm:$0xff]
    %v567 = vld [vmem:[#allocation5 + $0x120] sm:$0xff]
    %v568 = vld [vmem:[#allocation5 + $0x128] sm:$0xff]
    %v569 = vld [vmem:[#allocation5 + $0x130] sm:$0xff]
    %v570 = vld [vmem:[#allocation5 + $0x138] sm:$0xff]
    %v571 = vld [vmem:[#allocation5 + $0x140] sm:$0xff]
    %v572 = vld [vmem:[#allocation5 + $0x148] sm:$0xff]
    %v573 = vld [vmem:[#allocation5 + $0x150] sm:$0xff]
    %v574 = vld [vmem:[#allocation5 + $0x158] sm:$0xff]
    %v575 = vld [vmem:[#allocation5 + $0x160] sm:$0xff]
    %v576 = vld [vmem:[#allocation5 + $0x168] sm:$0xff]
    %v577 = vld [vmem:[#allocation5 + $0x170] sm:$0xff]
    %v578 = vld [vmem:[#allocation5 + $0x178] sm:$0xff]
    %v579 = vld [vmem:[#allocation5 + $0x180] sm:$0xff]
    %v580 = vld [vmem:[#allocation5 + $0x188] sm:$0xff]
    %v581 = vld [vmem:[#allocation5 + $0x190] sm:$0xff]
    %v582 = vld [vmem:[#allocation5 + $0x198] sm:$0xff]
    %v583 = vld [vmem:[#allocation5 + $0x1a0] sm:$0xff]
    %v584 = vld [vmem:[#allocation5 + $0x1a8] sm:$0xff]
    %v585 = vld [vmem:[#allocation5 + $0x1b0] sm:$0xff]
    %v586 = vld [vmem:[#allocation5 + $0x1b8] sm:$0xff]
    %v587 = vld [vmem:[#allocation5 + $0x1c0] sm:$0xff]
    %v588 = vld [vmem:[#allocation5 + $0x1c8] sm:$0xff]
    %v589 = vld [vmem:[#allocation5 + $0x1d0] sm:$0xff]
    %v590 = vld [vmem:[#allocation5 + $0x1d8] sm:$0xff]
    %v591 = vld [vmem:[#allocation5 + $0x1e0] sm:$0xff]
    %v592 = vld [vmem:[#allocation5 + $0x1e8] sm:$0xff]
    %v593 = vld [vmem:[#allocation5 + $0x1f0] sm:$0xff]
    %v594 = vld [vmem:[#allocation5 + $0x1f8] sm:$0xff]
    %v595 = vld [vmem:[#allocation2] sm:$0xff]
    %v596 = vld [vmem:[#allocation3] sm:$0xff]
    %s597 = smul.u32 0, 4
    %s598 = smul.addr %s597, 8
    %s599 = scalar_lea.vmem [#allocation4], %s598
    %v600 = vld [vmem:[%s599] sm:$0xff]
    %v601 = vld [vmem:[%s599 + $0x8] sm:$0xff]
    %v602 = vld [vmem:[%s599 + $0x10] sm:$0xff]
    %v603 = vld [vmem:[%s599 + $0x18] sm:$0xff]
    %604 = vmatprep.subr.mxu0 %v532
    %605 = vmatpush1.msra.mxu0 %v531
    %606 = vmatprep.subr.mxu0 %v536
    %607 = vmatpush1.msra.mxu0 %v535
    %608 = vmatprep.subr.mxu0 %v540
    %609 = vmatpush1.msra.mxu0 %v539
    %610 = vmatprep.subr.mxu0 %v544
    %611 = vmatpush1.msra.mxu0 %v543
    %612 = vmatprep.subr.mxu0 %v548
    %613 = vmatpush1.msra.mxu0 %v547
    %614 = vmatprep.subr.mxu0 %v552
    %615 = vmatpush1.msra.mxu0 %v551
    %616 = vmatprep.subr.mxu0 %v556
    %617 = vmatpush1.msra.mxu0 %v555
    %618 = vmatprep.subr.mxu0 %v560
    %619 = vmatpush1.msra.mxu0 %v559
    %620 = vmatprep.subr.mxu0 %v564
    %621 = vmatpush1.msra.mxu0 %v563
    %622 = vmatprep.subr.mxu0 %v568
    %623 = vmatpush1.msra.mxu0 %v567
    %624 = vmatprep.subr.mxu0 %v572
    %625 = vmatpush1.msra.mxu0 %v571
    %626 = vmatprep.subr.mxu0 %v576
    %627 = vmatpush1.msra.mxu0 %v575
    %628 = vmatprep.subr.mxu0 %v580
    %629 = vmatpush1.msra.mxu0 %v579
    %630 = vmatprep.subr.mxu0 %v584
    %631 = vmatpush1.msra.mxu0 %v583
    %632 = vmatprep.subr.mxu0 %v588
    %633 = vmatpush1.msra.mxu0 %v587
    %634 = vmatprep.subr.mxu0 %v592
    %635 = vmatpush1.msra.mxu0 %v591
    %636 = vmatprep.subr.mxu0 0.0
    %637 = vmatpush1.msra.mxu0 0.0
    %638 = vmatprep.subr.mxu0 0.0
    %639 = vmatpush1.msra.mxu0 0.0
    %640 = vmatprep.subr.mxu0 0.0
    %641 = vmatpush1.msra.mxu0 0.0
    %642 = vmatprep.subr.mxu0 0.0
    %643 = vmatpush1.msra.mxu0 0.0
    %644 = vmatprep.subr.mxu0 0.0
    %645 = vmatpush1.msra.mxu0 0.0
    %646 = vmatprep.subr.mxu0 0.0
    %647 = vmatpush1.msra.mxu0 0.0
    %648 = vmatprep.subr.mxu0 0.0
    %649 = vmatpush1.msra.mxu0 0.0
    %650 = vmatprep.subr.mxu0 0.0
    %651 = vmatpush1.msra.mxu0 0.0
    %652 = vmatprep.subr.mxu0 0.0
    %653 = vmatpush1.msra.mxu0 0.0
    %654 = vmatprep.subr.mxu0 0.0
    %655 = vmatpush1.msra.mxu0 0.0
    %656 = vmatprep.subr.mxu0 0.0
    %657 = vmatpush1.msra.mxu0 0.0
    %658 = vmatprep.subr.mxu0 0.0
    %659 = vmatpush1.msra.mxu0 0.0
    %660 = vmatprep.subr.mxu0 0.0
    %661 = vmatpush1.msra.mxu0 0.0
    %662 = vmatprep.subr.mxu0 0.0
    %663 = vmatpush1.msra.mxu0 0.0
    %664 = vmatprep.subr.mxu0 0.0
    %665 = vmatpush1.msra.mxu0 0.0
    %666 = vmatprep.subr.mxu0 0.0
    %667 = vmatpush1.msra.mxu0 0.0
    %668 = vmatprep.mubr.f32.mxu0 0.0
    %669 = vmatmul.mubr.f32.gmra.mrb[0].mxu0 %v595
    %v670 = vpop.f32.mrb[0].mxu0
    %v671 = vadd.f32 0.0, %v670
    %v672 = vpop.f32.mrb[0].mxu0
    %v673 = vadd.f32 0.0, %v672
    %674 = vdwg.mxu0
    %675 = vmatprep.subr.mxu0 %v534
    %676 = vmatpush1.msra.mxu0 %v533
    %677 = vmatprep.subr.mxu0 %v538
    %678 = vmatpush1.msra.mxu0 %v537
    %679 = vmatprep.subr.mxu0 %v542
    %680 = vmatpush1.msra.mxu0 %v541
    %681 = vmatprep.subr.mxu0 %v546
    %682 = vmatpush1.msra.mxu0 %v545
    %683 = vmatprep.subr.mxu0 %v550
    %684 = vmatpush1.msra.mxu0 %v549
    %685 = vmatprep.subr.mxu0 %v554
    %686 = vmatpush1.msra.mxu0 %v553
    %687 = vmatprep.subr.mxu0 %v558
    %688 = vmatpush1.msra.mxu0 %v557
    %689 = vmatprep.subr.mxu0 %v562
    %690 = vmatpush1.msra.mxu0 %v561
    %691 = vmatprep.subr.mxu0 %v566
    %692 = vmatpush1.msra.mxu0 %v565
    %693 = vmatprep.subr.mxu0 %v570
    %694 = vmatpush1.msra.mxu0 %v569
    %695 = vmatprep.subr.mxu0 %v574
    %696 = vmatpush1.msra.mxu0 %v573
    %697 = vmatprep.subr.mxu0 %v578
    %698 = vmatpush1.msra.mxu0 %v577
    %699 = vmatprep.subr.mxu0 %v582
    %700 = vmatpush1.msra.mxu0 %v581
    %701 = vmatprep.subr.mxu0 %v586
    %702 = vmatpush1.msra.mxu0 %v585
    %703 = vmatprep.subr.mxu0 %v590
    %704 = vmatpush1.msra.mxu0 %v589
    %705 = vmatprep.subr.mxu0 %v594
    %706 = vmatpush1.msra.mxu0 %v593
    %707 = vmatprep.subr.mxu0 0.0
    %708 = vmatpush1.msra.mxu0 0.0
    %709 = vmatprep.subr.mxu0 0.0
    %710 = vmatpush1.msra.mxu0 0.0
    %711 = vmatprep.subr.mxu0 0.0
    %712 = vmatpush1.msra.mxu0 0.0
    %713 = vmatprep.subr.mxu0 0.0
    %714 = vmatpush1.msra.mxu0 0.0
    %715 = vmatprep.subr.mxu0 0.0
    %716 = vmatpush1.msra.mxu0 0.0
    %717 = vmatprep.subr.mxu0 0.0
    %718 = vmatpush1.msra.mxu0 0.0
    %719 = vmatprep.subr.mxu0 0.0
    %720 = vmatpush1.msra.mxu0 0.0
    %721 = vmatprep.subr.mxu0 0.0
    %722 = vmatpush1.msra.mxu0 0.0
    %723 = vmatprep.subr.mxu0 0.0
    %724 = vmatpush1.msra.mxu0 0.0
    %725 = vmatprep.subr.mxu0 0.0
    %726 = vmatpush1.msra.mxu0 0.0
    %727 = vmatprep.subr.mxu0 0.0
    %728 = vmatpush1.msra.mxu0 0.0
    %729 = vmatprep.subr.mxu0 0.0
    %730 = vmatpush1.msra.mxu0 0.0
    %731 = vmatprep.subr.mxu0 0.0
    %732 = vmatpush1.msra.mxu0 0.0
    %733 = vmatprep.subr.mxu0 0.0
    %734 = vmatpush1.msra.mxu0 0.0
    %735 = vmatprep.subr.mxu0 0.0
    %736 = vmatpush1.msra.mxu0 0.0
    %737 = vmatprep.subr.mxu0 0.0
    %738 = vmatpush1.msra.mxu0 0.0
    %739 = vmatprep.mubr.f32.mxu0 0.0
    %740 = vmatmul.mubr.f32.gmra.mrb[0].mxu0 %v595
    %v741 = vpop.f32.mrb[0].mxu0
    %v742 = vadd.f32 0.0, %v741
    %v743 = vpop.f32.mrb[0].mxu0
    %v744 = vadd.f32 0.0, %v743
    %745 = vdwg.mxu0
    %v746 = vadd.f32 %v600, %v671
    %v747 = vadd.f32 %v601, %v673
    %v748 = vadd.f32 %v602, %v742
    %v749 = vadd.f32 %v603, %v744
    %v750 = vxor.u32 %v746, 2147483648
    %v751 = vxor.u32 %v747, 2147483648
    %v752 = vxor.u32 %v748, 2147483648
    %v753 = vmul.f32 %v750, 1.442695
    %v754 = vpow.pop %v753
    %v755 = vmul.f32 %v751, 1.442695
    %v756 = vpow.pop %v755
    %v757 = vmul.f32 %v752, 1.442695
    %v758 = vpow.pop %v757
    %v759 = vadd.f32 %v754, 1.0
    %v760 = vadd.f32 %v756, 1.0
    %v761 = vadd.f32 %v758, 1.0
    %v762 = vrcp.pop %v759
    %v763 = vmul.f32 1.0, %v762
    %v764 = vrcp.pop %v760
    %v765 = vmul.f32 1.0, %v764
    %v766 = vrcp.pop %v761
    %v767 = vmul.f32 1.0, %v766
    %v768 = vtanh.pop %v749
    %v769 = vmul.f32 %v765, %v596
    %v770 = vmul.f32 %v763, %v768
    %v771 = vadd.f32 %v769, %v770
    %v772 = vtanh.pop %v771
    %v773 = vmul.f32 %v767, %v772
    %774 = vst [vmem:[#allocation8] sm:$0xff] %v773
    %s775 = smul.u32 1, 4
    %s776 = smul.addr %s775, 8
    %s777 = scalar_lea.vmem [#allocation4], %s776
    %v778 = vld [vmem:[%s777] sm:$0xff]
    %v779 = vld [vmem:[%s777 + $0x8] sm:$0xff]
    %v780 = vld [vmem:[%s777 + $0x10] sm:$0xff]
    %v781 = vld [vmem:[%s777 + $0x18] sm:$0xff]
    %782 = vmatprep.subr.mxu0 %v532
    %783 = vmatpush1.msra.mxu0 %v531
    %784 = vmatprep.subr.mxu0 %v536
    %785 = vmatpush1.msra.mxu0 %v535
    %786 = vmatprep.subr.mxu0 %v540
    %787 = vmatpush1.msra.mxu0 %v539
    %788 = vmatprep.subr.mxu0 %v544
    %789 = vmatpush1.msra.mxu0 %v543
    %790 = vmatprep.subr.mxu0 %v548
    %791 = vmatpush1.msra.mxu0 %v547
    %792 = vmatprep.subr.mxu0 %v552
    %793 = vmatpush1.msra.mxu0 %v551
    %794 = vmatprep.subr.mxu0 %v556
    %795 = vmatpush1.msra.mxu0 %v555
    %796 = vmatprep.subr.mxu0 %v560
    %797 = vmatpush1.msra.mxu0 %v559
    %798 = vmatprep.subr.mxu0 %v564
    %799 = vmatpush1.msra.mxu0 %v563
    %800 = vmatprep.subr.mxu0 %v568
    %801 = vmatpush1.msra.mxu0 %v567
    %802 = vmatprep.subr.mxu0 %v572
    %803 = vmatpush1.msra.mxu0 %v571
    %804 = vmatprep.subr.mxu0 %v576
    %805 = vmatpush1.msra.mxu0 %v575
    %806 = vmatprep.subr.mxu0 %v580
    %807 = vmatpush1.msra.mxu0 %v579
    %808 = vmatprep.subr.mxu0 %v584
    %809 = vmatpush1.msra.mxu0 %v583
    %810 = vmatprep.subr.mxu0 %v588
    %811 = vmatpush1.msra.mxu0 %v587
    %812 = vmatprep.subr.mxu0 %v592
    %813 = vmatpush1.msra.mxu0 %v591
    %814 = vmatprep.subr.mxu0 0.0
    %815 = vmatpush1.msra.mxu0 0.0
    %816 = vmatprep.subr.mxu0 0.0
    %817 = vmatpush1.msra.mxu0 0.0
    %818 = vmatprep.subr.mxu0 0.0
    %819 = vmatpush1.msra.mxu0 0.0
    %820 = vmatprep.subr.mxu0 0.0
    %821 = vmatpush1.msra.mxu0 0.0
    %822 = vmatprep.subr.mxu0 0.0
    %823 = vmatpush1.msra.mxu0 0.0
    %824 = vmatprep.subr.mxu0 0.0
    %825 = vmatpush1.msra.mxu0 0.0
    %826 = vmatprep.subr.mxu0 0.0
    %827 = vmatpush1.msra.mxu0 0.0
    %828 = vmatprep.subr.mxu0 0.0
    %829 = vmatpush1.msra.mxu0 0.0
    %830 = vmatprep.subr.mxu0 0.0
    %831 = vmatpush1.msra.mxu0 0.0
    %832 = vmatprep.subr.mxu0 0.0
    %833 = vmatpush1.msra.mxu0 0.0
    %834 = vmatprep.subr.mxu0 0.0
    %835 = vmatpush1.msra.mxu0 0.0
    %836 = vmatprep.subr.mxu0 0.0
    %837 = vmatpush1.msra.mxu0 0.0
    %838 = vmatprep.subr.mxu0 0.0
    %839 = vmatpush1.msra.mxu0 0.0
    %840 = vmatprep.subr.mxu0 0.0
    %841 = vmatpush1.msra.mxu0 0.0
    %842 = vmatprep.subr.mxu0 0.0
    %843 = vmatpush1.msra.mxu0 0.0
    %844 = vmatprep.subr.mxu0 0.0
    %845 = vmatpush1.msra.mxu0 0.0
    %846 = vmatprep.mubr.f32.mxu0 0.0
    %847 = vmatmul.mubr.f32.gmra.mrb[0].mxu0 %v773
    %v848 = vpop.f32.mrb[0].mxu0
    %v849 = vadd.f32 0.0, %v848
    %v850 = vpop.f32.mrb[0].mxu0
    %v851 = vadd.f32 0.0, %v850
    %852 = vdwg.mxu0
    %853 = vmatprep.subr.mxu0 %v534
    %854 = vmatpush1.msra.mxu0 %v533
    %855 = vmatprep.subr.mxu0 %v538
    %856 = vmatpush1.msra.mxu0 %v537
    %857 = vmatprep.subr.mxu0 %v542
    %858 = vmatpush1.msra.mxu0 %v541
    %859 = vmatprep.subr.mxu0 %v546
    %860 = vmatpush1.msra.mxu0 %v545
    %861 = vmatprep.subr.mxu0 %v550
    %862 = vmatpush1.msra.mxu0 %v549
    %863 = vmatprep.subr.mxu0 %v554
    %864 = vmatpush1.msra.mxu0 %v553
    %865 = vmatprep.subr.mxu0 %v558
    %866 = vmatpush1.msra.mxu0 %v557
    %867 = vmatprep.subr.mxu0 %v562
    %868 = vmatpush1.msra.mxu0 %v561
    %869 = vmatprep.subr.mxu0 %v566
    %870 = vmatpush1.msra.mxu0 %v565
    %871 = vmatprep.subr.mxu0 %v570
    %872 = vmatpush1.msra.mxu0 %v569
    %873 = vmatprep.subr.mxu0 %v574
    %874 = vmatpush1.msra.mxu0 %v573
    %875 = vmatprep.subr.mxu0 %v578
    %876 = vmatpush1.msra.mxu0 %v577
    %877 = vmatprep.subr.mxu0 %v582
    %878 = vmatpush1.msra.mxu0 %v581
    %879 = vmatprep.subr.mxu0 %v586
    %880 = vmatpush1.msra.mxu0 %v585
    %881 = vmatprep.subr.mxu0 %v590
    %882 = vmatpush1.msra.mxu0 %v589
    %883 = vmatprep.subr.mxu0 %v594
    %884 = vmatpush1.msra.mxu0 %v593
    %885 = vmatprep.subr.mxu0 0.0
    %886 = vmatpush1.msra.mxu0 0.0
    %887 = vmatprep.subr.mxu0 0.0
    %888 = vmatpush1.msra.mxu0 0.0
    %889 = vmatprep.subr.mxu0 0.0
    %890 = vmatpush1.msra.mxu0 0.0
    %891 = vmatprep.subr.mxu0 0.0
    %892 = vmatpush1.msra.mxu0 0.0
    %893 = vmatprep.subr.mxu0 0.0
    %894 = vmatpush1.msra.mxu0 0.0
    %895 = vmatprep.subr.mxu0 0.0
    %896 = vmatpush1.msra.mxu0 0.0
    %897 = vmatprep.subr.mxu0 0.0
    %898 = vmatpush1.msra.mxu0 0.0
    %899 = vmatprep.subr.mxu0 0.0
    %900 = vmatpush1.msra.mxu0 0.0
    %901 = vmatprep.subr.mxu0 0.0
    %902 = vmatpush1.msra.mxu0 0.0
    %903 = vmatprep.subr.mxu0 0.0
    %904 = vmatpush1.msra.mxu0 0.0
    %905 = vmatprep.subr.mxu0 0.0
    %906 = vmatpush1.msra.mxu0 0.0
    %907 = vmatprep.subr.mxu0 0.0
    %908 = vmatpush1.msra.mxu0 0.0
    %909 = vmatprep.subr.mxu0 0.0
    %910 = vmatpush1.msra.mxu0 0.0
    %911 = vmatprep.subr.mxu0 0.0
    %912 = vmatpush1.msra.mxu0 0.0
    %913 = vmatprep.subr.mxu0 0.0
    %914 = vmatpush1.msra.mxu0 0.0
    %915 = vmatprep.subr.mxu0 0.0
    %916 = vmatpush1.msra.mxu0 0.0
    %917 = vmatprep.mubr.f32.mxu0 0.0
    %918 = vmatmul.mubr.f32.gmra.mrb[0].mxu0 %v773
    %v919 = vpop.f32.mrb[0].mxu0
    %v920 = vadd.f32 0.0, %v919
    %v921 = vpop.f32.mrb[0].mxu0
    %v922 = vadd.f32 0.0, %v921
    %923 = vdwg.mxu0
    %v924 = vadd.f32 %v778, %v849
    %v925 = vadd.f32 %v779, %v851
    %v926 = vadd.f32 %v780, %v920
    %v927 = vadd.f32 %v781, %v922
    %v928 = vxor.u32 %v924, 2147483648
    %v929 = vxor.u32 %v925, 2147483648
    %v930 = vxor.u32 %v926, 2147483648
    %v931 = vmul.f32 %v928, 1.442695
    %v932 = vpow.pop %v931
    %v933 = vmul.f32 %v929, 1.442695
    %v934 = vpow.pop %v933
    %v935 = vmul.f32 %v930, 1.442695
    %v936 = vpow.pop %v935
    %v937 = vadd.f32 %v932, 1.0
    %v938 = vadd.f32 %v934, 1.0
    %v939 = vadd.f32 %v936, 1.0
    %v940 = vrcp.pop %v937
    %v941 = vmul.f32 1.0, %v940
    %v942 = vrcp.pop %v938
    %v943 = vmul.f32 1.0, %v942
    %v944 = vrcp.pop %v939
    %v945 = vmul.f32 1.0, %v944
    %v946 = vtanh.pop %v927
    %v947 = vmul.f32 %v943, %v771
    %v948 = vmul.f32 %v941, %v946
    %v949 = vadd.f32 %v947, %v948
    %v950 = vtanh.pop %v949
    %v951 = vmul.f32 %v945, %v950
    %s952 = scalar_lea.vmem [#allocation8], 8
    %953 = vst [vmem:[%s952] sm:$0xff] %v951
    %s954 = smul.u32 2, 4
    %s955 = smul.addr %s954, 8
    %s956 = scalar_lea.vmem [#allocation4], %s955
    %v957 = vld [vmem:[%s956] sm:$0xff]
    %v958 = vld [vmem:[%s956 + $0x8] sm:$0xff]
    %v959 = vld [vmem:[%s956 + $0x10] sm:$0xff]
    %v960 = vld [vmem:[%s956 + $0x18] sm:$0xff]
    %961 = vmatprep.subr.mxu0 %v532
    %962 = vmatpush1.msra.mxu0 %v531
    %963 = vmatprep.subr.mxu0 %v536
    %964 = vmatpush1.msra.mxu0 %v535
    %965 = vmatprep.subr.mxu0 %v540
    %966 = vmatpush1.msra.mxu0 %v539
    %967 = vmatprep.subr.mxu0 %v544
    %968 = vmatpush1.msra.mxu0 %v543
    %969 = vmatprep.subr.mxu0 %v548
    %970 = vmatpush1.msra.mxu0 %v547
    %971 = vmatprep.subr.mxu0 %v552
    %972 = vmatpush1.msra.mxu0 %v551
    %973 = vmatprep.subr.mxu0 %v556
    %974 = vmatpush1.msra.mxu0 %v555
    %975 = vmatprep.subr.mxu0 %v560
    %976 = vmatpush1.msra.mxu0 %v559
    %977 = vmatprep.subr.mxu0 %v564
    %978 = vmatpush1.msra.mxu0 %v563
    %979 = vmatprep.subr.mxu0 %v568
    %980 = vmatpush1.msra.mxu0 %v567
    %981 = vmatprep.subr.mxu0 %v572
    %982 = vmatpush1.msra.mxu0 %v571
    %983 = vmatprep.subr.mxu0 %v576
    %984 = vmatpush1.msra.mxu0 %v575
    %985 = vmatprep.subr.mxu0 %v580
    %986 = vmatpush1.msra.mxu0 %v579
    %987 = vmatprep.subr.mxu0 %v584
    %988 = vmatpush1.msra.mxu0 %v583
    %989 = vmatprep.subr.mxu0 %v588
    %990 = vmatpush1.msra.mxu0 %v587
    %991 = vmatprep.subr.mxu0 %v592
    %992 = vmatpush1.msra.mxu0 %v591
    %993 = vmatprep.subr.mxu0 0.0
    %994 = vmatpush1.msra.mxu0 0.0
    %995 = vmatprep.subr.mxu0 0.0
    %996 = vmatpush1.msra.mxu0 0.0
    %997 = vmatprep.subr.mxu0 0.0
    %998 = vmatpush1.msra.mxu0 0.0
    %999 = vmatprep.subr.mxu0 0.0
    %1000 = vmatpush1.msra.mxu0 0.0
    %1001 = vmatprep.subr.mxu0 0.0
    %1002 = vmatpush1.msra.mxu0 0.0
    %1003 = vmatprep.subr.mxu0 0.0
    %1004 = vmatpush1.msra.mxu0 0.0
    %1005 = vmatprep.subr.mxu0 0.0
    %1006 = vmatpush1.msra.mxu0 0.0
    %1007 = vmatprep.subr.mxu0 0.0
    %1008 = vmatpush1.msra.mxu0 0.0
    %1009 = vmatprep.subr.mxu0 0.0
    %1010 = vmatpush1.msra.mxu0 0.0
    %1011 = vmatprep.subr.mxu0 0.0
    %1012 = vmatpush1.msra.mxu0 0.0
    %1013 = vmatprep.subr.mxu0 0.0
    %1014 = vmatpush1.msra.mxu0 0.0
    %1015 = vmatprep.subr.mxu0 0.0
    %1016 = vmatpush1.msra.mxu0 0.0
    %1017 = vmatprep.subr.mxu0 0.0
    %1018 = vmatpush1.msra.mxu0 0.0
    %1019 = vmatprep.subr.mxu0 0.0
    %1020 = vmatpush1.msra.mxu0 0.0
    %1021 = vmatprep.subr.mxu0 0.0
    %1022 = vmatpush1.msra.mxu0 0.0
    %1023 = vmatprep.subr.mxu0 0.0
    %1024 = vmatpush1.msra.mxu0 0.0
    %1025 = vmatprep.mubr.f32.mxu0 0.0
    %1026 = vmatmul.mubr.f32.gmra.mrb[0].mxu0 %v951
    %v1027 = vpop.f32.mrb[0].mxu0
    %v1028 = vadd.f32 0.0, %v1027
    %v1029 = vpop.f32.mrb[0].mxu0
    %v1030 = vadd.f32 0.0, %v1029
    %1031 = vdwg.mxu0
    %1032 = vmatprep.subr.mxu0 %v534
    %1033 = vmatpush1.msra.mxu0 %v533
    %1034 = vmatprep.subr.mxu0 %v538
    %1035 = vmatpush1.msra.mxu0 %v537
    %1036 = vmatprep.subr.mxu0 %v542
    %1037 = vmatpush1.msra.mxu0 %v541
    %1038 = vmatprep.subr.mxu0 %v546
    %1039 = vmatpush1.msra.mxu0 %v545
    %1040 = vmatprep.subr.mxu0 %v550
    %1041 = vmatpush1.msra.mxu0 %v549
    %1042 = vmatprep.subr.mxu0 %v554
    %1043 = vmatpush1.msra.mxu0 %v553
    %1044 = vmatprep.subr.mxu0 %v558
    %1045 = vmatpush1.msra.mxu0 %v557
    %1046 = vmatprep.subr.mxu0 %v562
    %1047 = vmatpush1.msra.mxu0 %v561
    %1048 = vmatprep.subr.mxu0 %v566
    %1049 = vmatpush1.msra.mxu0 %v565
    %1050 = vmatprep.subr.mxu0 %v570
    %1051 = vmatpush1.msra.mxu0 %v569
    %1052 = vmatprep.subr.mxu0 %v574
    %1053 = vmatpush1.msra.mxu0 %v573
    %1054 = vmatprep.subr.mxu0 %v578
    %1055 = vmatpush1.msra.mxu0 %v577
    %1056 = vmatprep.subr.mxu0 %v582
    %1057 = vmatpush1.msra.mxu0 %v581
    %1058 = vmatprep.subr.mxu0 %v586
    %1059 = vmatpush1.msra.mxu0 %v585
    %1060 = vmatprep.subr.mxu0 %v590
    %1061 = vmatpush1.msra.mxu0 %v589
    %1062 = vmatprep.subr.mxu0 %v594
    %1063 = vmatpush1.msra.mxu0 %v593
    %1064 = vmatprep.subr.mxu0 0.0
    %1065 = vmatpush1.msra.mxu0 0.0
    %1066 = vmatprep.subr.mxu0 0.0
    %1067 = vmatpush1.msra.mxu0 0.0
    %1068 = vmatprep.subr.mxu0 0.0
    %1069 = vmatpush1.msra.mxu0 0.0
    %1070 = vmatprep.subr.mxu0 0.0
    %1071 = vmatpush1.msra.mxu0 0.0
    %1072 = vmatprep.subr.mxu0 0.0
    %1073 = vmatpush1.msra.mxu0 0.0
    %1074 = vmatprep.subr.mxu0 0.0
    %1075 = vmatpush1.msra.mxu0 0.0
    %1076 = vmatprep.subr.mxu0 0.0
    %1077 = vmatpush1.msra.mxu0 0.0
    %1078 = vmatprep.subr.mxu0 0.0
    %1079 = vmatpush1.msra.mxu0 0.0
    %1080 = vmatprep.subr.mxu0 0.0
    %1081 = vmatpush1.msra.mxu0 0.0
    %1082 = vmatprep.subr.mxu0 0.0
    %1083 = vmatpush1.msra.mxu0 0.0
    %1084 = vmatprep.subr.mxu0 0.0
    %1085 = vmatpush1.msra.mxu0 0.0
    %1086 = vmatprep.subr.mxu0 0.0
    %1087 = vmatpush1.msra.mxu0 0.0
    %1088 = vmatprep.subr.mxu0 0.0
    %1089 = vmatpush1.msra.mxu0 0.0
    %1090 = vmatprep.subr.mxu0 0.0
    %1091 = vmatpush1.msra.mxu0 0.0
    %1092 = vmatprep.subr.mxu0 0.0
    %1093 = vmatpush1.msra.mxu0 0.0
    %1094 = vmatprep.subr.mxu0 0.0
    %1095 = vmatpush1.msra.mxu0 0.0
    %1096 = vmatprep.mubr.f32.mxu0 0.0
    %1097 = vmatmul.mubr.f32.gmra.mrb[0].mxu0 %v951
    %v1098 = vpop.f32.mrb[0].mxu0
    %v1099 = vadd.f32 0.0, %v1098
    %v1100 = vpop.f32.mrb[0].mxu0
    %v1101 = vadd.f32 0.0, %v1100
    %1102 = vdwg.mxu0
    %v1103 = vadd.f32 %v957, %v1028
    %v1104 = vadd.f32 %v958, %v1030
    %v1105 = vadd.f32 %v959, %v1099
    %v1106 = vadd.f32 %v960, %v1101
    %v1107 = vxor.u32 %v1103, 2147483648
    %v1108 = vxor.u32 %v1104, 2147483648
    %v1109 = vxor.u32 %v1105, 2147483648
    %v1110 = vmul.f32 %v1107, 1.442695
    %v1111 = vpow.pop %v1110
    %v1112 = vmul.f32 %v1108, 1.442695
    %v1113 = vpow.pop %v1112
    %v1114 = vmul.f32 %v1109, 1.442695
    %v1115 = vpow.pop %v1114
    %v1116 = vadd.f32 %v1111, 1.0
    %v1117 = vadd.f32 %v1113, 1.0
    %v1118 = vadd.f32 %v1115, 1.0
    %v1119 = vrcp.pop %v1116
    %v1120 = vmul.f32 1.0, %v1119
    %v1121 = vrcp.pop %v1117
    %v1122 = vmul.f32 1.0, %v1121
    %v1123 = vrcp.pop %v1118
    %v1124 = vmul.f32 1.0, %v1123
    %v1125 = vtanh.pop %v1106
    %v1126 = vmul.f32 %v1122, %v949
    %v1127 = vmul.f32 %v1120, %v1125
    %v1128 = vadd.f32 %v1126, %v1127
    %v1129 = vtanh.pop %v1128
    %v1130 = vmul.f32 %v1124, %v1129
    %s1131 = scalar_lea.vmem [#allocation8], 16
    %1132 = vst [vmem:[%s1131] sm:$0xff] %v1130
    %s1133 = smul.u32 3, 4
    %s1134 = smul.addr %s1133, 8
    %s1135 = scalar_lea.vmem [#allocation4], %s1134
    %v1136 = vld [vmem:[%s1135] sm:$0xff]
    %v1137 = vld [vmem:[%s1135 + $0x8] sm:$0xff]
    %v1138 = vld [vmem:[%s1135 + $0x10] sm:$0xff]
    %v1139 = vld [vmem:[%s1135 + $0x18] sm:$0xff]
    %1140 = vmatprep.subr.mxu0 %v532
    %1141 = vmatpush1.msra.mxu0 %v531
    %1142 = vmatprep.subr.mxu0 %v536
    %1143 = vmatpush1.msra.mxu0 %v535
    %1144 = vmatprep.subr.mxu0 %v540
    %1145 = vmatpush1.msra.mxu0 %v539
    %1146 = vmatprep.subr.mxu0 %v544
    %1147 = vmatpush1.msra.mxu0 %v543
    %1148 = vmatprep.subr.mxu0 %v548
    %1149 = vmatpush1.msra.mxu0 %v547
    %1150 = vmatprep.subr.mxu0 %v552
    %1151 = vmatpush1.msra.mxu0 %v551
    %1152 = vmatprep.subr.mxu0 %v556
    %1153 = vmatpush1.msra.mxu0 %v555
    %1154 = vmatprep.subr.mxu0 %v560
    %1155 = vmatpush1.msra.mxu0 %v559
    %1156 = vmatprep.subr.mxu0 %v564
    %1157 = vmatpush1.msra.mxu0 %v563
    %1158 = vmatprep.subr.mxu0 %v568
    %1159 = vmatpush1.msra.mxu0 %v567
    %1160 = vmatprep.subr.mxu0 %v572
    %1161 = vmatpush1.msra.mxu0 %v571
    %1162 = vmatprep.subr.mxu0 %v576
    %1163 = vmatpush1.msra.mxu0 %v575
    %1164 = vmatprep.subr.mxu0 %v580
    %1165 = vmatpush1.msra.mxu0 %v579
    %1166 = vmatprep.subr.mxu0 %v584
    %1167 = vmatpush1.msra.mxu0 %v583
    %1168 = vmatprep.subr.mxu0 %v588
    %1169 = vmatpush1.msra.mxu0 %v587
    %1170 = vmatprep.subr.mxu0 %v592
    %1171 = vmatpush1.msra.mxu0 %v591
    %1172 = vmatprep.subr.mxu0 0.0
    %1173 = vmatpush1.msra.mxu0 0.0
    %1174 = vmatprep.subr.mxu0 0.0
    %1175 = vmatpush1.msra.mxu0 0.0
    %1176 = vmatprep.subr.mxu0 0.0
    %1177 = vmatpush1.msra.mxu0 0.0
    %1178 = vmatprep.subr.mxu0 0.0
    %1179 = vmatpush1.msra.mxu0 0.0
    %1180 = vmatprep.subr.mxu0 0.0
    %1181 = vmatpush1.msra.mxu0 0.0
    %1182 = vmatprep.subr.mxu0 0.0
    %1183 = vmatpush1.msra.mxu0 0.0
    %1184 = vmatprep.subr.mxu0 0.0
    %1185 = vmatpush1.msra.mxu0 0.0
    %1186 = vmatprep.subr.mxu0 0.0
    %1187 = vmatpush1.msra.mxu0 0.0
    %1188 = vmatprep.subr.mxu0 0.0
    %1189 = vmatpush1.msra.mxu0 0.0
    %1190 = vmatprep.subr.mxu0 0.0
    %1191 = vmatpush1.msra.mxu0 0.0
    %1192 = vmatprep.subr.mxu0 0.0
    %1193 = vmatpush1.msra.mxu0 0.0
    %1194 = vmatprep.subr.mxu0 0.0
    %1195 = vmatpush1.msra.mxu0 0.0
    %1196 = vmatprep.subr.mxu0 0.0
    %1197 = vmatpush1.msra.mxu0 0.0
    %1198 = vmatprep.subr.mxu0 0.0
    %1199 = vmatpush1.msra.mxu0 0.0
    %1200 = vmatprep.subr.mxu0 0.0
    %1201 = vmatpush1.msra.mxu0 0.0
    %1202 = vmatprep.subr.mxu0 0.0
    %1203 = vmatpush1.msra.mxu0 0.0
    %1204 = vmatprep.mubr.f32.mxu0 0.0
    %1205 = vmatmul.mubr.f32.gmra.mrb[0].mxu0 %v1130
    %v1206 = vpop.f32.mrb[0].mxu0
    %v1207 = vadd.f32 0.0, %v1206
    %v1208 = vpop.f32.mrb[0].mxu0
    %v1209 = vadd.f32 0.0, %v1208
    %1210 = vdwg.mxu0
    %1211 = vmatprep.subr.mxu0 %v534
    %1212 = vmatpush1.msra.mxu0 %v533
    %1213 = vmatprep.subr.mxu0 %v538
    %1214 = vmatpush1.msra.mxu0 %v537
    %1215 = vmatprep.subr.mxu0 %v542
    %1216 = vmatpush1.msra.mxu0 %v541
    %1217 = vmatprep.subr.mxu0 %v546
    %1218 = vmatpush1.msra.mxu0 %v545
    %1219 = vmatprep.subr.mxu0 %v550
    %1220 = vmatpush1.msra.mxu0 %v549
    %1221 = vmatprep.subr.mxu0 %v554
    %1222 = vmatpush1.msra.mxu0 %v553
    %1223 = vmatprep.subr.mxu0 %v558
    %1224 = vmatpush1.msra.mxu0 %v557
    %1225 = vmatprep.subr.mxu0 %v562
    %1226 = vmatpush1.msra.mxu0 %v561
    %1227 = vmatprep.subr.mxu0 %v566
    %1228 = vmatpush1.msra.mxu0 %v565
    %1229 = vmatprep.subr.mxu0 %v570
    %1230 = vmatpush1.msra.mxu0 %v569
    %1231 = vmatprep.subr.mxu0 %v574
    %1232 = vmatpush1.msra.mxu0 %v573
    %1233 = vmatprep.subr.mxu0 %v578
    %1234 = vmatpush1.msra.mxu0 %v577
    %1235 = vmatprep.subr.mxu0 %v582
    %1236 = vmatpush1.msra.mxu0 %v581
    %1237 = vmatprep.subr.mxu0 %v586
    %1238 = vmatpush1.msra.mxu0 %v585
    %1239 = vmatprep.subr.mxu0 %v590
    %1240 = vmatpush1.msra.mxu0 %v589
    %1241 = vmatprep.subr.mxu0 %v594
    %1242 = vmatpush1.msra.mxu0 %v593
    %1243 = vmatprep.subr.mxu0 0.0
    %1244 = vmatpush1.msra.mxu0 0.0
    %1245 = vmatprep.subr.mxu0 0.0
    %1246 = vmatpush1.msra.mxu0 0.0
    %1247 = vmatprep.subr.mxu0 0.0
    %1248 = vmatpush1.msra.mxu0 0.0
    %1249 = vmatprep.subr.mxu0 0.0
    %1250 = vmatpush1.msra.mxu0 0.0
    %1251 = vmatprep.subr.mxu0 0.0
    %1252 = vmatpush1.msra.mxu0 0.0
    %1253 = vmatprep.subr.mxu0 0.0
    %1254 = vmatpush1.msra.mxu0 0.0
    %1255 = vmatprep.subr.mxu0 0.0
    %1256 = vmatpush1.msra.mxu0 0.0
    %1257 = vmatprep.subr.mxu0 0.0
    %1258 = vmatpush1.msra.mxu0 0.0
    %1259 = vmatprep.subr.mxu0 0.0
    %1260 = vmatpush1.msra.mxu0 0.0
    %1261 = vmatprep.subr.mxu0 0.0
    %1262 = vmatpush1.msra.mxu0 0.0
    %1263 = vmatprep.subr.mxu0 0.0
    %1264 = vmatpush1.msra.mxu0 0.0
    %1265 = vmatprep.subr.mxu0 0.0
    %1266 = vmatpush1.msra.mxu0 0.0
    %1267 = vmatprep.subr.mxu0 0.0
    %1268 = vmatpush1.msra.mxu0 0.0
    %1269 = vmatprep.subr.mxu0 0.0
    %1270 = vmatpush1.msra.mxu0 0.0
    %1271 = vmatprep.subr.mxu0 0.0
    %1272 = vmatpush1.msra.mxu0 0.0
    %1273 = vmatprep.subr.mxu0 0.0
    %1274 = vmatpush1.msra.mxu0 0.0
    %1275 = vmatprep.mubr.f32.mxu0 0.0
    %1276 = vmatmul.mubr.f32.gmra.mrb[0].mxu0 %v1130
    %v1277 = vpop.f32.mrb[0].mxu0
    %v1278 = vadd.f32 0.0, %v1277
    %v1279 = vpop.f32.mrb[0].mxu0
    %v1280 = vadd.f32 0.0, %v1279
    %1281 = vdwg.mxu0
    %v1282 = vadd.f32 %v1136, %v1207
    %v1283 = vadd.f32 %v1137, %v1209
    %v1284 = vadd.f32 %v1138, %v1278
    %v1285 = vadd.f32 %v1139, %v1280
    %v1286 = vxor.u32 %v1282, 2147483648
    %v1287 = vxor.u32 %v1283, 2147483648
    %v1288 = vxor.u32 %v1284, 2147483648
    %v1289 = vmul.f32 %v1286, 1.442695
    %v1290 = vpow.pop %v1289
    %v1291 = vmul.f32 %v1287, 1.442695
    %v1292 = vpow.pop %v1291
    %v1293 = vmul.f32 %v1288, 1.442695
    %v1294 = vpow.pop %v1293
    %v1295 = vadd.f32 %v1290, 1.0
    %v1296 = vadd.f32 %v1292, 1.0
    %v1297 = vadd.f32 %v1294, 1.0
    %v1298 = vrcp.pop %v1295
    %v1299 = vmul.f32 1.0, %v1298
    %v1300 = vrcp.pop %v1296
    %v1301 = vmul.f32 1.0, %v1300
    %v1302 = vrcp.pop %v1297
    %v1303 = vmul.f32 1.0, %v1302
    %v1304 = vtanh.pop %v1285
    %v1305 = vmul.f32 %v1301, %v1128
    %v1306 = vmul.f32 %v1299, %v1304
    %v1307 = vadd.f32 %v1305, %v1306
    %v1308 = vtanh.pop %v1307
    %v1309 = vmul.f32 %v1303, %v1308
    %s1310 = scalar_lea.vmem [#allocation8], 24
    %1311 = vst [vmem:[%s1310] sm:$0xff] %v1309
    %s1312 = smul.u32 4, 4
    %s1313 = smul.addr %s1312, 8
    %s1314 = scalar_lea.vmem [#allocation4], %s1313
    %v1315 = vld [vmem:[%s1314] sm:$0xff]
    %v1316 = vld [vmem:[%s1314 + $0x8] sm:$0xff]
    %v1317 = vld [vmem:[%s1314 + $0x10] sm:$0xff]
    %v1318 = vld [vmem:[%s1314 + $0x18] sm:$0xff]
    %1319 = vmatprep.subr.mxu0 %v532
    %1320 = vmatpush1.msra.mxu0 %v531
    %1321 = vmatprep.subr.mxu0 %v536
    %1322 = vmatpush1.msra.mxu0 %v535
    %1323 = vmatprep.subr.mxu0 %v540
    %1324 = vmatpush1.msra.mxu0 %v539
    %1325 = vmatprep.subr.mxu0 %v544
    %1326 = vmatpush1.msra.mxu0 %v543
    %1327 = vmatprep.subr.mxu0 %v548
    %1328 = vmatpush1.msra.mxu0 %v547
    %1329 = vmatprep.subr.mxu0 %v552
    %1330 = vmatpush1.msra.mxu0 %v551
    %1331 = vmatprep.subr.mxu0 %v556
    %1332 = vmatpush1.msra.mxu0 %v555
    %1333 = vmatprep.subr.mxu0 %v560
    %1334 = vmatpush1.msra.mxu0 %v559
    %1335 = vmatprep.subr.mxu0 %v564
    %1336 = vmatpush1.msra.mxu0 %v563
    %1337 = vmatprep.subr.mxu0 %v568
    %1338 = vmatpush1.msra.mxu0 %v567
    %1339 = vmatprep.subr.mxu0 %v572
    %1340 = vmatpush1.msra.mxu0 %v571
    %1341 = vmatprep.subr.mxu0 %v576
    %1342 = vmatpush1.msra.mxu0 %v575
    %1343 = vmatprep.subr.mxu0 %v580
    %1344 = vmatpush1.msra.mxu0 %v579
    %1345 = vmatprep.subr.mxu0 %v584
    %1346 = vmatpush1.msra.mxu0 %v583
    %1347 = vmatprep.subr.mxu0 %v588
    %1348 = vmatpush1.msra.mxu0 %v587
    %1349 = vmatprep.subr.mxu0 %v592
    %1350 = vmatpush1.msra.mxu0 %v591
    %1351 = vmatprep.subr.mxu0 0.0
    %1352 = vmatpush1.msra.mxu0 0.0
    %1353 = vmatprep.subr.mxu0 0.0
    %1354 = vmatpush1.msra.mxu0 0.0
    %1355 = vmatprep.subr.mxu0 0.0
    %1356 = vmatpush1.msra.mxu0 0.0
    %1357 = vmatprep.subr.mxu0 0.0
    %1358 = vmatpush1.msra.mxu0 0.0
    %1359 = vmatprep.subr.mxu0 0.0
    %1360 = vmatpush1.msra.mxu0 0.0
    %1361 = vmatprep.subr.mxu0 0.0
    %1362 = vmatpush1.msra.mxu0 0.0
    %1363 = vmatprep.subr.mxu0 0.0
    %1364 = vmatpush1.msra.mxu0 0.0
    %1365 = vmatprep.subr.mxu0 0.0
    %1366 = vmatpush1.msra.mxu0 0.0
    %1367 = vmatprep.subr.mxu0 0.0
    %1368 = vmatpush1.msra.mxu0 0.0
    %1369 = vmatprep.subr.mxu0 0.0
    %1370 = vmatpush1.msra.mxu0 0.0
    %1371 = vmatprep.subr.mxu0 0.0
    %1372 = vmatpush1.msra.mxu0 0.0
    %1373 = vmatprep.subr.mxu0 0.0
    %1374 = vmatpush1.msra.mxu0 0.0
    %1375 = vmatprep.subr.mxu0 0.0
    %1376 = vmatpush1.msra.mxu0 0.0
    %1377 = vmatprep.subr.mxu0 0.0
    %1378 = vmatpush1.msra.mxu0 0.0
    %1379 = vmatprep.subr.mxu0 0.0
    %1380 = vmatpush1.msra.mxu0 0.0
    %1381 = vmatprep.subr.mxu0 0.0
    %1382 = vmatpush1.msra.mxu0 0.0
    %1383 = vmatprep.mubr.f32.mxu0 0.0
    %1384 = vmatmul.mubr.f32.gmra.mrb[0].mxu0 %v1309
    %v1385 = vpop.f32.mrb[0].mxu0
    %v1386 = vadd.f32 0.0, %v1385
    %v1387 = vpop.f32.mrb[0].mxu0
    %v1388 = vadd.f32 0.0, %v1387
    %1389 = vdwg.mxu0
    %1390 = vmatprep.subr.mxu0 %v534
    %1391 = vmatpush1.msra.mxu0 %v533
    %1392 = vmatprep.subr.mxu0 %v538
    %1393 = vmatpush1.msra.mxu0 %v537
    %1394 = vmatprep.subr.mxu0 %v542
    %1395 = vmatpush1.msra.mxu0 %v541
    %1396 = vmatprep.subr.mxu0 %v546
    %1397 = vmatpush1.msra.mxu0 %v545
    %1398 = vmatprep.subr.mxu0 %v550
    %1399 = vmatpush1.msra.mxu0 %v549
    %1400 = vmatprep.subr.mxu0 %v554
    %1401 = vmatpush1.msra.mxu0 %v553
    %1402 = vmatprep.subr.mxu0 %v558
    %1403 = vmatpush1.msra.mxu0 %v557
    %1404 = vmatprep.subr.mxu0 %v562
    %1405 = vmatpush1.msra.mxu0 %v561
    %1406 = vmatprep.subr.mxu0 %v566
    %1407 = vmatpush1.msra.mxu0 %v565
    %1408 = vmatprep.subr.mxu0 %v570
    %1409 = vmatpush1.msra.mxu0 %v569
    %1410 = vmatprep.subr.mxu0 %v574
    %1411 = vmatpush1.msra.mxu0 %v573
    %1412 = vmatprep.subr.mxu0 %v578
    %1413 = vmatpush1.msra.mxu0 %v577
    %1414 = vmatprep.subr.mxu0 %v582
    %1415 = vmatpush1.msra.mxu0 %v581
    %1416 = vmatprep.subr.mxu0 %v586
    %1417 = vmatpush1.msra.mxu0 %v585
    %1418 = vmatprep.subr.mxu0 %v590
    %1419 = vmatpush1.msra.mxu0 %v589
    %1420 = vmatprep.subr.mxu0 %v594
    %1421 = vmatpush1.msra.mxu0 %v593
    %1422 = vmatprep.subr.mxu0 0.0
    %1423 = vmatpush1.msra.mxu0 0.0
    %1424 = vmatprep.subr.mxu0 0.0
    %1425 = vmatpush1.msra.mxu0 0.0
    %1426 = vmatprep.subr.mxu0 0.0
    %1427 = vmatpush1.msra.mxu0 0.0
    %1428 = vmatprep.subr.mxu0 0.0
    %1429 = vmatpush1.msra.mxu0 0.0
    %1430 = vmatprep.subr.mxu0 0.0
    %1431 = vmatpush1.msra.mxu0 0.0
    %1432 = vmatprep.subr.mxu0 0.0
    %1433 = vmatpush1.msra.mxu0 0.0
    %1434 = vmatprep.subr.mxu0 0.0
    %1435 = vmatpush1.msra.mxu0 0.0
    %1436 = vmatprep.subr.mxu0 0.0
    %1437 = vmatpush1.msra.mxu0 0.0
    %1438 = vmatprep.subr.mxu0 0.0
    %1439 = vmatpush1.msra.mxu0 0.0
    %1440 = vmatprep.subr.mxu0 0.0
    %1441 = vmatpush1.msra.mxu0 0.0
    %1442 = vmatprep.subr.mxu0 0.0
    %1443 = vmatpush1.msra.mxu0 0.0
    %1444 = vmatprep.subr.mxu0 0.0
    %1445 = vmatpush1.msra.mxu0 0.0
    %1446 = vmatprep.subr.mxu0 0.0
    %1447 = vmatpush1.msra.mxu0 0.0
    %1448 = vmatprep.subr.mxu0 0.0
    %1449 = vmatpush1.msra.mxu0 0.0
    %1450 = vmatprep.subr.mxu0 0.0
    %1451 = vmatpush1.msra.mxu0 0.0
    %1452 = vmatprep.subr.mxu0 0.0
    %1453 = vmatpush1.msra.mxu0 0.0
    %1454 = vmatprep.mubr.f32.mxu0 0.0
    %1455 = vmatmul.mubr.f32.gmra.mrb[0].mxu0 %v1309
    %v1456 = vpop.f32.mrb[0].mxu0
    %v1457 = vadd.f32 0.0, %v1456
    %v1458 = vpop.f32.mrb[0].mxu0
    %v1459 = vadd.f32 0.0, %v1458
    %1460 = vdwg.mxu0
    %v1461 = vadd.f32 %v1315, %v1386
    %v1462 = vadd.f32 %v1316, %v1388
    %v1463 = vadd.f32 %v1317, %v1457
    %v1464 = vadd.f32 %v1318, %v1459
    %v1465 = vxor.u32 %v1461, 2147483648
    %v1466 = vxor.u32 %v1462, 2147483648
    %v1467 = vxor.u32 %v1463, 2147483648
    %v1468 = vmul.f32 %v1465, 1.442695
    %v1469 = vpow.pop %v1468
    %v1470 = vmul.f32 %v1466, 1.442695
    %v1471 = vpow.pop %v1470
    %v1472 = vmul.f32 %v1467, 1.442695
    %v1473 = vpow.pop %v1472
    %v1474 = vadd.f32 %v1469, 1.0
    %v1475 = vadd.f32 %v1471, 1.0
    %v1476 = vadd.f32 %v1473, 1.0
    %v1477 = vrcp.pop %v1474
    %v1478 = vmul.f32 1.0, %v1477
    %v1479 = vrcp.pop %v1475
    %v1480 = vmul.f32 1.0, %v1479
    %v1481 = vrcp.pop %v1476
    %v1482 = vmul.f32 1.0, %v1481
    %v1483 = vtanh.pop %v1464
    %v1484 = vmul.f32 %v1480, %v1307
    %v1485 = vmul.f32 %v1478, %v1483
    %v1486 = vadd.f32 %v1484, %v1485
    %v1487 = vtanh.pop %v1486
    %v1488 = vmul.f32 %v1482, %v1487
    %s1489 = scalar_lea.vmem [#allocation8], 32
    %1490 = vst [vmem:[%s1489] sm:$0xff] %v1488
    %s1491 = smul.u32 5, 4
    %s1492 = smul.addr %s1491, 8
    %s1493 = scalar_lea.vmem [#allocation4], %s1492
    %v1494 = vld [vmem:[%s1493] sm:$0xff]
    %v1495 = vld [vmem:[%s1493 + $0x8] sm:$0xff]
    %v1496 = vld [vmem:[%s1493 + $0x10] sm:$0xff]
    %v1497 = vld [vmem:[%s1493 + $0x18] sm:$0xff]
    %1498 = vmatprep.subr.mxu0 %v532
    %1499 = vmatpush1.msra.mxu0 %v531
    %1500 = vmatprep.subr.mxu0 %v536
    %1501 = vmatpush1.msra.mxu0 %v535
    %1502 = vmatprep.subr.mxu0 %v540
    %1503 = vmatpush1.msra.mxu0 %v539
    %1504 = vmatprep.subr.mxu0 %v544
    %1505 = vmatpush1.msra.mxu0 %v543
    %1506 = vmatprep.subr.mxu0 %v548
    %1507 = vmatpush1.msra.mxu0 %v547
    %1508 = vmatprep.subr.mxu0 %v552
    %1509 = vmatpush1.msra.mxu0 %v551
    %1510 = vmatprep.subr.mxu0 %v556
    %1511 = vmatpush1.msra.mxu0 %v555
    %1512 = vmatprep.subr.mxu0 %v560
    %1513 = vmatpush1.msra.mxu0 %v559
    %1514 = vmatprep.subr.mxu0 %v564
    %1515 = vmatpush1.msra.mxu0 %v563
    %1516 = vmatprep.subr.mxu0 %v568
    %1517 = vmatpush1.msra.mxu0 %v567
    %1518 = vmatprep.subr.mxu0 %v572
    %1519 = vmatpush1.msra.mxu0 %v571
    %1520 = vmatprep.subr.mxu0 %v576
    %1521 = vmatpush1.msra.mxu0 %v575
    %1522 = vmatprep.subr.mxu0 %v580
    %1523 = vmatpush1.msra.mxu0 %v579
    %1524 = vmatprep.subr.mxu0 %v584
    %1525 = vmatpush1.msra.mxu0 %v583
    %1526 = vmatprep.subr.mxu0 %v588
    %1527 = vmatpush1.msra.mxu0 %v587
    %1528 = vmatprep.subr.mxu0 %v592
    %1529 = vmatpush1.msra.mxu0 %v591
    %1530 = vmatprep.subr.mxu0 0.0
    %1531 = vmatpush1.msra.mxu0 0.0
    %1532 = vmatprep.subr.mxu0 0.0
    %1533 = vmatpush1.msra.mxu0 0.0
    %1534 = vmatprep.subr.mxu0 0.0
    %1535 = vmatpush1.msra.mxu0 0.0
    %1536 = vmatprep.subr.mxu0 0.0
    %1537 = vmatpush1.msra.mxu0 0.0
    %1538 = vmatprep.subr.mxu0 0.0
    %1539 = vmatpush1.msra.mxu0 0.0
    %1540 = vmatprep.subr.mxu0 0.0
    %1541 = vmatpush1.msra.mxu0 0.0
    %1542 = vmatprep.subr.mxu0 0.0
    %1543 = vmatpush1.msra.mxu0 0.0
    %1544 = vmatprep.subr.mxu0 0.0
    %1545 = vmatpush1.msra.mxu0 0.0
    %1546 = vmatprep.subr.mxu0 0.0
    %1547 = vmatpush1.msra.mxu0 0.0
    %1548 = vmatprep.subr.mxu0 0.0
    %1549 = vmatpush1.msra.mxu0 0.0
    %1550 = vmatprep.subr.mxu0 0.0
    %1551 = vmatpush1.msra.mxu0 0.0
    %1552 = vmatprep.subr.mxu0 0.0
    %1553 = vmatpush1.msra.mxu0 0.0
    %1554 = vmatprep.subr.mxu0 0.0
    %1555 = vmatpush1.msra.mxu0 0.0
    %1556 = vmatprep.subr.mxu0 0.0
    %1557 = vmatpush1.msra.mxu0 0.0
    %1558 = vmatprep.subr.mxu0 0.0
    %1559 = vmatpush1.msra.mxu0 0.0
    %1560 = vmatprep.subr.mxu0 0.0
    %1561 = vmatpush1.msra.mxu0 0.0
    %1562 = vmatprep.mubr.f32.mxu0 0.0
    %1563 = vmatmul.mubr.f32.gmra.mrb[0].mxu0 %v1488
    %v1564 = vpop.f32.mrb[0].mxu0
    %v1565 = vadd.f32 0.0, %v1564
    %v1566 = vpop.f32.mrb[0].mxu0
    %v1567 = vadd.f32 0.0, %v1566
    %1568 = vdwg.mxu0
    %1569 = vmatprep.subr.mxu0 %v534
    %1570 = vmatpush1.msra.mxu0 %v533
    %1571 = vmatprep.subr.mxu0 %v538
    %1572 = vmatpush1.msra.mxu0 %v537
    %1573 = vmatprep.subr.mxu0 %v542
    %1574 = vmatpush1.msra.mxu0 %v541
    %1575 = vmatprep.subr.mxu0 %v546
    %1576 = vmatpush1.msra.mxu0 %v545
    %1577 = vmatprep.subr.mxu0 %v550
    %1578 = vmatpush1.msra.mxu0 %v549
    %1579 = vmatprep.subr.mxu0 %v554
    %1580 = vmatpush1.msra.mxu0 %v553
    %1581 = vmatprep.subr.mxu0 %v558
    %1582 = vmatpush1.msra.mxu0 %v557
    %1583 = vmatprep.subr.mxu0 %v562
    %1584 = vmatpush1.msra.mxu0 %v561
    %1585 = vmatprep.subr.mxu0 %v566
    %1586 = vmatpush1.msra.mxu0 %v565
    %1587 = vmatprep.subr.mxu0 %v570
    %1588 = vmatpush1.msra.mxu0 %v569
    %1589 = vmatprep.subr.mxu0 %v574
    %1590 = vmatpush1.msra.mxu0 %v573
    %1591 = vmatprep.subr.mxu0 %v578
    %1592 = vmatpush1.msra.mxu0 %v577
    %1593 = vmatprep.subr.mxu0 %v582
    %1594 = vmatpush1.msra.mxu0 %v581
    %1595 = vmatprep.subr.mxu0 %v586
    %1596 = vmatpush1.msra.mxu0 %v585
    %1597 = vmatprep.subr.mxu0 %v590
    %1598 = vmatpush1.msra.mxu0 %v589
    %1599 = vmatprep.subr.mxu0 %v594
    %1600 = vmatpush1.msra.mxu0 %v593
    %1601 = vmatprep.subr.mxu0 0.0
    %1602 = vmatpush1.msra.mxu0 0.0
    %1603 = vmatprep.subr.mxu0 0.0
    %1604 = vmatpush1.msra.mxu0 0.0
    %1605 = vmatprep.subr.mxu0 0.0
    %1606 = vmatpush1.msra.mxu0 0.0
    %1607 = vmatprep.subr.mxu0 0.0
    %1608 = vmatpush1.msra.mxu0 0.0
    %1609 = vmatprep.subr.mxu0 0.0
    %1610 = vmatpush1.msra.mxu0 0.0
    %1611 = vmatprep.subr.mxu0 0.0
    %1612 = vmatpush1.msra.mxu0 0.0
    %1613 = vmatprep.subr.mxu0 0.0
    %1614 = vmatpush1.msra.mxu0 0.0
    %1615 = vmatprep.subr.mxu0 0.0
    %1616 = vmatpush1.msra.mxu0 0.0
    %1617 = vmatprep.subr.mxu0 0.0
    %1618 = vmatpush1.msra.mxu0 0.0
    %1619 = vmatprep.subr.mxu0 0.0
    %1620 = vmatpush1.msra.mxu0 0.0
    %1621 = vmatprep.subr.mxu0 0.0
    %1622 = vmatpush1.msra.mxu0 0.0
    %1623 = vmatprep.subr.mxu0 0.0
    %1624 = vmatpush1.msra.mxu0 0.0
    %1625 = vmatprep.subr.mxu0 0.0
    %1626 = vmatpush1.msra.mxu0 0.0
    %1627 = vmatprep.subr.mxu0 0.0
    %1628 = vmatpush1.msra.mxu0 0.0
    %1629 = vmatprep.subr.mxu0 0.0
    %1630 = vmatpush1.msra.mxu0 0.0
    %1631 = vmatprep.subr.mxu0 0.0
    %1632 = vmatpush1.msra.mxu0 0.0
    %1633 = vmatprep.mubr.f32.mxu0 0.0
    %1634 = vmatmul.mubr.f32.gmra.mrb[0].mxu0 %v1488
    %v1635 = vpop.f32.mrb[0].mxu0
    %v1636 = vadd.f32 0.0, %v1635
    %v1637 = vpop.f32.mrb[0].mxu0
    %v1638 = vadd.f32 0.0, %v1637
    %1639 = vdwg.mxu0
    %v1640 = vadd.f32 %v1494, %v1565
    %v1641 = vadd.f32 %v1495, %v1567
    %v1642 = vadd.f32 %v1496, %v1636
    %v1643 = vadd.f32 %v1497, %v1638
    %v1644 = vxor.u32 %v1640, 2147483648
    %v1645 = vxor.u32 %v1641, 2147483648
    %v1646 = vxor.u32 %v1642, 2147483648
    %v1647 = vmul.f32 %v1644, 1.442695
    %v1648 = vpow.pop %v1647
    %v1649 = vmul.f32 %v1645, 1.442695
    %v1650 = vpow.pop %v1649
    %v1651 = vmul.f32 %v1646, 1.442695
    %v1652 = vpow.pop %v1651
    %v1653 = vadd.f32 %v1648, 1.0
    %v1654 = vadd.f32 %v1650, 1.0
    %v1655 = vadd.f32 %v1652, 1.0
    %v1656 = vrcp.pop %v1653
    %v1657 = vmul.f32 1.0, %v1656
    %v1658 = vrcp.pop %v1654
    %v1659 = vmul.f32 1.0, %v1658
    %v1660 = vrcp.pop %v1655
    %v1661 = vmul.f32 1.0, %v1660
    %v1662 = vtanh.pop %v1643
    %v1663 = vmul.f32 %v1659, %v1486
    %v1664 = vmul.f32 %v1657, %v1662
    %v1665 = vadd.f32 %v1663, %v1664
    %v1666 = vtanh.pop %v1665
    %v1667 = vmul.f32 %v1661, %v1666
    %s1668 = scalar_lea.vmem [#allocation8], 40
    %1669 = vst [vmem:[%s1668] sm:$0xff] %v1667
    %s1670 = smul.u32 6, 4
    %s1671 = smul.addr %s1670, 8
    %s1672 = scalar_lea.vmem [#allocation4], %s1671
    %v1673 = vld [vmem:[%s1672] sm:$0xff]
    %v1674 = vld [vmem:[%s1672 + $0x8] sm:$0xff]
    %v1675 = vld [vmem:[%s1672 + $0x10] sm:$0xff]
    %v1676 = vld [vmem:[%s1672 + $0x18] sm:$0xff]
    %1677 = vmatprep.subr.mxu0 %v532
    %1678 = vmatpush1.msra.mxu0 %v531
    %1679 = vmatprep.subr.mxu0 %v536
    %1680 = vmatpush1.msra.mxu0 %v535
    %1681 = vmatprep.subr.mxu0 %v540
    %1682 = vmatpush1.msra.mxu0 %v539
    %1683 = vmatprep.subr.mxu0 %v544
    %1684 = vmatpush1.msra.mxu0 %v543
    %1685 = vmatprep.subr.mxu0 %v548
    %1686 = vmatpush1.msra.mxu0 %v547
    %1687 = vmatprep.subr.mxu0 %v552
    %1688 = vmatpush1.msra.mxu0 %v551
    %1689 = vmatprep.subr.mxu0 %v556
    %1690 = vmatpush1.msra.mxu0 %v555
    %1691 = vmatprep.subr.mxu0 %v560
    %1692 = vmatpush1.msra.mxu0 %v559
    %1693 = vmatprep.subr.mxu0 %v564
    %1694 = vmatpush1.msra.mxu0 %v563
    %1695 = vmatprep.subr.mxu0 %v568
    %1696 = vmatpush1.msra.mxu0 %v567
    %1697 = vmatprep.subr.mxu0 %v572
    %1698 = vmatpush1.msra.mxu0 %v571
    %1699 = vmatprep.subr.mxu0 %v576
    %1700 = vmatpush1.msra.mxu0 %v575
    %1701 = vmatprep.subr.mxu0 %v580
    %1702 = vmatpush1.msra.mxu0 %v579
    %1703 = vmatprep.subr.mxu0 %v584
    %1704 = vmatpush1.msra.mxu0 %v583
    %1705 = vmatprep.subr.mxu0 %v588
    %1706 = vmatpush1.msra.mxu0 %v587
    %1707 = vmatprep.subr.mxu0 %v592
    %1708 = vmatpush1.msra.mxu0 %v591
    %1709 = vmatprep.subr.mxu0 0.0
    %1710 = vmatpush1.msra.mxu0 0.0
    %1711 = vmatprep.subr.mxu0 0.0
    %1712 = vmatpush1.msra.mxu0 0.0
    %1713 = vmatprep.subr.mxu0 0.0
    %1714 = vmatpush1.msra.mxu0 0.0
    %1715 = vmatprep.subr.mxu0 0.0
    %1716 = vmatpush1.msra.mxu0 0.0
    %1717 = vmatprep.subr.mxu0 0.0
    %1718 = vmatpush1.msra.mxu0 0.0
    %1719 = vmatprep.subr.mxu0 0.0
    %1720 = vmatpush1.msra.mxu0 0.0
    %1721 = vmatprep.subr.mxu0 0.0
    %1722 = vmatpush1.msra.mxu0 0.0
    %1723 = vmatprep.subr.mxu0 0.0
    %1724 = vmatpush1.msra.mxu0 0.0
    %1725 = vmatprep.subr.mxu0 0.0
    %1726 = vmatpush1.msra.mxu0 0.0
    %1727 = vmatprep.subr.mxu0 0.0
    %1728 = vmatpush1.msra.mxu0 0.0
    %1729 = vmatprep.subr.mxu0 0.0
    %1730 = vmatpush1.msra.mxu0 0.0
    %1731 = vmatprep.subr.mxu0 0.0
    %1732 = vmatpush1.msra.mxu0 0.0
    %1733 = vmatprep.subr.mxu0 0.0
    %1734 = vmatpush1.msra.mxu0 0.0
    %1735 = vmatprep.subr.mxu0 0.0
    %1736 = vmatpush1.msra.mxu0 0.0
    %1737 = vmatprep.subr.mxu0 0.0
    %1738 = vmatpush1.msra.mxu0 0.0
    %1739 = vmatprep.subr.mxu0 0.0
    %1740 = vmatpush1.msra.mxu0 0.0
    %1741 = vmatprep.mubr.f32.mxu0 0.0
    %1742 = vmatmul.mubr.f32.gmra.mrb[0].mxu0 %v1667
    %v1743 = vpop.f32.mrb[0].mxu0
    %v1744 = vadd.f32 0.0, %v1743
    %v1745 = vpop.f32.mrb[0].mxu0
    %v1746 = vadd.f32 0.0, %v1745
    %1747 = vdwg.mxu0
    %1748 = vmatprep.subr.mxu0 %v534
    %1749 = vmatpush1.msra.mxu0 %v533
    %1750 = vmatprep.subr.mxu0 %v538
    %1751 = vmatpush1.msra.mxu0 %v537
    %1752 = vmatprep.subr.mxu0 %v542
    %1753 = vmatpush1.msra.mxu0 %v541
    %1754 = vmatprep.subr.mxu0 %v546
    %1755 = vmatpush1.msra.mxu0 %v545
    %1756 = vmatprep.subr.mxu0 %v550
    %1757 = vmatpush1.msra.mxu0 %v549
    %1758 = vmatprep.subr.mxu0 %v554
    %1759 = vmatpush1.msra.mxu0 %v553
    %1760 = vmatprep.subr.mxu0 %v558
    %1761 = vmatpush1.msra.mxu0 %v557
    %1762 = vmatprep.subr.mxu0 %v562
    %1763 = vmatpush1.msra.mxu0 %v561
    %1764 = vmatprep.subr.mxu0 %v566
    %1765 = vmatpush1.msra.mxu0 %v565
    %1766 = vmatprep.subr.mxu0 %v570
    %1767 = vmatpush1.msra.mxu0 %v569
    %1768 = vmatprep.subr.mxu0 %v574
    %1769 = vmatpush1.msra.mxu0 %v573
    %1770 = vmatprep.subr.mxu0 %v578
    %1771 = vmatpush1.msra.mxu0 %v577
    %1772 = vmatprep.subr.mxu0 %v582
    %1773 = vmatpush1.msra.mxu0 %v581
    %1774 = vmatprep.subr.mxu0 %v586
    %1775 = vmatpush1.msra.mxu0 %v585
    %1776 = vmatprep.subr.mxu0 %v590
    %1777 = vmatpush1.msra.mxu0 %v589
    %1778 = vmatprep.subr.mxu0 %v594
    %1779 = vmatpush1.msra.mxu0 %v593
    %1780 = vmatprep.subr.mxu0 0.0
    %1781 = vmatpush1.msra.mxu0 0.0
    %1782 = vmatprep.subr.mxu0 0.0
    %1783 = vmatpush1.msra.mxu0 0.0
    %1784 = vmatprep.subr.mxu0 0.0
    %1785 = vmatpush1.msra.mxu0 0.0
    %1786 = vmatprep.subr.mxu0 0.0
    %1787 = vmatpush1.msra.mxu0 0.0
    %1788 = vmatprep.subr.mxu0 0.0
    %1789 = vmatpush1.msra.mxu0 0.0
    %1790 = vmatprep.subr.mxu0 0.0
    %1791 = vmatpush1.msra.mxu0 0.0
    %1792 = vmatprep.subr.mxu0 0.0
    %1793 = vmatpush1.msra.mxu0 0.0
    %1794 = vmatprep.subr.mxu0 0.0
    %1795 = vmatpush1.msra.mxu0 0.0
    %1796 = vmatprep.subr.mxu0 0.0
    %1797 = vmatpush1.msra.mxu0 0.0
    %1798 = vmatprep.subr.mxu0 0.0
    %1799 = vmatpush1.msra.mxu0 0.0
    %1800 = vmatprep.subr.mxu0 0.0
    %1801 = vmatpush1.msra.mxu0 0.0
    %1802 = vmatprep.subr.mxu0 0.0
    %1803 = vmatpush1.msra.mxu0 0.0
    %1804 = vmatprep.subr.mxu0 0.0
    %1805 = vmatpush1.msra.mxu0 0.0
    %1806 = vmatprep.subr.mxu0 0.0
    %1807 = vmatpush1.msra.mxu0 0.0
    %1808 = vmatprep.subr.mxu0 0.0
    %1809 = vmatpush1.msra.mxu0 0.0
    %1810 = vmatprep.subr.mxu0 0.0
    %1811 = vmatpush1.msra.mxu0 0.0
    %1812 = vmatprep.mubr.f32.mxu0 0.0
    %1813 = vmatmul.mubr.f32.gmra.mrb[0].mxu0 %v1667
    %v1814 = vpop.f32.mrb[0].mxu0
    %v1815 = vadd.f32 0.0, %v1814
    %v1816 = vpop.f32.mrb[0].mxu0
    %v1817 = vadd.f32 0.0, %v1816
    %1818 = vdwg.mxu0
    %v1819 = vadd.f32 %v1673, %v1744
    %v1820 = vadd.f32 %v1674, %v1746
    %v1821 = vadd.f32 %v1675, %v1815
    %v1822 = vadd.f32 %v1676, %v1817
    %v1823 = vxor.u32 %v1819, 2147483648
    %v1824 = vxor.u32 %v1820, 2147483648
    %v1825 = vxor.u32 %v1821, 2147483648
    %v1826 = vmul.f32 %v1823, 1.442695
    %v1827 = vpow.pop %v1826
    %v1828 = vmul.f32 %v1824, 1.442695
    %v1829 = vpow.pop %v1828
    %v1830 = vmul.f32 %v1825, 1.442695
    %v1831 = vpow.pop %v1830
    %v1832 = vadd.f32 %v1827, 1.0
    %v1833 = vadd.f32 %v1829, 1.0
    %v1834 = vadd.f32 %v1831, 1.0
    %v1835 = vrcp.pop %v1832
    %v1836 = vmul.f32 1.0, %v1835
    %v1837 = vrcp.pop %v1833
    %v1838 = vmul.f32 1.0, %v1837
    %v1839 = vrcp.pop %v1834
    %v1840 = vmul.f32 1.0, %v1839
    %v1841 = vtanh.pop %v1822
    %v1842 = vmul.f32 %v1838, %v1665
    %v1843 = vmul.f32 %v1836, %v1841
    %v1844 = vadd.f32 %v1842, %v1843
    %v1845 = vtanh.pop %v1844
    %v1846 = vmul.f32 %v1840, %v1845
    %s1847 = scalar_lea.vmem [#allocation8], 48
    %1848 = vst [vmem:[%s1847] sm:$0xff] %v1846
    %s1849 = smul.u32 7, 4
    %s1850 = smul.addr %s1849, 8
    %s1851 = scalar_lea.vmem [#allocation4], %s1850
    %v1852 = vld [vmem:[%s1851] sm:$0xff]
    %v1853 = vld [vmem:[%s1851 + $0x8] sm:$0xff]
    %v1854 = vld [vmem:[%s1851 + $0x10] sm:$0xff]
    %v1855 = vld [vmem:[%s1851 + $0x18] sm:$0xff]
    %1856 = vmatprep.subr.mxu0 %v532
    %1857 = vmatpush1.msra.mxu0 %v531
    %1858 = vmatprep.subr.mxu0 %v536
    %1859 = vmatpush1.msra.mxu0 %v535
    %1860 = vmatprep.subr.mxu0 %v540
    %1861 = vmatpush1.msra.mxu0 %v539
    %1862 = vmatprep.subr.mxu0 %v544
    %1863 = vmatpush1.msra.mxu0 %v543
    %1864 = vmatprep.subr.mxu0 %v548
    %1865 = vmatpush1.msra.mxu0 %v547
    %1866 = vmatprep.subr.mxu0 %v552
    %1867 = vmatpush1.msra.mxu0 %v551
    %1868 = vmatprep.subr.mxu0 %v556
    %1869 = vmatpush1.msra.mxu0 %v555
    %1870 = vmatprep.subr.mxu0 %v560
    %1871 = vmatpush1.msra.mxu0 %v559
    %1872 = vmatprep.subr.mxu0 %v564
    %1873 = vmatpush1.msra.mxu0 %v563
    %1874 = vmatprep.subr.mxu0 %v568
    %1875 = vmatpush1.msra.mxu0 %v567
    %1876 = vmatprep.subr.mxu0 %v572
    %1877 = vmatpush1.msra.mxu0 %v571
    %1878 = vmatprep.subr.mxu0 %v576
    %1879 = vmatpush1.msra.mxu0 %v575
    %1880 = vmatprep.subr.mxu0 %v580
    %1881 = vmatpush1.msra.mxu0 %v579
    %1882 = vmatprep.subr.mxu0 %v584
    %1883 = vmatpush1.msra.mxu0 %v583
    %1884 = vmatprep.subr.mxu0 %v588
    %1885 = vmatpush1.msra.mxu0 %v587
    %1886 = vmatprep.subr.mxu0 %v592
    %1887 = vmatpush1.msra.mxu0 %v591
    %1888 = vmatprep.subr.mxu0 0.0
    %1889 = vmatpush1.msra.mxu0 0.0
    %1890 = vmatprep.subr.mxu0 0.0
    %1891 = vmatpush1.msra.mxu0 0.0
    %1892 = vmatprep.subr.mxu0 0.0
    %1893 = vmatpush1.msra.mxu0 0.0
    %1894 = vmatprep.subr.mxu0 0.0
    %1895 = vmatpush1.msra.mxu0 0.0
    %1896 = vmatprep.subr.mxu0 0.0
    %1897 = vmatpush1.msra.mxu0 0.0
    %1898 = vmatprep.subr.mxu0 0.0
    %1899 = vmatpush1.msra.mxu0 0.0
    %1900 = vmatprep.subr.mxu0 0.0
    %1901 = vmatpush1.msra.mxu0 0.0
    %1902 = vmatprep.subr.mxu0 0.0
    %1903 = vmatpush1.msra.mxu0 0.0
    %1904 = vmatprep.subr.mxu0 0.0
    %1905 = vmatpush1.msra.mxu0 0.0
    %1906 = vmatprep.subr.mxu0 0.0
    %1907 = vmatpush1.msra.mxu0 0.0
    %1908 = vmatprep.subr.mxu0 0.0
    %1909 = vmatpush1.msra.mxu0 0.0
    %1910 = vmatprep.subr.mxu0 0.0
    %1911 = vmatpush1.msra.mxu0 0.0
    %1912 = vmatprep.subr.mxu0 0.0
    %1913 = vmatpush1.msra.mxu0 0.0
    %1914 = vmatprep.subr.mxu0 0.0
    %1915 = vmatpush1.msra.mxu0 0.0
    %1916 = vmatprep.subr.mxu0 0.0
    %1917 = vmatpush1.msra.mxu0 0.0
    %1918 = vmatprep.subr.mxu0 0.0
    %1919 = vmatpush1.msra.mxu0 0.0
    %1920 = vmatprep.mubr.f32.mxu0 0.0
    %1921 = vmatmul.mubr.f32.gmra.mrb[0].mxu0 %v1846
    %v1922 = vpop.f32.mrb[0].mxu0
    %v1923 = vadd.f32 0.0, %v1922
    %v1924 = vpop.f32.mrb[0].mxu0
    %v1925 = vadd.f32 0.0, %v1924
    %1926 = vdwg.mxu0
    %1927 = vmatprep.subr.mxu0 %v534
    %1928 = vmatpush1.msra.mxu0 %v533
    %1929 = vmatprep.subr.mxu0 %v538
    %1930 = vmatpush1.msra.mxu0 %v537
    %1931 = vmatprep.subr.mxu0 %v542
    %1932 = vmatpush1.msra.mxu0 %v541
    %1933 = vmatprep.subr.mxu0 %v546
    %1934 = vmatpush1.msra.mxu0 %v545
    %1935 = vmatprep.subr.mxu0 %v550
    %1936 = vmatpush1.msra.mxu0 %v549
    %1937 = vmatprep.subr.mxu0 %v554
    %1938 = vmatpush1.msra.mxu0 %v553
    %1939 = vmatprep.subr.mxu0 %v558
    %1940 = vmatpush1.msra.mxu0 %v557
    %1941 = vmatprep.subr.mxu0 %v562
    %1942 = vmatpush1.msra.mxu0 %v561
    %1943 = vmatprep.subr.mxu0 %v566
    %1944 = vmatpush1.msra.mxu0 %v565
    %1945 = vmatprep.subr.mxu0 %v570
    %1946 = vmatpush1.msra.mxu0 %v569
    %1947 = vmatprep.subr.mxu0 %v574
    %1948 = vmatpush1.msra.mxu0 %v573
    %1949 = vmatprep.subr.mxu0 %v578
    %1950 = vmatpush1.msra.mxu0 %v577
    %1951 = vmatprep.subr.mxu0 %v582
    %1952 = vmatpush1.msra.mxu0 %v581
    %1953 = vmatprep.subr.mxu0 %v586
    %1954 = vmatpush1.msra.mxu0 %v585
    %1955 = vmatprep.subr.mxu0 %v590
    %1956 = vmatpush1.msra.mxu0 %v589
    %1957 = vmatprep.subr.mxu0 %v594
    %1958 = vmatpush1.msra.mxu0 %v593
    %1959 = vmatprep.subr.mxu0 0.0
    %1960 = vmatpush1.msra.mxu0 0.0
    %1961 = vmatprep.subr.mxu0 0.0
    %1962 = vmatpush1.msra.mxu0 0.0
    %1963 = vmatprep.subr.mxu0 0.0
    %1964 = vmatpush1.msra.mxu0 0.0
    %1965 = vmatprep.subr.mxu0 0.0
    %1966 = vmatpush1.msra.mxu0 0.0
    %1967 = vmatprep.subr.mxu0 0.0
    %1968 = vmatpush1.msra.mxu0 0.0
    %1969 = vmatprep.subr.mxu0 0.0
    %1970 = vmatpush1.msra.mxu0 0.0
    %1971 = vmatprep.subr.mxu0 0.0
    %1972 = vmatpush1.msra.mxu0 0.0
    %1973 = vmatprep.subr.mxu0 0.0
    %1974 = vmatpush1.msra.mxu0 0.0
    %1975 = vmatprep.subr.mxu0 0.0
    %1976 = vmatpush1.msra.mxu0 0.0
    %1977 = vmatprep.subr.mxu0 0.0
    %1978 = vmatpush1.msra.mxu0 0.0
    %1979 = vmatprep.subr.mxu0 0.0
    %1980 = vmatpush1.msra.mxu0 0.0
    %1981 = vmatprep.subr.mxu0 0.0
    %1982 = vmatpush1.msra.mxu0 0.0
    %1983 = vmatprep.subr.mxu0 0.0
    %1984 = vmatpush1.msra.mxu0 0.0
    %1985 = vmatprep.subr.mxu0 0.0
    %1986 = vmatpush1.msra.mxu0 0.0
    %1987 = vmatprep.subr.mxu0 0.0
    %1988 = vmatpush1.msra.mxu0 0.0
    %1989 = vmatprep.subr.mxu0 0.0
    %1990 = vmatpush1.msra.mxu0 0.0
    %1991 = vmatprep.mubr.f32.mxu0 0.0
    %1992 = vmatmul.mubr.f32.gmra.mrb[0].mxu0 %v1846
    %v1993 = vpop.f32.mrb[0].mxu0
    %v1994 = vadd.f32 0.0, %v1993
    %v1995 = vpop.f32.mrb[0].mxu0
    %v1996 = vadd.f32 0.0, %v1995
    %1997 = vdwg.mxu0
    %v1998 = vadd.f32 %v1852, %v1923
    %v1999 = vadd.f32 %v1853, %v1925
    %v2000 = vadd.f32 %v1854, %v1994
    %v2001 = vadd.f32 %v1855, %v1996
    %v2002 = vxor.u32 %v1998, 2147483648
    %v2003 = vxor.u32 %v1999, 2147483648
    %v2004 = vxor.u32 %v2000, 2147483648
    %v2005 = vmul.f32 %v2002, 1.442695
    %v2006 = vpow.pop %v2005
    %v2007 = vmul.f32 %v2003, 1.442695
    %v2008 = vpow.pop %v2007
    %v2009 = vmul.f32 %v2004, 1.442695
    %v2010 = vpow.pop %v2009
    %v2011 = vadd.f32 %v2006, 1.0
    %v2012 = vadd.f32 %v2008, 1.0
    %v2013 = vadd.f32 %v2010, 1.0
    %v2014 = vrcp.pop %v2011
    %v2015 = vmul.f32 1.0, %v2014
    %v2016 = vrcp.pop %v2012
    %v2017 = vmul.f32 1.0, %v2016
    %v2018 = vrcp.pop %v2013
    %v2019 = vmul.f32 1.0, %v2018
    %v2020 = vtanh.pop %v2001
    %v2021 = vmul.f32 %v2017, %v1844
    %v2022 = vmul.f32 %v2015, %v2020
    %v2023 = vadd.f32 %v2021, %v2022
    %v2024 = vtanh.pop %v2023
    %v2025 = vmul.f32 %v2019, %v2024
    %s2026 = scalar_lea.vmem [#allocation8], 56
    %2027 = vst [vmem:[%s2026] sm:$0xff] %v2025
    %s2028 = smul.u32 8, 4
    %s2029 = smul.addr %s2028, 8
    %s2030 = scalar_lea.vmem [#allocation4], %s2029
    %v2031 = vld [vmem:[%s2030] sm:$0xff]
    %v2032 = vld [vmem:[%s2030 + $0x8] sm:$0xff]
    %v2033 = vld [vmem:[%s2030 + $0x10] sm:$0xff]
    %v2034 = vld [vmem:[%s2030 + $0x18] sm:$0xff]
    %2035 = vmatprep.subr.mxu0 %v532
    %2036 = vmatpush1.msra.mxu0 %v531
    %2037 = vmatprep.subr.mxu0 %v536
    %2038 = vmatpush1.msra.mxu0 %v535
    %2039 = vmatprep.subr.mxu0 %v540
    %2040 = vmatpush1.msra.mxu0 %v539
    %2041 = vmatprep.subr.mxu0 %v544
    %2042 = vmatpush1.msra.mxu0 %v543
    %2043 = vmatprep.subr.mxu0 %v548
    %2044 = vmatpush1.msra.mxu0 %v547
    %2045 = vmatprep.subr.mxu0 %v552
    %2046 = vmatpush1.msra.mxu0 %v551
    %2047 = vmatprep.subr.mxu0 %v556
    %2048 = vmatpush1.msra.mxu0 %v555
    %2049 = vmatprep.subr.mxu0 %v560
    %2050 = vmatpush1.msra.mxu0 %v559
    %2051 = vmatprep.subr.mxu0 %v564
    %2052 = vmatpush1.msra.mxu0 %v563
    %2053 = vmatprep.subr.mxu0 %v568
    %2054 = vmatpush1.msra.mxu0 %v567
    %2055 = vmatprep.subr.mxu0 %v572
    %2056 = vmatpush1.msra.mxu0 %v571
    %2057 = vmatprep.subr.mxu0 %v576
    %2058 = vmatpush1.msra.mxu0 %v575
    %2059 = vmatprep.subr.mxu0 %v580
    %2060 = vmatpush1.msra.mxu0 %v579
    %2061 = vmatprep.subr.mxu0 %v584
    %2062 = vmatpush1.msra.mxu0 %v583
    %2063 = vmatprep.subr.mxu0 %v588
    %2064 = vmatpush1.msra.mxu0 %v587
    %2065 = vmatprep.subr.mxu0 %v592
    %2066 = vmatpush1.msra.mxu0 %v591
    %2067 = vmatprep.subr.mxu0 0.0
    %2068 = vmatpush1.msra.mxu0 0.0
    %2069 = vmatprep.subr.mxu0 0.0
    %2070 = vmatpush1.msra.mxu0 0.0
    %2071 = vmatprep.subr.mxu0 0.0
    %2072 = vmatpush1.msra.mxu0 0.0
    %2073 = vmatprep.subr.mxu0 0.0
    %2074 = vmatpush1.msra.mxu0 0.0
    %2075 = vmatprep.subr.mxu0 0.0
    %2076 = vmatpush1.msra.mxu0 0.0
    %2077 = vmatprep.subr.mxu0 0.0
    %2078 = vmatpush1.msra.mxu0 0.0
    %2079 = vmatprep.subr.mxu0 0.0
    %2080 = vmatpush1.msra.mxu0 0.0
    %2081 = vmatprep.subr.mxu0 0.0
    %2082 = vmatpush1.msra.mxu0 0.0
    %2083 = vmatprep.subr.mxu0 0.0
    %2084 = vmatpush1.msra.mxu0 0.0
    %2085 = vmatprep.subr.mxu0 0.0
    %2086 = vmatpush1.msra.mxu0 0.0
    %2087 = vmatprep.subr.mxu0 0.0
    %2088 = vmatpush1.msra.mxu0 0.0
    %2089 = vmatprep.subr.mxu0 0.0
    %2090 = vmatpush1.msra.mxu0 0.0
    %2091 = vmatprep.subr.mxu0 0.0
    %2092 = vmatpush1.msra.mxu0 0.0
    %2093 = vmatprep.subr.mxu0 0.0
    %2094 = vmatpush1.msra.mxu0 0.0
    %2095 = vmatprep.subr.mxu0 0.0
    %2096 = vmatpush1.msra.mxu0 0.0
    %2097 = vmatprep.subr.mxu0 0.0
    %2098 = vmatpush1.msra.mxu0 0.0
    %2099 = vmatprep.mubr.f32.mxu0 0.0
    %2100 = vmatmul.mubr.f32.gmra.mrb[0].mxu0 %v2025
    %v2101 = vpop.f32.mrb[0].mxu0
    %v2102 = vadd.f32 0.0, %v2101
    %v2103 = vpop.f32.mrb[0].mxu0
    %v2104 = vadd.f32 0.0, %v2103
    %2105 = vdwg.mxu0
    %2106 = vmatprep.subr.mxu0 %v534
    %2107 = vmatpush1.msra.mxu0 %v533
    %2108 = vmatprep.subr.mxu0 %v538
    %2109 = vmatpush1.msra.mxu0 %v537
    %2110 = vmatprep.subr.mxu0 %v542
    %2111 = vmatpush1.msra.mxu0 %v541
    %2112 = vmatprep.subr.mxu0 %v546
    %2113 = vmatpush1.msra.mxu0 %v545
    %2114 = vmatprep.subr.mxu0 %v550
    %2115 = vmatpush1.msra.mxu0 %v549
    %2116 = vmatprep.subr.mxu0 %v554
    %2117 = vmatpush1.msra.mxu0 %v553
    %2118 = vmatprep.subr.mxu0 %v558
    %2119 = vmatpush1.msra.mxu0 %v557
    %2120 = vmatprep.subr.mxu0 %v562
    %2121 = vmatpush1.msra.mxu0 %v561
    %2122 = vmatprep.subr.mxu0 %v566
    %2123 = vmatpush1.msra.mxu0 %v565
    %2124 = vmatprep.subr.mxu0 %v570
    %2125 = vmatpush1.msra.mxu0 %v569
    %2126 = vmatprep.subr.mxu0 %v574
    %2127 = vmatpush1.msra.mxu0 %v573
    %2128 = vmatprep.subr.mxu0 %v578
    %2129 = vmatpush1.msra.mxu0 %v577
    %2130 = vmatprep.subr.mxu0 %v582
    %2131 = vmatpush1.msra.mxu0 %v581
    %2132 = vmatprep.subr.mxu0 %v586
    %2133 = vmatpush1.msra.mxu0 %v585
    %2134 = vmatprep.subr.mxu0 %v590
    %2135 = vmatpush1.msra.mxu0 %v589
    %2136 = vmatprep.subr.mxu0 %v594
    %2137 = vmatpush1.msra.mxu0 %v593
    %2138 = vmatprep.subr.mxu0 0.0
    %2139 = vmatpush1.msra.mxu0 0.0
    %2140 = vmatprep.subr.mxu0 0.0
    %2141 = vmatpush1.msra.mxu0 0.0
    %2142 = vmatprep.subr.mxu0 0.0
    %2143 = vmatpush1.msra.mxu0 0.0
    %2144 = vmatprep.subr.mxu0 0.0
    %2145 = vmatpush1.msra.mxu0 0.0
    %2146 = vmatprep.subr.mxu0 0.0
    %2147 = vmatpush1.msra.mxu0 0.0
    %2148 = vmatprep.subr.mxu0 0.0
    %2149 = vmatpush1.msra.mxu0 0.0
    %2150 = vmatprep.subr.mxu0 0.0
    %2151 = vmatpush1.msra.mxu0 0.0
    %2152 = vmatprep.subr.mxu0 0.0
    %2153 = vmatpush1.msra.mxu0 0.0
    %2154 = vmatprep.subr.mxu0 0.0
    %2155 = vmatpush1.msra.mxu0 0.0
    %2156 = vmatprep.subr.mxu0 0.0
    %2157 = vmatpush1.msra.mxu0 0.0
    %2158 = vmatprep.subr.mxu0 0.0
    %2159 = vmatpush1.msra.mxu0 0.0
    %2160 = vmatprep.subr.mxu0 0.0
    %2161 = vmatpush1.msra.mxu0 0.0
    %2162 = vmatprep.subr.mxu0 0.0
    %2163 = vmatpush1.msra.mxu0 0.0
    %2164 = vmatprep.subr.mxu0 0.0
    %2165 = vmatpush1.msra.mxu0 0.0
    %2166 = vmatprep.subr.mxu0 0.0
    %2167 = vmatpush1.msra.mxu0 0.0
    %2168 = vmatprep.subr.mxu0 0.0
    %2169 = vmatpush1.msra.mxu0 0.0
    %2170 = vmatprep.mubr.f32.mxu0 0.0
    %2171 = vmatmul.mubr.f32.gmra.mrb[0].mxu0 %v2025
    %v2172 = vpop.f32.mrb[0].mxu0
    %v2173 = vadd.f32 0.0, %v2172
    %v2174 = vpop.f32.mrb[0].mxu0
    %v2175 = vadd.f32 0.0, %v2174
    %2176 = vdwg.mxu0
    %v2177 = vadd.f32 %v2031, %v2102
    %v2178 = vadd.f32 %v2032, %v2104
    %v2179 = vadd.f32 %v2033, %v2173
    %v2180 = vadd.f32 %v2034, %v2175
    %v2181 = vxor.u32 %v2177, 2147483648
    %v2182 = vxor.u32 %v2178, 2147483648
    %v2183 = vxor.u32 %v2179, 2147483648
    %v2184 = vmul.f32 %v2181, 1.442695
    %v2185 = vpow.pop %v2184
    %v2186 = vmul.f32 %v2182, 1.442695
    %v2187 = vpow.pop %v2186
    %v2188 = vmul.f32 %v2183, 1.442695
    %v2189 = vpow.pop %v2188
    %v2190 = vadd.f32 %v2185, 1.0
    %v2191 = vadd.f32 %v2187, 1.0
    %v2192 = vadd.f32 %v2189, 1.0
    %v2193 = vrcp.pop %v2190
    %v2194 = vmul.f32 1.0, %v2193
    %v2195 = vrcp.pop %v2191
    %v2196 = vmul.f32 1.0, %v2195
    %v2197 = vrcp.pop %v2192
    %v2198 = vmul.f32 1.0, %v2197
    %v2199 = vtanh.pop %v2180
    %v2200 = vmul.f32 %v2196, %v2023
    %v2201 = vmul.f32 %v2194, %v2199
    %v2202 = vadd.f32 %v2200, %v2201
    %v2203 = vtanh.pop %v2202
    %v2204 = vmul.f32 %v2198, %v2203
    %s2205 = scalar_lea.vmem [#allocation8], 64
    %2206 = vst [vmem:[%s2205] sm:$0xff] %v2204
    %s2207 = smul.u32 9, 4
    %s2208 = smul.addr %s2207, 8
    %s2209 = scalar_lea.vmem [#allocation4], %s2208
    %v2210 = vld [vmem:[%s2209] sm:$0xff]
    %v2211 = vld [vmem:[%s2209 + $0x8] sm:$0xff]
    %v2212 = vld [vmem:[%s2209 + $0x10] sm:$0xff]
    %v2213 = vld [vmem:[%s2209 + $0x18] sm:$0xff]
    %2214 = vmatprep.subr.mxu0 %v532
    %2215 = vmatpush1.msra.mxu0 %v531
    %2216 = vmatprep.subr.mxu0 %v536
    %2217 = vmatpush1.msra.mxu0 %v535
    %2218 = vmatprep.subr.mxu0 %v540
    %2219 = vmatpush1.msra.mxu0 %v539
    %2220 = vmatprep.subr.mxu0 %v544
    %2221 = vmatpush1.msra.mxu0 %v543
    %2222 = vmatprep.subr.mxu0 %v548
    %2223 = vmatpush1.msra.mxu0 %v547
    %2224 = vmatprep.subr.mxu0 %v552
    %2225 = vmatpush1.msra.mxu0 %v551
    %2226 = vmatprep.subr.mxu0 %v556
    %2227 = vmatpush1.msra.mxu0 %v555
    %2228 = vmatprep.subr.mxu0 %v560
    %2229 = vmatpush1.msra.mxu0 %v559
    %2230 = vmatprep.subr.mxu0 %v564
    %2231 = vmatpush1.msra.mxu0 %v563
    %2232 = vmatprep.subr.mxu0 %v568
    %2233 = vmatpush1.msra.mxu0 %v567
    %2234 = vmatprep.subr.mxu0 %v572
    %2235 = vmatpush1.msra.mxu0 %v571
    %2236 = vmatprep.subr.mxu0 %v576
    %2237 = vmatpush1.msra.mxu0 %v575
    %2238 = vmatprep.subr.mxu0 %v580
    %2239 = vmatpush1.msra.mxu0 %v579
    %2240 = vmatprep.subr.mxu0 %v584
    %2241 = vmatpush1.msra.mxu0 %v583
    %2242 = vmatprep.subr.mxu0 %v588
    %2243 = vmatpush1.msra.mxu0 %v587
    %2244 = vmatprep.subr.mxu0 %v592
    %2245 = vmatpush1.msra.mxu0 %v591
    %2246 = vmatprep.subr.mxu0 0.0
    %2247 = vmatpush1.msra.mxu0 0.0
    %2248 = vmatprep.subr.mxu0 0.0
    %2249 = vmatpush1.msra.mxu0 0.0
    %2250 = vmatprep.subr.mxu0 0.0
    %2251 = vmatpush1.msra.mxu0 0.0
    %2252 = vmatprep.subr.mxu0 0.0
    %2253 = vmatpush1.msra.mxu0 0.0
    %2254 = vmatprep.subr.mxu0 0.0
    %2255 = vmatpush1.msra.mxu0 0.0
    %2256 = vmatprep.subr.mxu0 0.0
    %2257 = vmatpush1.msra.mxu0 0.0
    %2258 = vmatprep.subr.mxu0 0.0
    %2259 = vmatpush1.msra.mxu0 0.0
    %2260 = vmatprep.subr.mxu0 0.0
    %2261 = vmatpush1.msra.mxu0 0.0
    %2262 = vmatprep.subr.mxu0 0.0
    %2263 = vmatpush1.msra.mxu0 0.0
    %2264 = vmatprep.subr.mxu0 0.0
    %2265 = vmatpush1.msra.mxu0 0.0
    %2266 = vmatprep.subr.mxu0 0.0
    %2267 = vmatpush1.msra.mxu0 0.0
    %2268 = vmatprep.subr.mxu0 0.0
    %2269 = vmatpush1.msra.mxu0 0.0
    %2270 = vmatprep.subr.mxu0 0.0
    %2271 = vmatpush1.msra.mxu0 0.0
    %2272 = vmatprep.subr.mxu0 0.0
    %2273 = vmatpush1.msra.mxu0 0.0
    %2274 = vmatprep.subr.mxu0 0.0
    %2275 = vmatpush1.msra.mxu0 0.0
    %2276 = vmatprep.subr.mxu0 0.0
    %2277 = vmatpush1.msra.mxu0 0.0
    %2278 = vmatprep.mubr.f32.mxu0 0.0
    %2279 = vmatmul.mubr.f32.gmra.mrb[0].mxu0 %v2204
    %v2280 = vpop.f32.mrb[0].mxu0
    %v2281 = vadd.f32 0.0, %v2280
    %v2282 = vpop.f32.mrb[0].mxu0
    %v2283 = vadd.f32 0.0, %v2282
    %2284 = vdwg.mxu0
    %2285 = vmatprep.subr.mxu0 %v534
    %2286 = vmatpush1.msra.mxu0 %v533
    %2287 = vmatprep.subr.mxu0 %v538
    %2288 = vmatpush1.msra.mxu0 %v537
    %2289 = vmatprep.subr.mxu0 %v542
    %2290 = vmatpush1.msra.mxu0 %v541
    %2291 = vmatprep.subr.mxu0 %v546
    %2292 = vmatpush1.msra.mxu0 %v545
    %2293 = vmatprep.subr.mxu0 %v550
    %2294 = vmatpush1.msra.mxu0 %v549
    %2295 = vmatprep.subr.mxu0 %v554
    %2296 = vmatpush1.msra.mxu0 %v553
    %2297 = vmatprep.subr.mxu0 %v558
    %2298 = vmatpush1.msra.mxu0 %v557
    %2299 = vmatprep.subr.mxu0 %v562
    %2300 = vmatpush1.msra.mxu0 %v561
    %2301 = vmatprep.subr.mxu0 %v566
    %2302 = vmatpush1.msra.mxu0 %v565
    %2303 = vmatprep.subr.mxu0 %v570
    %2304 = vmatpush1.msra.mxu0 %v569
    %2305 = vmatprep.subr.mxu0 %v574
    %2306 = vmatpush1.msra.mxu0 %v573
    %2307 = vmatprep.subr.mxu0 %v578
    %2308 = vmatpush1.msra.mxu0 %v577
    %2309 = vmatprep.subr.mxu0 %v582
    %2310 = vmatpush1.msra.mxu0 %v581
    %2311 = vmatprep.subr.mxu0 %v586
    %2312 = vmatpush1.msra.mxu0 %v585
    %2313 = vmatprep.subr.mxu0 %v590
    %2314 = vmatpush1.msra.mxu0 %v589
    %2315 = vmatprep.subr.mxu0 %v594
    %2316 = vmatpush1.msra.mxu0 %v593
    %2317 = vmatprep.subr.mxu0 0.0
    %2318 = vmatpush1.msra.mxu0 0.0
    %2319 = vmatprep.subr.mxu0 0.0
    %2320 = vmatpush1.msra.mxu0 0.0
    %2321 = vmatprep.subr.mxu0 0.0
    %2322 = vmatpush1.msra.mxu0 0.0
    %2323 = vmatprep.subr.mxu0 0.0
    %2324 = vmatpush1.msra.mxu0 0.0
    %2325 = vmatprep.subr.mxu0 0.0
    %2326 = vmatpush1.msra.mxu0 0.0
    %2327 = vmatprep.subr.mxu0 0.0
    %2328 = vmatpush1.msra.mxu0 0.0
    %2329 = vmatprep.subr.mxu0 0.0
    %2330 = vmatpush1.msra.mxu0 0.0
    %2331 = vmatprep.subr.mxu0 0.0
    %2332 = vmatpush1.msra.mxu0 0.0
    %2333 = vmatprep.subr.mxu0 0.0
    %2334 = vmatpush1.msra.mxu0 0.0
    %2335 = vmatprep.subr.mxu0 0.0
    %2336 = vmatpush1.msra.mxu0 0.0
    %2337 = vmatprep.subr.mxu0 0.0
    %2338 = vmatpush1.msra.mxu0 0.0
    %2339 = vmatprep.subr.mxu0 0.0
    %2340 = vmatpush1.msra.mxu0 0.0
    %2341 = vmatprep.subr.mxu0 0.0
    %2342 = vmatpush1.msra.mxu0 0.0
    %2343 = vmatprep.subr.mxu0 0.0
    %2344 = vmatpush1.msra.mxu0 0.0
    %2345 = vmatprep.subr.mxu0 0.0
    %2346 = vmatpush1.msra.mxu0 0.0
    %2347 = vmatprep.subr.mxu0 0.0
    %2348 = vmatpush1.msra.mxu0 0.0
    %2349 = vmatprep.mubr.f32.mxu0 0.0
    %2350 = vmatmul.mubr.f32.gmra.mrb[0].mxu0 %v2204
    %v2351 = vpop.f32.mrb[0].mxu0
    %v2352 = vadd.f32 0.0, %v2351
    %v2353 = vpop.f32.mrb[0].mxu0
    %v2354 = vadd.f32 0.0, %v2353
    %2355 = vdwg.mxu0
    %v2356 = vadd.f32 %v2210, %v2281
    %v2357 = vadd.f32 %v2211, %v2283
    %v2358 = vadd.f32 %v2212, %v2352
    %v2359 = vadd.f32 %v2213, %v2354
    %v2360 = vxor.u32 %v2356, 2147483648
    %v2361 = vxor.u32 %v2357, 2147483648
    %v2362 = vxor.u32 %v2358, 2147483648
    %v2363 = vmul.f32 %v2360, 1.442695
    %v2364 = vpow.pop %v2363
    %v2365 = vmul.f32 %v2361, 1.442695
    %v2366 = vpow.pop %v2365
    %v2367 = vmul.f32 %v2362, 1.442695
    %v2368 = vpow.pop %v2367
    %v2369 = vadd.f32 %v2364, 1.0
    %v2370 = vadd.f32 %v2366, 1.0
    %v2371 = vadd.f32 %v2368, 1.0
    %v2372 = vrcp.pop %v2369
    %v2373 = vmul.f32 1.0, %v2372
    %v2374 = vrcp.pop %v2370
    %v2375 = vmul.f32 1.0, %v2374
    %v2376 = vrcp.pop %v2371
    %v2377 = vmul.f32 1.0, %v2376
    %v2378 = vtanh.pop %v2359
    %v2379 = vmul.f32 %v2375, %v2202
    %v2380 = vmul.f32 %v2373, %v2378
    %v2381 = vadd.f32 %v2379, %v2380
    %v2382 = vtanh.pop %v2381
    %v2383 = vmul.f32 %v2377, %v2382
    %s2384 = scalar_lea.vmem [#allocation8], 72
    %2385 = vst [vmem:[%s2384] sm:$0xff] %v2383
    %s2386 = smul.u32 10, 4
    %s2387 = smul.addr %s2386, 8
    %s2388 = scalar_lea.vmem [#allocation4], %s2387
    %v2389 = vld [vmem:[%s2388] sm:$0xff]
    %v2390 = vld [vmem:[%s2388 + $0x8] sm:$0xff]
    %v2391 = vld [vmem:[%s2388 + $0x10] sm:$0xff]
    %v2392 = vld [vmem:[%s2388 + $0x18] sm:$0xff]
    %2393 = vmatprep.subr.mxu0 %v532
    %2394 = vmatpush1.msra.mxu0 %v531
    %2395 = vmatprep.subr.mxu0 %v536
    %2396 = vmatpush1.msra.mxu0 %v535
    %2397 = vmatprep.subr.mxu0 %v540
    %2398 = vmatpush1.msra.mxu0 %v539
    %2399 = vmatprep.subr.mxu0 %v544
    %2400 = vmatpush1.msra.mxu0 %v543
    %2401 = vmatprep.subr.mxu0 %v548
    %2402 = vmatpush1.msra.mxu0 %v547
    %2403 = vmatprep.subr.mxu0 %v552
    %2404 = vmatpush1.msra.mxu0 %v551
    %2405 = vmatprep.subr.mxu0 %v556
    %2406 = vmatpush1.msra.mxu0 %v555
    %2407 = vmatprep.subr.mxu0 %v560
    %2408 = vmatpush1.msra.mxu0 %v559
    %2409 = vmatprep.subr.mxu0 %v564
    %2410 = vmatpush1.msra.mxu0 %v563
    %2411 = vmatprep.subr.mxu0 %v568
    %2412 = vmatpush1.msra.mxu0 %v567
    %2413 = vmatprep.subr.mxu0 %v572
    %2414 = vmatpush1.msra.mxu0 %v571
    %2415 = vmatprep.subr.mxu0 %v576
    %2416 = vmatpush1.msra.mxu0 %v575
    %2417 = vmatprep.subr.mxu0 %v580
    %2418 = vmatpush1.msra.mxu0 %v579
    %2419 = vmatprep.subr.mxu0 %v584
    %2420 = vmatpush1.msra.mxu0 %v583
    %2421 = vmatprep.subr.mxu0 %v588
    %2422 = vmatpush1.msra.mxu0 %v587
    %2423 = vmatprep.subr.mxu0 %v592
    %2424 = vmatpush1.msra.mxu0 %v591
    %2425 = vmatprep.subr.mxu0 0.0
    %2426 = vmatpush1.msra.mxu0 0.0
    %2427 = vmatprep.subr.mxu0 0.0
    %2428 = vmatpush1.msra.mxu0 0.0
    %2429 = vmatprep.subr.mxu0 0.0
    %2430 = vmatpush1.msra.mxu0 0.0
    %2431 = vmatprep.subr.mxu0 0.0
    %2432 = vmatpush1.msra.mxu0 0.0
    %2433 = vmatprep.subr.mxu0 0.0
    %2434 = vmatpush1.msra.mxu0 0.0
    %2435 = vmatprep.subr.mxu0 0.0
    %2436 = vmatpush1.msra.mxu0 0.0
    %2437 = vmatprep.subr.mxu0 0.0
    %2438 = vmatpush1.msra.mxu0 0.0
    %2439 = vmatprep.subr.mxu0 0.0
    %2440 = vmatpush1.msra.mxu0 0.0
    %2441 = vmatprep.subr.mxu0 0.0
    %2442 = vmatpush1.msra.mxu0 0.0
    %2443 = vmatprep.subr.mxu0 0.0
    %2444 = vmatpush1.msra.mxu0 0.0
    %2445 = vmatprep.subr.mxu0 0.0
    %2446 = vmatpush1.msra.mxu0 0.0
    %2447 = vmatprep.subr.mxu0 0.0
    %2448 = vmatpush1.msra.mxu0 0.0
    %2449 = vmatprep.subr.mxu0 0.0
    %2450 = vmatpush1.msra.mxu0 0.0
    %2451 = vmatprep.subr.mxu0 0.0
    %2452 = vmatpush1.msra.mxu0 0.0
    %2453 = vmatprep.subr.mxu0 0.0
    %2454 = vmatpush1.msra.mxu0 0.0
    %2455 = vmatprep.subr.mxu0 0.0
    %2456 = vmatpush1.msra.mxu0 0.0
    %2457 = vmatprep.mubr.f32.mxu0 0.0
    %2458 = vmatmul.mubr.f32.gmra.mrb[0].mxu0 %v2383
    %v2459 = vpop.f32.mrb[0].mxu0
    %v2460 = vadd.f32 0.0, %v2459
    %v2461 = vpop.f32.mrb[0].mxu0
    %v2462 = vadd.f32 0.0, %v2461
    %2463 = vdwg.mxu0
    %2464 = vmatprep.subr.mxu0 %v534
    %2465 = vmatpush1.msra.mxu0 %v533
    %2466 = vmatprep.subr.mxu0 %v538
    %2467 = vmatpush1.msra.mxu0 %v537
    %2468 = vmatprep.subr.mxu0 %v542
    %2469 = vmatpush1.msra.mxu0 %v541
    %2470 = vmatprep.subr.mxu0 %v546
    %2471 = vmatpush1.msra.mxu0 %v545
    %2472 = vmatprep.subr.mxu0 %v550
    %2473 = vmatpush1.msra.mxu0 %v549
    %2474 = vmatprep.subr.mxu0 %v554
    %2475 = vmatpush1.msra.mxu0 %v553
    %2476 = vmatprep.subr.mxu0 %v558
    %2477 = vmatpush1.msra.mxu0 %v557
    %2478 = vmatprep.subr.mxu0 %v562
    %2479 = vmatpush1.msra.mxu0 %v561
    %2480 = vmatprep.subr.mxu0 %v566
    %2481 = vmatpush1.msra.mxu0 %v565
    %2482 = vmatprep.subr.mxu0 %v570
    %2483 = vmatpush1.msra.mxu0 %v569
    %2484 = vmatprep.subr.mxu0 %v574
    %2485 = vmatpush1.msra.mxu0 %v573
    %2486 = vmatprep.subr.mxu0 %v578
    %2487 = vmatpush1.msra.mxu0 %v577
    %2488 = vmatprep.subr.mxu0 %v582
    %2489 = vmatpush1.msra.mxu0 %v581
    %2490 = vmatprep.subr.mxu0 %v586
    %2491 = vmatpush1.msra.mxu0 %v585
    %2492 = vmatprep.subr.mxu0 %v590
    %2493 = vmatpush1.msra.mxu0 %v589
    %2494 = vmatprep.subr.mxu0 %v594
    %2495 = vmatpush1.msra.mxu0 %v593
    %2496 = vmatprep.subr.mxu0 0.0
    %2497 = vmatpush1.msra.mxu0 0.0
    %2498 = vmatprep.subr.mxu0 0.0
    %2499 = vmatpush1.msra.mxu0 0.0
    %2500 = vmatprep.subr.mxu0 0.0
    %2501 = vmatpush1.msra.mxu0 0.0
    %2502 = vmatprep.subr.mxu0 0.0
    %2503 = vmatpush1.msra.mxu0 0.0
    %2504 = vmatprep.subr.mxu0 0.0
    %2505 = vmatpush1.msra.mxu0 0.0
    %2506 = vmatprep.subr.mxu0 0.0
    %2507 = vmatpush1.msra.mxu0 0.0
    %2508 = vmatprep.subr.mxu0 0.0
    %2509 = vmatpush1.msra.mxu0 0.0
    %2510 = vmatprep.subr.mxu0 0.0
    %2511 = vmatpush1.msra.mxu0 0.0
    %2512 = vmatprep.subr.mxu0 0.0
    %2513 = vmatpush1.msra.mxu0 0.0
    %2514 = vmatprep.subr.mxu0 0.0
    %2515 = vmatpush1.msra.mxu0 0.0
    %2516 = vmatprep.subr.mxu0 0.0
    %2517 = vmatpush1.msra.mxu0 0.0
    %2518 = vmatprep.subr.mxu0 0.0
    %2519 = vmatpush1.msra.mxu0 0.0
    %2520 = vmatprep.subr.mxu0 0.0
    %2521 = vmatpush1.msra.mxu0 0.0
    %2522 = vmatprep.subr.mxu0 0.0
    %2523 = vmatpush1.msra.mxu0 0.0
    %2524 = vmatprep.subr.mxu0 0.0
    %2525 = vmatpush1.msra.mxu0 0.0
    %2526 = vmatprep.subr.mxu0 0.0
    %2527 = vmatpush1.msra.mxu0 0.0
    %2528 = vmatprep.mubr.f32.mxu0 0.0
    %2529 = vmatmul.mubr.f32.gmra.mrb[0].mxu0 %v2383
    %v2530 = vpop.f32.mrb[0].mxu0
    %v2531 = vadd.f32 0.0, %v2530
    %v2532 = vpop.f32.mrb[0].mxu0
    %v2533 = vadd.f32 0.0, %v2532
    %2534 = vdwg.mxu0
    %v2535 = vadd.f32 %v2389, %v2460
    %v2536 = vadd.f32 %v2390, %v2462
    %v2537 = vadd.f32 %v2391, %v2531
    %v2538 = vadd.f32 %v2392, %v2533
    %v2539 = vxor.u32 %v2535, 2147483648
    %v2540 = vxor.u32 %v2536, 2147483648
    %v2541 = vxor.u32 %v2537, 2147483648
    %v2542 = vmul.f32 %v2539, 1.442695
    %v2543 = vpow.pop %v2542
    %v2544 = vmul.f32 %v2540, 1.442695
    %v2545 = vpow.pop %v2544
    %v2546 = vmul.f32 %v2541, 1.442695
    %v2547 = vpow.pop %v2546
    %v2548 = vadd.f32 %v2543, 1.0
    %v2549 = vadd.f32 %v2545, 1.0
    %v2550 = vadd.f32 %v2547, 1.0
    %v2551 = vrcp.pop %v2548
    %v2552 = vmul.f32 1.0, %v2551
    %v2553 = vrcp.pop %v2549
    %v2554 = vmul.f32 1.0, %v2553
    %v2555 = vrcp.pop %v2550
    %v2556 = vmul.f32 1.0, %v2555
    %v2557 = vtanh.pop %v2538
    %v2558 = vmul.f32 %v2554, %v2381
    %v2559 = vmul.f32 %v2552, %v2557
    %v2560 = vadd.f32 %v2558, %v2559
    %v2561 = vtanh.pop %v2560
    %v2562 = vmul.f32 %v2556, %v2561
    %s2563 = scalar_lea.vmem [#allocation8], 80
    %2564 = vst [vmem:[%s2563] sm:$0xff] %v2562
    %s2565 = smul.u32 11, 4
    %s2566 = smul.addr %s2565, 8
    %s2567 = scalar_lea.vmem [#allocation4], %s2566
    %v2568 = vld [vmem:[%s2567] sm:$0xff]
    %v2569 = vld [vmem:[%s2567 + $0x8] sm:$0xff]
    %v2570 = vld [vmem:[%s2567 + $0x10] sm:$0xff]
    %v2571 = vld [vmem:[%s2567 + $0x18] sm:$0xff]
    %2572 = vmatprep.subr.mxu0 %v532
    %2573 = vmatpush1.msra.mxu0 %v531
    %2574 = vmatprep.subr.mxu0 %v536
    %2575 = vmatpush1.msra.mxu0 %v535
    %2576 = vmatprep.subr.mxu0 %v540
    %2577 = vmatpush1.msra.mxu0 %v539
    %2578 = vmatprep.subr.mxu0 %v544
    %2579 = vmatpush1.msra.mxu0 %v543
    %2580 = vmatprep.subr.mxu0 %v548
    %2581 = vmatpush1.msra.mxu0 %v547
    %2582 = vmatprep.subr.mxu0 %v552
    %2583 = vmatpush1.msra.mxu0 %v551
    %2584 = vmatprep.subr.mxu0 %v556
    %2585 = vmatpush1.msra.mxu0 %v555
    %2586 = vmatprep.subr.mxu0 %v560
    %2587 = vmatpush1.msra.mxu0 %v559
    %2588 = vmatprep.subr.mxu0 %v564
    %2589 = vmatpush1.msra.mxu0 %v563
    %2590 = vmatprep.subr.mxu0 %v568
    %2591 = vmatpush1.msra.mxu0 %v567
    %2592 = vmatprep.subr.mxu0 %v572
    %2593 = vmatpush1.msra.mxu0 %v571
    %2594 = vmatprep.subr.mxu0 %v576
    %2595 = vmatpush1.msra.mxu0 %v575
    %2596 = vmatprep.subr.mxu0 %v580
    %2597 = vmatpush1.msra.mxu0 %v579
    %2598 = vmatprep.subr.mxu0 %v584
    %2599 = vmatpush1.msra.mxu0 %v583
    %2600 = vmatprep.subr.mxu0 %v588
    %2601 = vmatpush1.msra.mxu0 %v587
    %2602 = vmatprep.subr.mxu0 %v592
    %2603 = vmatpush1.msra.mxu0 %v591
    %2604 = vmatprep.subr.mxu0 0.0
    %2605 = vmatpush1.msra.mxu0 0.0
    %2606 = vmatprep.subr.mxu0 0.0
    %2607 = vmatpush1.msra.mxu0 0.0
    %2608 = vmatprep.subr.mxu0 0.0
    %2609 = vmatpush1.msra.mxu0 0.0
    %2610 = vmatprep.subr.mxu0 0.0
    %2611 = vmatpush1.msra.mxu0 0.0
    %2612 = vmatprep.subr.mxu0 0.0
    %2613 = vmatpush1.msra.mxu0 0.0
    %2614 = vmatprep.subr.mxu0 0.0
    %2615 = vmatpush1.msra.mxu0 0.0
    %2616 = vmatprep.subr.mxu0 0.0
    %2617 = vmatpush1.msra.mxu0 0.0
    %2618 = vmatprep.subr.mxu0 0.0
    %2619 = vmatpush1.msra.mxu0 0.0
    %2620 = vmatprep.subr.mxu0 0.0
    %2621 = vmatpush1.msra.mxu0 0.0
    %2622 = vmatprep.subr.mxu0 0.0
    %2623 = vmatpush1.msra.mxu0 0.0
    %2624 = vmatprep.subr.mxu0 0.0
    %2625 = vmatpush1.msra.mxu0 0.0
    %2626 = vmatprep.subr.mxu0 0.0
    %2627 = vmatpush1.msra.mxu0 0.0
    %2628 = vmatprep.subr.mxu0 0.0
    %2629 = vmatpush1.msra.mxu0 0.0
    %2630 = vmatprep.subr.mxu0 0.0
    %2631 = vmatpush1.msra.mxu0 0.0
    %2632 = vmatprep.subr.mxu0 0.0
    %2633 = vmatpush1.msra.mxu0 0.0
    %2634 = vmatprep.subr.mxu0 0.0
    %2635 = vmatpush1.msra.mxu0 0.0
    %2636 = vmatprep.mubr.f32.mxu0 0.0
    %2637 = vmatmul.mubr.f32.gmra.mrb[0].mxu0 %v2562
    %v2638 = vpop.f32.mrb[0].mxu0
    %v2639 = vadd.f32 0.0, %v2638
    %v2640 = vpop.f32.mrb[0].mxu0
    %v2641 = vadd.f32 0.0, %v2640
    %2642 = vdwg.mxu0
    %2643 = vmatprep.subr.mxu0 %v534
    %2644 = vmatpush1.msra.mxu0 %v533
    %2645 = vmatprep.subr.mxu0 %v538
    %2646 = vmatpush1.msra.mxu0 %v537
    %2647 = vmatprep.subr.mxu0 %v542
    %2648 = vmatpush1.msra.mxu0 %v541
    %2649 = vmatprep.subr.mxu0 %v546
    %2650 = vmatpush1.msra.mxu0 %v545
    %2651 = vmatprep.subr.mxu0 %v550
    %2652 = vmatpush1.msra.mxu0 %v549
    %2653 = vmatprep.subr.mxu0 %v554
    %2654 = vmatpush1.msra.mxu0 %v553
    %2655 = vmatprep.subr.mxu0 %v558
    %2656 = vmatpush1.msra.mxu0 %v557
    %2657 = vmatprep.subr.mxu0 %v562
    %2658 = vmatpush1.msra.mxu0 %v561
    %2659 = vmatprep.subr.mxu0 %v566
    %2660 = vmatpush1.msra.mxu0 %v565
    %2661 = vmatprep.subr.mxu0 %v570
    %2662 = vmatpush1.msra.mxu0 %v569
    %2663 = vmatprep.subr.mxu0 %v574
    %2664 = vmatpush1.msra.mxu0 %v573
    %2665 = vmatprep.subr.mxu0 %v578
    %2666 = vmatpush1.msra.mxu0 %v577
    %2667 = vmatprep.subr.mxu0 %v582
    %2668 = vmatpush1.msra.mxu0 %v581
    %2669 = vmatprep.subr.mxu0 %v586
    %2670 = vmatpush1.msra.mxu0 %v585
    %2671 = vmatprep.subr.mxu0 %v590
    %2672 = vmatpush1.msra.mxu0 %v589
    %2673 = vmatprep.subr.mxu0 %v594
    %2674 = vmatpush1.msra.mxu0 %v593
    %2675 = vmatprep.subr.mxu0 0.0
    %2676 = vmatpush1.msra.mxu0 0.0
    %2677 = vmatprep.subr.mxu0 0.0
    %2678 = vmatpush1.msra.mxu0 0.0
    %2679 = vmatprep.subr.mxu0 0.0
    %2680 = vmatpush1.msra.mxu0 0.0
    %2681 = vmatprep.subr.mxu0 0.0
    %2682 = vmatpush1.msra.mxu0 0.0
    %2683 = vmatprep.subr.mxu0 0.0
    %2684 = vmatpush1.msra.mxu0 0.0
    %2685 = vmatprep.subr.mxu0 0.0
    %2686 = vmatpush1.msra.mxu0 0.0
    %2687 = vmatprep.subr.mxu0 0.0
    %2688 = vmatpush1.msra.mxu0 0.0
    %2689 = vmatprep.subr.mxu0 0.0
    %2690 = vmatpush1.msra.mxu0 0.0
    %2691 = vmatprep.subr.mxu0 0.0
    %2692 = vmatpush1.msra.mxu0 0.0
    %2693 = vmatprep.subr.mxu0 0.0
    %2694 = vmatpush1.msra.mxu0 0.0
    %2695 = vmatprep.subr.mxu0 0.0
    %2696 = vmatpush1.msra.mxu0 0.0
    %2697 = vmatprep.subr.mxu0 0.0
    %2698 = vmatpush1.msra.mxu0 0.0
    %2699 = vmatprep.subr.mxu0 0.0
    %2700 = vmatpush1.msra.mxu0 0.0
    %2701 = vmatprep.subr.mxu0 0.0
    %2702 = vmatpush1.msra.mxu0 0.0
    %2703 = vmatprep.subr.mxu0 0.0
    %2704 = vmatpush1.msra.mxu0 0.0
    %2705 = vmatprep.subr.mxu0 0.0
    %2706 = vmatpush1.msra.mxu0 0.0
    %2707 = vmatprep.mubr.f32.mxu0 0.0
    %2708 = vmatmul.mubr.f32.gmra.mrb[0].mxu0 %v2562
    %v2709 = vpop.f32.mrb[0].mxu0
    %v2710 = vadd.f32 0.0, %v2709
    %v2711 = vpop.f32.mrb[0].mxu0
    %v2712 = vadd.f32 0.0, %v2711
    %2713 = vdwg.mxu0
    %v2714 = vadd.f32 %v2568, %v2639
    %v2715 = vadd.f32 %v2569, %v2641
    %v2716 = vadd.f32 %v2570, %v2710
    %v2717 = vadd.f32 %v2571, %v2712
    %v2718 = vxor.u32 %v2714, 2147483648
    %v2719 = vxor.u32 %v2715, 2147483648
    %v2720 = vxor.u32 %v2716, 2147483648
    %v2721 = vmul.f32 %v2718, 1.442695
    %v2722 = vpow.pop %v2721
    %v2723 = vmul.f32 %v2719, 1.442695
    %v2724 = vpow.pop %v2723
    %v2725 = vmul.f32 %v2720, 1.442695
    %v2726 = vpow.pop %v2725
    %v2727 = vadd.f32 %v2722, 1.0
    %v2728 = vadd.f32 %v2724, 1.0
    %v2729 = vadd.f32 %v2726, 1.0
    %v2730 = vrcp.pop %v2727
    %v2731 = vmul.f32 1.0, %v2730
    %v2732 = vrcp.pop %v2728
    %v2733 = vmul.f32 1.0, %v2732
    %v2734 = vrcp.pop %v2729
    %v2735 = vmul.f32 1.0, %v2734
    %v2736 = vtanh.pop %v2717
    %v2737 = vmul.f32 %v2733, %v2560
    %v2738 = vmul.f32 %v2731, %v2736
    %v2739 = vadd.f32 %v2737, %v2738
    %v2740 = vtanh.pop %v2739
    %v2741 = vmul.f32 %v2735, %v2740
    %s2742 = scalar_lea.vmem [#allocation8], 88
    %2743 = vst [vmem:[%s2742] sm:$0xff] %v2741
    %s2744 = smul.u32 12, 4
    %s2745 = smul.addr %s2744, 8
    %s2746 = scalar_lea.vmem [#allocation4], %s2745
    %v2747 = vld [vmem:[%s2746] sm:$0xff]
    %v2748 = vld [vmem:[%s2746 + $0x8] sm:$0xff]
    %v2749 = vld [vmem:[%s2746 + $0x10] sm:$0xff]
    %v2750 = vld [vmem:[%s2746 + $0x18] sm:$0xff]
    %2751 = vmatprep.subr.mxu0 %v532
    %2752 = vmatpush1.msra.mxu0 %v531
    %2753 = vmatprep.subr.mxu0 %v536
    %2754 = vmatpush1.msra.mxu0 %v535
    %2755 = vmatprep.subr.mxu0 %v540
    %2756 = vmatpush1.msra.mxu0 %v539
    %2757 = vmatprep.subr.mxu0 %v544
    %2758 = vmatpush1.msra.mxu0 %v543
    %2759 = vmatprep.subr.mxu0 %v548
    %2760 = vmatpush1.msra.mxu0 %v547
    %2761 = vmatprep.subr.mxu0 %v552
    %2762 = vmatpush1.msra.mxu0 %v551
    %2763 = vmatprep.subr.mxu0 %v556
    %2764 = vmatpush1.msra.mxu0 %v555
    %2765 = vmatprep.subr.mxu0 %v560
    %2766 = vmatpush1.msra.mxu0 %v559
    %2767 = vmatprep.subr.mxu0 %v564
    %2768 = vmatpush1.msra.mxu0 %v563
    %2769 = vmatprep.subr.mxu0 %v568
    %2770 = vmatpush1.msra.mxu0 %v567
    %2771 = vmatprep.subr.mxu0 %v572
    %2772 = vmatpush1.msra.mxu0 %v571
    %2773 = vmatprep.subr.mxu0 %v576
    %2774 = vmatpush1.msra.mxu0 %v575
    %2775 = vmatprep.subr.mxu0 %v580
    %2776 = vmatpush1.msra.mxu0 %v579
    %2777 = vmatprep.subr.mxu0 %v584
    %2778 = vmatpush1.msra.mxu0 %v583
    %2779 = vmatprep.subr.mxu0 %v588
    %2780 = vmatpush1.msra.mxu0 %v587
    %2781 = vmatprep.subr.mxu0 %v592
    %2782 = vmatpush1.msra.mxu0 %v591
    %2783 = vmatprep.subr.mxu0 0.0
    %2784 = vmatpush1.msra.mxu0 0.0
    %2785 = vmatprep.subr.mxu0 0.0
    %2786 = vmatpush1.msra.mxu0 0.0
    %2787 = vmatprep.subr.mxu0 0.0
    %2788 = vmatpush1.msra.mxu0 0.0
    %2789 = vmatprep.subr.mxu0 0.0
    %2790 = vmatpush1.msra.mxu0 0.0
    %2791 = vmatprep.subr.mxu0 0.0
    %2792 = vmatpush1.msra.mxu0 0.0
    %2793 = vmatprep.subr.mxu0 0.0
    %2794 = vmatpush1.msra.mxu0 0.0
    %2795 = vmatprep.subr.mxu0 0.0
    %2796 = vmatpush1.msra.mxu0 0.0
    %2797 = vmatprep.subr.mxu0 0.0
    %2798 = vmatpush1.msra.mxu0 0.0
    %2799 = vmatprep.subr.mxu0 0.0
    %2800 = vmatpush1.msra.mxu0 0.0
    %2801 = vmatprep.subr.mxu0 0.0
    %2802 = vmatpush1.msra.mxu0 0.0
    %2803 = vmatprep.subr.mxu0 0.0
    %2804 = vmatpush1.msra.mxu0 0.0
    %2805 = vmatprep.subr.mxu0 0.0
    %2806 = vmatpush1.msra.mxu0 0.0
    %2807 = vmatprep.subr.mxu0 0.0
    %2808 = vmatpush1.msra.mxu0 0.0
    %2809 = vmatprep.subr.mxu0 0.0
    %2810 = vmatpush1.msra.mxu0 0.0
    %2811 = vmatprep.subr.mxu0 0.0
    %2812 = vmatpush1.msra.mxu0 0.0
    %2813 = vmatprep.subr.mxu0 0.0
    %2814 = vmatpush1.msra.mxu0 0.0
    %2815 = vmatprep.mubr.f32.mxu0 0.0
    %2816 = vmatmul.mubr.f32.gmra.mrb[0].mxu0 %v2741
    %v2817 = vpop.f32.mrb[0].mxu0
    %v2818 = vadd.f32 0.0, %v2817
    %v2819 = vpop.f32.mrb[0].mxu0
    %v2820 = vadd.f32 0.0, %v2819
    %2821 = vdwg.mxu0
    %2822 = vmatprep.subr.mxu0 %v534
    %2823 = vmatpush1.msra.mxu0 %v533
    %2824 = vmatprep.subr.mxu0 %v538
    %2825 = vmatpush1.msra.mxu0 %v537
    %2826 = vmatprep.subr.mxu0 %v542
    %2827 = vmatpush1.msra.mxu0 %v541
    %2828 = vmatprep.subr.mxu0 %v546
    %2829 = vmatpush1.msra.mxu0 %v545
    %2830 = vmatprep.subr.mxu0 %v550
    %2831 = vmatpush1.msra.mxu0 %v549
    %2832 = vmatprep.subr.mxu0 %v554
    %2833 = vmatpush1.msra.mxu0 %v553
    %2834 = vmatprep.subr.mxu0 %v558
    %2835 = vmatpush1.msra.mxu0 %v557
    %2836 = vmatprep.subr.mxu0 %v562
    %2837 = vmatpush1.msra.mxu0 %v561
    %2838 = vmatprep.subr.mxu0 %v566
    %2839 = vmatpush1.msra.mxu0 %v565
    %2840 = vmatprep.subr.mxu0 %v570
    %2841 = vmatpush1.msra.mxu0 %v569
    %2842 = vmatprep.subr.mxu0 %v574
    %2843 = vmatpush1.msra.mxu0 %v573
    %2844 = vmatprep.subr.mxu0 %v578
    %2845 = vmatpush1.msra.mxu0 %v577
    %2846 = vmatprep.subr.mxu0 %v582
    %2847 = vmatpush1.msra.mxu0 %v581
    %2848 = vmatprep.subr.mxu0 %v586
    %2849 = vmatpush1.msra.mxu0 %v585
    %2850 = vmatprep.subr.mxu0 %v590
    %2851 = vmatpush1.msra.mxu0 %v589
    %2852 = vmatprep.subr.mxu0 %v594
    %2853 = vmatpush1.msra.mxu0 %v593
    %2854 = vmatprep.subr.mxu0 0.0
    %2855 = vmatpush1.msra.mxu0 0.0
    %2856 = vmatprep.subr.mxu0 0.0
    %2857 = vmatpush1.msra.mxu0 0.0
    %2858 = vmatprep.subr.mxu0 0.0
    %2859 = vmatpush1.msra.mxu0 0.0
    %2860 = vmatprep.subr.mxu0 0.0
    %2861 = vmatpush1.msra.mxu0 0.0
    %2862 = vmatprep.subr.mxu0 0.0
    %2863 = vmatpush1.msra.mxu0 0.0
    %2864 = vmatprep.subr.mxu0 0.0
    %2865 = vmatpush1.msra.mxu0 0.0
    %2866 = vmatprep.subr.mxu0 0.0
    %2867 = vmatpush1.msra.mxu0 0.0
    %2868 = vmatprep.subr.mxu0 0.0
    %2869 = vmatpush1.msra.mxu0 0.0
    %2870 = vmatprep.subr.mxu0 0.0
    %2871 = vmatpush1.msra.mxu0 0.0
    %2872 = vmatprep.subr.mxu0 0.0
    %2873 = vmatpush1.msra.mxu0 0.0
    %2874 = vmatprep.subr.mxu0 0.0
    %2875 = vmatpush1.msra.mxu0 0.0
    %2876 = vmatprep.subr.mxu0 0.0
    %2877 = vmatpush1.msra.mxu0 0.0
    %2878 = vmatprep.subr.mxu0 0.0
    %2879 = vmatpush1.msra.mxu0 0.0
    %2880 = vmatprep.subr.mxu0 0.0
    %2881 = vmatpush1.msra.mxu0 0.0
    %2882 = vmatprep.subr.mxu0 0.0
    %2883 = vmatpush1.msra.mxu0 0.0
    %2884 = vmatprep.subr.mxu0 0.0
    %2885 = vmatpush1.msra.mxu0 0.0
    %2886 = vmatprep.mubr.f32.mxu0 0.0
    %2887 = vmatmul.mubr.f32.gmra.mrb[0].mxu0 %v2741
    %v2888 = vpop.f32.mrb[0].mxu0
    %v2889 = vadd.f32 0.0, %v2888
    %v2890 = vpop.f32.mrb[0].mxu0
    %v2891 = vadd.f32 0.0, %v2890
    %2892 = vdwg.mxu0
    %v2893 = vadd.f32 %v2747, %v2818
    %v2894 = vadd.f32 %v2748, %v2820
    %v2895 = vadd.f32 %v2749, %v2889
    %v2896 = vadd.f32 %v2750, %v2891
    %v2897 = vxor.u32 %v2893, 2147483648
    %v2898 = vxor.u32 %v2894, 2147483648
    %v2899 = vxor.u32 %v2895, 2147483648
    %v2900 = vmul.f32 %v2897, 1.442695
    %v2901 = vpow.pop %v2900
    %v2902 = vmul.f32 %v2898, 1.442695
    %v2903 = vpow.pop %v2902
    %v2904 = vmul.f32 %v2899, 1.442695
    %v2905 = vpow.pop %v2904
    %v2906 = vadd.f32 %v2901, 1.0
    %v2907 = vadd.f32 %v2903, 1.0
    %v2908 = vadd.f32 %v2905, 1.0
    %v2909 = vrcp.pop %v2906
    %v2910 = vmul.f32 1.0, %v2909
    %v2911 = vrcp.pop %v2907
    %v2912 = vmul.f32 1.0, %v2911
    %v2913 = vrcp.pop %v2908
    %v2914 = vmul.f32 1.0, %v2913
    %v2915 = vtanh.pop %v2896
    %v2916 = vmul.f32 %v2912, %v2739
    %v2917 = vmul.f32 %v2910, %v2915
    %v2918 = vadd.f32 %v2916, %v2917
    %v2919 = vtanh.pop %v2918
    %v2920 = vmul.f32 %v2914, %v2919
    %s2921 = scalar_lea.vmem [#allocation8], 96
    %2922 = vst [vmem:[%s2921] sm:$0xff] %v2920
    %s2923 = smul.u32 13, 4
    %s2924 = smul.addr %s2923, 8
    %s2925 = scalar_lea.vmem [#allocation4], %s2924
    %v2926 = vld [vmem:[%s2925] sm:$0xff]
    %v2927 = vld [vmem:[%s2925 + $0x8] sm:$0xff]
    %v2928 = vld [vmem:[%s2925 + $0x10] sm:$0xff]
    %v2929 = vld [vmem:[%s2925 + $0x18] sm:$0xff]
    %2930 = vmatprep.subr.mxu0 %v532
    %2931 = vmatpush1.msra.mxu0 %v531
    %2932 = vmatprep.subr.mxu0 %v536
    %2933 = vmatpush1.msra.mxu0 %v535
    %2934 = vmatprep.subr.mxu0 %v540
    %2935 = vmatpush1.msra.mxu0 %v539
    %2936 = vmatprep.subr.mxu0 %v544
    %2937 = vmatpush1.msra.mxu0 %v543
    %2938 = vmatprep.subr.mxu0 %v548
    %2939 = vmatpush1.msra.mxu0 %v547
    %2940 = vmatprep.subr.mxu0 %v552
    %2941 = vmatpush1.msra.mxu0 %v551
    %2942 = vmatprep.subr.mxu0 %v556
    %2943 = vmatpush1.msra.mxu0 %v555
    %2944 = vmatprep.subr.mxu0 %v560
    %2945 = vmatpush1.msra.mxu0 %v559
    %2946 = vmatprep.subr.mxu0 %v564
    %2947 = vmatpush1.msra.mxu0 %v563
    %2948 = vmatprep.subr.mxu0 %v568
    %2949 = vmatpush1.msra.mxu0 %v567
    %2950 = vmatprep.subr.mxu0 %v572
    %2951 = vmatpush1.msra.mxu0 %v571
    %2952 = vmatprep.subr.mxu0 %v576
    %2953 = vmatpush1.msra.mxu0 %v575
    %2954 = vmatprep.subr.mxu0 %v580
    %2955 = vmatpush1.msra.mxu0 %v579
    %2956 = vmatprep.subr.mxu0 %v584
    %2957 = vmatpush1.msra.mxu0 %v583
    %2958 = vmatprep.subr.mxu0 %v588
    %2959 = vmatpush1.msra.mxu0 %v587
    %2960 = vmatprep.subr.mxu0 %v592
    %2961 = vmatpush1.msra.mxu0 %v591
    %2962 = vmatprep.subr.mxu0 0.0
    %2963 = vmatpush1.msra.mxu0 0.0
    %2964 = vmatprep.subr.mxu0 0.0
    %2965 = vmatpush1.msra.mxu0 0.0
    %2966 = vmatprep.subr.mxu0 0.0
    %2967 = vmatpush1.msra.mxu0 0.0
    %2968 = vmatprep.subr.mxu0 0.0
    %2969 = vmatpush1.msra.mxu0 0.0
    %2970 = vmatprep.subr.mxu0 0.0
    %2971 = vmatpush1.msra.mxu0 0.0
    %2972 = vmatprep.subr.mxu0 0.0
    %2973 = vmatpush1.msra.mxu0 0.0
    %2974 = vmatprep.subr.mxu0 0.0
    %2975 = vmatpush1.msra.mxu0 0.0
    %2976 = vmatprep.subr.mxu0 0.0
    %2977 = vmatpush1.msra.mxu0 0.0
    %2978 = vmatprep.subr.mxu0 0.0
    %2979 = vmatpush1.msra.mxu0 0.0
    %2980 = vmatprep.subr.mxu0 0.0
    %2981 = vmatpush1.msra.mxu0 0.0
    %2982 = vmatprep.subr.mxu0 0.0
    %2983 = vmatpush1.msra.mxu0 0.0
    %2984 = vmatprep.subr.mxu0 0.0
    %2985 = vmatpush1.msra.mxu0 0.0
    %2986 = vmatprep.subr.mxu0 0.0
    %2987 = vmatpush1.msra.mxu0 0.0
    %2988 = vmatprep.subr.mxu0 0.0
    %2989 = vmatpush1.msra.mxu0 0.0
    %2990 = vmatprep.subr.mxu0 0.0
    %2991 = vmatpush1.msra.mxu0 0.0
    %2992 = vmatprep.subr.mxu0 0.0
    %2993 = vmatpush1.msra.mxu0 0.0
    %2994 = vmatprep.mubr.f32.mxu0 0.0
    %2995 = vmatmul.mubr.f32.gmra.mrb[0].mxu0 %v2920
    %v2996 = vpop.f32.mrb[0].mxu0
    %v2997 = vadd.f32 0.0, %v2996
    %v2998 = vpop.f32.mrb[0].mxu0
    %v2999 = vadd.f32 0.0, %v2998
    %3000 = vdwg.mxu0
    %3001 = vmatprep.subr.mxu0 %v534
    %3002 = vmatpush1.msra.mxu0 %v533
    %3003 = vmatprep.subr.mxu0 %v538
    %3004 = vmatpush1.msra.mxu0 %v537
    %3005 = vmatprep.subr.mxu0 %v542
    %3006 = vmatpush1.msra.mxu0 %v541
    %3007 = vmatprep.subr.mxu0 %v546
    %3008 = vmatpush1.msra.mxu0 %v545
    %3009 = vmatprep.subr.mxu0 %v550
    %3010 = vmatpush1.msra.mxu0 %v549
    %3011 = vmatprep.subr.mxu0 %v554
    %3012 = vmatpush1.msra.mxu0 %v553
    %3013 = vmatprep.subr.mxu0 %v558
    %3014 = vmatpush1.msra.mxu0 %v557
    %3015 = vmatprep.subr.mxu0 %v562
    %3016 = vmatpush1.msra.mxu0 %v561
    %3017 = vmatprep.subr.mxu0 %v566
    %3018 = vmatpush1.msra.mxu0 %v565
    %3019 = vmatprep.subr.mxu0 %v570
    %3020 = vmatpush1.msra.mxu0 %v569
    %3021 = vmatprep.subr.mxu0 %v574
    %3022 = vmatpush1.msra.mxu0 %v573
    %3023 = vmatprep.subr.mxu0 %v578
    %3024 = vmatpush1.msra.mxu0 %v577
    %3025 = vmatprep.subr.mxu0 %v582
    %3026 = vmatpush1.msra.mxu0 %v581
    %3027 = vmatprep.subr.mxu0 %v586
    %3028 = vmatpush1.msra.mxu0 %v585
    %3029 = vmatprep.subr.mxu0 %v590
    %3030 = vmatpush1.msra.mxu0 %v589
    %3031 = vmatprep.subr.mxu0 %v594
    %3032 = vmatpush1.msra.mxu0 %v593
    %3033 = vmatprep.subr.mxu0 0.0
    %3034 = vmatpush1.msra.mxu0 0.0
    %3035 = vmatprep.subr.mxu0 0.0
    %3036 = vmatpush1.msra.mxu0 0.0
    %3037 = vmatprep.subr.mxu0 0.0
    %3038 = vmatpush1.msra.mxu0 0.0
    %3039 = vmatprep.subr.mxu0 0.0
    %3040 = vmatpush1.msra.mxu0 0.0
    %3041 = vmatprep.subr.mxu0 0.0
    %3042 = vmatpush1.msra.mxu0 0.0
    %3043 = vmatprep.subr.mxu0 0.0
    %3044 = vmatpush1.msra.mxu0 0.0
    %3045 = vmatprep.subr.mxu0 0.0
    %3046 = vmatpush1.msra.mxu0 0.0
    %3047 = vmatprep.subr.mxu0 0.0
    %3048 = vmatpush1.msra.mxu0 0.0
    %3049 = vmatprep.subr.mxu0 0.0
    %3050 = vmatpush1.msra.mxu0 0.0
    %3051 = vmatprep.subr.mxu0 0.0
    %3052 = vmatpush1.msra.mxu0 0.0
    %3053 = vmatprep.subr.mxu0 0.0
    %3054 = vmatpush1.msra.mxu0 0.0
    %3055 = vmatprep.subr.mxu0 0.0
    %3056 = vmatpush1.msra.mxu0 0.0
    %3057 = vmatprep.subr.mxu0 0.0
    %3058 = vmatpush1.msra.mxu0 0.0
    %3059 = vmatprep.subr.mxu0 0.0
    %3060 = vmatpush1.msra.mxu0 0.0
    %3061 = vmatprep.subr.mxu0 0.0
    %3062 = vmatpush1.msra.mxu0 0.0
    %3063 = vmatprep.subr.mxu0 0.0
    %3064 = vmatpush1.msra.mxu0 0.0
    %3065 = vmatprep.mubr.f32.mxu0 0.0
    %3066 = vmatmul.mubr.f32.gmra.mrb[0].mxu0 %v2920
    %v3067 = vpop.f32.mrb[0].mxu0
    %v3068 = vadd.f32 0.0, %v3067
    %v3069 = vpop.f32.mrb[0].mxu0
    %v3070 = vadd.f32 0.0, %v3069
    %3071 = vdwg.mxu0
    %v3072 = vadd.f32 %v2926, %v2997
    %v3073 = vadd.f32 %v2927, %v2999
    %v3074 = vadd.f32 %v2928, %v3068
    %v3075 = vadd.f32 %v2929, %v3070
    %v3076 = vxor.u32 %v3072, 2147483648
    %v3077 = vxor.u32 %v3073, 2147483648
    %v3078 = vxor.u32 %v3074, 2147483648
    %v3079 = vmul.f32 %v3076, 1.442695
    %v3080 = vpow.pop %v3079
    %v3081 = vmul.f32 %v3077, 1.442695
    %v3082 = vpow.pop %v3081
    %v3083 = vmul.f32 %v3078, 1.442695
    %v3084 = vpow.pop %v3083
    %v3085 = vadd.f32 %v3080, 1.0
    %v3086 = vadd.f32 %v3082, 1.0
    %v3087 = vadd.f32 %v3084, 1.0
    %v3088 = vrcp.pop %v3085
    %v3089 = vmul.f32 1.0, %v3088
    %v3090 = vrcp.pop %v3086
    %v3091 = vmul.f32 1.0, %v3090
    %v3092 = vrcp.pop %v3087
    %v3093 = vmul.f32 1.0, %v3092
    %v3094 = vtanh.pop %v3075
    %v3095 = vmul.f32 %v3091, %v2918
    %v3096 = vmul.f32 %v3089, %v3094
    %v3097 = vadd.f32 %v3095, %v3096
    %v3098 = vtanh.pop %v3097
    %v3099 = vmul.f32 %v3093, %v3098
    %s3100 = scalar_lea.vmem [#allocation8], 104
    %3101 = vst [vmem:[%s3100] sm:$0xff] %v3099
    %s3102 = smul.u32 14, 4
    %s3103 = smul.addr %s3102, 8
    %s3104 = scalar_lea.vmem [#allocation4], %s3103
    %v3105 = vld [vmem:[%s3104] sm:$0xff]
    %v3106 = vld [vmem:[%s3104 + $0x8] sm:$0xff]
    %v3107 = vld [vmem:[%s3104 + $0x10] sm:$0xff]
    %v3108 = vld [vmem:[%s3104 + $0x18] sm:$0xff]
    %3109 = vmatprep.subr.mxu0 %v532
    %3110 = vmatpush1.msra.mxu0 %v531
    %3111 = vmatprep.subr.mxu0 %v536
    %3112 = vmatpush1.msra.mxu0 %v535
    %3113 = vmatprep.subr.mxu0 %v540
    %3114 = vmatpush1.msra.mxu0 %v539
    %3115 = vmatprep.subr.mxu0 %v544
    %3116 = vmatpush1.msra.mxu0 %v543
    %3117 = vmatprep.subr.mxu0 %v548
    %3118 = vmatpush1.msra.mxu0 %v547
    %3119 = vmatprep.subr.mxu0 %v552
    %3120 = vmatpush1.msra.mxu0 %v551
    %3121 = vmatprep.subr.mxu0 %v556
    %3122 = vmatpush1.msra.mxu0 %v555
    %3123 = vmatprep.subr.mxu0 %v560
    %3124 = vmatpush1.msra.mxu0 %v559
    %3125 = vmatprep.subr.mxu0 %v564
    %3126 = vmatpush1.msra.mxu0 %v563
    %3127 = vmatprep.subr.mxu0 %v568
    %3128 = vmatpush1.msra.mxu0 %v567
    %3129 = vmatprep.subr.mxu0 %v572
    %3130 = vmatpush1.msra.mxu0 %v571
    %3131 = vmatprep.subr.mxu0 %v576
    %3132 = vmatpush1.msra.mxu0 %v575
    %3133 = vmatprep.subr.mxu0 %v580
    %3134 = vmatpush1.msra.mxu0 %v579
    %3135 = vmatprep.subr.mxu0 %v584
    %3136 = vmatpush1.msra.mxu0 %v583
    %3137 = vmatprep.subr.mxu0 %v588
    %3138 = vmatpush1.msra.mxu0 %v587
    %3139 = vmatprep.subr.mxu0 %v592
    %3140 = vmatpush1.msra.mxu0 %v591
    %3141 = vmatprep.subr.mxu0 0.0
    %3142 = vmatpush1.msra.mxu0 0.0
    %3143 = vmatprep.subr.mxu0 0.0
    %3144 = vmatpush1.msra.mxu0 0.0
    %3145 = vmatprep.subr.mxu0 0.0
    %3146 = vmatpush1.msra.mxu0 0.0
    %3147 = vmatprep.subr.mxu0 0.0
    %3148 = vmatpush1.msra.mxu0 0.0
    %3149 = vmatprep.subr.mxu0 0.0
    %3150 = vmatpush1.msra.mxu0 0.0
    %3151 = vmatprep.subr.mxu0 0.0
    %3152 = vmatpush1.msra.mxu0 0.0
    %3153 = vmatprep.subr.mxu0 0.0
    %3154 = vmatpush1.msra.mxu0 0.0
    %3155 = vmatprep.subr.mxu0 0.0
    %3156 = vmatpush1.msra.mxu0 0.0
    %3157 = vmatprep.subr.mxu0 0.0
    %3158 = vmatpush1.msra.mxu0 0.0
    %3159 = vmatprep.subr.mxu0 0.0
    %3160 = vmatpush1.msra.mxu0 0.0
    %3161 = vmatprep.subr.mxu0 0.0
    %3162 = vmatpush1.msra.mxu0 0.0
    %3163 = vmatprep.subr.mxu0 0.0
    %3164 = vmatpush1.msra.mxu0 0.0
    %3165 = vmatprep.subr.mxu0 0.0
    %3166 = vmatpush1.msra.mxu0 0.0
    %3167 = vmatprep.subr.mxu0 0.0
    %3168 = vmatpush1.msra.mxu0 0.0
    %3169 = vmatprep.subr.mxu0 0.0
    %3170 = vmatpush1.msra.mxu0 0.0
    %3171 = vmatprep.subr.mxu0 0.0
    %3172 = vmatpush1.msra.mxu0 0.0
    %3173 = vmatprep.mubr.f32.mxu0 0.0
    %3174 = vmatmul.mubr.f32.gmra.mrb[0].mxu0 %v3099
    %v3175 = vpop.f32.mrb[0].mxu0
    %v3176 = vadd.f32 0.0, %v3175
    %v3177 = vpop.f32.mrb[0].mxu0
    %v3178 = vadd.f32 0.0, %v3177
    %3179 = vdwg.mxu0
    %3180 = vmatprep.subr.mxu0 %v534
    %3181 = vmatpush1.msra.mxu0 %v533
    %3182 = vmatprep.subr.mxu0 %v538
    %3183 = vmatpush1.msra.mxu0 %v537
    %3184 = vmatprep.subr.mxu0 %v542
    %3185 = vmatpush1.msra.mxu0 %v541
    %3186 = vmatprep.subr.mxu0 %v546
    %3187 = vmatpush1.msra.mxu0 %v545
    %3188 = vmatprep.subr.mxu0 %v550
    %3189 = vmatpush1.msra.mxu0 %v549
    %3190 = vmatprep.subr.mxu0 %v554
    %3191 = vmatpush1.msra.mxu0 %v553
    %3192 = vmatprep.subr.mxu0 %v558
    %3193 = vmatpush1.msra.mxu0 %v557
    %3194 = vmatprep.subr.mxu0 %v562
    %3195 = vmatpush1.msra.mxu0 %v561
    %3196 = vmatprep.subr.mxu0 %v566
    %3197 = vmatpush1.msra.mxu0 %v565
    %3198 = vmatprep.subr.mxu0 %v570
    %3199 = vmatpush1.msra.mxu0 %v569
    %3200 = vmatprep.subr.mxu0 %v574
    %3201 = vmatpush1.msra.mxu0 %v573
    %3202 = vmatprep.subr.mxu0 %v578
    %3203 = vmatpush1.msra.mxu0 %v577
    %3204 = vmatprep.subr.mxu0 %v582
    %3205 = vmatpush1.msra.mxu0 %v581
    %3206 = vmatprep.subr.mxu0 %v586
    %3207 = vmatpush1.msra.mxu0 %v585
    %3208 = vmatprep.subr.mxu0 %v590
    %3209 = vmatpush1.msra.mxu0 %v589
    %3210 = vmatprep.subr.mxu0 %v594
    %3211 = vmatpush1.msra.mxu0 %v593
    %3212 = vmatprep.subr.mxu0 0.0
    %3213 = vmatpush1.msra.mxu0 0.0
    %3214 = vmatprep.subr.mxu0 0.0
    %3215 = vmatpush1.msra.mxu0 0.0
    %3216 = vmatprep.subr.mxu0 0.0
    %3217 = vmatpush1.msra.mxu0 0.0
    %3218 = vmatprep.subr.mxu0 0.0
    %3219 = vmatpush1.msra.mxu0 0.0
    %3220 = vmatprep.subr.mxu0 0.0
    %3221 = vmatpush1.msra.mxu0 0.0
    %3222 = vmatprep.subr.mxu0 0.0
    %3223 = vmatpush1.msra.mxu0 0.0
    %3224 = vmatprep.subr.mxu0 0.0
    %3225 = vmatpush1.msra.mxu0 0.0
    %3226 = vmatprep.subr.mxu0 0.0
    %3227 = vmatpush1.msra.mxu0 0.0
    %3228 = vmatprep.subr.mxu0 0.0
    %3229 = vmatpush1.msra.mxu0 0.0
    %3230 = vmatprep.subr.mxu0 0.0
    %3231 = vmatpush1.msra.mxu0 0.0
    %3232 = vmatprep.subr.mxu0 0.0
    %3233 = vmatpush1.msra.mxu0 0.0
    %3234 = vmatprep.subr.mxu0 0.0
    %3235 = vmatpush1.msra.mxu0 0.0
    %3236 = vmatprep.subr.mxu0 0.0
    %3237 = vmatpush1.msra.mxu0 0.0
    %3238 = vmatprep.subr.mxu0 0.0
    %3239 = vmatpush1.msra.mxu0 0.0
    %3240 = vmatprep.subr.mxu0 0.0
    %3241 = vmatpush1.msra.mxu0 0.0
    %3242 = vmatprep.subr.mxu0 0.0
    %3243 = vmatpush1.msra.mxu0 0.0
    %3244 = vmatprep.mubr.f32.mxu0 0.0
    %3245 = vmatmul.mubr.f32.gmra.mrb[0].mxu0 %v3099
    %v3246 = vpop.f32.mrb[0].mxu0
    %v3247 = vadd.f32 0.0, %v3246
    %v3248 = vpop.f32.mrb[0].mxu0
    %v3249 = vadd.f32 0.0, %v3248
    %3250 = vdwg.mxu0
    %v3251 = vadd.f32 %v3105, %v3176
    %v3252 = vadd.f32 %v3106, %v3178
    %v3253 = vadd.f32 %v3107, %v3247
    %v3254 = vadd.f32 %v3108, %v3249
    %v3255 = vxor.u32 %v3251, 2147483648
    %v3256 = vxor.u32 %v3252, 2147483648
    %v3257 = vxor.u32 %v3253, 2147483648
    %v3258 = vmul.f32 %v3255, 1.442695
    %v3259 = vpow.pop %v3258
    %v3260 = vmul.f32 %v3256, 1.442695
    %v3261 = vpow.pop %v3260
    %v3262 = vmul.f32 %v3257, 1.442695
    %v3263 = vpow.pop %v3262
    %v3264 = vadd.f32 %v3259, 1.0
    %v3265 = vadd.f32 %v3261, 1.0
    %v3266 = vadd.f32 %v3263, 1.0
    %v3267 = vrcp.pop %v3264
    %v3268 = vmul.f32 1.0, %v3267
    %v3269 = vrcp.pop %v3265
    %v3270 = vmul.f32 1.0, %v3269
    %v3271 = vrcp.pop %v3266
    %v3272 = vmul.f32 1.0, %v3271
    %v3273 = vtanh.pop %v3254
    %v3274 = vmul.f32 %v3270, %v3097
    %v3275 = vmul.f32 %v3268, %v3273
    %v3276 = vadd.f32 %v3274, %v3275
    %v3277 = vtanh.pop %v3276
    %v3278 = vmul.f32 %v3272, %v3277
    %s3279 = scalar_lea.vmem [#allocation8], 112
    %3280 = vst [vmem:[%s3279] sm:$0xff] %v3278
    %s3281 = smul.u32 15, 4
    %s3282 = smul.addr %s3281, 8
    %s3283 = scalar_lea.vmem [#allocation4], %s3282
    %v3284 = vld [vmem:[%s3283] sm:$0xff]
    %v3285 = vld [vmem:[%s3283 + $0x8] sm:$0xff]
    %v3286 = vld [vmem:[%s3283 + $0x10] sm:$0xff]
    %v3287 = vld [vmem:[%s3283 + $0x18] sm:$0xff]
    %3288 = vmatprep.subr.mxu0 %v532
    %3289 = vmatpush1.msra.mxu0 %v531
    %3290 = vmatprep.subr.mxu0 %v536
    %3291 = vmatpush1.msra.mxu0 %v535
    %3292 = vmatprep.subr.mxu0 %v540
    %3293 = vmatpush1.msra.mxu0 %v539
    %3294 = vmatprep.subr.mxu0 %v544
    %3295 = vmatpush1.msra.mxu0 %v543
    %3296 = vmatprep.subr.mxu0 %v548
    %3297 = vmatpush1.msra.mxu0 %v547
    %3298 = vmatprep.subr.mxu0 %v552
    %3299 = vmatpush1.msra.mxu0 %v551
    %3300 = vmatprep.subr.mxu0 %v556
    %3301 = vmatpush1.msra.mxu0 %v555
    %3302 = vmatprep.subr.mxu0 %v560
    %3303 = vmatpush1.msra.mxu0 %v559
    %3304 = vmatprep.subr.mxu0 %v564
    %3305 = vmatpush1.msra.mxu0 %v563
    %3306 = vmatprep.subr.mxu0 %v568
    %3307 = vmatpush1.msra.mxu0 %v567
    %3308 = vmatprep.subr.mxu0 %v572
    %3309 = vmatpush1.msra.mxu0 %v571
    %3310 = vmatprep.subr.mxu0 %v576
    %3311 = vmatpush1.msra.mxu0 %v575
    %3312 = vmatprep.subr.mxu0 %v580
    %3313 = vmatpush1.msra.mxu0 %v579
    %3314 = vmatprep.subr.mxu0 %v584
    %3315 = vmatpush1.msra.mxu0 %v583
    %3316 = vmatprep.subr.mxu0 %v588
    %3317 = vmatpush1.msra.mxu0 %v587
    %3318 = vmatprep.subr.mxu0 %v592
    %3319 = vmatpush1.msra.mxu0 %v591
    %3320 = vmatprep.subr.mxu0 0.0
    %3321 = vmatpush1.msra.mxu0 0.0
    %3322 = vmatprep.subr.mxu0 0.0
    %3323 = vmatpush1.msra.mxu0 0.0
    %3324 = vmatprep.subr.mxu0 0.0
    %3325 = vmatpush1.msra.mxu0 0.0
    %3326 = vmatprep.subr.mxu0 0.0
    %3327 = vmatpush1.msra.mxu0 0.0
    %3328 = vmatprep.subr.mxu0 0.0
    %3329 = vmatpush1.msra.mxu0 0.0
    %3330 = vmatprep.subr.mxu0 0.0
    %3331 = vmatpush1.msra.mxu0 0.0
    %3332 = vmatprep.subr.mxu0 0.0
    %3333 = vmatpush1.msra.mxu0 0.0
    %3334 = vmatprep.subr.mxu0 0.0
    %3335 = vmatpush1.msra.mxu0 0.0
    %3336 = vmatprep.subr.mxu0 0.0
    %3337 = vmatpush1.msra.mxu0 0.0
    %3338 = vmatprep.subr.mxu0 0.0
    %3339 = vmatpush1.msra.mxu0 0.0
    %3340 = vmatprep.subr.mxu0 0.0
    %3341 = vmatpush1.msra.mxu0 0.0
    %3342 = vmatprep.subr.mxu0 0.0
    %3343 = vmatpush1.msra.mxu0 0.0
    %3344 = vmatprep.subr.mxu0 0.0
    %3345 = vmatpush1.msra.mxu0 0.0
    %3346 = vmatprep.subr.mxu0 0.0
    %3347 = vmatpush1.msra.mxu0 0.0
    %3348 = vmatprep.subr.mxu0 0.0
    %3349 = vmatpush1.msra.mxu0 0.0
    %3350 = vmatprep.subr.mxu0 0.0
    %3351 = vmatpush1.msra.mxu0 0.0
    %3352 = vmatprep.mubr.f32.mxu0 0.0
    %3353 = vmatmul.mubr.f32.gmra.mrb[0].mxu0 %v3278
    %v3354 = vpop.f32.mrb[0].mxu0
    %v3355 = vadd.f32 0.0, %v3354
    %v3356 = vpop.f32.mrb[0].mxu0
    %v3357 = vadd.f32 0.0, %v3356
    %3358 = vdwg.mxu0
    %3359 = vmatprep.subr.mxu0 %v534
    %3360 = vmatpush1.msra.mxu0 %v533
    %3361 = vmatprep.subr.mxu0 %v538
    %3362 = vmatpush1.msra.mxu0 %v537
    %3363 = vmatprep.subr.mxu0 %v542
    %3364 = vmatpush1.msra.mxu0 %v541
    %3365 = vmatprep.subr.mxu0 %v546
    %3366 = vmatpush1.msra.mxu0 %v545
    %3367 = vmatprep.subr.mxu0 %v550
    %3368 = vmatpush1.msra.mxu0 %v549
    %3369 = vmatprep.subr.mxu0 %v554
    %3370 = vmatpush1.msra.mxu0 %v553
    %3371 = vmatprep.subr.mxu0 %v558
    %3372 = vmatpush1.msra.mxu0 %v557
    %3373 = vmatprep.subr.mxu0 %v562
    %3374 = vmatpush1.msra.mxu0 %v561
    %3375 = vmatprep.subr.mxu0 %v566
    %3376 = vmatpush1.msra.mxu0 %v565
    %3377 = vmatprep.subr.mxu0 %v570
    %3378 = vmatpush1.msra.mxu0 %v569
    %3379 = vmatprep.subr.mxu0 %v574
    %3380 = vmatpush1.msra.mxu0 %v573
    %3381 = vmatprep.subr.mxu0 %v578
    %3382 = vmatpush1.msra.mxu0 %v577
    %3383 = vmatprep.subr.mxu0 %v582
    %3384 = vmatpush1.msra.mxu0 %v581
    %3385 = vmatprep.subr.mxu0 %v586
    %3386 = vmatpush1.msra.mxu0 %v585
    %3387 = vmatprep.subr.mxu0 %v590
    %3388 = vmatpush1.msra.mxu0 %v589
    %3389 = vmatprep.subr.mxu0 %v594
    %3390 = vmatpush1.msra.mxu0 %v593
    %3391 = vmatprep.subr.mxu0 0.0
    %3392 = vmatpush1.msra.mxu0 0.0
    %3393 = vmatprep.subr.mxu0 0.0
    %3394 = vmatpush1.msra.mxu0 0.0
    %3395 = vmatprep.subr.mxu0 0.0
    %3396 = vmatpush1.msra.mxu0 0.0
    %3397 = vmatprep.subr.mxu0 0.0
    %3398 = vmatpush1.msra.mxu0 0.0
    %3399 = vmatprep.subr.mxu0 0.0
    %3400 = vmatpush1.msra.mxu0 0.0
    %3401 = vmatprep.subr.mxu0 0.0
    %3402 = vmatpush1.msra.mxu0 0.0
    %3403 = vmatprep.subr.mxu0 0.0
    %3404 = vmatpush1.msra.mxu0 0.0
    %3405 = vmatprep.subr.mxu0 0.0
    %3406 = vmatpush1.msra.mxu0 0.0
    %3407 = vmatprep.subr.mxu0 0.0
    %3408 = vmatpush1.msra.mxu0 0.0
    %3409 = vmatprep.subr.mxu0 0.0
    %3410 = vmatpush1.msra.mxu0 0.0
    %3411 = vmatprep.subr.mxu0 0.0
    %3412 = vmatpush1.msra.mxu0 0.0
    %3413 = vmatprep.subr.mxu0 0.0
    %3414 = vmatpush1.msra.mxu0 0.0
    %3415 = vmatprep.subr.mxu0 0.0
    %3416 = vmatpush1.msra.mxu0 0.0
    %3417 = vmatprep.subr.mxu0 0.0
    %3418 = vmatpush1.msra.mxu0 0.0
    %3419 = vmatprep.subr.mxu0 0.0
    %3420 = vmatpush1.msra.mxu0 0.0
    %3421 = vmatprep.subr.mxu0 0.0
    %3422 = vmatpush1.msra.mxu0 0.0
    %3423 = vmatprep.mubr.f32.mxu0 0.0
    %3424 = vmatmul.mubr.f32.gmra.mrb[0].mxu0 %v3278
    %v3425 = vpop.f32.mrb[0].mxu0
    %v3426 = vadd.f32 0.0, %v3425
    %v3427 = vpop.f32.mrb[0].mxu0
    %v3428 = vadd.f32 0.0, %v3427
    %3429 = vdwg.mxu0
    %v3430 = vadd.f32 %v3284, %v3355
    %v3431 = vadd.f32 %v3285, %v3357
    %v3432 = vadd.f32 %v3286, %v3426
    %v3433 = vadd.f32 %v3287, %v3428
    %v3434 = vxor.u32 %v3430, 2147483648
    %v3435 = vxor.u32 %v3431, 2147483648
    %v3436 = vxor.u32 %v3432, 2147483648
    %v3437 = vmul.f32 %v3434, 1.442695
    %v3438 = vpow.pop %v3437
    %v3439 = vmul.f32 %v3435, 1.442695
    %v3440 = vpow.pop %v3439
    %v3441 = vmul.f32 %v3436, 1.442695
    %v3442 = vpow.pop %v3441
    %v3443 = vadd.f32 %v3438, 1.0
    %v3444 = vadd.f32 %v3440, 1.0
    %v3445 = vadd.f32 %v3442, 1.0
    %v3446 = vrcp.pop %v3443
    %v3447 = vmul.f32 1.0, %v3446
    %v3448 = vrcp.pop %v3444
    %v3449 = vmul.f32 1.0, %v3448
    %v3450 = vrcp.pop %v3445
    %v3451 = vmul.f32 1.0, %v3450
    %v3452 = vtanh.pop %v3433
    %v3453 = vmul.f32 %v3449, %v3276
    %v3454 = vmul.f32 %v3447, %v3452
    %v3455 = vadd.f32 %v3453, %v3454
    %v3456 = vtanh.pop %v3455
    %v3457 = vmul.f32 %v3451, %v3456
    %s3458 = scalar_lea.vmem [#allocation8], 120
    %3459 = vst [vmem:[%s3458] sm:$0xff] %v3457
    %3460 = vst [vmem:[#allocation2] sm:$0xff] %v3457
    %3461 = vst [vmem:[#allocation3] sm:$0xff] %v3455
    // Predicated region
    $region34: #{tpu_custom_call.1} parent=1 // pred_check
      %p3462 = pneg %p42
    $region35: #{tpu_custom_call.1} parent=1 // pred_check_branch
      %3464 = sbr.rel (%p3462) target = $region37
    $region36: #{tpu_custom_call.1} parent=1 // pred_region
      %v3465 = vld [vmem:[#allocation2] sm:$0xff]
      %3466 = vst [vmem:[#allocation9] sm:$0xff] %v3465
      %v3467 = vld [vmem:[#allocation3] sm:$0xff]
      %3468 = vst [vmem:[#allocation11] sm:$0xff] %v3467
    $region37: #{tpu_custom_call.1} parent=1 // pred_fallthru
      _
    // Predicated region
    $region38: #{tpu_custom_call.1} parent=1 // pred_check
      _
    $region39: #{tpu_custom_call.1} parent=1 // pred_check_branch
      %3470 = sbr.rel (0) target = $region41
    $region40: #{tpu_custom_call.1} parent=1 // pred_region
      %s3472 = ssub.s32 2048, 2048
      %3473 = vsyncadd [#allocation7], %s3472
      %s3474 = sshll.u32 [#allocation8], 4
      %s3475 = int_to_ptr.vmem [resolvable:$true] %s3474
      %3480 = dma.vmem_to_hbm [thread:$0]  %s3475, 2048, %s6, [#allocation7], 128, 128, 8
    $region41: #{tpu_custom_call.1} parent=1 // pred_fallthru
      _
    // Predicated region
    $region42: #{tpu_custom_call.1} parent=1 // pred_check
      _
    $region43: #{tpu_custom_call.1} parent=1 // pred_check_branch
      %3482 = sbr.rel (0) target = $region45
    $region44: #{tpu_custom_call.1} parent=1 // pred_region
      %s3484 = ssub.s32 128, 128
      %3485 = vsyncadd [#allocation10], %s3484
      %s3487 = sshll.u32 [#allocation9], 4
      %s3488 = int_to_ptr.vmem [resolvable:$true] %s3487
      %3490 = dma.vmem_to_hbm [thread:$0]  %s3488, 128, %s7, [#allocation10]
    $region45: #{tpu_custom_call.1} parent=1 // pred_fallthru
      _
    // Predicated region
    $region46: #{tpu_custom_call.1} parent=1 // pred_check
      _
    $region47: #{tpu_custom_call.1} parent=1 // pred_check_branch
      %3492 = sbr.rel (0) target = $region49
    $region48: #{tpu_custom_call.1} parent=1 // pred_region
      %s3494 = ssub.s32 128, 128
      %3495 = vsyncadd [#allocation10], %s3494
      %s3497 = sshll.u32 [#allocation11], 4
      %s3498 = int_to_ptr.vmem [resolvable:$true] %s3497
      %3500 = dma.vmem_to_hbm [thread:$0]  %s3498, 128, %s8, [#allocation10]
    $region49: #{tpu_custom_call.1} parent=1 // pred_fallthru
      _
    // Predicated region
    $region50: #{tpu_custom_call.1} parent=1 // pred_check
      _
    $region51: #{tpu_custom_call.1} parent=1 // pred_check_branch
      %3502 = sbr.rel (0) target = $region53
    $region52: #{tpu_custom_call.1} parent=1 // pred_region
      %3503 = dma.done [#allocation7], 2048
    $region53: #{tpu_custom_call.1} parent=1 // pred_fallthru
      _
    // Predicated region
    $region54: #{tpu_custom_call.1} parent=1 // pred_check
      _
    $region55: #{tpu_custom_call.1} parent=1 // pred_check_branch
      %3505 = sbr.rel (0) target = $region57
    $region56: #{tpu_custom_call.1} parent=1 // pred_region
      %3506 = dma.done [#allocation10], 128
    $region57: #{tpu_custom_call.1} parent=1 // pred_fallthru
      _
    // Predicated region
    $region58: #{tpu_custom_call.1} parent=1 // pred_check
      _
    $region59: #{tpu_custom_call.1} parent=1 // pred_check_branch
      %3508 = sbr.rel (0) target = $region61
    $region60: #{tpu_custom_call.1} parent=1 // pred_region
      %3509 = dma.done [#allocation10], 128
    $region61: #{tpu_custom_call.1} parent=1 // pred_fallthru
      _
    %3510 = vsyncpa [#allocation6], 1
    %3511 = vsyncpa [#allocation7], 1
    %3512 = vsyncpa [#allocation10], 1

// kernel: tpu_custom_call.1
$region0: #{tpu_custom_call.1}
  #allocation0 [shape = 'u32[]', space=smem, size = 0x4, offset = 0x4, fixed_abs, tag = 'smem constant byte address 0x4 - core index']
  #allocation1 [shape = 'u32[144,128]{1,0:T(1,128)}', space=vmem, size = 0x12000, scoped, tag = 'internal scratch']
  #allocation2 [shape = 'f32[8,128]{1,0:T(8,128)}', space=vmem, size = 0x1000, scoped, tag = 'scratch operand']
  #allocation3 [shape = 'f32[8,128]{1,0:T(8,128)}', space=vmem, size = 0x1000, scoped, tag = 'scratch operand']
  #allocation4 [shape = 'f32[128,512]{1,0:T(8,128)}', space=vmem, size = 0x40000, scoped, tag = 'scratch operand']
  %s0 = inlined_call_operand.vmem [shape: f32[1,128,16], index: 0, kind: input, shape index: {}]
  %s1 = inlined_call_operand.vmem [shape: f32[1,8,128], index: 1, kind: input, shape index: {}]
  %s2 = inlined_call_operand.vmem [shape: f32[1,8,128], index: 2, kind: input, shape index: {}]
  %s3 = inlined_call_operand.vmem [shape: f32[16,512], index: 3, kind: input, shape index: {}]
  %s4 = inlined_call_operand.hbm [shape: f32[128,512], index: 4, kind: input, shape index: {}]
  %s5 = inlined_call_operand.vmem [shape: f32[1,512], index: 5, kind: input, shape index: {}]
  %s6 = inlined_call_operand.hbm [shape: f32[1,128,128], index: 6, kind: output, shape index: {0}]
  %s7 = inlined_call_operand.hbm [shape: f32[1,8,128], index: 7, kind: output, shape index: {1}]
  %s8 = inlined_call_operand.hbm [shape: f32[1,8,128], index: 8, kind: output, shape index: {2}]
  %9 = xla_tuple %s6, %s7, %s8
  %s10 = sld [smem:[#allocation0]]
  $region62: #{tpu_custom_call.1} parent=0
    _
  %s12 = ssub.s32 1, %s10
  %s13 = scalar_select 0, %s12, %s10
  $region1: #{tpu_custom_call.1} parent=0
    #allocation5 [shape = 'u8[262144]{0}', space=vmem, size = 0x40000, scoped, tag = 'input window, operand 4, single buffered']
    #allocation6 [shape = 's32[1]{0}', space=sflag, size = 0x4, scoped, tag = 'scoped memory for tpu_custom_call.1']
    #allocation7 [shape = 's32[1]{0}', space=sflag, size = 0x4, scoped, tag = 'scoped memory for tpu_custom_call.1']
    #allocation8 [shape = 'u8[65536]{0}', space=vmem, size = 0x10000, scoped, tag = 'output window, operand 0, single buffered']
    #allocation9 [shape = 'u8[4096]{0}', space=vmem, size = 0x1000, scoped, tag = 'output window, operand 1, single buffered']
    #allocation10 [shape = 's32[1]{0}', space=sflag, size = 0x4, scoped, tag = 'scoped memory for tpu_custom_call.1']
    #allocation11 [shape = 'u8[4096]{0}', space=vmem, size = 0x1000, scoped, tag = 'output window, operand 2, single buffered']
    %14 = vsyncpa [#allocation6], 0
    %15 = vsyncpa [#allocation7], 0
    %16 = vsyncpa [#allocation10], 0
    // Predicated region
    $region2: #{tpu_custom_call.1} parent=1 // pred_check
      _
    $region3: #{tpu_custom_call.1} parent=1 // pred_check_branch
      %18 = sbr.rel (0) target = $region5
    $region4: #{tpu_custom_call.1} parent=1 // pred_region
      _
    $region5: #{tpu_custom_call.1} parent=1 // pred_fallthru
      _
    // Predicated region
    $region6: #{tpu_custom_call.1} parent=1 // pred_check
      _
    $region7: #{tpu_custom_call.1} parent=1 // pred_check_branch
      %20 = sbr.rel (0) target = $region9
    $region8: #{tpu_custom_call.1} parent=1 // pred_region
      _
    $region9: #{tpu_custom_call.1} parent=1 // pred_fallthru
      _
    // Predicated region
    $region10: #{tpu_custom_call.1} parent=1 // pred_check
      _
    $region11: #{tpu_custom_call.1} parent=1 // pred_check_branch
      %22 = sbr.rel (0) target = $region13
    $region12: #{tpu_custom_call.1} parent=1 // pred_region
      _
    $region13: #{tpu_custom_call.1} parent=1 // pred_fallthru
      _
    // Predicated region
    $region14: #{tpu_custom_call.1} parent=1 // pred_check
      _
    $region15: #{tpu_custom_call.1} parent=1 // pred_check_branch
      %24 = sbr.rel (0) target = $region17
    $region16: #{tpu_custom_call.1} parent=1 // pred_region
      _
    $region17: #{tpu_custom_call.1} parent=1 // pred_fallthru
      _
    // Predicated region
    $region18: #{tpu_custom_call.1} parent=1 // pred_check
      _
    $region19: #{tpu_custom_call.1} parent=1 // pred_check_branch
      %26 = sbr.rel (0) target = $region21
    $region20: #{tpu_custom_call.1} parent=1 // pred_region
      %s28 = ssub.s32 8192, 8192
      %29 = vsyncadd [#allocation6], %s28
      %s30 = sshll.u32 [#allocation5], 4
      %s31 = int_to_ptr.vmem [resolvable:$true] %s30
      %36 = dma.hbm_to_vmem [thread:$0]  %s4, 8192, %s31, [#allocation6], 512, 512, 32
    $region21: #{tpu_custom_call.1} parent=1 // pred_fallthru
      _
    // Predicated region
    $region22: #{tpu_custom_call.1} parent=1 // pred_check
      _
    $region23: #{tpu_custom_call.1} parent=1 // pred_check_branch
      %38 = sbr.rel (0) target = $region25
    $region24: #{tpu_custom_call.1} parent=1 // pred_region
      _
    $region25: #{tpu_custom_call.1} parent=1 // pred_fallthru
      _
    // Predicated region
    $region26: #{tpu_custom_call.1} parent=1 // pred_check
      _
    $region27: #{tpu_custom_call.1} parent=1 // pred_check_branch
      %40 = sbr.rel (0) target = $region29
    $region28: #{tpu_custom_call.1} parent=1 // pred_region
      %41 = dma.done [#allocation6], 8192
    $region29: #{tpu_custom_call.1} parent=1 // pred_fallthru
      _
    %p42 = scmp.eq.s32.totalorder 0, 0
    // Predicated region
    $region30: #{tpu_custom_call.1} parent=1 // pred_check
      %p43 = pneg %p42
    $region31: #{tpu_custom_call.1} parent=1 // pred_check_branch
      %45 = sbr.rel (%p43) target = $region33
    $region32: #{tpu_custom_call.1} parent=1 // pred_region
      %v46 = vld [vmem:[%s1] sm:$0xff]
      %47 = vst [vmem:[#allocation2] sm:$0xff] %v46
      %v48 = vld [vmem:[%s2] sm:$0xff]
      %49 = vst [vmem:[#allocation3] sm:$0xff] %v48
    $region33: #{tpu_custom_call.1} parent=1 // pred_fallthru
      _
    %v50 = vld [vmem:[%s0] sm:$0xff]
    %v51 = vld [vmem:[%s0 + $0x8] sm:$0xff]
    %v52 = vld [vmem:[%s0 + $0x10] sm:$0xff]
    %v53 = vld [vmem:[%s0 + $0x18] sm:$0xff]
    %v54 = vld [vmem:[%s0 + $0x20] sm:$0xff]
    %v55 = vld [vmem:[%s0 + $0x28] sm:$0xff]
    %v56 = vld [vmem:[%s0 + $0x30] sm:$0xff]
    %v57 = vld [vmem:[%s0 + $0x38] sm:$0xff]
    %v58 = vld [vmem:[%s0 + $0x40] sm:$0xff]
    %v59 = vld [vmem:[%s0 + $0x48] sm:$0xff]
    %v60 = vld [vmem:[%s0 + $0x50] sm:$0xff]
    %v61 = vld [vmem:[%s0 + $0x58] sm:$0xff]
    %v62 = vld [vmem:[%s0 + $0x60] sm:$0xff]
    %v63 = vld [vmem:[%s0 + $0x68] sm:$0xff]
    %v64 = vld [vmem:[%s0 + $0x70] sm:$0xff]
    %v65 = vld [vmem:[%s0 + $0x78] sm:$0xff]
    %v66 = vld [vmem:[%s3] sm:$0xff]
    %v67 = vld [vmem:[%s3 + $0x8] sm:$0xff]
    %v68 = vld [vmem:[%s3 + $0x10] sm:$0xff]
    %v69 = vld [vmem:[%s3 + $0x18] sm:$0xff]
    %v70 = vld [vmem:[%s3 + $0x20] sm:$0xff]
    %v71 = vld [vmem:[%s3 + $0x28] sm:$0xff]
    %v72 = vld [vmem:[%s3 + $0x30] sm:$0xff]
    %v73 = vld [vmem:[%s3 + $0x38] sm:$0xff]
    %v74 = vld [vmem:[%s5] sm:$0xf]
    %v76 = vlaneseq
    %v77 = vshrl.u32 %v76, 7
    %v78 = vsub.s32 0, %v77
    %v79 = vrot.slane %v74, %v78
    %v80 = vlaneseq
    %v81 = vshrl.u32 %v80, 7
    %v82 = vsub.s32 1, %v81
    %v83 = vrot.slane %v74, %v82
    %v84 = vlaneseq
    %v85 = vshrl.u32 %v84, 7
    %v86 = vsub.s32 2, %v85
    %v87 = vrot.slane %v74, %v86
    %v88 = vlaneseq
    %v89 = vshrl.u32 %v88, 7
    %v90 = vsub.s32 3, %v89
    %v91 = vrot.slane %v74, %v90
    %vm96 = vcmask 130048
    %v98 = vsel %vm96, %v50, 0
    %v101 = vsel %vm96, %v51, 0
    %v104 = vsel %vm96, %v52, 0
    %v107 = vsel %vm96, %v53, 0
    %v110 = vsel %vm96, %v54, 0
    %v113 = vsel %vm96, %v55, 0
    %v116 = vsel %vm96, %v56, 0
    %v119 = vsel %vm96, %v57, 0
    %v122 = vsel %vm96, %v58, 0
    %v125 = vsel %vm96, %v59, 0
    %v128 = vsel %vm96, %v60, 0
    %v131 = vsel %vm96, %v61, 0
    %v134 = vsel %vm96, %v62, 0
    %v137 = vsel %vm96, %v63, 0
    %v140 = vsel %vm96, %v64, 0
    %v143 = vsel %vm96, %v65, 0
    %145 = vmatprep.subr.mxu0 %v67
    %146 = vmatpush1.msra.mxu0 %v66
    %147 = vmatprep.subr.mxu0 %v71
    %148 = vmatpush1.msra.mxu0 %v70
    %149 = vmatprep.subr.mxu0 0.0
    %150 = vmatpush1.msra.mxu0 0.0
    %151 = vmatprep.subr.mxu0 0.0
    %152 = vmatpush1.msra.mxu0 0.0
    %153 = vmatprep.subr.mxu0 0.0
    %154 = vmatpush1.msra.mxu0 0.0
    %155 = vmatprep.subr.mxu0 0.0
    %156 = vmatpush1.msra.mxu0 0.0
    %157 = vmatprep.subr.mxu0 0.0
    %158 = vmatpush1.msra.mxu0 0.0
    %159 = vmatprep.subr.mxu0 0.0
    %160 = vmatpush1.msra.mxu0 0.0
    %161 = vmatprep.subr.mxu0 0.0
    %162 = vmatpush1.msra.mxu0 0.0
    %163 = vmatprep.subr.mxu0 0.0
    %164 = vmatpush1.msra.mxu0 0.0
    %165 = vmatprep.subr.mxu0 0.0
    %166 = vmatpush1.msra.mxu0 0.0
    %167 = vmatprep.subr.mxu0 0.0
    %168 = vmatpush1.msra.mxu0 0.0
    %169 = vmatprep.subr.mxu0 0.0
    %170 = vmatpush1.msra.mxu0 0.0
    %171 = vmatprep.subr.mxu0 0.0
    %172 = vmatpush1.msra.mxu0 0.0
    %173 = vmatprep.subr.mxu0 0.0
    %174 = vmatpush1.msra.mxu0 0.0
    %175 = vmatprep.subr.mxu0 0.0
    %176 = vmatpush1.msra.mxu0 0.0
    %177 = vmatprep.subr.mxu0 0.0
    %178 = vmatpush1.msra.mxu0 0.0
    %179 = vmatprep.subr.mxu0 0.0
    %180 = vmatpush1.msra.mxu0 0.0
    %181 = vmatprep.subr.mxu0 0.0
    %182 = vmatpush1.msra.mxu0 0.0
    %183 = vmatprep.subr.mxu0 0.0
    %184 = vmatpush1.msra.mxu0 0.0
    %185 = vmatprep.subr.mxu0 0.0
    %186 = vmatpush1.msra.mxu0 0.0
    %187 = vmatprep.subr.mxu0 0.0
    %188 = vmatpush1.msra.mxu0 0.0
    %189 = vmatprep.subr.mxu0 0.0
    %190 = vmatpush1.msra.mxu0 0.0
    %191 = vmatprep.subr.mxu0 0.0
    %192 = vmatpush1.msra.mxu0 0.0
    %193 = vmatprep.subr.mxu0 0.0
    %194 = vmatpush1.msra.mxu0 0.0
    %195 = vmatprep.subr.mxu0 0.0
    %196 = vmatpush1.msra.mxu0 0.0
    %197 = vmatprep.subr.mxu0 0.0
    %198 = vmatpush1.msra.mxu0 0.0
    %199 = vmatprep.subr.mxu0 0.0
    %200 = vmatpush1.msra.mxu0 0.0
    %201 = vmatprep.subr.mxu0 0.0
    %202 = vmatpush1.msra.mxu0 0.0
    %203 = vmatprep.subr.mxu0 0.0
    %204 = vmatpush1.msra.mxu0 0.0
    %205 = vmatprep.subr.mxu0 0.0
    %206 = vmatpush1.msra.mxu0 0.0
    %207 = vmatprep.subr.mxu0 0.0
    %208 = vmatpush1.msra.mxu0 0.0
    %209 = vmatprep.mubr.f32.mxu0 0.0
    %210 = vmatmul.mubr.f32.gmra.mrb[0].mxu0 %v98
    %v211 = vpop.f32.mrb[0].mxu0
    %v212 = vadd.f32 %v79, %v211
    %v213 = vpop.f32.mrb[0].mxu0
    %v214 = vadd.f32 %v83, %v213
    %215 = vmatprep.mubr.f32.mxu0 0.0
    %216 = vmatmul.mubr.f32.gmra.mrb[0].mxu0 %v101
    %v217 = vpop.f32.mrb[0].mxu0
    %v218 = vadd.f32 %v79, %v217
    %v219 = vpop.f32.mrb[0].mxu0
    %v220 = vadd.f32 %v83, %v219
    %221 = vmatprep.mubr.f32.mxu0 0.0
    %222 = vmatmul.mubr.f32.gmra.mrb[0].mxu0 %v104
    %v223 = vpop.f32.mrb[0].mxu0
    %v224 = vadd.f32 %v79, %v223
    %v225 = vpop.f32.mrb[0].mxu0
    %v226 = vadd.f32 %v83, %v225
    %227 = vmatprep.mubr.f32.mxu0 0.0
    %228 = vmatmul.mubr.f32.gmra.mrb[0].mxu0 %v107
    %v229 = vpop.f32.mrb[0].mxu0
    %v230 = vadd.f32 %v79, %v229
    %v231 = vpop.f32.mrb[0].mxu0
    %v232 = vadd.f32 %v83, %v231
    %233 = vmatprep.mubr.f32.mxu0 0.0
    %234 = vmatmul.mubr.f32.gmra.mrb[0].mxu0 %v110
    %v235 = vpop.f32.mrb[0].mxu0
    %v236 = vadd.f32 %v79, %v235
    %v237 = vpop.f32.mrb[0].mxu0
    %v238 = vadd.f32 %v83, %v237
    %239 = vmatprep.mubr.f32.mxu0 0.0
    %240 = vmatmul.mubr.f32.gmra.mrb[0].mxu0 %v113
    %v241 = vpop.f32.mrb[0].mxu0
    %v242 = vadd.f32 %v79, %v241
    %v243 = vpop.f32.mrb[0].mxu0
    %v244 = vadd.f32 %v83, %v243
    %245 = vmatprep.mubr.f32.mxu0 0.0
    %246 = vmatmul.mubr.f32.gmra.mrb[0].mxu0 %v116
    %v247 = vpop.f32.mrb[0].mxu0
    %v248 = vadd.f32 %v79, %v247
    %v249 = vpop.f32.mrb[0].mxu0
    %v250 = vadd.f32 %v83, %v249
    %251 = vmatprep.mubr.f32.mxu0 0.0
    %252 = vmatmul.mubr.f32.gmra.mrb[0].mxu0 %v119
    %v253 = vpop.f32.mrb[0].mxu0
    %v254 = vadd.f32 %v79, %v253
    %v255 = vpop.f32.mrb[0].mxu0
    %v256 = vadd.f32 %v83, %v255
    %257 = vmatprep.mubr.f32.mxu0 0.0
    %258 = vmatmul.mubr.f32.gmra.mrb[0].mxu0 %v122
    %v259 = vpop.f32.mrb[0].mxu0
    %v260 = vadd.f32 %v79, %v259
    %v261 = vpop.f32.mrb[0].mxu0
    %v262 = vadd.f32 %v83, %v261
    %263 = vmatprep.mubr.f32.mxu0 0.0
    %264 = vmatmul.mubr.f32.gmra.mrb[0].mxu0 %v125
    %v265 = vpop.f32.mrb[0].mxu0
    %v266 = vadd.f32 %v79, %v265
    %v267 = vpop.f32.mrb[0].mxu0
    %v268 = vadd.f32 %v83, %v267
    %269 = vmatprep.mubr.f32.mxu0 0.0
    %270 = vmatmul.mubr.f32.gmra.mrb[0].mxu0 %v128
    %v271 = vpop.f32.mrb[0].mxu0
    %v272 = vadd.f32 %v79, %v271
    %v273 = vpop.f32.mrb[0].mxu0
    %v274 = vadd.f32 %v83, %v273
    %275 = vmatprep.mubr.f32.mxu0 0.0
    %276 = vmatmul.mubr.f32.gmra.mrb[0].mxu0 %v131
    %v277 = vpop.f32.mrb[0].mxu0
    %v278 = vadd.f32 %v79, %v277
    %v279 = vpop.f32.mrb[0].mxu0
    %v280 = vadd.f32 %v83, %v279
    %281 = vmatprep.mubr.f32.mxu0 0.0
    %282 = vmatmul.mubr.f32.gmra.mrb[0].mxu0 %v134
    %v283 = vpop.f32.mrb[0].mxu0
    %v284 = vadd.f32 %v79, %v283
    %v285 = vpop.f32.mrb[0].mxu0
    %v286 = vadd.f32 %v83, %v285
    %287 = vmatprep.mubr.f32.mxu0 0.0
    %288 = vmatmul.mubr.f32.gmra.mrb[0].mxu0 %v137
    %v289 = vpop.f32.mrb[0].mxu0
    %v290 = vadd.f32 %v79, %v289
    %v291 = vpop.f32.mrb[0].mxu0
    %v292 = vadd.f32 %v83, %v291
    %293 = vmatprep.mubr.f32.mxu0 0.0
    %294 = vmatmul.mubr.f32.gmra.mrb[0].mxu0 %v140
    %v295 = vpop.f32.mrb[0].mxu0
    %v296 = vadd.f32 %v79, %v295
    %v297 = vpop.f32.mrb[0].mxu0
    %v298 = vadd.f32 %v83, %v297
    %299 = vmatprep.mubr.f32.mxu0 0.0
    %300 = vmatmul.mubr.f32.gmra.mrb[0].mxu0 %v143
    %v301 = vpop.f32.mrb[0].mxu0
    %v302 = vadd.f32 %v79, %v301
    %v303 = vpop.f32.mrb[0].mxu0
    %v304 = vadd.f32 %v83, %v303
    %305 = vdwg.mxu0
    %306 = vmatprep.subr.mxu0 %v69
    %307 = vmatpush1.msra.mxu0 %v68
    %308 = vmatprep.subr.mxu0 %v73
    %309 = vmatpush1.msra.mxu0 %v72
    %310 = vmatprep.subr.mxu0 0.0
    %311 = vmatpush1.msra.mxu0 0.0
    %312 = vmatprep.subr.mxu0 0.0
    %313 = vmatpush1.msra.mxu0 0.0
    %314 = vmatprep.subr.mxu0 0.0
    %315 = vmatpush1.msra.mxu0 0.0
    %316 = vmatprep.subr.mxu0 0.0
    %317 = vmatpush1.msra.mxu0 0.0
    %318 = vmatprep.subr.mxu0 0.0
    %319 = vmatpush1.msra.mxu0 0.0
    %320 = vmatprep.subr.mxu0 0.0
    %321 = vmatpush1.msra.mxu0 0.0
    %322 = vmatprep.subr.mxu0 0.0
    %323 = vmatpush1.msra.mxu0 0.0
    %324 = vmatprep.subr.mxu0 0.0
    %325 = vmatpush1.msra.mxu0 0.0
    %326 = vmatprep.subr.mxu0 0.0
    %327 = vmatpush1.msra.mxu0 0.0
    %328 = vmatprep.subr.mxu0 0.0
    %329 = vmatpush1.msra.mxu0 0.0
    %330 = vmatprep.subr.mxu0 0.0
    %331 = vmatpush1.msra.mxu0 0.0
    %332 = vmatprep.subr.mxu0 0.0
    %333 = vmatpush1.msra.mxu0 0.0
    %334 = vmatprep.subr.mxu0 0.0
    %335 = vmatpush1.msra.mxu0 0.0
    %336 = vmatprep.subr.mxu0 0.0
    %337 = vmatpush1.msra.mxu0 0.0
    %338 = vmatprep.subr.mxu0 0.0
    %339 = vmatpush1.msra.mxu0 0.0
    %340 = vmatprep.subr.mxu0 0.0
    %341 = vmatpush1.msra.mxu0 0.0
    %342 = vmatprep.subr.mxu0 0.0
    %343 = vmatpush1.msra.mxu0 0.0
    %344 = vmatprep.subr.mxu0 0.0
    %345 = vmatpush1.msra.mxu0 0.0
    %346 = vmatprep.subr.mxu0 0.0
    %347 = vmatpush1.msra.mxu0 0.0
    %348 = vmatprep.subr.mxu0 0.0
    %349 = vmatpush1.msra.mxu0 0.0
    %350 = vmatprep.subr.mxu0 0.0
    %351 = vmatpush1.msra.mxu0 0.0
    %352 = vmatprep.subr.mxu0 0.0
    %353 = vmatpush1.msra.mxu0 0.0
    %354 = vmatprep.subr.mxu0 0.0
    %355 = vmatpush1.msra.mxu0 0.0
    %356 = vmatprep.subr.mxu0 0.0
    %357 = vmatpush1.msra.mxu0 0.0
    %358 = vmatprep.subr.mxu0 0.0
    %359 = vmatpush1.msra.mxu0 0.0
    %360 = vmatprep.subr.mxu0 0.0
    %361 = vmatpush1.msra.mxu0 0.0
    %362 = vmatprep.subr.mxu0 0.0
    %363 = vmatpush1.msra.mxu0 0.0
    %364 = vmatprep.subr.mxu0 0.0
    %365 = vmatpush1.msra.mxu0 0.0
    %366 = vmatprep.subr.mxu0 0.0
    %367 = vmatpush1.msra.mxu0 0.0
    %368 = vmatprep.subr.mxu0 0.0
    %369 = vmatpush1.msra.mxu0 0.0
    %370 = vmatprep.mubr.f32.mxu0 0.0
    %371 = vmatmul.mubr.f32.gmra.mrb[0].mxu0 %v98
    %v372 = vpop.f32.mrb[0].mxu0
    %v373 = vadd.f32 %v87, %v372
    %v374 = vpop.f32.mrb[0].mxu0
    %v375 = vadd.f32 %v91, %v374
    %376 = vmatprep.mubr.f32.mxu0 0.0
    %377 = vmatmul.mubr.f32.gmra.mrb[0].mxu0 %v101
    %v378 = vpop.f32.mrb[0].mxu0
    %v379 = vadd.f32 %v87, %v378
    %v380 = vpop.f32.mrb[0].mxu0
    %v381 = vadd.f32 %v91, %v380
    %382 = vmatprep.mubr.f32.mxu0 0.0
    %383 = vmatmul.mubr.f32.gmra.mrb[0].mxu0 %v104
    %v384 = vpop.f32.mrb[0].mxu0
    %v385 = vadd.f32 %v87, %v384
    %v386 = vpop.f32.mrb[0].mxu0
    %v387 = vadd.f32 %v91, %v386
    %388 = vmatprep.mubr.f32.mxu0 0.0
    %389 = vmatmul.mubr.f32.gmra.mrb[0].mxu0 %v107
    %v390 = vpop.f32.mrb[0].mxu0
    %v391 = vadd.f32 %v87, %v390
    %v392 = vpop.f32.mrb[0].mxu0
    %v393 = vadd.f32 %v91, %v392
    %394 = vmatprep.mubr.f32.mxu0 0.0
    %395 = vmatmul.mubr.f32.gmra.mrb[0].mxu0 %v110
    %v396 = vpop.f32.mrb[0].mxu0
    %v397 = vadd.f32 %v87, %v396
    %v398 = vpop.f32.mrb[0].mxu0
    %v399 = vadd.f32 %v91, %v398
    %400 = vmatprep.mubr.f32.mxu0 0.0
    %401 = vmatmul.mubr.f32.gmra.mrb[0].mxu0 %v113
    %v402 = vpop.f32.mrb[0].mxu0
    %v403 = vadd.f32 %v87, %v402
    %v404 = vpop.f32.mrb[0].mxu0
    %v405 = vadd.f32 %v91, %v404
    %406 = vmatprep.mubr.f32.mxu0 0.0
    %407 = vmatmul.mubr.f32.gmra.mrb[0].mxu0 %v116
    %v408 = vpop.f32.mrb[0].mxu0
    %v409 = vadd.f32 %v87, %v408
    %v410 = vpop.f32.mrb[0].mxu0
    %v411 = vadd.f32 %v91, %v410
    %412 = vmatprep.mubr.f32.mxu0 0.0
    %413 = vmatmul.mubr.f32.gmra.mrb[0].mxu0 %v119
    %v414 = vpop.f32.mrb[0].mxu0
    %v415 = vadd.f32 %v87, %v414
    %v416 = vpop.f32.mrb[0].mxu0
    %v417 = vadd.f32 %v91, %v416
    %418 = vmatprep.mubr.f32.mxu0 0.0
    %419 = vmatmul.mubr.f32.gmra.mrb[0].mxu0 %v122
    %v420 = vpop.f32.mrb[0].mxu0
    %v421 = vadd.f32 %v87, %v420
    %v422 = vpop.f32.mrb[0].mxu0
    %v423 = vadd.f32 %v91, %v422
    %424 = vmatprep.mubr.f32.mxu0 0.0
    %425 = vmatmul.mubr.f32.gmra.mrb[0].mxu0 %v125
    %v426 = vpop.f32.mrb[0].mxu0
    %v427 = vadd.f32 %v87, %v426
    %v428 = vpop.f32.mrb[0].mxu0
    %v429 = vadd.f32 %v91, %v428
    %430 = vmatprep.mubr.f32.mxu0 0.0
    %431 = vmatmul.mubr.f32.gmra.mrb[0].mxu0 %v128
    %v432 = vpop.f32.mrb[0].mxu0
    %v433 = vadd.f32 %v87, %v432
    %v434 = vpop.f32.mrb[0].mxu0
    %v435 = vadd.f32 %v91, %v434
    %436 = vmatprep.mubr.f32.mxu0 0.0
    %437 = vmatmul.mubr.f32.gmra.mrb[0].mxu0 %v131
    %v438 = vpop.f32.mrb[0].mxu0
    %v439 = vadd.f32 %v87, %v438
    %v440 = vpop.f32.mrb[0].mxu0
    %v441 = vadd.f32 %v91, %v440
    %442 = vmatprep.mubr.f32.mxu0 0.0
    %443 = vmatmul.mubr.f32.gmra.mrb[0].mxu0 %v134
    %v444 = vpop.f32.mrb[0].mxu0
    %v445 = vadd.f32 %v87, %v444
    %v446 = vpop.f32.mrb[0].mxu0
    %v447 = vadd.f32 %v91, %v446
    %448 = vmatprep.mubr.f32.mxu0 0.0
    %449 = vmatmul.mubr.f32.gmra.mrb[0].mxu0 %v137
    %v450 = vpop.f32.mrb[0].mxu0
    %v451 = vadd.f32 %v87, %v450
    %v452 = vpop.f32.mrb[0].mxu0
    %v453 = vadd.f32 %v91, %v452
    %454 = vmatprep.mubr.f32.mxu0 0.0
    %455 = vmatmul.mubr.f32.gmra.mrb[0].mxu0 %v140
    %v456 = vpop.f32.mrb[0].mxu0
    %v457 = vadd.f32 %v87, %v456
    %v458 = vpop.f32.mrb[0].mxu0
    %v459 = vadd.f32 %v91, %v458
    %460 = vmatprep.mubr.f32.mxu0 0.0
    %461 = vmatmul.mubr.f32.gmra.mrb[0].mxu0 %v143
    %v462 = vpop.f32.mrb[0].mxu0
    %v463 = vadd.f32 %v87, %v462
    %v464 = vpop.f32.mrb[0].mxu0
    %v465 = vadd.f32 %v91, %v464
    %466 = vdwg.mxu0
    %467 = vst [vmem:[#allocation4] sm:$0xff] %v212
    %468 = vst [vmem:[#allocation4 + $0x8] sm:$0xff] %v214
    %469 = vst [vmem:[#allocation4 + $0x10] sm:$0xff] %v373
    %470 = vst [vmem:[#allocation4 + $0x18] sm:$0xff] %v375
    %471 = vst [vmem:[#allocation4 + $0x20] sm:$0xff] %v218
    %472 = vst [vmem:[#allocation4 + $0x28] sm:$0xff] %v220
    %473 = vst [vmem:[#allocation4 + $0x30] sm:$0xff] %v379
    %474 = vst [vmem:[#allocation4 + $0x38] sm:$0xff] %v381
    %475 = vst [vmem:[#allocation4 + $0x40] sm:$0xff] %v224
    %476 = vst [vmem:[#allocation4 + $0x48] sm:$0xff] %v226
    %477 = vst [vmem:[#allocation4 + $0x50] sm:$0xff] %v385
    %478 = vst [vmem:[#allocation4 + $0x58] sm:$0xff] %v387
    %479 = vst [vmem:[#allocation4 + $0x60] sm:$0xff] %v230
    %480 = vst [vmem:[#allocation4 + $0x68] sm:$0xff] %v232
    %481 = vst [vmem:[#allocation4 + $0x70] sm:$0xff] %v391
    %482 = vst [vmem:[#allocation4 + $0x78] sm:$0xff] %v393
    %483 = vst [vmem:[#allocation4 + $0x80] sm:$0xff] %v236
    %484 = vst [vmem:[#allocation4 + $0x88] sm:$0xff] %v238
    %485 = vst [vmem:[#allocation4 + $0x90] sm:$0xff] %v397
    %486 = vst [vmem:[#allocation4 + $0x98] sm:$0xff] %v399
    %487 = vst [vmem:[#allocation4 + $0xa0] sm:$0xff] %v242
    %488 = vst [vmem:[#allocation4 + $0xa8] sm:$0xff] %v244
    %489 = vst [vmem:[#allocation4 + $0xb0] sm:$0xff] %v403
    %490 = vst [vmem:[#allocation4 + $0xb8] sm:$0xff] %v405
    %491 = vst [vmem:[#allocation4 + $0xc0] sm:$0xff] %v248
    %492 = vst [vmem:[#allocation4 + $0xc8] sm:$0xff] %v250
    %493 = vst [vmem:[#allocation4 + $0xd0] sm:$0xff] %v409
    %494 = vst [vmem:[#allocation4 + $0xd8] sm:$0xff] %v411
    %495 = vst [vmem:[#allocation4 + $0xe0] sm:$0xff] %v254
    %496 = vst [vmem:[#allocation4 + $0xe8] sm:$0xff] %v256
    %497 = vst [vmem:[#allocation4 + $0xf0] sm:$0xff] %v415
    %498 = vst [vmem:[#allocation4 + $0xf8] sm:$0xff] %v417
    %499 = vst [vmem:[#allocation4 + $0x100] sm:$0xff] %v260
    %500 = vst [vmem:[#allocation4 + $0x108] sm:$0xff] %v262
    %501 = vst [vmem:[#allocation4 + $0x110] sm:$0xff] %v421
    %502 = vst [vmem:[#allocation4 + $0x118] sm:$0xff] %v423
    %503 = vst [vmem:[#allocation4 + $0x120] sm:$0xff] %v266
    %504 = vst [vmem:[#allocation4 + $0x128] sm:$0xff] %v268
    %505 = vst [vmem:[#allocation4 + $0x130] sm:$0xff] %v427
    %506 = vst [vmem:[#allocation4 + $0x138] sm:$0xff] %v429
    %507 = vst [vmem:[#allocation4 + $0x140] sm:$0xff] %v272
    %508 = vst [vmem:[#allocation4 + $0x148] sm:$0xff] %v274
    %509 = vst [vmem:[#allocation4 + $0x150] sm:$0xff] %v433
    %510 = vst [vmem:[#allocation4 + $0x158] sm:$0xff] %v435
    %511 = vst [vmem:[#allocation4 + $0x160] sm:$0xff] %v278
    %512 = vst [vmem:[#allocation4 + $0x168] sm:$0xff] %v280
    %513 = vst [vmem:[#allocation4 + $0x170] sm:$0xff] %v439
    %514 = vst [vmem:[#allocation4 + $0x178] sm:$0xff] %v441
    %515 = vst [vmem:[#allocation4 + $0x180] sm:$0xff] %v284
    %516 = vst [vmem:[#allocation4 + $0x188] sm:$0xff] %v286
    %517 = vst [vmem:[#allocation4 + $0x190] sm:$0xff] %v445
    %518 = vst [vmem:[#allocation4 + $0x198] sm:$0xff] %v447
    %519 = vst [vmem:[#allocation4 + $0x1a0] sm:$0xff] %v290
    %520 = vst [vmem:[#allocation4 + $0x1a8] sm:$0xff] %v292
    %521 = vst [vmem:[#allocation4 + $0x1b0] sm:$0xff] %v451
    %522 = vst [vmem:[#allocation4 + $0x1b8] sm:$0xff] %v453
    %523 = vst [vmem:[#allocation4 + $0x1c0] sm:$0xff] %v296
    %524 = vst [vmem:[#allocation4 + $0x1c8] sm:$0xff] %v298
    %525 = vst [vmem:[#allocation4 + $0x1d0] sm:$0xff] %v457
    %526 = vst [vmem:[#allocation4 + $0x1d8] sm:$0xff] %v459
    %527 = vst [vmem:[#allocation4 + $0x1e0] sm:$0xff] %v302
    %528 = vst [vmem:[#allocation4 + $0x1e8] sm:$0xff] %v304
    %529 = vst [vmem:[#allocation4 + $0x1f0] sm:$0xff] %v463
    %530 = vst [vmem:[#allocation4 + $0x1f8] sm:$0xff] %v465
    %v531 = vld [vmem:[#allocation5] sm:$0xff]
    %v532 = vld [vmem:[#allocation5 + $0x8] sm:$0xff]
    %v533 = vld [vmem:[#allocation5 + $0x10] sm:$0xff]
    %v534 = vld [vmem:[#allocation5 + $0x18] sm:$0xff]
    %v535 = vld [vmem:[#allocation5 + $0x20] sm:$0xff]
    %v536 = vld [vmem:[#allocation5 + $0x28] sm:$0xff]
    %v537 = vld [vmem:[#allocation5 + $0x30] sm:$0xff]
    %v538 = vld [vmem:[#allocation5 + $0x38] sm:$0xff]
    %v539 = vld [vmem:[#allocation5 + $0x40] sm:$0xff]
    %v540 = vld [vmem:[#allocation5 + $0x48] sm:$0xff]
    %v541 = vld [vmem:[#allocation5 + $0x50] sm:$0xff]
    %v542 = vld [vmem:[#allocation5 + $0x58] sm:$0xff]
    %v543 = vld [vmem:[#allocation5 + $0x60] sm:$0xff]
    %v544 = vld [vmem:[#allocation5 + $0x68] sm:$0xff]
    %v545 = vld [vmem:[#allocation5 + $0x70] sm:$0xff]
    %v546 = vld [vmem:[#allocation5 + $0x78] sm:$0xff]
    %v547 = vld [vmem:[#allocation5 + $0x80] sm:$0xff]
    %v548 = vld [vmem:[#allocation5 + $0x88] sm:$0xff]
    %v549 = vld [vmem:[#allocation5 + $0x90] sm:$0xff]
    %v550 = vld [vmem:[#allocation5 + $0x98] sm:$0xff]
    %v551 = vld [vmem:[#allocation5 + $0xa0] sm:$0xff]
    %v552 = vld [vmem:[#allocation5 + $0xa8] sm:$0xff]
    %v553 = vld [vmem:[#allocation5 + $0xb0] sm:$0xff]
    %v554 = vld [vmem:[#allocation5 + $0xb8] sm:$0xff]
    %v555 = vld [vmem:[#allocation5 + $0xc0] sm:$0xff]
    %v556 = vld [vmem:[#allocation5 + $0xc8] sm:$0xff]
    %v557 = vld [vmem:[#allocation5 + $0xd0] sm:$0xff]
    %v558 = vld [vmem:[#allocation5 + $0xd8] sm:$0xff]
    %v559 = vld [vmem:[#allocation5 + $0xe0] sm:$0xff]
    %v560 = vld [vmem:[#allocation5 + $0xe8] sm:$0xff]
    %v561 = vld [vmem:[#allocation5 + $0xf0] sm:$0xff]
    %v562 = vld [vmem:[#allocation5 + $0xf8] sm:$0xff]
    %v563 = vld [vmem:[#allocation5 + $0x100] sm:$0xff]
    %v564 = vld [vmem:[#allocation5 + $0x108] sm:$0xff]
    %v565 = vld [vmem:[#allocation5 + $0x110] sm:$0xff]
    %v566 = vld [vmem:[#allocation5 + $0x118] sm:$0xff]
    %v567 = vld [vmem:[#allocation5 + $0x120] sm:$0xff]
    %v568 = vld [vmem:[#allocation5 + $0x128] sm:$0xff]
    %v569 = vld [vmem:[#allocation5 + $0x130] sm:$0xff]
    %v570 = vld [vmem:[#allocation5 + $0x138] sm:$0xff]
    %v571 = vld [vmem:[#allocation5 + $0x140] sm:$0xff]
    %v572 = vld [vmem:[#allocation5 + $0x148] sm:$0xff]
    %v573 = vld [vmem:[#allocation5 + $0x150] sm:$0xff]
    %v574 = vld [vmem:[#allocation5 + $0x158] sm:$0xff]
    %v575 = vld [vmem:[#allocation5 + $0x160] sm:$0xff]
    %v576 = vld [vmem:[#allocation5 + $0x168] sm:$0xff]
    %v577 = vld [vmem:[#allocation5 + $0x170] sm:$0xff]
    %v578 = vld [vmem:[#allocation5 + $0x178] sm:$0xff]
    %v579 = vld [vmem:[#allocation5 + $0x180] sm:$0xff]
    %v580 = vld [vmem:[#allocation5 + $0x188] sm:$0xff]
    %v581 = vld [vmem:[#allocation5 + $0x190] sm:$0xff]
    %v582 = vld [vmem:[#allocation5 + $0x198] sm:$0xff]
    %v583 = vld [vmem:[#allocation5 + $0x1a0] sm:$0xff]
    %v584 = vld [vmem:[#allocation5 + $0x1a8] sm:$0xff]
    %v585 = vld [vmem:[#allocation5 + $0x1b0] sm:$0xff]
    %v586 = vld [vmem:[#allocation5 + $0x1b8] sm:$0xff]
    %v587 = vld [vmem:[#allocation5 + $0x1c0] sm:$0xff]
    %v588 = vld [vmem:[#allocation5 + $0x1c8] sm:$0xff]
    %v589 = vld [vmem:[#allocation5 + $0x1d0] sm:$0xff]
    %v590 = vld [vmem:[#allocation5 + $0x1d8] sm:$0xff]
    %v591 = vld [vmem:[#allocation5 + $0x1e0] sm:$0xff]
    %v592 = vld [vmem:[#allocation5 + $0x1e8] sm:$0xff]
    %v593 = vld [vmem:[#allocation5 + $0x1f0] sm:$0xff]
    %v594 = vld [vmem:[#allocation5 + $0x1f8] sm:$0xff]
    %v595 = vld [vmem:[#allocation2] sm:$0xff]
    %v596 = vld [vmem:[#allocation3] sm:$0xff]
    %s597 = smul.u32 0, 4
    %s598 = smul.addr %s597, 8
    %s599 = scalar_lea.vmem [#allocation4], %s598
    %v600 = vld [vmem:[%s599] sm:$0xff]
    %v601 = vld [vmem:[%s599 + $0x8] sm:$0xff]
    %v602 = vld [vmem:[%s599 + $0x10] sm:$0xff]
    %v603 = vld [vmem:[%s599 + $0x18] sm:$0xff]
    %604 = vmatprep.subr.mxu0 %v532
    %605 = vmatpush1.msra.mxu0 %v531
    %606 = vmatprep.subr.mxu0 %v536
    %607 = vmatpush1.msra.mxu0 %v535
    %608 = vmatprep.subr.mxu0 %v540
    %609 = vmatpush1.msra.mxu0 %v539
    %610 = vmatprep.subr.mxu0 %v544
    %611 = vmatpush1.msra.mxu0 %v543
    %612 = vmatprep.subr.mxu0 %v548
    %613 = vmatpush1.msra.mxu0 %v547
    %614 = vmatprep.subr.mxu0 %v552
    %615 = vmatpush1.msra.mxu0 %v551
    %616 = vmatprep.subr.mxu0 %v556
    %617 = vmatpush1.msra.mxu0 %v555
    %618 = vmatprep.subr.mxu0 %v560
    %619 = vmatpush1.msra.mxu0 %v559
    %620 = vmatprep.subr.mxu0 %v564
    %621 = vmatpush1.msra.mxu0 %v563
    %622 = vmatprep.subr.mxu0 %v568
    %623 = vmatpush1.msra.mxu0 %v567
    %624 = vmatprep.subr.mxu0 %v572
    %625 = vmatpush1.msra.mxu0 %v571
    %626 = vmatprep.subr.mxu0 %v576
    %627 = vmatpush1.msra.mxu0 %v575
    %628 = vmatprep.subr.mxu0 %v580
    %629 = vmatpush1.msra.mxu0 %v579
    %630 = vmatprep.subr.mxu0 %v584
    %631 = vmatpush1.msra.mxu0 %v583
    %632 = vmatprep.subr.mxu0 %v588
    %633 = vmatpush1.msra.mxu0 %v587
    %634 = vmatprep.subr.mxu0 %v592
    %635 = vmatpush1.msra.mxu0 %v591
    %636 = vmatprep.subr.mxu0 0.0
    %637 = vmatpush1.msra.mxu0 0.0
    %638 = vmatprep.subr.mxu0 0.0
    %639 = vmatpush1.msra.mxu0 0.0
    %640 = vmatprep.subr.mxu0 0.0
    %641 = vmatpush1.msra.mxu0 0.0
    %642 = vmatprep.subr.mxu0 0.0
    %643 = vmatpush1.msra.mxu0 0.0
    %644 = vmatprep.subr.mxu0 0.0
    %645 = vmatpush1.msra.mxu0 0.0
    %646 = vmatprep.subr.mxu0 0.0
    %647 = vmatpush1.msra.mxu0 0.0
    %648 = vmatprep.subr.mxu0 0.0
    %649 = vmatpush1.msra.mxu0 0.0
    %650 = vmatprep.subr.mxu0 0.0
    %651 = vmatpush1.msra.mxu0 0.0
    %652 = vmatprep.subr.mxu0 0.0
    %653 = vmatpush1.msra.mxu0 0.0
    %654 = vmatprep.subr.mxu0 0.0
    %655 = vmatpush1.msra.mxu0 0.0
    %656 = vmatprep.subr.mxu0 0.0
    %657 = vmatpush1.msra.mxu0 0.0
    %658 = vmatprep.subr.mxu0 0.0
    %659 = vmatpush1.msra.mxu0 0.0
    %660 = vmatprep.subr.mxu0 0.0
    %661 = vmatpush1.msra.mxu0 0.0
    %662 = vmatprep.subr.mxu0 0.0
    %663 = vmatpush1.msra.mxu0 0.0
    %664 = vmatprep.subr.mxu0 0.0
    %665 = vmatpush1.msra.mxu0 0.0
    %666 = vmatprep.subr.mxu0 0.0
    %667 = vmatpush1.msra.mxu0 0.0
    %668 = vmatprep.mubr.f32.mxu0 0.0
    %669 = vmatmul.mubr.f32.gmra.mrb[0].mxu0 %v595
    %v670 = vpop.f32.mrb[0].mxu0
    %v671 = vadd.f32 0.0, %v670
    %v672 = vpop.f32.mrb[0].mxu0
    %v673 = vadd.f32 0.0, %v672
    %674 = vdwg.mxu0
    %675 = vmatprep.subr.mxu0 %v534
    %676 = vmatpush1.msra.mxu0 %v533
    %677 = vmatprep.subr.mxu0 %v538
    %678 = vmatpush1.msra.mxu0 %v537
    %679 = vmatprep.subr.mxu0 %v542
    %680 = vmatpush1.msra.mxu0 %v541
    %681 = vmatprep.subr.mxu0 %v546
    %682 = vmatpush1.msra.mxu0 %v545
    %683 = vmatprep.subr.mxu0 %v550
    %684 = vmatpush1.msra.mxu0 %v549
    %685 = vmatprep.subr.mxu0 %v554
    %686 = vmatpush1.msra.mxu0 %v553
    %687 = vmatprep.subr.mxu0 %v558
    %688 = vmatpush1.msra.mxu0 %v557
    %689 = vmatprep.subr.mxu0 %v562
    %690 = vmatpush1.msra.mxu0 %v561
    %691 = vmatprep.subr.mxu0 %v566
    %692 = vmatpush1.msra.mxu0 %v565
    %693 = vmatprep.subr.mxu0 %v570
    %694 = vmatpush1.msra.mxu0 %v569
    %695 = vmatprep.subr.mxu0 %v574
    %696 = vmatpush1.msra.mxu0 %v573
    %697 = vmatprep.subr.mxu0 %v578
    %698 = vmatpush1.msra.mxu0 %v577
    %699 = vmatprep.subr.mxu0 %v582
    %700 = vmatpush1.msra.mxu0 %v581
    %701 = vmatprep.subr.mxu0 %v586
    %702 = vmatpush1.msra.mxu0 %v585
    %703 = vmatprep.subr.mxu0 %v590
    %704 = vmatpush1.msra.mxu0 %v589
    %705 = vmatprep.subr.mxu0 %v594
    %706 = vmatpush1.msra.mxu0 %v593
    %707 = vmatprep.subr.mxu0 0.0
    %708 = vmatpush1.msra.mxu0 0.0
    %709 = vmatprep.subr.mxu0 0.0
    %710 = vmatpush1.msra.mxu0 0.0
    %711 = vmatprep.subr.mxu0 0.0
    %712 = vmatpush1.msra.mxu0 0.0
    %713 = vmatprep.subr.mxu0 0.0
    %714 = vmatpush1.msra.mxu0 0.0
    %715 = vmatprep.subr.mxu0 0.0
    %716 = vmatpush1.msra.mxu0 0.0
    %717 = vmatprep.subr.mxu0 0.0
    %718 = vmatpush1.msra.mxu0 0.0
    %719 = vmatprep.subr.mxu0 0.0
    %720 = vmatpush1.msra.mxu0 0.0
    %721 = vmatprep.subr.mxu0 0.0
    %722 = vmatpush1.msra.mxu0 0.0
    %723 = vmatprep.subr.mxu0 0.0
    %724 = vmatpush1.msra.mxu0 0.0
    %725 = vmatprep.subr.mxu0 0.0
    %726 = vmatpush1.msra.mxu0 0.0
    %727 = vmatprep.subr.mxu0 0.0
    %728 = vmatpush1.msra.mxu0 0.0
    %729 = vmatprep.subr.mxu0 0.0
    %730 = vmatpush1.msra.mxu0 0.0
    %731 = vmatprep.subr.mxu0 0.0
    %732 = vmatpush1.msra.mxu0 0.0
    %733 = vmatprep.subr.mxu0 0.0
    %734 = vmatpush1.msra.mxu0 0.0
    %735 = vmatprep.subr.mxu0 0.0
    %736 = vmatpush1.msra.mxu0 0.0
    %737 = vmatprep.subr.mxu0 0.0
    %738 = vmatpush1.msra.mxu0 0.0
    %739 = vmatprep.mubr.f32.mxu0 0.0
    %740 = vmatmul.mubr.f32.gmra.mrb[0].mxu0 %v595
    %v741 = vpop.f32.mrb[0].mxu0
    %v742 = vadd.f32 0.0, %v741
    %v743 = vpop.f32.mrb[0].mxu0
    %v744 = vadd.f32 0.0, %v743
    %745 = vdwg.mxu0
    %v746 = vadd.f32 %v600, %v671
    %v747 = vadd.f32 %v601, %v673
    %v748 = vadd.f32 %v602, %v742
    %v749 = vadd.f32 %v603, %v744
    %v750 = vxor.u32 %v746, 2147483648
    %v751 = vxor.u32 %v747, 2147483648
    %v752 = vxor.u32 %v748, 2147483648
    %v753 = vmul.f32 %v750, 1.442695
    %v754 = vpow.pop %v753
    %v755 = vmul.f32 %v751, 1.442695
    %v756 = vpow.pop %v755
    %v757 = vmul.f32 %v752, 1.442695
    %v758 = vpow.pop %v757
    %v759 = vadd.f32 %v754, 1.0
    %v760 = vadd.f32 %v756, 1.0
    %v761 = vadd.f32 %v758, 1.0
    %v762 = vrcp.pop %v759
    %v763 = vmul.f32 1.0, %v762
    %v764 = vrcp.pop %v760
    %v765 = vmul.f32 1.0, %v764
    %v766 = vrcp.pop %v761
    %v767 = vmul.f32 1.0, %v766
    %v768 = vtanh.pop %v749
    %v769 = vmul.f32 %v765, %v596
    %v770 = vmul.f32 %v763, %v768
    %v771 = vadd.f32 %v769, %v770
    %v772 = vtanh.pop %v771
    %v773 = vmul.f32 %v767, %v772
    %774 = vst [vmem:[#allocation8] sm:$0xff] %v773
    %s775 = smul.u32 1, 4
    %s776 = smul.addr %s775, 8
    %s777 = scalar_lea.vmem [#allocation4], %s776
    %v778 = vld [vmem:[%s777] sm:$0xff]
    %v779 = vld [vmem:[%s777 + $0x8] sm:$0xff]
    %v780 = vld [vmem:[%s777 + $0x10] sm:$0xff]
    %v781 = vld [vmem:[%s777 + $0x18] sm:$0xff]
    %782 = vmatprep.subr.mxu0 %v532
    %783 = vmatpush1.msra.mxu0 %v531
    %784 = vmatprep.subr.mxu0 %v536
    %785 = vmatpush1.msra.mxu0 %v535
    %786 = vmatprep.subr.mxu0 %v540
    %787 = vmatpush1.msra.mxu0 %v539
    %788 = vmatprep.subr.mxu0 %v544
    %789 = vmatpush1.msra.mxu0 %v543
    %790 = vmatprep.subr.mxu0 %v548
    %791 = vmatpush1.msra.mxu0 %v547
    %792 = vmatprep.subr.mxu0 %v552
    %793 = vmatpush1.msra.mxu0 %v551
    %794 = vmatprep.subr.mxu0 %v556
    %795 = vmatpush1.msra.mxu0 %v555
    %796 = vmatprep.subr.mxu0 %v560
    %797 = vmatpush1.msra.mxu0 %v559
    %798 = vmatprep.subr.mxu0 %v564
    %799 = vmatpush1.msra.mxu0 %v563
    %800 = vmatprep.subr.mxu0 %v568
    %801 = vmatpush1.msra.mxu0 %v567
    %802 = vmatprep.subr.mxu0 %v572
    %803 = vmatpush1.msra.mxu0 %v571
    %804 = vmatprep.subr.mxu0 %v576
    %805 = vmatpush1.msra.mxu0 %v575
    %806 = vmatprep.subr.mxu0 %v580
    %807 = vmatpush1.msra.mxu0 %v579
    %808 = vmatprep.subr.mxu0 %v584
    %809 = vmatpush1.msra.mxu0 %v583
    %810 = vmatprep.subr.mxu0 %v588
    %811 = vmatpush1.msra.mxu0 %v587
    %812 = vmatprep.subr.mxu0 %v592
    %813 = vmatpush1.msra.mxu0 %v591
    %814 = vmatprep.subr.mxu0 0.0
    %815 = vmatpush1.msra.mxu0 0.0
    %816 = vmatprep.subr.mxu0 0.0
    %817 = vmatpush1.msra.mxu0 0.0
    %818 = vmatprep.subr.mxu0 0.0
    %819 = vmatpush1.msra.mxu0 0.0
    %820 = vmatprep.subr.mxu0 0.0
    %821 = vmatpush1.msra.mxu0 0.0
    %822 = vmatprep.subr.mxu0 0.0
    %823 = vmatpush1.msra.mxu0 0.0
    %824 = vmatprep.subr.mxu0 0.0
    %825 = vmatpush1.msra.mxu0 0.0
    %826 = vmatprep.subr.mxu0 0.0
    %827 = vmatpush1.msra.mxu0 0.0
    %828 = vmatprep.subr.mxu0 0.0
    %829 = vmatpush1.msra.mxu0 0.0
    %830 = vmatprep.subr.mxu0 0.0
    %831 = vmatpush1.msra.mxu0 0.0
    %832 = vmatprep.subr.mxu0 0.0
    %833 = vmatpush1.msra.mxu0 0.0
    %834 = vmatprep.subr.mxu0 0.0
    %835 = vmatpush1.msra.mxu0 0.0
    %836 = vmatprep.subr.mxu0 0.0
    %837 = vmatpush1.msra.mxu0 0.0
    %838 = vmatprep.subr.mxu0 0.0
    %839 = vmatpush1.msra.mxu0 0.0
    %840 = vmatprep.subr.mxu0 0.0
    %841 = vmatpush1.msra.mxu0 0.0
    %842 = vmatprep.subr.mxu0 0.0
    %843 = vmatpush1.msra.mxu0 0.0
    %844 = vmatprep.subr.mxu0 0.0
    %845 = vmatpush1.msra.mxu0 0.0
    %846 = vmatprep.mubr.f32.mxu0 0.0
    %847 = vmatmul.mubr.f32.gmra.mrb[0].mxu0 %v773
    %v848 = vpop.f32.mrb[0].mxu0
    %v849 = vadd.f32 0.0, %v848
    %v850 = vpop.f32.mrb[0].mxu0
    %v851 = vadd.f32 0.0, %v850
    %852 = vdwg.mxu0
    %853 = vmatprep.subr.mxu0 %v534
    %854 = vmatpush1.msra.mxu0 %v533
    %855 = vmatprep.subr.mxu0 %v538
    %856 = vmatpush1.msra.mxu0 %v537
    %857 = vmatprep.subr.mxu0 %v542
    %858 = vmatpush1.msra.mxu0 %v541
    %859 = vmatprep.subr.mxu0 %v546
    %860 = vmatpush1.msra.mxu0 %v545
    %861 = vmatprep.subr.mxu0 %v550
    %862 = vmatpush1.msra.mxu0 %v549
    %863 = vmatprep.subr.mxu0 %v554
    %864 = vmatpush1.msra.mxu0 %v553
    %865 = vmatprep.subr.mxu0 %v558
    %866 = vmatpush1.msra.mxu0 %v557
    %867 = vmatprep.subr.mxu0 %v562
    %868 = vmatpush1.msra.mxu0 %v561
    %869 = vmatprep.subr.mxu0 %v566
    %870 = vmatpush1.msra.mxu0 %v565
    %871 = vmatprep.subr.mxu0 %v570
    %872 = vmatpush1.msra.mxu0 %v569
    %873 = vmatprep.subr.mxu0 %v574
    %874 = vmatpush1.msra.mxu0 %v573
    %875 = vmatprep.subr.mxu0 %v578
    %876 = vmatpush1.msra.mxu0 %v577
    %877 = vmatprep.subr.mxu0 %v582
    %878 = vmatpush1.msra.mxu0 %v581
    %879 = vmatprep.subr.mxu0 %v586
    %880 = vmatpush1.msra.mxu0 %v585
    %881 = vmatprep.subr.mxu0 %v590
    %882 = vmatpush1.msra.mxu0 %v589
    %883 = vmatprep.subr.mxu0 %v594
    %884 = vmatpush1.msra.mxu0 %v593
    %885 = vmatprep.subr.mxu0 0.0
    %886 = vmatpush1.msra.mxu0 0.0
    %887 = vmatprep.subr.mxu0 0.0
    %888 = vmatpush1.msra.mxu0 0.0
    %889 = vmatprep.subr.mxu0 0.0
    %890 = vmatpush1.msra.mxu0 0.0
    %891 = vmatprep.subr.mxu0 0.0
    %892 = vmatpush1.msra.mxu0 0.0
    %893 = vmatprep.subr.mxu0 0.0
    %894 = vmatpush1.msra.mxu0 0.0
    %895 = vmatprep.subr.mxu0 0.0
    %896 = vmatpush1.msra.mxu0 0.0
    %897 = vmatprep.subr.mxu0 0.0
    %898 = vmatpush1.msra.mxu0 0.0
    %899 = vmatprep.subr.mxu0 0.0
    %900 = vmatpush1.msra.mxu0 0.0
    %901 = vmatprep.subr.mxu0 0.0
    %902 = vmatpush1.msra.mxu0 0.0
    %903 = vmatprep.subr.mxu0 0.0
    %904 = vmatpush1.msra.mxu0 0.0
    %905 = vmatprep.subr.mxu0 0.0
    %906 = vmatpush1.msra.mxu0 0.0
    %907 = vmatprep.subr.mxu0 0.0
    %908 = vmatpush1.msra.mxu0 0.0
    %909 = vmatprep.subr.mxu0 0.0
    %910 = vmatpush1.msra.mxu0 0.0
    %911 = vmatprep.subr.mxu0 0.0
    %912 = vmatpush1.msra.mxu0 0.0
    %913 = vmatprep.subr.mxu0 0.0
    %914 = vmatpush1.msra.mxu0 0.0
    %915 = vmatprep.subr.mxu0 0.0
    %916 = vmatpush1.msra.mxu0 0.0
    %917 = vmatprep.mubr.f32.mxu0 0.0
    %918 = vmatmul.mubr.f32.gmra.mrb[0].mxu0 %v773
    %v919 = vpop.f32.mrb[0].mxu0
    %v920 = vadd.f32 0.0, %v919
    %v921 = vpop.f32.mrb[0].mxu0
    %v922 = vadd.f32 0.0, %v921
    %923 = vdwg.mxu0
    %v924 = vadd.f32 %v778, %v849
    %v925 = vadd.f32 %v779, %v851
    %v926 = vadd.f32 %v780, %v920
    %v927 = vadd.f32 %v781, %v922
    %v928 = vxor.u32 %v924, 2147483648
    %v929 = vxor.u32 %v925, 2147483648
    %v930 = vxor.u32 %v926, 2147483648
    %v931 = vmul.f32 %v928, 1.442695
    %v932 = vpow.pop %v931
    %v933 = vmul.f32 %v929, 1.442695
    %v934 = vpow.pop %v933
    %v935 = vmul.f32 %v930, 1.442695
    %v936 = vpow.pop %v935
    %v937 = vadd.f32 %v932, 1.0
    %v938 = vadd.f32 %v934, 1.0
    %v939 = vadd.f32 %v936, 1.0
    %v940 = vrcp.pop %v937
    %v941 = vmul.f32 1.0, %v940
    %v942 = vrcp.pop %v938
    %v943 = vmul.f32 1.0, %v942
    %v944 = vrcp.pop %v939
    %v945 = vmul.f32 1.0, %v944
    %v946 = vtanh.pop %v927
    %v947 = vmul.f32 %v943, %v771
    %v948 = vmul.f32 %v941, %v946
    %v949 = vadd.f32 %v947, %v948
    %v950 = vtanh.pop %v949
    %v951 = vmul.f32 %v945, %v950
    %s952 = scalar_lea.vmem [#allocation8], 8
    %953 = vst [vmem:[%s952] sm:$0xff] %v951
    %s954 = smul.u32 2, 4
    %s955 = smul.addr %s954, 8
    %s956 = scalar_lea.vmem [#allocation4], %s955
    %v957 = vld [vmem:[%s956] sm:$0xff]
    %v958 = vld [vmem:[%s956 + $0x8] sm:$0xff]
    %v959 = vld [vmem:[%s956 + $0x10] sm:$0xff]
    %v960 = vld [vmem:[%s956 + $0x18] sm:$0xff]
    %961 = vmatprep.subr.mxu0 %v532
    %962 = vmatpush1.msra.mxu0 %v531
    %963 = vmatprep.subr.mxu0 %v536
    %964 = vmatpush1.msra.mxu0 %v535
    %965 = vmatprep.subr.mxu0 %v540
    %966 = vmatpush1.msra.mxu0 %v539
    %967 = vmatprep.subr.mxu0 %v544
    %968 = vmatpush1.msra.mxu0 %v543
    %969 = vmatprep.subr.mxu0 %v548
    %970 = vmatpush1.msra.mxu0 %v547
    %971 = vmatprep.subr.mxu0 %v552
    %972 = vmatpush1.msra.mxu0 %v551
    %973 = vmatprep.subr.mxu0 %v556
    %974 = vmatpush1.msra.mxu0 %v555
    %975 = vmatprep.subr.mxu0 %v560
    %976 = vmatpush1.msra.mxu0 %v559
    %977 = vmatprep.subr.mxu0 %v564
    %978 = vmatpush1.msra.mxu0 %v563
    %979 = vmatprep.subr.mxu0 %v568
    %980 = vmatpush1.msra.mxu0 %v567
    %981 = vmatprep.subr.mxu0 %v572
    %982 = vmatpush1.msra.mxu0 %v571
    %983 = vmatprep.subr.mxu0 %v576
    %984 = vmatpush1.msra.mxu0 %v575
    %985 = vmatprep.subr.mxu0 %v580
    %986 = vmatpush1.msra.mxu0 %v579
    %987 = vmatprep.subr.mxu0 %v584
    %988 = vmatpush1.msra.mxu0 %v583
    %989 = vmatprep.subr.mxu0 %v588
    %990 = vmatpush1.msra.mxu0 %v587
    %991 = vmatprep.subr.mxu0 %v592
    %992 = vmatpush1.msra.mxu0 %v591
    %993 = vmatprep.subr.mxu0 0.0
    %994 = vmatpush1.msra.mxu0 0.0
    %995 = vmatprep.subr.mxu0 0.0
    %996 = vmatpush1.msra.mxu0 0.0
    %997 = vmatprep.subr.mxu0 0.0
    %998 = vmatpush1.msra.mxu0 0.0
    %999 = vmatprep.subr.mxu0 0.0
    %1000 = vmatpush1.msra.mxu0 0.0
    %1001 = vmatprep.subr.mxu0 0.0
    %1002 = vmatpush1.msra.mxu0 0.0
    %1003 = vmatprep.subr.mxu0 0.0
    %1004 = vmatpush1.msra.mxu0 0.0
    %1005 = vmatprep.subr.mxu0 0.0
    %1006 = vmatpush1.msra.mxu0 0.0
    %1007 = vmatprep.subr.mxu0 0.0
    %1008 = vmatpush1.msra.mxu0 0.0
    %1009 = vmatprep.subr.mxu0 0.0
    %1010 = vmatpush1.msra.mxu0 0.0
    %1011 = vmatprep.subr.mxu0 0.0
    %1012 = vmatpush1.msra.mxu0 0.0
    %1013 = vmatprep.subr.mxu0 0.0
    %1014 = vmatpush1.msra.mxu0 0.0
    %1015 = vmatprep.subr.mxu0 0.0
    %1016 = vmatpush1.msra.mxu0 0.0
    %1017 = vmatprep.subr.mxu0 0.0
    %1018 = vmatpush1.msra.mxu0 0.0
    %1019 = vmatprep.subr.mxu0 0.0
    %1020 = vmatpush1.msra.mxu0 0.0
    %1021 = vmatprep.subr.mxu0 0.0
    %1022 = vmatpush1.msra.mxu0 0.0
    %1023 = vmatprep.subr.mxu0 0.0
    %1024 = vmatpush1.msra.mxu0 0.0
    %1025 = vmatprep.mubr.f32.mxu0 0.0
    %1026 = vmatmul.mubr.f32.gmra.mrb[0].mxu0 %v951
    %v1027 = vpop.f32.mrb[0].mxu0
    %v1028 = vadd.f32 0.0, %v1027
    %v1029 = vpop.f32.mrb[0].mxu0
    %v1030 = vadd.f32 0.0, %v1029
    %1031 = vdwg.mxu0
    %1032 = vmatprep.subr.mxu0 %v534
    %1033 = vmatpush1.msra.mxu0 %v533
    %1034 = vmatprep.subr.mxu0 %v538
    %1035 = vmatpush1.msra.mxu0 %v537
    %1036 = vmatprep.subr.mxu0 %v542
    %1037 = vmatpush1.msra.mxu0 %v541
    %1038 = vmatprep.subr.mxu0 %v546
    %1039 = vmatpush1.msra.mxu0 %v545
    %1040 = vmatprep.subr.mxu0 %v550
    %1041 = vmatpush1.msra.mxu0 %v549
    %1042 = vmatprep.subr.mxu0 %v554
    %1043 = vmatpush1.msra.mxu0 %v553
    %1044 = vmatprep.subr.mxu0 %v558
    %1045 = vmatpush1.msra.mxu0 %v557
    %1046 = vmatprep.subr.mxu0 %v562
    %1047 = vmatpush1.msra.mxu0 %v561
    %1048 = vmatprep.subr.mxu0 %v566
    %1049 = vmatpush1.msra.mxu0 %v565
    %1050 = vmatprep.subr.mxu0 %v570
    %1051 = vmatpush1.msra.mxu0 %v569
    %1052 = vmatprep.subr.mxu0 %v574
    %1053 = vmatpush1.msra.mxu0 %v573
    %1054 = vmatprep.subr.mxu0 %v578
    %1055 = vmatpush1.msra.mxu0 %v577
    %1056 = vmatprep.subr.mxu0 %v582
    %1057 = vmatpush1.msra.mxu0 %v581
    %1058 = vmatprep.subr.mxu0 %v586
    %1059 = vmatpush1.msra.mxu0 %v585
    %1060 = vmatprep.subr.mxu0 %v590
    %1061 = vmatpush1.msra.mxu0 %v589
    %1062 = vmatprep.subr.mxu0 %v594
    %1063 = vmatpush1.msra.mxu0 %v593
    %1064 = vmatprep.subr.mxu0 0.0
    %1065 = vmatpush1.msra.mxu0 0.0
    %1066 = vmatprep.subr.mxu0 0.0
    %1067 = vmatpush1.msra.mxu0 0.0
    %1068 = vmatprep.subr.mxu0 0.0
    %1069 = vmatpush1.msra.mxu0 0.0
    %1070 = vmatprep.subr.mxu0 0.0
    %1071 = vmatpush1.msra.mxu0 0.0
    %1072 = vmatprep.subr.mxu0 0.0
    %1073 = vmatpush1.msra.mxu0 0.0
    %1074 = vmatprep.subr.mxu0 0.0
    %1075 = vmatpush1.msra.mxu0 0.0
    %1076 = vmatprep.subr.mxu0 0.0
    %1077 = vmatpush1.msra.mxu0 0.0
    %1078 = vmatprep.subr.mxu0 0.0
    %1079 = vmatpush1.msra.mxu0 0.0
    %1080 = vmatprep.subr.mxu0 0.0
    %1081 = vmatpush1.msra.mxu0 0.0
    %1082 = vmatprep.subr.mxu0 0.0
    %1083 = vmatpush1.msra.mxu0 0.0
    %1084 = vmatprep.subr.mxu0 0.0
    %1085 = vmatpush1.msra.mxu0 0.0
    %1086 = vmatprep.subr.mxu0 0.0
    %1087 = vmatpush1.msra.mxu0 0.0
    %1088 = vmatprep.subr.mxu0 0.0
    %1089 = vmatpush1.msra.mxu0 0.0
    %1090 = vmatprep.subr.mxu0 0.0
    %1091 = vmatpush1.msra.mxu0 0.0
    %1092 = vmatprep.subr.mxu0 0.0
    %1093 = vmatpush1.msra.mxu0 0.0
    %1094 = vmatprep.subr.mxu0 0.0
    %1095 = vmatpush1.msra.mxu0 0.0
    %1096 = vmatprep.mubr.f32.mxu0 0.0
    %1097 = vmatmul.mubr.f32.gmra.mrb[0].mxu0 %v951
    %v1098 = vpop.f32.mrb[0].mxu0
    %v1099 = vadd.f32 0.0, %v1098
    %v1100 = vpop.f32.mrb[0].mxu0
    %v1101 = vadd.f32 0.0, %v1100
    %1102 = vdwg.mxu0
    %v1103 = vadd.f32 %v957, %v1028
    %v1104 = vadd.f32 %v958, %v1030
    %v1105 = vadd.f32 %v959, %v1099
    %v1106 = vadd.f32 %v960, %v1101
    %v1107 = vxor.u32 %v1103, 2147483648
    %v1108 = vxor.u32 %v1104, 2147483648
    %v1109 = vxor.u32 %v1105, 2147483648
    %v1110 = vmul.f32 %v1107, 1.442695
    %v1111 = vpow.pop %v1110
    %v1112 = vmul.f32 %v1108, 1.442695
    %v1113 = vpow.pop %v1112
    %v1114 = vmul.f32 %v1109, 1.442695
    %v1115 = vpow.pop %v1114
    %v1116 = vadd.f32 %v1111, 1.0
    %v1117 = vadd.f32 %v1113, 1.0
    %v1118 = vadd.f32 %v1115, 1.0
    %v1119 = vrcp.pop %v1116
    %v1120 = vmul.f32 1.0, %v1119
    %v1121 = vrcp.pop %v1117
    %v1122 = vmul.f32 1.0, %v1121
    %v1123 = vrcp.pop %v1118
    %v1124 = vmul.f32 1.0, %v1123
    %v1125 = vtanh.pop %v1106
    %v1126 = vmul.f32 %v1122, %v949
    %v1127 = vmul.f32 %v1120, %v1125
    %v1128 = vadd.f32 %v1126, %v1127
    %v1129 = vtanh.pop %v1128
    %v1130 = vmul.f32 %v1124, %v1129
    %s1131 = scalar_lea.vmem [#allocation8], 16
    %1132 = vst [vmem:[%s1131] sm:$0xff] %v1130
    %s1133 = smul.u32 3, 4
    %s1134 = smul.addr %s1133, 8
    %s1135 = scalar_lea.vmem [#allocation4], %s1134
    %v1136 = vld [vmem:[%s1135] sm:$0xff]
    %v1137 = vld [vmem:[%s1135 + $0x8] sm:$0xff]
    %v1138 = vld [vmem:[%s1135 + $0x10] sm:$0xff]
    %v1139 = vld [vmem:[%s1135 + $0x18] sm:$0xff]
    %1140 = vmatprep.subr.mxu0 %v532
    %1141 = vmatpush1.msra.mxu0 %v531
    %1142 = vmatprep.subr.mxu0 %v536
    %1143 = vmatpush1.msra.mxu0 %v535
    %1144 = vmatprep.subr.mxu0 %v540
    %1145 = vmatpush1.msra.mxu0 %v539
    %1146 = vmatprep.subr.mxu0 %v544
    %1147 = vmatpush1.msra.mxu0 %v543
    %1148 = vmatprep.subr.mxu0 %v548
    %1149 = vmatpush1.msra.mxu0 %v547
    %1150 = vmatprep.subr.mxu0 %v552
    %1151 = vmatpush1.msra.mxu0 %v551
    %1152 = vmatprep.subr.mxu0 %v556
    %1153 = vmatpush1.msra.mxu0 %v555
    %1154 = vmatprep.subr.mxu0 %v560
    %1155 = vmatpush1.msra.mxu0 %v559
    %1156 = vmatprep.subr.mxu0 %v564
    %1157 = vmatpush1.msra.mxu0 %v563
    %1158 = vmatprep.subr.mxu0 %v568
    %1159 = vmatpush1.msra.mxu0 %v567
    %1160 = vmatprep.subr.mxu0 %v572
    %1161 = vmatpush1.msra.mxu0 %v571
    %1162 = vmatprep.subr.mxu0 %v576
    %1163 = vmatpush1.msra.mxu0 %v575
    %1164 = vmatprep.subr.mxu0 %v580
    %1165 = vmatpush1.msra.mxu0 %v579
    %1166 = vmatprep.subr.mxu0 %v584
    %1167 = vmatpush1.msra.mxu0 %v583
    %1168 = vmatprep.subr.mxu0 %v588
    %1169 = vmatpush1.msra.mxu0 %v587
    %1170 = vmatprep.subr.mxu0 %v592
    %1171 = vmatpush1.msra.mxu0 %v591
    %1172 = vmatprep.subr.mxu0 0.0
    %1173 = vmatpush1.msra.mxu0 0.0
    %1174 = vmatprep.subr.mxu0 0.0
    %1175 = vmatpush1.msra.mxu0 0.0
    %1176 = vmatprep.subr.mxu0 0.0
    %1177 = vmatpush1.msra.mxu0 0.0
    %1178 = vmatprep.subr.mxu0 0.0
    %1179 = vmatpush1.msra.mxu0 0.0
    %1180 = vmatprep.subr.mxu0 0.0
    %1181 = vmatpush1.msra.mxu0 0.0
    %1182 = vmatprep.subr.mxu0 0.0
    %1183 = vmatpush1.msra.mxu0 0.0
    %1184 = vmatprep.subr.mxu0 0.0
    %1185 = vmatpush1.msra.mxu0 0.0
    %1186 = vmatprep.subr.mxu0 0.0
    %1187 = vmatpush1.msra.mxu0 0.0
    %1188 = vmatprep.subr.mxu0 0.0
    %1189 = vmatpush1.msra.mxu0 0.0
    %1190 = vmatprep.subr.mxu0 0.0
    %1191 = vmatpush1.msra.mxu0 0.0
    %1192 = vmatprep.subr.mxu0 0.0
    %1193 = vmatpush1.msra.mxu0 0.0
    %1194 = vmatprep.subr.mxu0 0.0
    %1195 = vmatpush1.msra.mxu0 0.0
    %1196 = vmatprep.subr.mxu0 0.0
    %1197 = vmatpush1.msra.mxu0 0.0
    %1198 = vmatprep.subr.mxu0 0.0
    %1199 = vmatpush1.msra.mxu0 0.0
    %1200 = vmatprep.subr.mxu0 0.0
    %1201 = vmatpush1.msra.mxu0 0.0
    %1202 = vmatprep.subr.mxu0 0.0
    %1203 = vmatpush1.msra.mxu0 0.0
    %1204 = vmatprep.mubr.f32.mxu0 0.0
    %1205 = vmatmul.mubr.f32.gmra.mrb[0].mxu0 %v1130
    %v1206 = vpop.f32.mrb[0].mxu0
    %v1207 = vadd.f32 0.0, %v1206
    %v1208 = vpop.f32.mrb[0].mxu0
    %v1209 = vadd.f32 0.0, %v1208
    %1210 = vdwg.mxu0
    %1211 = vmatprep.subr.mxu0 %v534
    %1212 = vmatpush1.msra.mxu0 %v533
    %1213 = vmatprep.subr.mxu0 %v538
    %1214 = vmatpush1.msra.mxu0 %v537
    %1215 = vmatprep.subr.mxu0 %v542
    %1216 = vmatpush1.msra.mxu0 %v541
    %1217 = vmatprep.subr.mxu0 %v546
    %1218 = vmatpush1.msra.mxu0 %v545
    %1219 = vmatprep.subr.mxu0 %v550
    %1220 = vmatpush1.msra.mxu0 %v549
    %1221 = vmatprep.subr.mxu0 %v554
    %1222 = vmatpush1.msra.mxu0 %v553
    %1223 = vmatprep.subr.mxu0 %v558
    %1224 = vmatpush1.msra.mxu0 %v557
    %1225 = vmatprep.subr.mxu0 %v562
    %1226 = vmatpush1.msra.mxu0 %v561
    %1227 = vmatprep.subr.mxu0 %v566
    %1228 = vmatpush1.msra.mxu0 %v565
    %1229 = vmatprep.subr.mxu0 %v570
    %1230 = vmatpush1.msra.mxu0 %v569
    %1231 = vmatprep.subr.mxu0 %v574
    %1232 = vmatpush1.msra.mxu0 %v573
    %1233 = vmatprep.subr.mxu0 %v578
    %1234 = vmatpush1.msra.mxu0 %v577
    %1235 = vmatprep.subr.mxu0 %v582
    %1236 = vmatpush1.msra.mxu0 %v581
    %1237 = vmatprep.subr.mxu0 %v586
    %1238 = vmatpush1.msra.mxu0 %v585
    %1239 = vmatprep.subr.mxu0 %v590
    %1240 = vmatpush1.msra.mxu0 %v589
    %1241 = vmatprep.subr.mxu0 %v594
    %1242 = vmatpush1.msra.mxu0 %v593
    %1243 = vmatprep.subr.mxu0 0.0
    %1244 = vmatpush1.msra.mxu0 0.0
    %1245 = vmatprep.subr.mxu0 0.0
    %1246 = vmatpush1.msra.mxu0 0.0
    %1247 = vmatprep.subr.mxu0 0.0
    %1248 = vmatpush1.msra.mxu0 0.0
    %1249 = vmatprep.subr.mxu0 0.0
    %1250 = vmatpush1.msra.mxu0 0.0
    %1251 = vmatprep.subr.mxu0 0.0
    %1252 = vmatpush1.msra.mxu0 0.0
    %1253 = vmatprep.subr.mxu0 0.0
    %1254 = vmatpush1.msra.mxu0 0.0
    %1255 = vmatprep.subr.mxu0 0.0
    %1256 = vmatpush1.msra.mxu0 0.0
    %1257 = vmatprep.subr.mxu0 0.0
    %1258 = vmatpush1.msra.mxu0 0.0
    %1259 = vmatprep.subr.mxu0 0.0
    %1260 = vmatpush1.msra.mxu0 0.0
    %1261 = vmatprep.subr.mxu0 0.0
    %1262 = vmatpush1.msra.mxu0 0.0
    %1263 = vmatprep.subr.mxu0 0.0
    %1264 = vmatpush1.msra.mxu0 0.0
    %1265 = vmatprep.subr.mxu0 0.0
    %1266 = vmatpush1.msra.mxu0 0.0
    %1267 = vmatprep.subr.mxu0 0.0
    %1268 = vmatpush1.msra.mxu0 0.0
    %1269 = vmatprep.subr.mxu0 0.0
    %1270 = vmatpush1.msra.mxu0 0.0
    %1271 = vmatprep.subr.mxu0 0.0
    %1272 = vmatpush1.msra.mxu0 0.0
    %1273 = vmatprep.subr.mxu0 0.0
    %1274 = vmatpush1.msra.mxu0 0.0
    %1275 = vmatprep.mubr.f32.mxu0 0.0
    %1276 = vmatmul.mubr.f32.gmra.mrb[0].mxu0 %v1130
    %v1277 = vpop.f32.mrb[0].mxu0
    %v1278 = vadd.f32 0.0, %v1277
    %v1279 = vpop.f32.mrb[0].mxu0
    %v1280 = vadd.f32 0.0, %v1279
    %1281 = vdwg.mxu0
    %v1282 = vadd.f32 %v1136, %v1207
    %v1283 = vadd.f32 %v1137, %v1209
    %v1284 = vadd.f32 %v1138, %v1278
    %v1285 = vadd.f32 %v1139, %v1280
    %v1286 = vxor.u32 %v1282, 2147483648
    %v1287 = vxor.u32 %v1283, 2147483648
    %v1288 = vxor.u32 %v1284, 2147483648
    %v1289 = vmul.f32 %v1286, 1.442695
    %v1290 = vpow.pop %v1289
    %v1291 = vmul.f32 %v1287, 1.442695
    %v1292 = vpow.pop %v1291
    %v1293 = vmul.f32 %v1288, 1.442695
    %v1294 = vpow.pop %v1293
    %v1295 = vadd.f32 %v1290, 1.0
    %v1296 = vadd.f32 %v1292, 1.0
    %v1297 = vadd.f32 %v1294, 1.0
    %v1298 = vrcp.pop %v1295
    %v1299 = vmul.f32 1.0, %v1298
    %v1300 = vrcp.pop %v1296
    %v1301 = vmul.f32 1.0, %v1300
    %v1302 = vrcp.pop %v1297
    %v1303 = vmul.f32 1.0, %v1302
    %v1304 = vtanh.pop %v1285
    %v1305 = vmul.f32 %v1301, %v1128
    %v1306 = vmul.f32 %v1299, %v1304
    %v1307 = vadd.f32 %v1305, %v1306
    %v1308 = vtanh.pop %v1307
    %v1309 = vmul.f32 %v1303, %v1308
    %s1310 = scalar_lea.vmem [#allocation8], 24
    %1311 = vst [vmem:[%s1310] sm:$0xff] %v1309
    %s1312 = smul.u32 4, 4
    %s1313 = smul.addr %s1312, 8
    %s1314 = scalar_lea.vmem [#allocation4], %s1313
    %v1315 = vld [vmem:[%s1314] sm:$0xff]
    %v1316 = vld [vmem:[%s1314 + $0x8] sm:$0xff]
    %v1317 = vld [vmem:[%s1314 + $0x10] sm:$0xff]
    %v1318 = vld [vmem:[%s1314 + $0x18] sm:$0xff]
    %1319 = vmatprep.subr.mxu0 %v532
    %1320 = vmatpush1.msra.mxu0 %v531
    %1321 = vmatprep.subr.mxu0 %v536
    %1322 = vmatpush1.msra.mxu0 %v535
    %1323 = vmatprep.subr.mxu0 %v540
    %1324 = vmatpush1.msra.mxu0 %v539
    %1325 = vmatprep.subr.mxu0 %v544
    %1326 = vmatpush1.msra.mxu0 %v543
    %1327 = vmatprep.subr.mxu0 %v548
    %1328 = vmatpush1.msra.mxu0 %v547
    %1329 = vmatprep.subr.mxu0 %v552
    %1330 = vmatpush1.msra.mxu0 %v551
    %1331 = vmatprep.subr.mxu0 %v556
    %1332 = vmatpush1.msra.mxu0 %v555
    %1333 = vmatprep.subr.mxu0 %v560
    %1334 = vmatpush1.msra.mxu0 %v559
    %1335 = vmatprep.subr.mxu0 %v564
    %1336 = vmatpush1.msra.mxu0 %v563
    %1337 = vmatprep.subr.mxu0 %v568
    %1338 = vmatpush1.msra.mxu0 %v567
    %1339 = vmatprep.subr.mxu0 %v572
    %1340 = vmatpush1.msra.mxu0 %v571
    %1341 = vmatprep.subr.mxu0 %v576
    %1342 = vmatpush1.msra.mxu0 %v575
    %1343 = vmatprep.subr.mxu0 %v580
    %1344 = vmatpush1.msra.mxu0 %v579
    %1345 = vmatprep.subr.mxu0 %v584
    %1346 = vmatpush1.msra.mxu0 %v583
    %1347 = vmatprep.subr.mxu0 %v588
    %1348 = vmatpush1.msra.mxu0 %v587
    %1349 = vmatprep.subr.mxu0 %v592
    %1350 = vmatpush1.msra.mxu0 %v591
    %1351 = vmatprep.subr.mxu0 0.0
    %1352 = vmatpush1.msra.mxu0 0.0
    %1353 = vmatprep.subr.mxu0 0.0
    %1354 = vmatpush1.msra.mxu0 0.0
    %1355 = vmatprep.subr.mxu0 0.0
    %1356 = vmatpush1.msra.mxu0 0.0
    %1357 = vmatprep.subr.mxu0 0.0
    %1358 = vmatpush1.msra.mxu0 0.0
    %1359 = vmatprep.subr.mxu0 0.0
    %1360 = vmatpush1.msra.mxu0 0.0
    %1361 = vmatprep.subr.mxu0 0.0
    %1362 = vmatpush1.msra.mxu0 0.0
    %1363 = vmatprep.subr.mxu0 0.0
    %1364 = vmatpush1.msra.mxu0 0.0
    %1365 = vmatprep.subr.mxu0 0.0
    %1366 = vmatpush1.msra.mxu0 0.0
    %1367 = vmatprep.subr.mxu0 0.0
    %1368 = vmatpush1.msra.mxu0 0.0
    %1369 = vmatprep.subr.mxu0 0.0
    %1370 = vmatpush1.msra.mxu0 0.0
    %1371 = vmatprep.subr.mxu0 0.0
    %1372 = vmatpush1.msra.mxu0 0.0
    %1373 = vmatprep.subr.mxu0 0.0
    %1374 = vmatpush1.msra.mxu0 0.0
    %1375 = vmatprep.subr.mxu0 0.0
    %1376 = vmatpush1.msra.mxu0 0.0
    %1377 = vmatprep.subr.mxu0 0.0
    %1378 = vmatpush1.msra.mxu0 0.0
    %1379 = vmatprep.subr.mxu0 0.0
    %1380 = vmatpush1.msra.mxu0 0.0
    %1381 = vmatprep.subr.mxu0 0.0
    %1382 = vmatpush1.msra.mxu0 0.0
    %1383 = vmatprep.mubr.f32.mxu0 0.0
    %1384 = vmatmul.mubr.f32.gmra.mrb[0].mxu0 %v1309
    %v1385 = vpop.f32.mrb[0].mxu0
    %v1386 = vadd.f32 0.0, %v1385
    %v1387 = vpop.f32.mrb[0].mxu0
    %v1388 = vadd.f32 0.0, %v1387
    %1389 = vdwg.mxu0
    %1390 = vmatprep.subr.mxu0 %v534
    %1391 = vmatpush1.msra.mxu0 %v533
    %1392 = vmatprep.subr.mxu0 %v538
    %1393 = vmatpush1.msra.mxu0 %v537
    %1394 = vmatprep.subr.mxu0 %v542
    %1395 = vmatpush1.msra.mxu0 %v541
    %1396 = vmatprep.subr.mxu0 %v546
    %1397 = vmatpush1.msra.mxu0 %v545
    %1398 = vmatprep.subr.mxu0 %v550
    %1399 = vmatpush1.msra.mxu0 %v549
    %1400 = vmatprep.subr.mxu0 %v554
    %1401 = vmatpush1.msra.mxu0 %v553
    %1402 = vmatprep.subr.mxu0 %v558
    %1403 = vmatpush1.msra.mxu0 %v557
    %1404 = vmatprep.subr.mxu0 %v562
    %1405 = vmatpush1.msra.mxu0 %v561
    %1406 = vmatprep.subr.mxu0 %v566
    %1407 = vmatpush1.msra.mxu0 %v565
    %1408 = vmatprep.subr.mxu0 %v570
    %1409 = vmatpush1.msra.mxu0 %v569
    %1410 = vmatprep.subr.mxu0 %v574
    %1411 = vmatpush1.msra.mxu0 %v573
    %1412 = vmatprep.subr.mxu0 %v578
    %1413 = vmatpush1.msra.mxu0 %v577
    %1414 = vmatprep.subr.mxu0 %v582
    %1415 = vmatpush1.msra.mxu0 %v581
    %1416 = vmatprep.subr.mxu0 %v586
    %1417 = vmatpush1.msra.mxu0 %v585
    %1418 = vmatprep.subr.mxu0 %v590
    %1419 = vmatpush1.msra.mxu0 %v589
    %1420 = vmatprep.subr.mxu0 %v594
    %1421 = vmatpush1.msra.mxu0 %v593
    %1422 = vmatprep.subr.mxu0 0.0
    %1423 = vmatpush1.msra.mxu0 0.0
    %1424 = vmatprep.subr.mxu0 0.0
    %1425 = vmatpush1.msra.mxu0 0.0
    %1426 = vmatprep.subr.mxu0 0.0
    %1427 = vmatpush1.msra.mxu0 0.0
    %1428 = vmatprep.subr.mxu0 0.0
    %1429 = vmatpush1.msra.mxu0 0.0
    %1430 = vmatprep.subr.mxu0 0.0
    %1431 = vmatpush1.msra.mxu0 0.0
    %1432 = vmatprep.subr.mxu0 0.0
    %1433 = vmatpush1.msra.mxu0 0.0
    %1434 = vmatprep.subr.mxu0 0.0
    %1435 = vmatpush1.msra.mxu0 0.0
    %1436 = vmatprep.subr.mxu0 0.0
    %1437 = vmatpush1.msra.mxu0 0.0
    %1438 = vmatprep.subr.mxu0 0.0
    %1439 = vmatpush1.msra.mxu0 0.0
    %1440 = vmatprep.subr.mxu0 0.0
    %1441 = vmatpush1.msra.mxu0 0.0
    %1442 = vmatprep.subr.mxu0 0.0
    %1443 = vmatpush1.msra.mxu0 0.0
    %1444 = vmatprep.subr.mxu0 0.0
    %1445 = vmatpush1.msra.mxu0 0.0
    %1446 = vmatprep.subr.mxu0 0.0
    %1447 = vmatpush1.msra.mxu0 0.0
    %1448 = vmatprep.subr.mxu0 0.0
    %1449 = vmatpush1.msra.mxu0 0.0
    %1450 = vmatprep.subr.mxu0 0.0
    %1451 = vmatpush1.msra.mxu0 0.0
    %1452 = vmatprep.subr.mxu0 0.0
    %1453 = vmatpush1.msra.mxu0 0.0
    %1454 = vmatprep.mubr.f32.mxu0 0.0
    %1455 = vmatmul.mubr.f32.gmra.mrb[0].mxu0 %v1309
    %v1456 = vpop.f32.mrb[0].mxu0
    %v1457 = vadd.f32 0.0, %v1456
    %v1458 = vpop.f32.mrb[0].mxu0
    %v1459 = vadd.f32 0.0, %v1458
    %1460 = vdwg.mxu0
    %v1461 = vadd.f32 %v1315, %v1386
    %v1462 = vadd.f32 %v1316, %v1388
    %v1463 = vadd.f32 %v1317, %v1457
    %v1464 = vadd.f32 %v1318, %v1459
    %v1465 = vxor.u32 %v1461, 2147483648
    %v1466 = vxor.u32 %v1462, 2147483648
    %v1467 = vxor.u32 %v1463, 2147483648
    %v1468 = vmul.f32 %v1465, 1.442695
    %v1469 = vpow.pop %v1468
    %v1470 = vmul.f32 %v1466, 1.442695
    %v1471 = vpow.pop %v1470
    %v1472 = vmul.f32 %v1467, 1.442695
    %v1473 = vpow.pop %v1472
    %v1474 = vadd.f32 %v1469, 1.0
    %v1475 = vadd.f32 %v1471, 1.0
    %v1476 = vadd.f32 %v1473, 1.0
    %v1477 = vrcp.pop %v1474
    %v1478 = vmul.f32 1.0, %v1477
    %v1479 = vrcp.pop %v1475
    %v1480 = vmul.f32 1.0, %v1479
    %v1481 = vrcp.pop %v1476
    %v1482 = vmul.f32 1.0, %v1481
    %v1483 = vtanh.pop %v1464
    %v1484 = vmul.f32 %v1480, %v1307
    %v1485 = vmul.f32 %v1478, %v1483
    %v1486 = vadd.f32 %v1484, %v1485
    %v1487 = vtanh.pop %v1486
    %v1488 = vmul.f32 %v1482, %v1487
    %s1489 = scalar_lea.vmem [#allocation8], 32
    %1490 = vst [vmem:[%s1489] sm:$0xff] %v1488
    %s1491 = smul.u32 5, 4
    %s1492 = smul.addr %s1491, 8
    %s1493 = scalar_lea.vmem [#allocation4], %s1492
    %v1494 = vld [vmem:[%s1493] sm:$0xff]
    %v1495 = vld [vmem:[%s1493 + $0x8] sm:$0xff]
    %v1496 = vld [vmem:[%s1493 + $0x10] sm:$0xff]
    %v1497 = vld [vmem:[%s1493 + $0x18] sm:$0xff]
    %1498 = vmatprep.subr.mxu0 %v532
    %1499 = vmatpush1.msra.mxu0 %v531
    %1500 = vmatprep.subr.mxu0 %v536
    %1501 = vmatpush1.msra.mxu0 %v535
    %1502 = vmatprep.subr.mxu0 %v540
    %1503 = vmatpush1.msra.mxu0 %v539
    %1504 = vmatprep.subr.mxu0 %v544
    %1505 = vmatpush1.msra.mxu0 %v543
    %1506 = vmatprep.subr.mxu0 %v548
    %1507 = vmatpush1.msra.mxu0 %v547
    %1508 = vmatprep.subr.mxu0 %v552
    %1509 = vmatpush1.msra.mxu0 %v551
    %1510 = vmatprep.subr.mxu0 %v556
    %1511 = vmatpush1.msra.mxu0 %v555
    %1512 = vmatprep.subr.mxu0 %v560
    %1513 = vmatpush1.msra.mxu0 %v559
    %1514 = vmatprep.subr.mxu0 %v564
    %1515 = vmatpush1.msra.mxu0 %v563
    %1516 = vmatprep.subr.mxu0 %v568
    %1517 = vmatpush1.msra.mxu0 %v567
    %1518 = vmatprep.subr.mxu0 %v572
    %1519 = vmatpush1.msra.mxu0 %v571
    %1520 = vmatprep.subr.mxu0 %v576
    %1521 = vmatpush1.msra.mxu0 %v575
    %1522 = vmatprep.subr.mxu0 %v580
    %1523 = vmatpush1.msra.mxu0 %v579
    %1524 = vmatprep.subr.mxu0 %v584
    %1525 = vmatpush1.msra.mxu0 %v583
    %1526 = vmatprep.subr.mxu0 %v588
    %1527 = vmatpush1.msra.mxu0 %v587
    %1528 = vmatprep.subr.mxu0 %v592
    %1529 = vmatpush1.msra.mxu0 %v591
    %1530 = vmatprep.subr.mxu0 0.0
    %1531 = vmatpush1.msra.mxu0 0.0
    %1532 = vmatprep.subr.mxu0 0.0
    %1533 = vmatpush1.msra.mxu0 0.0
    %1534 = vmatprep.subr.mxu0 0.0
    %1535 = vmatpush1.msra.mxu0 0.0
    %1536 = vmatprep.subr.mxu0 0.0
    %1537 = vmatpush1.msra.mxu0 0.0
    %1538 = vmatprep.subr.mxu0 0.0
    %1539 = vmatpush1.msra.mxu0 0.0
    %1540 = vmatprep.subr.mxu0 0.0
    %1541 = vmatpush1.msra.mxu0 0.0
    %1542 = vmatprep.subr.mxu0 0.0
    %1543 = vmatpush1.msra.mxu0 0.0
    %1544 = vmatprep.subr.mxu0 0.0
    %1545 = vmatpush1.msra.mxu0 0.0
    %1546 = vmatprep.subr.mxu0 0.0
    %1547 = vmatpush1.msra.mxu0 0.0
    %1548 = vmatprep.subr.mxu0 0.0
    %1549 = vmatpush1.msra.mxu0 0.0
    %1550 = vmatprep.subr.mxu0 0.0
    %1551 = vmatpush1.msra.mxu0 0.0
    %1552 = vmatprep.subr.mxu0 0.0
    %1553 = vmatpush1.msra.mxu0 0.0
    %1554 = vmatprep.subr.mxu0 0.0
    %1555 = vmatpush1.msra.mxu0 0.0
    %1556 = vmatprep.subr.mxu0 0.0
    %1557 = vmatpush1.msra.mxu0 0.0
    %1558 = vmatprep.subr.mxu0 0.0
    %1559 = vmatpush1.msra.mxu0 0.0
    %1560 = vmatprep.subr.mxu0 0.0
    %1561 = vmatpush1.msra.mxu0 0.0
    %1562 = vmatprep.mubr.f32.mxu0 0.0
    %1563 = vmatmul.mubr.f32.gmra.mrb[0].mxu0 %v1488
    %v1564 = vpop.f32.mrb[0].mxu0
    %v1565 = vadd.f32 0.0, %v1564
    %v1566 = vpop.f32.mrb[0].mxu0
    %v1567 = vadd.f32 0.0, %v1566
    %1568 = vdwg.mxu0
    %1569 = vmatprep.subr.mxu0 %v534
    %1570 = vmatpush1.msra.mxu0 %v533
    %1571 = vmatprep.subr.mxu0 %v538
    %1572 = vmatpush1.msra.mxu0 %v537
    %1573 = vmatprep.subr.mxu0 %v542
    %1574 = vmatpush1.msra.mxu0 %v541
    %1575 = vmatprep.subr.mxu0 %v546
    %1576 = vmatpush1.msra.mxu0 %v545
    %1577 = vmatprep.subr.mxu0 %v550
    %1578 = vmatpush1.msra.mxu0 %v549
    %1579 = vmatprep.subr.mxu0 %v554
    %1580 = vmatpush1.msra.mxu0 %v553
    %1581 = vmatprep.subr.mxu0 %v558
    %1582 = vmatpush1.msra.mxu0 %v557
    %1583 = vmatprep.subr.mxu0 %v562
    %1584 = vmatpush1.msra.mxu0 %v561
    %1585 = vmatprep.subr.mxu0 %v566
    %1586 = vmatpush1.msra.mxu0 %v565
    %1587 = vmatprep.subr.mxu0 %v570
    %1588 = vmatpush1.msra.mxu0 %v569
    %1589 = vmatprep.subr.mxu0 %v574
    %1590 = vmatpush1.msra.mxu0 %v573
    %1591 = vmatprep.subr.mxu0 %v578
    %1592 = vmatpush1.msra.mxu0 %v577
    %1593 = vmatprep.subr.mxu0 %v582
    %1594 = vmatpush1.msra.mxu0 %v581
    %1595 = vmatprep.subr.mxu0 %v586
    %1596 = vmatpush1.msra.mxu0 %v585
    %1597 = vmatprep.subr.mxu0 %v590
    %1598 = vmatpush1.msra.mxu0 %v589
    %1599 = vmatprep.subr.mxu0 %v594
    %1600 = vmatpush1.msra.mxu0 %v593
    %1601 = vmatprep.subr.mxu0 0.0
    %1602 = vmatpush1.msra.mxu0 0.0
    %1603 = vmatprep.subr.mxu0 0.0
    %1604 = vmatpush1.msra.mxu0 0.0
    %1605 = vmatprep.subr.mxu0 0.0
    %1606 = vmatpush1.msra.mxu0 0.0
    %1607 = vmatprep.subr.mxu0 0.0
    %1608 = vmatpush1.msra.mxu0 0.0
    %1609 = vmatprep.subr.mxu0 0.0
    %1610 = vmatpush1.msra.mxu0 0.0
    %1611 = vmatprep.subr.mxu0 0.0
    %1612 = vmatpush1.msra.mxu0 0.0
    %1613 = vmatprep.subr.mxu0 0.0
    %1614 = vmatpush1.msra.mxu0 0.0
    %1615 = vmatprep.subr.mxu0 0.0
    %1616 = vmatpush1.msra.mxu0 0.0
    %1617 = vmatprep.subr.mxu0 0.0
    %1618 = vmatpush1.msra.mxu0 0.0
    %1619 = vmatprep.subr.mxu0 0.0
    %1620 = vmatpush1.msra.mxu0 0.0
    %1621 = vmatprep.subr.mxu0 0.0
    %1622 = vmatpush1.msra.mxu0 0.0
    %1623 = vmatprep.subr.mxu0 0.0
    %1624 = vmatpush1.msra.mxu0 0.0
    %1625 = vmatprep.subr.mxu0 0.0
    %1626 = vmatpush1.msra.mxu0 0.0
    %1627 = vmatprep.subr.mxu0 0.0
    %1628 = vmatpush1.msra.mxu0 0.0
    %1629 = vmatprep.subr.mxu0 0.0
    %1630 = vmatpush1.msra.mxu0 0.0
    %1631 = vmatprep.subr.mxu0 0.0
    %1632 = vmatpush1.msra.mxu0 0.0
    %1633 = vmatprep.mubr.f32.mxu0 0.0
    %1634 = vmatmul.mubr.f32.gmra.mrb[0].mxu0 %v1488
    %v1635 = vpop.f32.mrb[0].mxu0
    %v1636 = vadd.f32 0.0, %v1635
    %v1637 = vpop.f32.mrb[0].mxu0
    %v1638 = vadd.f32 0.0, %v1637
    %1639 = vdwg.mxu0
    %v1640 = vadd.f32 %v1494, %v1565
    %v1641 = vadd.f32 %v1495, %v1567
    %v1642 = vadd.f32 %v1496, %v1636
    %v1643 = vadd.f32 %v1497, %v1638
    %v1644 = vxor.u32 %v1640, 2147483648
    %v1645 = vxor.u32 %v1641, 2147483648
    %v1646 = vxor.u32 %v1642, 2147483648
    %v1647 = vmul.f32 %v1644, 1.442695
    %v1648 = vpow.pop %v1647
    %v1649 = vmul.f32 %v1645, 1.442695
    %v1650 = vpow.pop %v1649
    %v1651 = vmul.f32 %v1646, 1.442695
    %v1652 = vpow.pop %v1651
    %v1653 = vadd.f32 %v1648, 1.0
    %v1654 = vadd.f32 %v1650, 1.0
    %v1655 = vadd.f32 %v1652, 1.0
    %v1656 = vrcp.pop %v1653
    %v1657 = vmul.f32 1.0, %v1656
    %v1658 = vrcp.pop %v1654
    %v1659 = vmul.f32 1.0, %v1658
    %v1660 = vrcp.pop %v1655
    %v1661 = vmul.f32 1.0, %v1660
    %v1662 = vtanh.pop %v1643
    %v1663 = vmul.f32 %v1659, %v1486
    %v1664 = vmul.f32 %v1657, %v1662
    %v1665 = vadd.f32 %v1663, %v1664
    %v1666 = vtanh.pop %v1665
    %v1667 = vmul.f32 %v1661, %v1666
    %s1668 = scalar_lea.vmem [#allocation8], 40
    %1669 = vst [vmem:[%s1668] sm:$0xff] %v1667
    %s1670 = smul.u32 6, 4
    %s1671 = smul.addr %s1670, 8
    %s1672 = scalar_lea.vmem [#allocation4], %s1671
    %v1673 = vld [vmem:[%s1672] sm:$0xff]
    %v1674 = vld [vmem:[%s1672 + $0x8] sm:$0xff]
    %v1675 = vld [vmem:[%s1672 + $0x10] sm:$0xff]
    %v1676 = vld [vmem:[%s1672 + $0x18] sm:$0xff]
    %1677 = vmatprep.subr.mxu0 %v532
    %1678 = vmatpush1.msra.mxu0 %v531
    %1679 = vmatprep.subr.mxu0 %v536
    %1680 = vmatpush1.msra.mxu0 %v535
    %1681 = vmatprep.subr.mxu0 %v540
    %1682 = vmatpush1.msra.mxu0 %v539
    %1683 = vmatprep.subr.mxu0 %v544
    %1684 = vmatpush1.msra.mxu0 %v543
    %1685 = vmatprep.subr.mxu0 %v548
    %1686 = vmatpush1.msra.mxu0 %v547
    %1687 = vmatprep.subr.mxu0 %v552
    %1688 = vmatpush1.msra.mxu0 %v551
    %1689 = vmatprep.subr.mxu0 %v556
    %1690 = vmatpush1.msra.mxu0 %v555
    %1691 = vmatprep.subr.mxu0 %v560
    %1692 = vmatpush1.msra.mxu0 %v559
    %1693 = vmatprep.subr.mxu0 %v564
    %1694 = vmatpush1.msra.mxu0 %v563
    %1695 = vmatprep.subr.mxu0 %v568
    %1696 = vmatpush1.msra.mxu0 %v567
    %1697 = vmatprep.subr.mxu0 %v572
    %1698 = vmatpush1.msra.mxu0 %v571
    %1699 = vmatprep.subr.mxu0 %v576
    %1700 = vmatpush1.msra.mxu0 %v575
    %1701 = vmatprep.subr.mxu0 %v580
    %1702 = vmatpush1.msra.mxu0 %v579
    %1703 = vmatprep.subr.mxu0 %v584
    %1704 = vmatpush1.msra.mxu0 %v583
    %1705 = vmatprep.subr.mxu0 %v588
    %1706 = vmatpush1.msra.mxu0 %v587
    %1707 = vmatprep.subr.mxu0 %v592
    %1708 = vmatpush1.msra.mxu0 %v591
    %1709 = vmatprep.subr.mxu0 0.0
    %1710 = vmatpush1.msra.mxu0 0.0
    %1711 = vmatprep.subr.mxu0 0.0
    %1712 = vmatpush1.msra.mxu0 0.0
    %1713 = vmatprep.subr.mxu0 0.0
    %1714 = vmatpush1.msra.mxu0 0.0
    %1715 = vmatprep.subr.mxu0 0.0
    %1716 = vmatpush1.msra.mxu0 0.0
    %1717 = vmatprep.subr.mxu0 0.0
    %1718 = vmatpush1.msra.mxu0 0.0
    %1719 = vmatprep.subr.mxu0 0.0
    %1720 = vmatpush1.msra.mxu0 0.0
    %1721 = vmatprep.subr.mxu0 0.0
    %1722 = vmatpush1.msra.mxu0 0.0
    %1723 = vmatprep.subr.mxu0 0.0
    %1724 = vmatpush1.msra.mxu0 0.0
    %1725 = vmatprep.subr.mxu0 0.0
    %1726 = vmatpush1.msra.mxu0 0.0
    %1727 = vmatprep.subr.mxu0 0.0
    %1728 = vmatpush1.msra.mxu0 0.0
    %1729 = vmatprep.subr.mxu0 0.0
    %1730 = vmatpush1.msra.mxu0 0.0
    %1731 = vmatprep.subr.mxu0 0.0
    %1732 = vmatpush1.msra.mxu0 0.0
    %1733 = vmatprep.subr.mxu0 0.0
    %1734 = vmatpush1.msra.mxu0 0.0
    %1735 = vmatprep.subr.mxu0 0.0
    %1736 = vmatpush1.msra.mxu0 0.0
    %1737 = vmatprep.subr.mxu0 0.0
    %1738 = vmatpush1.msra.mxu0 0.0
    %1739 = vmatprep.subr.mxu0 0.0
    %1740 = vmatpush1.msra.mxu0 0.0
    %1741 = vmatprep.mubr.f32.mxu0 0.0
    %1742 = vmatmul.mubr.f32.gmra.mrb[0].mxu0 %v1667
    %v1743 = vpop.f32.mrb[0].mxu0
    %v1744 = vadd.f32 0.0, %v1743
    %v1745 = vpop.f32.mrb[0].mxu0
    %v1746 = vadd.f32 0.0, %v1745
    %1747 = vdwg.mxu0
    %1748 = vmatprep.subr.mxu0 %v534
    %1749 = vmatpush1.msra.mxu0 %v533
    %1750 = vmatprep.subr.mxu0 %v538
    %1751 = vmatpush1.msra.mxu0 %v537
    %1752 = vmatprep.subr.mxu0 %v542
    %1753 = vmatpush1.msra.mxu0 %v541
    %1754 = vmatprep.subr.mxu0 %v546
    %1755 = vmatpush1.msra.mxu0 %v545
    %1756 = vmatprep.subr.mxu0 %v550
    %1757 = vmatpush1.msra.mxu0 %v549
    %1758 = vmatprep.subr.mxu0 %v554
    %1759 = vmatpush1.msra.mxu0 %v553
    %1760 = vmatprep.subr.mxu0 %v558
    %1761 = vmatpush1.msra.mxu0 %v557
    %1762 = vmatprep.subr.mxu0 %v562
    %1763 = vmatpush1.msra.mxu0 %v561
    %1764 = vmatprep.subr.mxu0 %v566
    %1765 = vmatpush1.msra.mxu0 %v565
    %1766 = vmatprep.subr.mxu0 %v570
    %1767 = vmatpush1.msra.mxu0 %v569
    %1768 = vmatprep.subr.mxu0 %v574
    %1769 = vmatpush1.msra.mxu0 %v573
    %1770 = vmatprep.subr.mxu0 %v578
    %1771 = vmatpush1.msra.mxu0 %v577
    %1772 = vmatprep.subr.mxu0 %v582
    %1773 = vmatpush1.msra.mxu0 %v581
    %1774 = vmatprep.subr.mxu0 %v586
    %1775 = vmatpush1.msra.mxu0 %v585
    %1776 = vmatprep.subr.mxu0 %v590
    %1777 = vmatpush1.msra.mxu0 %v589
    %1778 = vmatprep.subr.mxu0 %v594
    %1779 = vmatpush1.msra.mxu0 %v593
    %1780 = vmatprep.subr.mxu0 0.0
    %1781 = vmatpush1.msra.mxu0 0.0
    %1782 = vmatprep.subr.mxu0 0.0
    %1783 = vmatpush1.msra.mxu0 0.0
    %1784 = vmatprep.subr.mxu0 0.0
    %1785 = vmatpush1.msra.mxu0 0.0
    %1786 = vmatprep.subr.mxu0 0.0
    %1787 = vmatpush1.msra.mxu0 0.0
    %1788 = vmatprep.subr.mxu0 0.0
    %1789 = vmatpush1.msra.mxu0 0.0
    %1790 = vmatprep.subr.mxu0 0.0
    %1791 = vmatpush1.msra.mxu0 0.0
    %1792 = vmatprep.subr.mxu0 0.0
    %1793 = vmatpush1.msra.mxu0 0.0
    %1794 = vmatprep.subr.mxu0 0.0
    %1795 = vmatpush1.msra.mxu0 0.0
    %1796 = vmatprep.subr.mxu0 0.0
    %1797 = vmatpush1.msra.mxu0 0.0
    %1798 = vmatprep.subr.mxu0 0.0
    %1799 = vmatpush1.msra.mxu0 0.0
    %1800 = vmatprep.subr.mxu0 0.0
    %1801 = vmatpush1.msra.mxu0 0.0
    %1802 = vmatprep.subr.mxu0 0.0
    %1803 = vmatpush1.msra.mxu0 0.0
    %1804 = vmatprep.subr.mxu0 0.0
    %1805 = vmatpush1.msra.mxu0 0.0
    %1806 = vmatprep.subr.mxu0 0.0
    %1807 = vmatpush1.msra.mxu0 0.0
    %1808 = vmatprep.subr.mxu0 0.0
    %1809 = vmatpush1.msra.mxu0 0.0
    %1810 = vmatprep.subr.mxu0 0.0
    %1811 = vmatpush1.msra.mxu0 0.0
    %1812 = vmatprep.mubr.f32.mxu0 0.0
    %1813 = vmatmul.mubr.f32.gmra.mrb[0].mxu0 %v1667
    %v1814 = vpop.f32.mrb[0].mxu0
    %v1815 = vadd.f32 0.0, %v1814
    %v1816 = vpop.f32.mrb[0].mxu0
    %v1817 = vadd.f32 0.0, %v1816
    %1818 = vdwg.mxu0
    %v1819 = vadd.f32 %v1673, %v1744
    %v1820 = vadd.f32 %v1674, %v1746
    %v1821 = vadd.f32 %v1675, %v1815
    %v1822 = vadd.f32 %v1676, %v1817
    %v1823 = vxor.u32 %v1819, 2147483648
    %v1824 = vxor.u32 %v1820, 2147483648
    %v1825 = vxor.u32 %v1821, 2147483648
    %v1826 = vmul.f32 %v1823, 1.442695
    %v1827 = vpow.pop %v1826
    %v1828 = vmul.f32 %v1824, 1.442695
    %v1829 = vpow.pop %v1828
    %v1830 = vmul.f32 %v1825, 1.442695
    %v1831 = vpow.pop %v1830
    %v1832 = vadd.f32 %v1827, 1.0
    %v1833 = vadd.f32 %v1829, 1.0
    %v1834 = vadd.f32 %v1831, 1.0
    %v1835 = vrcp.pop %v1832
    %v1836 = vmul.f32 1.0, %v1835
    %v1837 = vrcp.pop %v1833
    %v1838 = vmul.f32 1.0, %v1837
    %v1839 = vrcp.pop %v1834
    %v1840 = vmul.f32 1.0, %v1839
    %v1841 = vtanh.pop %v1822
    %v1842 = vmul.f32 %v1838, %v1665
    %v1843 = vmul.f32 %v1836, %v1841
    %v1844 = vadd.f32 %v1842, %v1843
    %v1845 = vtanh.pop %v1844
    %v1846 = vmul.f32 %v1840, %v1845
    %s1847 = scalar_lea.vmem [#allocation8], 48
    %1848 = vst [vmem:[%s1847] sm:$0xff] %v1846
    %s1849 = smul.u32 7, 4
    %s1850 = smul.addr %s1849, 8
    %s1851 = scalar_lea.vmem [#allocation4], %s1850
    %v1852 = vld [vmem:[%s1851] sm:$0xff]
    %v1853 = vld [vmem:[%s1851 + $0x8] sm:$0xff]
    %v1854 = vld [vmem:[%s1851 + $0x10] sm:$0xff]
    %v1855 = vld [vmem:[%s1851 + $0x18] sm:$0xff]
    %1856 = vmatprep.subr.mxu0 %v532
    %1857 = vmatpush1.msra.mxu0 %v531
    %1858 = vmatprep.subr.mxu0 %v536
    %1859 = vmatpush1.msra.mxu0 %v535
    %1860 = vmatprep.subr.mxu0 %v540
    %1861 = vmatpush1.msra.mxu0 %v539
    %1862 = vmatprep.subr.mxu0 %v544
    %1863 = vmatpush1.msra.mxu0 %v543
    %1864 = vmatprep.subr.mxu0 %v548
    %1865 = vmatpush1.msra.mxu0 %v547
    %1866 = vmatprep.subr.mxu0 %v552
    %1867 = vmatpush1.msra.mxu0 %v551
    %1868 = vmatprep.subr.mxu0 %v556
    %1869 = vmatpush1.msra.mxu0 %v555
    %1870 = vmatprep.subr.mxu0 %v560
    %1871 = vmatpush1.msra.mxu0 %v559
    %1872 = vmatprep.subr.mxu0 %v564
    %1873 = vmatpush1.msra.mxu0 %v563
    %1874 = vmatprep.subr.mxu0 %v568
    %1875 = vmatpush1.msra.mxu0 %v567
    %1876 = vmatprep.subr.mxu0 %v572
    %1877 = vmatpush1.msra.mxu0 %v571
    %1878 = vmatprep.subr.mxu0 %v576
    %1879 = vmatpush1.msra.mxu0 %v575
    %1880 = vmatprep.subr.mxu0 %v580
    %1881 = vmatpush1.msra.mxu0 %v579
    %1882 = vmatprep.subr.mxu0 %v584
    %1883 = vmatpush1.msra.mxu0 %v583
    %1884 = vmatprep.subr.mxu0 %v588
    %1885 = vmatpush1.msra.mxu0 %v587
    %1886 = vmatprep.subr.mxu0 %v592
    %1887 = vmatpush1.msra.mxu0 %v591
    %1888 = vmatprep.subr.mxu0 0.0
    %1889 = vmatpush1.msra.mxu0 0.0
    %1890 = vmatprep.subr.mxu0 0.0
    %1891 = vmatpush1.msra.mxu0 0.0
    %1892 = vmatprep.subr.mxu0 0.0
    %1893 = vmatpush1.msra.mxu0 0.0
    %1894 = vmatprep.subr.mxu0 0.0
    %1895 = vmatpush1.msra.mxu0 0.0
    %1896 = vmatprep.subr.mxu0 0.0
    %1897 = vmatpush1.msra.mxu0 0.0
    %1898 = vmatprep.subr.mxu0 0.0
    %1899 = vmatpush1.msra.mxu0 0.0
    %1900 = vmatprep.subr.mxu0 0.0
    %1901 = vmatpush1.msra.mxu0 0.0
    %1902 = vmatprep.subr.mxu0 0.0
    %1903 = vmatpush1.msra.mxu0 0.0
    %1904 = vmatprep.subr.mxu0 0.0
    %1905 = vmatpush1.msra.mxu0 0.0
    %1906 = vmatprep.subr.mxu0 0.0
    %1907 = vmatpush1.msra.mxu0 0.0
    %1908 = vmatprep.subr.mxu0 0.0
    %1909 = vmatpush1.msra.mxu0 0.0
    %1910 = vmatprep.subr.mxu0 0.0
    %1911 = vmatpush1.msra.mxu0 0.0
    %1912 = vmatprep.subr.mxu0 0.0
    %1913 = vmatpush1.msra.mxu0 0.0
    %1914 = vmatprep.subr.mxu0 0.0
    %1915 = vmatpush1.msra.mxu0 0.0
    %1916 = vmatprep.subr.mxu0 0.0
    %1917 = vmatpush1.msra.mxu0 0.0
    %1918 = vmatprep.subr.mxu0 0.0
    %1919 = vmatpush1.msra.mxu0 0.0
    %1920 = vmatprep.mubr.f32.mxu0 0.0
    %1921 = vmatmul.mubr.f32.gmra.mrb[0].mxu0 %v1846
    %v1922 = vpop.f32.mrb[0].mxu0
    %v1923 = vadd.f32 0.0, %v1922
    %v1924 = vpop.f32.mrb[0].mxu0
    %v1925 = vadd.f32 0.0, %v1924
    %1926 = vdwg.mxu0
    %1927 = vmatprep.subr.mxu0 %v534
    %1928 = vmatpush1.msra.mxu0 %v533
    %1929 = vmatprep.subr.mxu0 %v538
    %1930 = vmatpush1.msra.mxu0 %v537
    %1931 = vmatprep.subr.mxu0 %v542
    %1932 = vmatpush1.msra.mxu0 %v541
    %1933 = vmatprep.subr.mxu0 %v546
    %1934 = vmatpush1.msra.mxu0 %v545
    %1935 = vmatprep.subr.mxu0 %v550
    %1936 = vmatpush1.msra.mxu0 %v549
    %1937 = vmatprep.subr.mxu0 %v554
    %1938 = vmatpush1.msra.mxu0 %v553
    %1939 = vmatprep.subr.mxu0 %v558
    %1940 = vmatpush1.msra.mxu0 %v557
    %1941 = vmatprep.subr.mxu0 %v562
    %1942 = vmatpush1.msra.mxu0 %v561
    %1943 = vmatprep.subr.mxu0 %v566
    %1944 = vmatpush1.msra.mxu0 %v565
    %1945 = vmatprep.subr.mxu0 %v570
    %1946 = vmatpush1.msra.mxu0 %v569
    %1947 = vmatprep.subr.mxu0 %v574
    %1948 = vmatpush1.msra.mxu0 %v573
    %1949 = vmatprep.subr.mxu0 %v578
    %1950 = vmatpush1.msra.mxu0 %v577
    %1951 = vmatprep.subr.mxu0 %v582
    %1952 = vmatpush1.msra.mxu0 %v581
    %1953 = vmatprep.subr.mxu0 %v586
    %1954 = vmatpush1.msra.mxu0 %v585
    %1955 = vmatprep.subr.mxu0 %v590
    %1956 = vmatpush1.msra.mxu0 %v589
    %1957 = vmatprep.subr.mxu0 %v594
    %1958 = vmatpush1.msra.mxu0 %v593
    %1959 = vmatprep.subr.mxu0 0.0
    %1960 = vmatpush1.msra.mxu0 0.0
    %1961 = vmatprep.subr.mxu0 0.0
    %1962 = vmatpush1.msra.mxu0 0.0
    %1963 = vmatprep.subr.mxu0 0.0
    %1964 = vmatpush1.msra.mxu0 0.0
    %1965 = vmatprep.subr.mxu0 0.0
    %1966 = vmatpush1.msra.mxu0 0.0
    %1967 = vmatprep.subr.mxu0 0.0
    %1968 = vmatpush1.msra.mxu0 0.0
    %1969 = vmatprep.subr.mxu0 0.0
    %1970 = vmatpush1.msra.mxu0 0.0
    %1971 = vmatprep.subr.mxu0 0.0
    %1972 = vmatpush1.msra.mxu0 0.0
    %1973 = vmatprep.subr.mxu0 0.0
    %1974 = vmatpush1.msra.mxu0 0.0
    %1975 = vmatprep.subr.mxu0 0.0
    %1976 = vmatpush1.msra.mxu0 0.0
    %1977 = vmatprep.subr.mxu0 0.0
    %1978 = vmatpush1.msra.mxu0 0.0
    %1979 = vmatprep.subr.mxu0 0.0
    %1980 = vmatpush1.msra.mxu0 0.0
    %1981 = vmatprep.subr.mxu0 0.0
    %1982 = vmatpush1.msra.mxu0 0.0
    %1983 = vmatprep.subr.mxu0 0.0
    %1984 = vmatpush1.msra.mxu0 0.0
    %1985 = vmatprep.subr.mxu0 0.0
    %1986 = vmatpush1.msra.mxu0 0.0
    %1987 = vmatprep.subr.mxu0 0.0
    %1988 = vmatpush1.msra.mxu0 0.0
    %1989 = vmatprep.subr.mxu0 0.0
    %1990 = vmatpush1.msra.mxu0 0.0
    %1991 = vmatprep.mubr.f32.mxu0 0.0
    %1992 = vmatmul.mubr.f32.gmra.mrb[0].mxu0 %v1846
    %v1993 = vpop.f32.mrb[0].mxu0
    %v1994 = vadd.f32 0.0, %v1993
    %v1995 = vpop.f32.mrb[0].mxu0
    %v1996 = vadd.f32 0.0, %v1995
    %1997 = vdwg.mxu0
    %v1998 = vadd.f32 %v1852, %v1923
    %v1999 = vadd.f32 %v1853, %v1925
    %v2000 = vadd.f32 %v1854, %v1994
    %v2001 = vadd.f32 %v1855, %v1996
    %v2002 = vxor.u32 %v1998, 2147483648
    %v2003 = vxor.u32 %v1999, 2147483648
    %v2004 = vxor.u32 %v2000, 2147483648
    %v2005 = vmul.f32 %v2002, 1.442695
    %v2006 = vpow.pop %v2005
    %v2007 = vmul.f32 %v2003, 1.442695
    %v2008 = vpow.pop %v2007
    %v2009 = vmul.f32 %v2004, 1.442695
    %v2010 = vpow.pop %v2009
    %v2011 = vadd.f32 %v2006, 1.0
    %v2012 = vadd.f32 %v2008, 1.0
    %v2013 = vadd.f32 %v2010, 1.0
    %v2014 = vrcp.pop %v2011
    %v2015 = vmul.f32 1.0, %v2014
    %v2016 = vrcp.pop %v2012
    %v2017 = vmul.f32 1.0, %v2016
    %v2018 = vrcp.pop %v2013
    %v2019 = vmul.f32 1.0, %v2018
    %v2020 = vtanh.pop %v2001
    %v2021 = vmul.f32 %v2017, %v1844
    %v2022 = vmul.f32 %v2015, %v2020
    %v2023 = vadd.f32 %v2021, %v2022
    %v2024 = vtanh.pop %v2023
    %v2025 = vmul.f32 %v2019, %v2024
    %s2026 = scalar_lea.vmem [#allocation8], 56
    %2027 = vst [vmem:[%s2026] sm:$0xff] %v2025
    %s2028 = smul.u32 8, 4
    %s2029 = smul.addr %s2028, 8
    %s2030 = scalar_lea.vmem [#allocation4], %s2029
    %v2031 = vld [vmem:[%s2030] sm:$0xff]
    %v2032 = vld [vmem:[%s2030 + $0x8] sm:$0xff]
    %v2033 = vld [vmem:[%s2030 + $0x10] sm:$0xff]
    %v2034 = vld [vmem:[%s2030 + $0x18] sm:$0xff]
    %2035 = vmatprep.subr.mxu0 %v532
    %2036 = vmatpush1.msra.mxu0 %v531
    %2037 = vmatprep.subr.mxu0 %v536
    %2038 = vmatpush1.msra.mxu0 %v535
    %2039 = vmatprep.subr.mxu0 %v540
    %2040 = vmatpush1.msra.mxu0 %v539
    %2041 = vmatprep.subr.mxu0 %v544
    %2042 = vmatpush1.msra.mxu0 %v543
    %2043 = vmatprep.subr.mxu0 %v548
    %2044 = vmatpush1.msra.mxu0 %v547
    %2045 = vmatprep.subr.mxu0 %v552
    %2046 = vmatpush1.msra.mxu0 %v551
    %2047 = vmatprep.subr.mxu0 %v556
    %2048 = vmatpush1.msra.mxu0 %v555
    %2049 = vmatprep.subr.mxu0 %v560
    %2050 = vmatpush1.msra.mxu0 %v559
    %2051 = vmatprep.subr.mxu0 %v564
    %2052 = vmatpush1.msra.mxu0 %v563
    %2053 = vmatprep.subr.mxu0 %v568
    %2054 = vmatpush1.msra.mxu0 %v567
    %2055 = vmatprep.subr.mxu0 %v572
    %2056 = vmatpush1.msra.mxu0 %v571
    %2057 = vmatprep.subr.mxu0 %v576
    %2058 = vmatpush1.msra.mxu0 %v575
    %2059 = vmatprep.subr.mxu0 %v580
    %2060 = vmatpush1.msra.mxu0 %v579
    %2061 = vmatprep.subr.mxu0 %v584
    %2062 = vmatpush1.msra.mxu0 %v583
    %2063 = vmatprep.subr.mxu0 %v588
    %2064 = vmatpush1.msra.mxu0 %v587
    %2065 = vmatprep.subr.mxu0 %v592
    %2066 = vmatpush1.msra.mxu0 %v591
    %2067 = vmatprep.subr.mxu0 0.0
    %2068 = vmatpush1.msra.mxu0 0.0
    %2069 = vmatprep.subr.mxu0 0.0
    %2070 = vmatpush1.msra.mxu0 0.0
    %2071 = vmatprep.subr.mxu0 0.0
    %2072 = vmatpush1.msra.mxu0 0.0
    %2073 = vmatprep.subr.mxu0 0.0
    %2074 = vmatpush1.msra.mxu0 0.0
    %2075 = vmatprep.subr.mxu0 0.0
    %2076 = vmatpush1.msra.mxu0 0.0
    %2077 = vmatprep.subr.mxu0 0.0
    %2078 = vmatpush1.msra.mxu0 0.0
    %2079 = vmatprep.subr.mxu0 0.0
    %2080 = vmatpush1.msra.mxu0 0.0
    %2081 = vmatprep.subr.mxu0 0.0
    %2082 = vmatpush1.msra.mxu0 0.0
    %2083 = vmatprep.subr.mxu0 0.0
    %2084 = vmatpush1.msra.mxu0 0.0
    %2085 = vmatprep.subr.mxu0 0.0
    %2086 = vmatpush1.msra.mxu0 0.0
    %2087 = vmatprep.subr.mxu0 0.0
    %2088 = vmatpush1.msra.mxu0 0.0
    %2089 = vmatprep.subr.mxu0 0.0
    %2090 = vmatpush1.msra.mxu0 0.0
    %2091 = vmatprep.subr.mxu0 0.0
    %2092 = vmatpush1.msra.mxu0 0.0
    %2093 = vmatprep.subr.mxu0 0.0
    %2094 = vmatpush1.msra.mxu0 0.0
    %2095 = vmatprep.subr.mxu0 0.0
    %2096 = vmatpush1.msra.mxu0 0.0
    %2097 = vmatprep.subr.mxu0 0.0
    %2098 = vmatpush1.msra.mxu0 0.0
    %2099 = vmatprep.mubr.f32.mxu0 0.0
    %2100 = vmatmul.mubr.f32.gmra.mrb[0].mxu0 %v2025
    %v2101 = vpop.f32.mrb[0].mxu0
    %v2102 = vadd.f32 0.0, %v2101
    %v2103 = vpop.f32.mrb[0].mxu0
    %v2104 = vadd.f32 0.0, %v2103
    %2105 = vdwg.mxu0
    %2106 = vmatprep.subr.mxu0 %v534
    %2107 = vmatpush1.msra.mxu0 %v533
    %2108 = vmatprep.subr.mxu0 %v538
    %2109 = vmatpush1.msra.mxu0 %v537
    %2110 = vmatprep.subr.mxu0 %v542
    %2111 = vmatpush1.msra.mxu0 %v541
    %2112 = vmatprep.subr.mxu0 %v546
    %2113 = vmatpush1.msra.mxu0 %v545
    %2114 = vmatprep.subr.mxu0 %v550
    %2115 = vmatpush1.msra.mxu0 %v549
    %2116 = vmatprep.subr.mxu0 %v554
    %2117 = vmatpush1.msra.mxu0 %v553
    %2118 = vmatprep.subr.mxu0 %v558
    %2119 = vmatpush1.msra.mxu0 %v557
    %2120 = vmatprep.subr.mxu0 %v562
    %2121 = vmatpush1.msra.mxu0 %v561
    %2122 = vmatprep.subr.mxu0 %v566
    %2123 = vmatpush1.msra.mxu0 %v565
    %2124 = vmatprep.subr.mxu0 %v570
    %2125 = vmatpush1.msra.mxu0 %v569
    %2126 = vmatprep.subr.mxu0 %v574
    %2127 = vmatpush1.msra.mxu0 %v573
    %2128 = vmatprep.subr.mxu0 %v578
    %2129 = vmatpush1.msra.mxu0 %v577
    %2130 = vmatprep.subr.mxu0 %v582
    %2131 = vmatpush1.msra.mxu0 %v581
    %2132 = vmatprep.subr.mxu0 %v586
    %2133 = vmatpush1.msra.mxu0 %v585
    %2134 = vmatprep.subr.mxu0 %v590
    %2135 = vmatpush1.msra.mxu0 %v589
    %2136 = vmatprep.subr.mxu0 %v594
    %2137 = vmatpush1.msra.mxu0 %v593
    %2138 = vmatprep.subr.mxu0 0.0
    %2139 = vmatpush1.msra.mxu0 0.0
    %2140 = vmatprep.subr.mxu0 0.0
    %2141 = vmatpush1.msra.mxu0 0.0
    %2142 = vmatprep.subr.mxu0 0.0
    %2143 = vmatpush1.msra.mxu0 0.0
    %2144 = vmatprep.subr.mxu0 0.0
    %2145 = vmatpush1.msra.mxu0 0.0
    %2146 = vmatprep.subr.mxu0 0.0
    %2147 = vmatpush1.msra.mxu0 0.0
    %2148 = vmatprep.subr.mxu0 0.0
    %2149 = vmatpush1.msra.mxu0 0.0
    %2150 = vmatprep.subr.mxu0 0.0
    %2151 = vmatpush1.msra.mxu0 0.0
    %2152 = vmatprep.subr.mxu0 0.0
    %2153 = vmatpush1.msra.mxu0 0.0
    %2154 = vmatprep.subr.mxu0 0.0
    %2155 = vmatpush1.msra.mxu0 0.0
    %2156 = vmatprep.subr.mxu0 0.0
    %2157 = vmatpush1.msra.mxu0 0.0
    %2158 = vmatprep.subr.mxu0 0.0
    %2159 = vmatpush1.msra.mxu0 0.0
    %2160 = vmatprep.subr.mxu0 0.0
    %2161 = vmatpush1.msra.mxu0 0.0
    %2162 = vmatprep.subr.mxu0 0.0
    %2163 = vmatpush1.msra.mxu0 0.0
    %2164 = vmatprep.subr.mxu0 0.0
    %2165 = vmatpush1.msra.mxu0 0.0
    %2166 = vmatprep.subr.mxu0 0.0
    %2167 = vmatpush1.msra.mxu0 0.0
    %2168 = vmatprep.subr.mxu0 0.0
    %2169 = vmatpush1.msra.mxu0 0.0
    %2170 = vmatprep.mubr.f32.mxu0 0.0
    %2171 = vmatmul.mubr.f32.gmra.mrb[0].mxu0 %v2025
    %v2172 = vpop.f32.mrb[0].mxu0
    %v2173 = vadd.f32 0.0, %v2172
    %v2174 = vpop.f32.mrb[0].mxu0
    %v2175 = vadd.f32 0.0, %v2174
    %2176 = vdwg.mxu0
    %v2177 = vadd.f32 %v2031, %v2102
    %v2178 = vadd.f32 %v2032, %v2104
    %v2179 = vadd.f32 %v2033, %v2173
    %v2180 = vadd.f32 %v2034, %v2175
    %v2181 = vxor.u32 %v2177, 2147483648
    %v2182 = vxor.u32 %v2178, 2147483648
    %v2183 = vxor.u32 %v2179, 2147483648
    %v2184 = vmul.f32 %v2181, 1.442695
    %v2185 = vpow.pop %v2184
    %v2186 = vmul.f32 %v2182, 1.442695
    %v2187 = vpow.pop %v2186
    %v2188 = vmul.f32 %v2183, 1.442695
    %v2189 = vpow.pop %v2188
    %v2190 = vadd.f32 %v2185, 1.0
    %v2191 = vadd.f32 %v2187, 1.0
    %v2192 = vadd.f32 %v2189, 1.0
    %v2193 = vrcp.pop %v2190
    %v2194 = vmul.f32 1.0, %v2193
    %v2195 = vrcp.pop %v2191
    %v2196 = vmul.f32 1.0, %v2195
    %v2197 = vrcp.pop %v2192
    %v2198 = vmul.f32 1.0, %v2197
    %v2199 = vtanh.pop %v2180
    %v2200 = vmul.f32 %v2196, %v2023
    %v2201 = vmul.f32 %v2194, %v2199
    %v2202 = vadd.f32 %v2200, %v2201
    %v2203 = vtanh.pop %v2202
    %v2204 = vmul.f32 %v2198, %v2203
    %s2205 = scalar_lea.vmem [#allocation8], 64
    %2206 = vst [vmem:[%s2205] sm:$0xff] %v2204
    %s2207 = smul.u32 9, 4
    %s2208 = smul.addr %s2207, 8
    %s2209 = scalar_lea.vmem [#allocation4], %s2208
    %v2210 = vld [vmem:[%s2209] sm:$0xff]
    %v2211 = vld [vmem:[%s2209 + $0x8] sm:$0xff]
    %v2212 = vld [vmem:[%s2209 + $0x10] sm:$0xff]
    %v2213 = vld [vmem:[%s2209 + $0x18] sm:$0xff]
    %2214 = vmatprep.subr.mxu0 %v532
    %2215 = vmatpush1.msra.mxu0 %v531
    %2216 = vmatprep.subr.mxu0 %v536
    %2217 = vmatpush1.msra.mxu0 %v535
    %2218 = vmatprep.subr.mxu0 %v540
    %2219 = vmatpush1.msra.mxu0 %v539
    %2220 = vmatprep.subr.mxu0 %v544
    %2221 = vmatpush1.msra.mxu0 %v543
    %2222 = vmatprep.subr.mxu0 %v548
    %2223 = vmatpush1.msra.mxu0 %v547
    %2224 = vmatprep.subr.mxu0 %v552
    %2225 = vmatpush1.msra.mxu0 %v551
    %2226 = vmatprep.subr.mxu0 %v556
    %2227 = vmatpush1.msra.mxu0 %v555
    %2228 = vmatprep.subr.mxu0 %v560
    %2229 = vmatpush1.msra.mxu0 %v559
    %2230 = vmatprep.subr.mxu0 %v564
    %2231 = vmatpush1.msra.mxu0 %v563
    %2232 = vmatprep.subr.mxu0 %v568
    %2233 = vmatpush1.msra.mxu0 %v567
    %2234 = vmatprep.subr.mxu0 %v572
    %2235 = vmatpush1.msra.mxu0 %v571
    %2236 = vmatprep.subr.mxu0 %v576
    %2237 = vmatpush1.msra.mxu0 %v575
    %2238 = vmatprep.subr.mxu0 %v580
    %2239 = vmatpush1.msra.mxu0 %v579
    %2240 = vmatprep.subr.mxu0 %v584
    %2241 = vmatpush1.msra.mxu0 %v583
    %2242 = vmatprep.subr.mxu0 %v588
    %2243 = vmatpush1.msra.mxu0 %v587
    %2244 = vmatprep.subr.mxu0 %v592
    %2245 = vmatpush1.msra.mxu0 %v591
    %2246 = vmatprep.subr.mxu0 0.0
    %2247 = vmatpush1.msra.mxu0 0.0
    %2248 = vmatprep.subr.mxu0 0.0
    %2249 = vmatpush1.msra.mxu0 0.0
    %2250 = vmatprep.subr.mxu0 0.0
    %2251 = vmatpush1.msra.mxu0 0.0
    %2252 = vmatprep.subr.mxu0 0.0
    %2253 = vmatpush1.msra.mxu0 0.0
    %2254 = vmatprep.subr.mxu0 0.0
    %2255 = vmatpush1.msra.mxu0 0.0
    %2256 = vmatprep.subr.mxu0 0.0
    %2257 = vmatpush1.msra.mxu0 0.0
    %2258 = vmatprep.subr.mxu0 0.0
    %2259 = vmatpush1.msra.mxu0 0.0
    %2260 = vmatprep.subr.mxu0 0.0
    %2261 = vmatpush1.msra.mxu0 0.0
    %2262 = vmatprep.subr.mxu0 0.0
    %2263 = vmatpush1.msra.mxu0 0.0
    %2264 = vmatprep.subr.mxu0 0.0
    %2265 = vmatpush1.msra.mxu0 0.0
    %2266 = vmatprep.subr.mxu0 0.0
    %2267 = vmatpush1.msra.mxu0 0.0
    %2268 = vmatprep.subr.mxu0 0.0
    %2269 = vmatpush1.msra.mxu0 0.0
    %2270 = vmatprep.subr.mxu0 0.0
    %2271 = vmatpush1.msra.mxu0 0.0
    %2272 = vmatprep.subr.mxu0 0.0
    %2273 = vmatpush1.msra.mxu0 0.0
    %2274 = vmatprep.subr.mxu0 0.0
    %2275 = vmatpush1.msra.mxu0 0.0
    %2276 = vmatprep.subr.mxu0 0.0
    %2277 = vmatpush1.msra.mxu0 0.0
    %2278 = vmatprep.mubr.f32.mxu0 0.0
    %2279 = vmatmul.mubr.f32.gmra.mrb[0].mxu0 %v2204
    %v2280 = vpop.f32.mrb[0].mxu0
    %v2281 = vadd.f32 0.0, %v2280
    %v2282 = vpop.f32.mrb[0].mxu0
    %v2283 = vadd.f32 0.0, %v2282
    %2284 = vdwg.mxu0
    %2285 = vmatprep.subr.mxu0 %v534
    %2286 = vmatpush1.msra.mxu0 %v533
    %2287 = vmatprep.subr.mxu0 %v538
    %2288 = vmatpush1.msra.mxu0 %v537
    %2289 = vmatprep.subr.mxu0 %v542
    %2290 = vmatpush1.msra.mxu0 %v541
    %2291 = vmatprep.subr.mxu0 %v546
    %2292 = vmatpush1.msra.mxu0 %v545
    %2293 = vmatprep.subr.mxu0 %v550
    %2294 = vmatpush1.msra.mxu0 %v549
    %2295 = vmatprep.subr.mxu0 %v554
    %2296 = vmatpush1.msra.mxu0 %v553
    %2297 = vmatprep.subr.mxu0 %v558
    %2298 = vmatpush1.msra.mxu0 %v557
    %2299 = vmatprep.subr.mxu0 %v562
    %2300 = vmatpush1.msra.mxu0 %v561
    %2301 = vmatprep.subr.mxu0 %v566
    %2302 = vmatpush1.msra.mxu0 %v565
    %2303 = vmatprep.subr.mxu0 %v570
    %2304 = vmatpush1.msra.mxu0 %v569
    %2305 = vmatprep.subr.mxu0 %v574
    %2306 = vmatpush1.msra.mxu0 %v573
    %2307 = vmatprep.subr.mxu0 %v578
    %2308 = vmatpush1.msra.mxu0 %v577
    %2309 = vmatprep.subr.mxu0 %v582
    %2310 = vmatpush1.msra.mxu0 %v581
    %2311 = vmatprep.subr.mxu0 %v586
    %2312 = vmatpush1.msra.mxu0 %v585
    %2313 = vmatprep.subr.mxu0 %v590
    %2314 = vmatpush1.msra.mxu0 %v589
    %2315 = vmatprep.subr.mxu0 %v594
    %2316 = vmatpush1.msra.mxu0 %v593
    %2317 = vmatprep.subr.mxu0 0.0
    %2318 = vmatpush1.msra.mxu0 0.0
    %2319 = vmatprep.subr.mxu0 0.0
    %2320 = vmatpush1.msra.mxu0 0.0
    %2321 = vmatprep.subr.mxu0 0.0
    %2322 = vmatpush1.msra.mxu0 0.0
    %2323 = vmatprep.subr.mxu0 0.0
    %2324 = vmatpush1.msra.mxu0 0.0
    %2325 = vmatprep.subr.mxu0 0.0
    %2326 = vmatpush1.msra.mxu0 0.0
    %2327 = vmatprep.subr.mxu0 0.0
    %2328 = vmatpush1.msra.mxu0 0.0
    %2329 = vmatprep.subr.mxu0 0.0
    %2330 = vmatpush1.msra.mxu0 0.0
    %2331 = vmatprep.subr.mxu0 0.0
    %2332 = vmatpush1.msra.mxu0 0.0
    %2333 = vmatprep.subr.mxu0 0.0
    %2334 = vmatpush1.msra.mxu0 0.0
    %2335 = vmatprep.subr.mxu0 0.0
    %2336 = vmatpush1.msra.mxu0 0.0
    %2337 = vmatprep.subr.mxu0 0.0
    %2338 = vmatpush1.msra.mxu0 0.0
    %2339 = vmatprep.subr.mxu0 0.0
    %2340 = vmatpush1.msra.mxu0 0.0
    %2341 = vmatprep.subr.mxu0 0.0
    %2342 = vmatpush1.msra.mxu0 0.0
    %2343 = vmatprep.subr.mxu0 0.0
    %2344 = vmatpush1.msra.mxu0 0.0
    %2345 = vmatprep.subr.mxu0 0.0
    %2346 = vmatpush1.msra.mxu0 0.0
    %2347 = vmatprep.subr.mxu0 0.0
    %2348 = vmatpush1.msra.mxu0 0.0
    %2349 = vmatprep.mubr.f32.mxu0 0.0
    %2350 = vmatmul.mubr.f32.gmra.mrb[0].mxu0 %v2204
    %v2351 = vpop.f32.mrb[0].mxu0
    %v2352 = vadd.f32 0.0, %v2351
    %v2353 = vpop.f32.mrb[0].mxu0
    %v2354 = vadd.f32 0.0, %v2353
    %2355 = vdwg.mxu0
    %v2356 = vadd.f32 %v2210, %v2281
    %v2357 = vadd.f32 %v2211, %v2283
    %v2358 = vadd.f32 %v2212, %v2352
    %v2359 = vadd.f32 %v2213, %v2354
    %v2360 = vxor.u32 %v2356, 2147483648
    %v2361 = vxor.u32 %v2357, 2147483648
    %v2362 = vxor.u32 %v2358, 2147483648
    %v2363 = vmul.f32 %v2360, 1.442695
    %v2364 = vpow.pop %v2363
    %v2365 = vmul.f32 %v2361, 1.442695
    %v2366 = vpow.pop %v2365
    %v2367 = vmul.f32 %v2362, 1.442695
    %v2368 = vpow.pop %v2367
    %v2369 = vadd.f32 %v2364, 1.0
    %v2370 = vadd.f32 %v2366, 1.0
    %v2371 = vadd.f32 %v2368, 1.0
    %v2372 = vrcp.pop %v2369
    %v2373 = vmul.f32 1.0, %v2372
    %v2374 = vrcp.pop %v2370
    %v2375 = vmul.f32 1.0, %v2374
    %v2376 = vrcp.pop %v2371
    %v2377 = vmul.f32 1.0, %v2376
    %v2378 = vtanh.pop %v2359
    %v2379 = vmul.f32 %v2375, %v2202
    %v2380 = vmul.f32 %v2373, %v2378
    %v2381 = vadd.f32 %v2379, %v2380
    %v2382 = vtanh.pop %v2381
    %v2383 = vmul.f32 %v2377, %v2382
    %s2384 = scalar_lea.vmem [#allocation8], 72
    %2385 = vst [vmem:[%s2384] sm:$0xff] %v2383
    %s2386 = smul.u32 10, 4
    %s2387 = smul.addr %s2386, 8
    %s2388 = scalar_lea.vmem [#allocation4], %s2387
    %v2389 = vld [vmem:[%s2388] sm:$0xff]
    %v2390 = vld [vmem:[%s2388 + $0x8] sm:$0xff]
    %v2391 = vld [vmem:[%s2388 + $0x10] sm:$0xff]
    %v2392 = vld [vmem:[%s2388 + $0x18] sm:$0xff]
    %2393 = vmatprep.subr.mxu0 %v532
    %2394 = vmatpush1.msra.mxu0 %v531
    %2395 = vmatprep.subr.mxu0 %v536
    %2396 = vmatpush1.msra.mxu0 %v535
    %2397 = vmatprep.subr.mxu0 %v540
    %2398 = vmatpush1.msra.mxu0 %v539
    %2399 = vmatprep.subr.mxu0 %v544
    %2400 = vmatpush1.msra.mxu0 %v543
    %2401 = vmatprep.subr.mxu0 %v548
    %2402 = vmatpush1.msra.mxu0 %v547
    %2403 = vmatprep.subr.mxu0 %v552
    %2404 = vmatpush1.msra.mxu0 %v551
    %2405 = vmatprep.subr.mxu0 %v556
    %2406 = vmatpush1.msra.mxu0 %v555
    %2407 = vmatprep.subr.mxu0 %v560
    %2408 = vmatpush1.msra.mxu0 %v559
    %2409 = vmatprep.subr.mxu0 %v564
    %2410 = vmatpush1.msra.mxu0 %v563
    %2411 = vmatprep.subr.mxu0 %v568
    %2412 = vmatpush1.msra.mxu0 %v567
    %2413 = vmatprep.subr.mxu0 %v572
    %2414 = vmatpush1.msra.mxu0 %v571
    %2415 = vmatprep.subr.mxu0 %v576
    %2416 = vmatpush1.msra.mxu0 %v575
    %2417 = vmatprep.subr.mxu0 %v580
    %2418 = vmatpush1.msra.mxu0 %v579
    %2419 = vmatprep.subr.mxu0 %v584
    %2420 = vmatpush1.msra.mxu0 %v583
    %2421 = vmatprep.subr.mxu0 %v588
    %2422 = vmatpush1.msra.mxu0 %v587
    %2423 = vmatprep.subr.mxu0 %v592
    %2424 = vmatpush1.msra.mxu0 %v591
    %2425 = vmatprep.subr.mxu0 0.0
    %2426 = vmatpush1.msra.mxu0 0.0
    %2427 = vmatprep.subr.mxu0 0.0
    %2428 = vmatpush1.msra.mxu0 0.0
    %2429 = vmatprep.subr.mxu0 0.0
    %2430 = vmatpush1.msra.mxu0 0.0
    %2431 = vmatprep.subr.mxu0 0.0
    %2432 = vmatpush1.msra.mxu0 0.0
    %2433 = vmatprep.subr.mxu0 0.0
    %2434 = vmatpush1.msra.mxu0 0.0
    %2435 = vmatprep.subr.mxu0 0.0
    %2436 = vmatpush1.msra.mxu0 0.0
    %2437 = vmatprep.subr.mxu0 0.0
    %2438 = vmatpush1.msra.mxu0 0.0
    %2439 = vmatprep.subr.mxu0 0.0
    %2440 = vmatpush1.msra.mxu0 0.0
    %2441 = vmatprep.subr.mxu0 0.0
    %2442 = vmatpush1.msra.mxu0 0.0
    %2443 = vmatprep.subr.mxu0 0.0
    %2444 = vmatpush1.msra.mxu0 0.0
    %2445 = vmatprep.subr.mxu0 0.0
    %2446 = vmatpush1.msra.mxu0 0.0
    %2447 = vmatprep.subr.mxu0 0.0
    %2448 = vmatpush1.msra.mxu0 0.0
    %2449 = vmatprep.subr.mxu0 0.0
    %2450 = vmatpush1.msra.mxu0 0.0
    %2451 = vmatprep.subr.mxu0 0.0
    %2452 = vmatpush1.msra.mxu0 0.0
    %2453 = vmatprep.subr.mxu0 0.0
    %2454 = vmatpush1.msra.mxu0 0.0
    %2455 = vmatprep.subr.mxu0 0.0
    %2456 = vmatpush1.msra.mxu0 0.0
    %2457 = vmatprep.mubr.f32.mxu0 0.0
    %2458 = vmatmul.mubr.f32.gmra.mrb[0].mxu0 %v2383
    %v2459 = vpop.f32.mrb[0].mxu0
    %v2460 = vadd.f32 0.0, %v2459
    %v2461 = vpop.f32.mrb[0].mxu0
    %v2462 = vadd.f32 0.0, %v2461
    %2463 = vdwg.mxu0
    %2464 = vmatprep.subr.mxu0 %v534
    %2465 = vmatpush1.msra.mxu0 %v533
    %2466 = vmatprep.subr.mxu0 %v538
    %2467 = vmatpush1.msra.mxu0 %v537
    %2468 = vmatprep.subr.mxu0 %v542
    %2469 = vmatpush1.msra.mxu0 %v541
    %2470 = vmatprep.subr.mxu0 %v546
    %2471 = vmatpush1.msra.mxu0 %v545
    %2472 = vmatprep.subr.mxu0 %v550
    %2473 = vmatpush1.msra.mxu0 %v549
    %2474 = vmatprep.subr.mxu0 %v554
    %2475 = vmatpush1.msra.mxu0 %v553
    %2476 = vmatprep.subr.mxu0 %v558
    %2477 = vmatpush1.msra.mxu0 %v557
    %2478 = vmatprep.subr.mxu0 %v562
    %2479 = vmatpush1.msra.mxu0 %v561
    %2480 = vmatprep.subr.mxu0 %v566
    %2481 = vmatpush1.msra.mxu0 %v565
    %2482 = vmatprep.subr.mxu0 %v570
    %2483 = vmatpush1.msra.mxu0 %v569
    %2484 = vmatprep.subr.mxu0 %v574
    %2485 = vmatpush1.msra.mxu0 %v573
    %2486 = vmatprep.subr.mxu0 %v578
    %2487 = vmatpush1.msra.mxu0 %v577
    %2488 = vmatprep.subr.mxu0 %v582
    %2489 = vmatpush1.msra.mxu0 %v581
    %2490 = vmatprep.subr.mxu0 %v586
    %2491 = vmatpush1.msra.mxu0 %v585
    %2492 = vmatprep.subr.mxu0 %v590
    %2493 = vmatpush1.msra.mxu0 %v589
    %2494 = vmatprep.subr.mxu0 %v594
    %2495 = vmatpush1.msra.mxu0 %v593
    %2496 = vmatprep.subr.mxu0 0.0
    %2497 = vmatpush1.msra.mxu0 0.0
    %2498 = vmatprep.subr.mxu0 0.0
    %2499 = vmatpush1.msra.mxu0 0.0
    %2500 = vmatprep.subr.mxu0 0.0
    %2501 = vmatpush1.msra.mxu0 0.0
    %2502 = vmatprep.subr.mxu0 0.0
    %2503 = vmatpush1.msra.mxu0 0.0
    %2504 = vmatprep.subr.mxu0 0.0
    %2505 = vmatpush1.msra.mxu0 0.0
    %2506 = vmatprep.subr.mxu0 0.0
    %2507 = vmatpush1.msra.mxu0 0.0
    %2508 = vmatprep.subr.mxu0 0.0
    %2509 = vmatpush1.msra.mxu0 0.0
    %2510 = vmatprep.subr.mxu0 0.0
    %2511 = vmatpush1.msra.mxu0 0.0
    %2512 = vmatprep.subr.mxu0 0.0
    %2513 = vmatpush1.msra.mxu0 0.0
    %2514 = vmatprep.subr.mxu0 0.0
    %2515 = vmatpush1.msra.mxu0 0.0
    %2516 = vmatprep.subr.mxu0 0.0
    %2517 = vmatpush1.msra.mxu0 0.0
    %2518 = vmatprep.subr.mxu0 0.0
    %2519 = vmatpush1.msra.mxu0 0.0
    %2520 = vmatprep.subr.mxu0 0.0
    %2521 = vmatpush1.msra.mxu0 0.0
    %2522 = vmatprep.subr.mxu0 0.0
    %2523 = vmatpush1.msra.mxu0 0.0
    %2524 = vmatprep.subr.mxu0 0.0
    %2525 = vmatpush1.msra.mxu0 0.0
    %2526 = vmatprep.subr.mxu0 0.0
    %2527 = vmatpush1.msra.mxu0 0.0
    %2528 = vmatprep.mubr.f32.mxu0 0.0
    %2529 = vmatmul.mubr.f32.gmra.mrb[0].mxu0 %v2383
    %v2530 = vpop.f32.mrb[0].mxu0
    %v2531 = vadd.f32 0.0, %v2530
    %v2532 = vpop.f32.mrb[0].mxu0
    %v2533 = vadd.f32 0.0, %v2532
    %2534 = vdwg.mxu0
    %v2535 = vadd.f32 %v2389, %v2460
    %v2536 = vadd.f32 %v2390, %v2462
    %v2537 = vadd.f32 %v2391, %v2531
    %v2538 = vadd.f32 %v2392, %v2533
    %v2539 = vxor.u32 %v2535, 2147483648
    %v2540 = vxor.u32 %v2536, 2147483648
    %v2541 = vxor.u32 %v2537, 2147483648
    %v2542 = vmul.f32 %v2539, 1.442695
    %v2543 = vpow.pop %v2542
    %v2544 = vmul.f32 %v2540, 1.442695
    %v2545 = vpow.pop %v2544
    %v2546 = vmul.f32 %v2541, 1.442695
    %v2547 = vpow.pop %v2546
    %v2548 = vadd.f32 %v2543, 1.0
    %v2549 = vadd.f32 %v2545, 1.0
    %v2550 = vadd.f32 %v2547, 1.0
    %v2551 = vrcp.pop %v2548
    %v2552 = vmul.f32 1.0, %v2551
    %v2553 = vrcp.pop %v2549
    %v2554 = vmul.f32 1.0, %v2553
    %v2555 = vrcp.pop %v2550
    %v2556 = vmul.f32 1.0, %v2555
    %v2557 = vtanh.pop %v2538
    %v2558 = vmul.f32 %v2554, %v2381
    %v2559 = vmul.f32 %v2552, %v2557
    %v2560 = vadd.f32 %v2558, %v2559
    %v2561 = vtanh.pop %v2560
    %v2562 = vmul.f32 %v2556, %v2561
    %s2563 = scalar_lea.vmem [#allocation8], 80
    %2564 = vst [vmem:[%s2563] sm:$0xff] %v2562
    %s2565 = smul.u32 11, 4
    %s2566 = smul.addr %s2565, 8
    %s2567 = scalar_lea.vmem [#allocation4], %s2566
    %v2568 = vld [vmem:[%s2567] sm:$0xff]
    %v2569 = vld [vmem:[%s2567 + $0x8] sm:$0xff]
    %v2570 = vld [vmem:[%s2567 + $0x10] sm:$0xff]
    %v2571 = vld [vmem:[%s2567 + $0x18] sm:$0xff]
    %2572 = vmatprep.subr.mxu0 %v532
    %2573 = vmatpush1.msra.mxu0 %v531
    %2574 = vmatprep.subr.mxu0 %v536
    %2575 = vmatpush1.msra.mxu0 %v535
    %2576 = vmatprep.subr.mxu0 %v540
    %2577 = vmatpush1.msra.mxu0 %v539
    %2578 = vmatprep.subr.mxu0 %v544
    %2579 = vmatpush1.msra.mxu0 %v543
    %2580 = vmatprep.subr.mxu0 %v548
    %2581 = vmatpush1.msra.mxu0 %v547
    %2582 = vmatprep.subr.mxu0 %v552
    %2583 = vmatpush1.msra.mxu0 %v551
    %2584 = vmatprep.subr.mxu0 %v556
    %2585 = vmatpush1.msra.mxu0 %v555
    %2586 = vmatprep.subr.mxu0 %v560
    %2587 = vmatpush1.msra.mxu0 %v559
    %2588 = vmatprep.subr.mxu0 %v564
    %2589 = vmatpush1.msra.mxu0 %v563
    %2590 = vmatprep.subr.mxu0 %v568
    %2591 = vmatpush1.msra.mxu0 %v567
    %2592 = vmatprep.subr.mxu0 %v572
    %2593 = vmatpush1.msra.mxu0 %v571
    %2594 = vmatprep.subr.mxu0 %v576
    %2595 = vmatpush1.msra.mxu0 %v575
    %2596 = vmatprep.subr.mxu0 %v580
    %2597 = vmatpush1.msra.mxu0 %v579
    %2598 = vmatprep.subr.mxu0 %v584
    %2599 = vmatpush1.msra.mxu0 %v583
    %2600 = vmatprep.subr.mxu0 %v588
    %2601 = vmatpush1.msra.mxu0 %v587
    %2602 = vmatprep.subr.mxu0 %v592
    %2603 = vmatpush1.msra.mxu0 %v591
    %2604 = vmatprep.subr.mxu0 0.0
    %2605 = vmatpush1.msra.mxu0 0.0
    %2606 = vmatprep.subr.mxu0 0.0
    %2607 = vmatpush1.msra.mxu0 0.0
    %2608 = vmatprep.subr.mxu0 0.0
    %2609 = vmatpush1.msra.mxu0 0.0
    %2610 = vmatprep.subr.mxu0 0.0
    %2611 = vmatpush1.msra.mxu0 0.0
    %2612 = vmatprep.subr.mxu0 0.0
    %2613 = vmatpush1.msra.mxu0 0.0
    %2614 = vmatprep.subr.mxu0 0.0
    %2615 = vmatpush1.msra.mxu0 0.0
    %2616 = vmatprep.subr.mxu0 0.0
    %2617 = vmatpush1.msra.mxu0 0.0
    %2618 = vmatprep.subr.mxu0 0.0
    %2619 = vmatpush1.msra.mxu0 0.0
    %2620 = vmatprep.subr.mxu0 0.0
    %2621 = vmatpush1.msra.mxu0 0.0
    %2622 = vmatprep.subr.mxu0 0.0
    %2623 = vmatpush1.msra.mxu0 0.0
    %2624 = vmatprep.subr.mxu0 0.0
    %2625 = vmatpush1.msra.mxu0 0.0
    %2626 = vmatprep.subr.mxu0 0.0
    %2627 = vmatpush1.msra.mxu0 0.0
    %2628 = vmatprep.subr.mxu0 0.0
    %2629 = vmatpush1.msra.mxu0 0.0
    %2630 = vmatprep.subr.mxu0 0.0
    %2631 = vmatpush1.msra.mxu0 0.0
    %2632 = vmatprep.subr.mxu0 0.0
    %2633 = vmatpush1.msra.mxu0 0.0
    %2634 = vmatprep.subr.mxu0 0.0
    %2635 = vmatpush1.msra.mxu0 0.0
    %2636 = vmatprep.mubr.f32.mxu0 0.0
    %2637 = vmatmul.mubr.f32.gmra.mrb[0].mxu0 %v2562
    %v2638 = vpop.f32.mrb[0].mxu0
    %v2639 = vadd.f32 0.0, %v2638
    %v2640 = vpop.f32.mrb[0].mxu0
    %v2641 = vadd.f32 0.0, %v2640
    %2642 = vdwg.mxu0
    %2643 = vmatprep.subr.mxu0 %v534
    %2644 = vmatpush1.msra.mxu0 %v533
    %2645 = vmatprep.subr.mxu0 %v538
    %2646 = vmatpush1.msra.mxu0 %v537
    %2647 = vmatprep.subr.mxu0 %v542
    %2648 = vmatpush1.msra.mxu0 %v541
    %2649 = vmatprep.subr.mxu0 %v546
    %2650 = vmatpush1.msra.mxu0 %v545
    %2651 = vmatprep.subr.mxu0 %v550
    %2652 = vmatpush1.msra.mxu0 %v549
    %2653 = vmatprep.subr.mxu0 %v554
    %2654 = vmatpush1.msra.mxu0 %v553
    %2655 = vmatprep.subr.mxu0 %v558
    %2656 = vmatpush1.msra.mxu0 %v557
    %2657 = vmatprep.subr.mxu0 %v562
    %2658 = vmatpush1.msra.mxu0 %v561
    %2659 = vmatprep.subr.mxu0 %v566
    %2660 = vmatpush1.msra.mxu0 %v565
    %2661 = vmatprep.subr.mxu0 %v570
    %2662 = vmatpush1.msra.mxu0 %v569
    %2663 = vmatprep.subr.mxu0 %v574
    %2664 = vmatpush1.msra.mxu0 %v573
    %2665 = vmatprep.subr.mxu0 %v578
    %2666 = vmatpush1.msra.mxu0 %v577
    %2667 = vmatprep.subr.mxu0 %v582
    %2668 = vmatpush1.msra.mxu0 %v581
    %2669 = vmatprep.subr.mxu0 %v586
    %2670 = vmatpush1.msra.mxu0 %v585
    %2671 = vmatprep.subr.mxu0 %v590
    %2672 = vmatpush1.msra.mxu0 %v589
    %2673 = vmatprep.subr.mxu0 %v594
    %2674 = vmatpush1.msra.mxu0 %v593
    %2675 = vmatprep.subr.mxu0 0.0
    %2676 = vmatpush1.msra.mxu0 0.0
    %2677 = vmatprep.subr.mxu0 0.0
    %2678 = vmatpush1.msra.mxu0 0.0
    %2679 = vmatprep.subr.mxu0 0.0
    %2680 = vmatpush1.msra.mxu0 0.0
    %2681 = vmatprep.subr.mxu0 0.0
    %2682 = vmatpush1.msra.mxu0 0.0
    %2683 = vmatprep.subr.mxu0 0.0
    %2684 = vmatpush1.msra.mxu0 0.0
    %2685 = vmatprep.subr.mxu0 0.0
    %2686 = vmatpush1.msra.mxu0 0.0
    %2687 = vmatprep.subr.mxu0 0.0
    %2688 = vmatpush1.msra.mxu0 0.0
    %2689 = vmatprep.subr.mxu0 0.0
    %2690 = vmatpush1.msra.mxu0 0.0
    %2691 = vmatprep.subr.mxu0 0.0
    %2692 = vmatpush1.msra.mxu0 0.0
    %2693 = vmatprep.subr.mxu0 0.0
    %2694 = vmatpush1.msra.mxu0 0.0
    %2695 = vmatprep.subr.mxu0 0.0
    %2696 = vmatpush1.msra.mxu0 0.0
    %2697 = vmatprep.subr.mxu0 0.0
    %2698 = vmatpush1.msra.mxu0 0.0
    %2699 = vmatprep.subr.mxu0 0.0
    %2700 = vmatpush1.msra.mxu0 0.0
    %2701 = vmatprep.subr.mxu0 0.0
    %2702 = vmatpush1.msra.mxu0 0.0
    %2703 = vmatprep.subr.mxu0 0.0
    %2704 = vmatpush1.msra.mxu0 0.0
    %2705 = vmatprep.subr.mxu0 0.0
    %2706 = vmatpush1.msra.mxu0 0.0
    %2707 = vmatprep.mubr.f32.mxu0 0.0
    %2708 = vmatmul.mubr.f32.gmra.mrb[0].mxu0 %v2562
    %v2709 = vpop.f32.mrb[0].mxu0
    %v2710 = vadd.f32 0.0, %v2709
    %v2711 = vpop.f32.mrb[0].mxu0
    %v2712 = vadd.f32 0.0, %v2711
    %2713 = vdwg.mxu0
    %v2714 = vadd.f32 %v2568, %v2639
    %v2715 = vadd.f32 %v2569, %v2641
    %v2716 = vadd.f32 %v2570, %v2710
    %v2717 = vadd.f32 %v2571, %v2712
    %v2718 = vxor.u32 %v2714, 2147483648
    %v2719 = vxor.u32 %v2715, 2147483648
    %v2720 = vxor.u32 %v2716, 2147483648
    %v2721 = vmul.f32 %v2718, 1.442695
    %v2722 = vpow.pop %v2721
    %v2723 = vmul.f32 %v2719, 1.442695
    %v2724 = vpow.pop %v2723
    %v2725 = vmul.f32 %v2720, 1.442695
    %v2726 = vpow.pop %v2725
    %v2727 = vadd.f32 %v2722, 1.0
    %v2728 = vadd.f32 %v2724, 1.0
    %v2729 = vadd.f32 %v2726, 1.0
    %v2730 = vrcp.pop %v2727
    %v2731 = vmul.f32 1.0, %v2730
    %v2732 = vrcp.pop %v2728
    %v2733 = vmul.f32 1.0, %v2732
    %v2734 = vrcp.pop %v2729
    %v2735 = vmul.f32 1.0, %v2734
    %v2736 = vtanh.pop %v2717
    %v2737 = vmul.f32 %v2733, %v2560
    %v2738 = vmul.f32 %v2731, %v2736
    %v2739 = vadd.f32 %v2737, %v2738
    %v2740 = vtanh.pop %v2739
    %v2741 = vmul.f32 %v2735, %v2740
    %s2742 = scalar_lea.vmem [#allocation8], 88
    %2743 = vst [vmem:[%s2742] sm:$0xff] %v2741
    %s2744 = smul.u32 12, 4
    %s2745 = smul.addr %s2744, 8
    %s2746 = scalar_lea.vmem [#allocation4], %s2745
    %v2747 = vld [vmem:[%s2746] sm:$0xff]
    %v2748 = vld [vmem:[%s2746 + $0x8] sm:$0xff]
    %v2749 = vld [vmem:[%s2746 + $0x10] sm:$0xff]
    %v2750 = vld [vmem:[%s2746 + $0x18] sm:$0xff]
    %2751 = vmatprep.subr.mxu0 %v532
    %2752 = vmatpush1.msra.mxu0 %v531
    %2753 = vmatprep.subr.mxu0 %v536
    %2754 = vmatpush1.msra.mxu0 %v535
    %2755 = vmatprep.subr.mxu0 %v540
    %2756 = vmatpush1.msra.mxu0 %v539
    %2757 = vmatprep.subr.mxu0 %v544
    %2758 = vmatpush1.msra.mxu0 %v543
    %2759 = vmatprep.subr.mxu0 %v548
    %2760 = vmatpush1.msra.mxu0 %v547
    %2761 = vmatprep.subr.mxu0 %v552
    %2762 = vmatpush1.msra.mxu0 %v551
    %2763 = vmatprep.subr.mxu0 %v556
    %2764 = vmatpush1.msra.mxu0 %v555
    %2765 = vmatprep.subr.mxu0 %v560
    %2766 = vmatpush1.msra.mxu0 %v559
    %2767 = vmatprep.subr.mxu0 %v564
    %2768 = vmatpush1.msra.mxu0 %v563
    %2769 = vmatprep.subr.mxu0 %v568
    %2770 = vmatpush1.msra.mxu0 %v567
    %2771 = vmatprep.subr.mxu0 %v572
    %2772 = vmatpush1.msra.mxu0 %v571
    %2773 = vmatprep.subr.mxu0 %v576
    %2774 = vmatpush1.msra.mxu0 %v575
    %2775 = vmatprep.subr.mxu0 %v580
    %2776 = vmatpush1.msra.mxu0 %v579
    %2777 = vmatprep.subr.mxu0 %v584
    %2778 = vmatpush1.msra.mxu0 %v583
    %2779 = vmatprep.subr.mxu0 %v588
    %2780 = vmatpush1.msra.mxu0 %v587
    %2781 = vmatprep.subr.mxu0 %v592
    %2782 = vmatpush1.msra.mxu0 %v591
    %2783 = vmatprep.subr.mxu0 0.0
    %2784 = vmatpush1.msra.mxu0 0.0
    %2785 = vmatprep.subr.mxu0 0.0
    %2786 = vmatpush1.msra.mxu0 0.0
    %2787 = vmatprep.subr.mxu0 0.0
    %2788 = vmatpush1.msra.mxu0 0.0
    %2789 = vmatprep.subr.mxu0 0.0
    %2790 = vmatpush1.msra.mxu0 0.0
    %2791 = vmatprep.subr.mxu0 0.0
    %2792 = vmatpush1.msra.mxu0 0.0
    %2793 = vmatprep.subr.mxu0 0.0
    %2794 = vmatpush1.msra.mxu0 0.0
    %2795 = vmatprep.subr.mxu0 0.0
    %2796 = vmatpush1.msra.mxu0 0.0
    %2797 = vmatprep.subr.mxu0 0.0
    %2798 = vmatpush1.msra.mxu0 0.0
    %2799 = vmatprep.subr.mxu0 0.0
    %2800 = vmatpush1.msra.mxu0 0.0
    %2801 = vmatprep.subr.mxu0 0.0
    %2802 = vmatpush1.msra.mxu0 0.0
    %2803 = vmatprep.subr.mxu0 0.0
    %2804 = vmatpush1.msra.mxu0 0.0
    %2805 = vmatprep.subr.mxu0 0.0
    %2806 = vmatpush1.msra.mxu0 0.0
    %2807 = vmatprep.subr.mxu0 0.0
    %2808 = vmatpush1.msra.mxu0 0.0
    %2809 = vmatprep.subr.mxu0 0.0
    %2810 = vmatpush1.msra.mxu0 0.0
    %2811 = vmatprep.subr.mxu0 0.0
    %2812 = vmatpush1.msra.mxu0 0.0
    %2813 = vmatprep.subr.mxu0 0.0
    %2814 = vmatpush1.msra.mxu0 0.0
    %2815 = vmatprep.mubr.f32.mxu0 0.0
    %2816 = vmatmul.mubr.f32.gmra.mrb[0].mxu0 %v2741
    %v2817 = vpop.f32.mrb[0].mxu0
    %v2818 = vadd.f32 0.0, %v2817
    %v2819 = vpop.f32.mrb[0].mxu0
    %v2820 = vadd.f32 0.0, %v2819
    %2821 = vdwg.mxu0
    %2822 = vmatprep.subr.mxu0 %v534
    %2823 = vmatpush1.msra.mxu0 %v533
    %2824 = vmatprep.subr.mxu0 %v538
    %2825 = vmatpush1.msra.mxu0 %v537
    %2826 = vmatprep.subr.mxu0 %v542
    %2827 = vmatpush1.msra.mxu0 %v541
    %2828 = vmatprep.subr.mxu0 %v546
    %2829 = vmatpush1.msra.mxu0 %v545
    %2830 = vmatprep.subr.mxu0 %v550
    %2831 = vmatpush1.msra.mxu0 %v549
    %2832 = vmatprep.subr.mxu0 %v554
    %2833 = vmatpush1.msra.mxu0 %v553
    %2834 = vmatprep.subr.mxu0 %v558
    %2835 = vmatpush1.msra.mxu0 %v557
    %2836 = vmatprep.subr.mxu0 %v562
    %2837 = vmatpush1.msra.mxu0 %v561
    %2838 = vmatprep.subr.mxu0 %v566
    %2839 = vmatpush1.msra.mxu0 %v565
    %2840 = vmatprep.subr.mxu0 %v570
    %2841 = vmatpush1.msra.mxu0 %v569
    %2842 = vmatprep.subr.mxu0 %v574
    %2843 = vmatpush1.msra.mxu0 %v573
    %2844 = vmatprep.subr.mxu0 %v578
    %2845 = vmatpush1.msra.mxu0 %v577
    %2846 = vmatprep.subr.mxu0 %v582
    %2847 = vmatpush1.msra.mxu0 %v581
    %2848 = vmatprep.subr.mxu0 %v586
    %2849 = vmatpush1.msra.mxu0 %v585
    %2850 = vmatprep.subr.mxu0 %v590
    %2851 = vmatpush1.msra.mxu0 %v589
    %2852 = vmatprep.subr.mxu0 %v594
    %2853 = vmatpush1.msra.mxu0 %v593
    %2854 = vmatprep.subr.mxu0 0.0
    %2855 = vmatpush1.msra.mxu0 0.0
    %2856 = vmatprep.subr.mxu0 0.0
    %2857 = vmatpush1.msra.mxu0 0.0
    %2858 = vmatprep.subr.mxu0 0.0
    %2859 = vmatpush1.msra.mxu0 0.0
    %2860 = vmatprep.subr.mxu0 0.0
    %2861 = vmatpush1.msra.mxu0 0.0
    %2862 = vmatprep.subr.mxu0 0.0
    %2863 = vmatpush1.msra.mxu0 0.0
    %2864 = vmatprep.subr.mxu0 0.0
    %2865 = vmatpush1.msra.mxu0 0.0
    %2866 = vmatprep.subr.mxu0 0.0
    %2867 = vmatpush1.msra.mxu0 0.0
    %2868 = vmatprep.subr.mxu0 0.0
    %2869 = vmatpush1.msra.mxu0 0.0
    %2870 = vmatprep.subr.mxu0 0.0
    %2871 = vmatpush1.msra.mxu0 0.0
    %2872 = vmatprep.subr.mxu0 0.0
    %2873 = vmatpush1.msra.mxu0 0.0
    %2874 = vmatprep.subr.mxu0 0.0
    %2875 = vmatpush1.msra.mxu0 0.0
    %2876 = vmatprep.subr.mxu0 0.0
    %2877 = vmatpush1.msra.mxu0 0.0
    %2878 = vmatprep.subr.mxu0 0.0
    %2879 = vmatpush1.msra.mxu0 0.0
    %2880 = vmatprep.subr.mxu0 0.0
    %2881 = vmatpush1.msra.mxu0 0.0
    %2882 = vmatprep.subr.mxu0 0.0
    %2883 = vmatpush1.msra.mxu0 0.0
    %2884 = vmatprep.subr.mxu0 0.0
    %2885 = vmatpush1.msra.mxu0 0.0
    %2886 = vmatprep.mubr.f32.mxu0 0.0
    %2887 = vmatmul.mubr.f32.gmra.mrb[0].mxu0 %v2741
    %v2888 = vpop.f32.mrb[0].mxu0
    %v2889 = vadd.f32 0.0, %v2888
    %v2890 = vpop.f32.mrb[0].mxu0
    %v2891 = vadd.f32 0.0, %v2890
    %2892 = vdwg.mxu0
    %v2893 = vadd.f32 %v2747, %v2818
    %v2894 = vadd.f32 %v2748, %v2820
    %v2895 = vadd.f32 %v2749, %v2889
    %v2896 = vadd.f32 %v2750, %v2891
    %v2897 = vxor.u32 %v2893, 2147483648
    %v2898 = vxor.u32 %v2894, 2147483648
    %v2899 = vxor.u32 %v2895, 2147483648
    %v2900 = vmul.f32 %v2897, 1.442695
    %v2901 = vpow.pop %v2900
    %v2902 = vmul.f32 %v2898, 1.442695
    %v2903 = vpow.pop %v2902
    %v2904 = vmul.f32 %v2899, 1.442695
    %v2905 = vpow.pop %v2904
    %v2906 = vadd.f32 %v2901, 1.0
    %v2907 = vadd.f32 %v2903, 1.0
    %v2908 = vadd.f32 %v2905, 1.0
    %v2909 = vrcp.pop %v2906
    %v2910 = vmul.f32 1.0, %v2909
    %v2911 = vrcp.pop %v2907
    %v2912 = vmul.f32 1.0, %v2911
    %v2913 = vrcp.pop %v2908
    %v2914 = vmul.f32 1.0, %v2913
    %v2915 = vtanh.pop %v2896
    %v2916 = vmul.f32 %v2912, %v2739
    %v2917 = vmul.f32 %v2910, %v2915
    %v2918 = vadd.f32 %v2916, %v2917
    %v2919 = vtanh.pop %v2918
    %v2920 = vmul.f32 %v2914, %v2919
    %s2921 = scalar_lea.vmem [#allocation8], 96
    %2922 = vst [vmem:[%s2921] sm:$0xff] %v2920
    %s2923 = smul.u32 13, 4
    %s2924 = smul.addr %s2923, 8
    %s2925 = scalar_lea.vmem [#allocation4], %s2924
    %v2926 = vld [vmem:[%s2925] sm:$0xff]
    %v2927 = vld [vmem:[%s2925 + $0x8] sm:$0xff]
    %v2928 = vld [vmem:[%s2925 + $0x10] sm:$0xff]
    %v2929 = vld [vmem:[%s2925 + $0x18] sm:$0xff]
    %2930 = vmatprep.subr.mxu0 %v532
    %2931 = vmatpush1.msra.mxu0 %v531
    %2932 = vmatprep.subr.mxu0 %v536
    %2933 = vmatpush1.msra.mxu0 %v535
    %2934 = vmatprep.subr.mxu0 %v540
    %2935 = vmatpush1.msra.mxu0 %v539
    %2936 = vmatprep.subr.mxu0 %v544
    %2937 = vmatpush1.msra.mxu0 %v543
    %2938 = vmatprep.subr.mxu0 %v548
    %2939 = vmatpush1.msra.mxu0 %v547
    %2940 = vmatprep.subr.mxu0 %v552
    %2941 = vmatpush1.msra.mxu0 %v551
    %2942 = vmatprep.subr.mxu0 %v556
    %2943 = vmatpush1.msra.mxu0 %v555
    %2944 = vmatprep.subr.mxu0 %v560
    %2945 = vmatpush1.msra.mxu0 %v559
    %2946 = vmatprep.subr.mxu0 %v564
    %2947 = vmatpush1.msra.mxu0 %v563
    %2948 = vmatprep.subr.mxu0 %v568
    %2949 = vmatpush1.msra.mxu0 %v567
    %2950 = vmatprep.subr.mxu0 %v572
    %2951 = vmatpush1.msra.mxu0 %v571
    %2952 = vmatprep.subr.mxu0 %v576
    %2953 = vmatpush1.msra.mxu0 %v575
    %2954 = vmatprep.subr.mxu0 %v580
    %2955 = vmatpush1.msra.mxu0 %v579
    %2956 = vmatprep.subr.mxu0 %v584
    %2957 = vmatpush1.msra.mxu0 %v583
    %2958 = vmatprep.subr.mxu0 %v588
    %2959 = vmatpush1.msra.mxu0 %v587
    %2960 = vmatprep.subr.mxu0 %v592
    %2961 = vmatpush1.msra.mxu0 %v591
    %2962 = vmatprep.subr.mxu0 0.0
    %2963 = vmatpush1.msra.mxu0 0.0
    %2964 = vmatprep.subr.mxu0 0.0
    %2965 = vmatpush1.msra.mxu0 0.0
    %2966 = vmatprep.subr.mxu0 0.0
    %2967 = vmatpush1.msra.mxu0 0.0
    %2968 = vmatprep.subr.mxu0 0.0
    %2969 = vmatpush1.msra.mxu0 0.0
    %2970 = vmatprep.subr.mxu0 0.0
    %2971 = vmatpush1.msra.mxu0 0.0
    %2972 = vmatprep.subr.mxu0 0.0
    %2973 = vmatpush1.msra.mxu0 0.0
    %2974 = vmatprep.subr.mxu0 0.0
    %2975 = vmatpush1.msra.mxu0 0.0
    %2976 = vmatprep.subr.mxu0 0.0
    %2977 = vmatpush1.msra.mxu0 0.0
    %2978 = vmatprep.subr.mxu0 0.0
    %2979 = vmatpush1.msra.mxu0 0.0
    %2980 = vmatprep.subr.mxu0 0.0
    %2981 = vmatpush1.msra.mxu0 0.0
    %2982 = vmatprep.subr.mxu0 0.0
    %2983 = vmatpush1.msra.mxu0 0.0
    %2984 = vmatprep.subr.mxu0 0.0
    %2985 = vmatpush1.msra.mxu0 0.0
    %2986 = vmatprep.subr.mxu0 0.0
    %2987 = vmatpush1.msra.mxu0 0.0
    %2988 = vmatprep.subr.mxu0 0.0
    %2989 = vmatpush1.msra.mxu0 0.0
    %2990 = vmatprep.subr.mxu0 0.0
    %2991 = vmatpush1.msra.mxu0 0.0
    %2992 = vmatprep.subr.mxu0 0.0
    %2993 = vmatpush1.msra.mxu0 0.0
    %2994 = vmatprep.mubr.f32.mxu0 0.0
    %2995 = vmatmul.mubr.f32.gmra.mrb[0].mxu0 %v2920
    %v2996 = vpop.f32.mrb[0].mxu0
    %v2997 = vadd.f32 0.0, %v2996
    %v2998 = vpop.f32.mrb[0].mxu0
    %v2999 = vadd.f32 0.0, %v2998
    %3000 = vdwg.mxu0
    %3001 = vmatprep.subr.mxu0 %v534
    %3002 = vmatpush1.msra.mxu0 %v533
    %3003 = vmatprep.subr.mxu0 %v538
    %3004 = vmatpush1.msra.mxu0 %v537
    %3005 = vmatprep.subr.mxu0 %v542
    %3006 = vmatpush1.msra.mxu0 %v541
    %3007 = vmatprep.subr.mxu0 %v546
    %3008 = vmatpush1.msra.mxu0 %v545
    %3009 = vmatprep.subr.mxu0 %v550
    %3010 = vmatpush1.msra.mxu0 %v549
    %3011 = vmatprep.subr.mxu0 %v554
    %3012 = vmatpush1.msra.mxu0 %v553
    %3013 = vmatprep.subr.mxu0 %v558
    %3014 = vmatpush1.msra.mxu0 %v557
    %3015 = vmatprep.subr.mxu0 %v562
    %3016 = vmatpush1.msra.mxu0 %v561
    %3017 = vmatprep.subr.mxu0 %v566
    %3018 = vmatpush1.msra.mxu0 %v565
    %3019 = vmatprep.subr.mxu0 %v570
    %3020 = vmatpush1.msra.mxu0 %v569
    %3021 = vmatprep.subr.mxu0 %v574
    %3022 = vmatpush1.msra.mxu0 %v573
    %3023 = vmatprep.subr.mxu0 %v578
    %3024 = vmatpush1.msra.mxu0 %v577
    %3025 = vmatprep.subr.mxu0 %v582
    %3026 = vmatpush1.msra.mxu0 %v581
    %3027 = vmatprep.subr.mxu0 %v586
    %3028 = vmatpush1.msra.mxu0 %v585
    %3029 = vmatprep.subr.mxu0 %v590
    %3030 = vmatpush1.msra.mxu0 %v589
    %3031 = vmatprep.subr.mxu0 %v594
    %3032 = vmatpush1.msra.mxu0 %v593
    %3033 = vmatprep.subr.mxu0 0.0
    %3034 = vmatpush1.msra.mxu0 0.0
    %3035 = vmatprep.subr.mxu0 0.0
    %3036 = vmatpush1.msra.mxu0 0.0
    %3037 = vmatprep.subr.mxu0 0.0
    %3038 = vmatpush1.msra.mxu0 0.0
    %3039 = vmatprep.subr.mxu0 0.0
    %3040 = vmatpush1.msra.mxu0 0.0
    %3041 = vmatprep.subr.mxu0 0.0
    %3042 = vmatpush1.msra.mxu0 0.0
    %3043 = vmatprep.subr.mxu0 0.0
    %3044 = vmatpush1.msra.mxu0 0.0
    %3045 = vmatprep.subr.mxu0 0.0
    %3046 = vmatpush1.msra.mxu0 0.0
    %3047 = vmatprep.subr.mxu0 0.0
    %3048 = vmatpush1.msra.mxu0 0.0
    %3049 = vmatprep.subr.mxu0 0.0
    %3050 = vmatpush1.msra.mxu0 0.0
    %3051 = vmatprep.subr.mxu0 0.0
    %3052 = vmatpush1.msra.mxu0 0.0
    %3053 = vmatprep.subr.mxu0 0.0
    %3054 = vmatpush1.msra.mxu0 0.0
    %3055 = vmatprep.subr.mxu0 0.0
    %3056 = vmatpush1.msra.mxu0 0.0
    %3057 = vmatprep.subr.mxu0 0.0
    %3058 = vmatpush1.msra.mxu0 0.0
    %3059 = vmatprep.subr.mxu0 0.0
    %3060 = vmatpush1.msra.mxu0 0.0
    %3061 = vmatprep.subr.mxu0 0.0
    %3062 = vmatpush1.msra.mxu0 0.0
    %3063 = vmatprep.subr.mxu0 0.0
    %3064 = vmatpush1.msra.mxu0 0.0
    %3065 = vmatprep.mubr.f32.mxu0 0.0
    %3066 = vmatmul.mubr.f32.gmra.mrb[0].mxu0 %v2920
    %v3067 = vpop.f32.mrb[0].mxu0
    %v3068 = vadd.f32 0.0, %v3067
    %v3069 = vpop.f32.mrb[0].mxu0
    %v3070 = vadd.f32 0.0, %v3069
    %3071 = vdwg.mxu0
    %v3072 = vadd.f32 %v2926, %v2997
    %v3073 = vadd.f32 %v2927, %v2999
    %v3074 = vadd.f32 %v2928, %v3068
    %v3075 = vadd.f32 %v2929, %v3070
    %v3076 = vxor.u32 %v3072, 2147483648
    %v3077 = vxor.u32 %v3073, 2147483648
    %v3078 = vxor.u32 %v3074, 2147483648
    %v3079 = vmul.f32 %v3076, 1.442695
    %v3080 = vpow.pop %v3079
    %v3081 = vmul.f32 %v3077, 1.442695
    %v3082 = vpow.pop %v3081
    %v3083 = vmul.f32 %v3078, 1.442695
    %v3084 = vpow.pop %v3083
    %v3085 = vadd.f32 %v3080, 1.0
    %v3086 = vadd.f32 %v3082, 1.0
    %v3087 = vadd.f32 %v3084, 1.0
    %v3088 = vrcp.pop %v3085
    %v3089 = vmul.f32 1.0, %v3088
    %v3090 = vrcp.pop %v3086
    %v3091 = vmul.f32 1.0, %v3090
    %v3092 = vrcp.pop %v3087
    %v3093 = vmul.f32 1.0, %v3092
    %v3094 = vtanh.pop %v3075
    %v3095 = vmul.f32 %v3091, %v2918
    %v3096 = vmul.f32 %v3089, %v3094
    %v3097 = vadd.f32 %v3095, %v3096
    %v3098 = vtanh.pop %v3097
    %v3099 = vmul.f32 %v3093, %v3098
    %s3100 = scalar_lea.vmem [#allocation8], 104
    %3101 = vst [vmem:[%s3100] sm:$0xff] %v3099
    %s3102 = smul.u32 14, 4
    %s3103 = smul.addr %s3102, 8
    %s3104 = scalar_lea.vmem [#allocation4], %s3103
    %v3105 = vld [vmem:[%s3104] sm:$0xff]
    %v3106 = vld [vmem:[%s3104 + $0x8] sm:$0xff]
    %v3107 = vld [vmem:[%s3104 + $0x10] sm:$0xff]
    %v3108 = vld [vmem:[%s3104 + $0x18] sm:$0xff]
    %3109 = vmatprep.subr.mxu0 %v532
    %3110 = vmatpush1.msra.mxu0 %v531
    %3111 = vmatprep.subr.mxu0 %v536
    %3112 = vmatpush1.msra.mxu0 %v535
    %3113 = vmatprep.subr.mxu0 %v540
    %3114 = vmatpush1.msra.mxu0 %v539
    %3115 = vmatprep.subr.mxu0 %v544
    %3116 = vmatpush1.msra.mxu0 %v543
    %3117 = vmatprep.subr.mxu0 %v548
    %3118 = vmatpush1.msra.mxu0 %v547
    %3119 = vmatprep.subr.mxu0 %v552
    %3120 = vmatpush1.msra.mxu0 %v551
    %3121 = vmatprep.subr.mxu0 %v556
    %3122 = vmatpush1.msra.mxu0 %v555
    %3123 = vmatprep.subr.mxu0 %v560
    %3124 = vmatpush1.msra.mxu0 %v559
    %3125 = vmatprep.subr.mxu0 %v564
    %3126 = vmatpush1.msra.mxu0 %v563
    %3127 = vmatprep.subr.mxu0 %v568
    %3128 = vmatpush1.msra.mxu0 %v567
    %3129 = vmatprep.subr.mxu0 %v572
    %3130 = vmatpush1.msra.mxu0 %v571
    %3131 = vmatprep.subr.mxu0 %v576
    %3132 = vmatpush1.msra.mxu0 %v575
    %3133 = vmatprep.subr.mxu0 %v580
    %3134 = vmatpush1.msra.mxu0 %v579
    %3135 = vmatprep.subr.mxu0 %v584
    %3136 = vmatpush1.msra.mxu0 %v583
    %3137 = vmatprep.subr.mxu0 %v588
    %3138 = vmatpush1.msra.mxu0 %v587
    %3139 = vmatprep.subr.mxu0 %v592
    %3140 = vmatpush1.msra.mxu0 %v591
    %3141 = vmatprep.subr.mxu0 0.0
    %3142 = vmatpush1.msra.mxu0 0.0
    %3143 = vmatprep.subr.mxu0 0.0
    %3144 = vmatpush1.msra.mxu0 0.0
    %3145 = vmatprep.subr.mxu0 0.0
    %3146 = vmatpush1.msra.mxu0 0.0
    %3147 = vmatprep.subr.mxu0 0.0
    %3148 = vmatpush1.msra.mxu0 0.0
    %3149 = vmatprep.subr.mxu0 0.0
    %3150 = vmatpush1.msra.mxu0 0.0
    %3151 = vmatprep.subr.mxu0 0.0
    %3152 = vmatpush1.msra.mxu0 0.0
    %3153 = vmatprep.subr.mxu0 0.0
    %3154 = vmatpush1.msra.mxu0 0.0
    %3155 = vmatprep.subr.mxu0 0.0
    %3156 = vmatpush1.msra.mxu0 0.0
    %3157 = vmatprep.subr.mxu0 0.0
    %3158 = vmatpush1.msra.mxu0 0.0
    %3159 = vmatprep.subr.mxu0 0.0
    %3160 = vmatpush1.msra.mxu0 0.0
    %3161 = vmatprep.subr.mxu0 0.0
    %3162 = vmatpush1.msra.mxu0 0.0
    %3163 = vmatprep.subr.mxu0 0.0
    %3164 = vmatpush1.msra.mxu0 0.0
    %3165 = vmatprep.subr.mxu0 0.0
    %3166 = vmatpush1.msra.mxu0 0.0
    %3167 = vmatprep.subr.mxu0 0.0
    %3168 = vmatpush1.msra.mxu0 0.0
    %3169 = vmatprep.subr.mxu0 0.0
    %3170 = vmatpush1.msra.mxu0 0.0
    %3171 = vmatprep.subr.mxu0 0.0
    %3172 = vmatpush1.msra.mxu0 0.0
    %3173 = vmatprep.mubr.f32.mxu0 0.0
    %3174 = vmatmul.mubr.f32.gmra.mrb[0].mxu0 %v3099
    %v3175 = vpop.f32.mrb[0].mxu0
    %v3176 = vadd.f32 0.0, %v3175
    %v3177 = vpop.f32.mrb[0].mxu0
    %v3178 = vadd.f32 0.0, %v3177
    %3179 = vdwg.mxu0
    %3180 = vmatprep.subr.mxu0 %v534
    %3181 = vmatpush1.msra.mxu0 %v533
    %3182 = vmatprep.subr.mxu0 %v538
    %3183 = vmatpush1.msra.mxu0 %v537
    %3184 = vmatprep.subr.mxu0 %v542
    %3185 = vmatpush1.msra.mxu0 %v541
    %3186 = vmatprep.subr.mxu0 %v546
    %3187 = vmatpush1.msra.mxu0 %v545
    %3188 = vmatprep.subr.mxu0 %v550
    %3189 = vmatpush1.msra.mxu0 %v549
    %3190 = vmatprep.subr.mxu0 %v554
    %3191 = vmatpush1.msra.mxu0 %v553
    %3192 = vmatprep.subr.mxu0 %v558
    %3193 = vmatpush1.msra.mxu0 %v557
    %3194 = vmatprep.subr.mxu0 %v562
    %3195 = vmatpush1.msra.mxu0 %v561
    %3196 = vmatprep.subr.mxu0 %v566
    %3197 = vmatpush1.msra.mxu0 %v565
    %3198 = vmatprep.subr.mxu0 %v570
    %3199 = vmatpush1.msra.mxu0 %v569
    %3200 = vmatprep.subr.mxu0 %v574
    %3201 = vmatpush1.msra.mxu0 %v573
    %3202 = vmatprep.subr.mxu0 %v578
    %3203 = vmatpush1.msra.mxu0 %v577
    %3204 = vmatprep.subr.mxu0 %v582
    %3205 = vmatpush1.msra.mxu0 %v581
    %3206 = vmatprep.subr.mxu0 %v586
    %3207 = vmatpush1.msra.mxu0 %v585
    %3208 = vmatprep.subr.mxu0 %v590
    %3209 = vmatpush1.msra.mxu0 %v589
    %3210 = vmatprep.subr.mxu0 %v594
    %3211 = vmatpush1.msra.mxu0 %v593
    %3212 = vmatprep.subr.mxu0 0.0
    %3213 = vmatpush1.msra.mxu0 0.0
    %3214 = vmatprep.subr.mxu0 0.0
    %3215 = vmatpush1.msra.mxu0 0.0
    %3216 = vmatprep.subr.mxu0 0.0
    %3217 = vmatpush1.msra.mxu0 0.0
    %3218 = vmatprep.subr.mxu0 0.0
    %3219 = vmatpush1.msra.mxu0 0.0
    %3220 = vmatprep.subr.mxu0 0.0
    %3221 = vmatpush1.msra.mxu0 0.0
    %3222 = vmatprep.subr.mxu0 0.0
    %3223 = vmatpush1.msra.mxu0 0.0
    %3224 = vmatprep.subr.mxu0 0.0
    %3225 = vmatpush1.msra.mxu0 0.0
    %3226 = vmatprep.subr.mxu0 0.0
    %3227 = vmatpush1.msra.mxu0 0.0
    %3228 = vmatprep.subr.mxu0 0.0
    %3229 = vmatpush1.msra.mxu0 0.0
    %3230 = vmatprep.subr.mxu0 0.0
    %3231 = vmatpush1.msra.mxu0 0.0
    %3232 = vmatprep.subr.mxu0 0.0
    %3233 = vmatpush1.msra.mxu0 0.0
    %3234 = vmatprep.subr.mxu0 0.0
    %3235 = vmatpush1.msra.mxu0 0.0
    %3236 = vmatprep.subr.mxu0 0.0
    %3237 = vmatpush1.msra.mxu0 0.0
    %3238 = vmatprep.subr.mxu0 0.0
    %3239 = vmatpush1.msra.mxu0 0.0
    %3240 = vmatprep.subr.mxu0 0.0
    %3241 = vmatpush1.msra.mxu0 0.0
    %3242 = vmatprep.subr.mxu0 0.0
    %3243 = vmatpush1.msra.mxu0 0.0
    %3244 = vmatprep.mubr.f32.mxu0 0.0
    %3245 = vmatmul.mubr.f32.gmra.mrb[0].mxu0 %v3099
    %v3246 = vpop.f32.mrb[0].mxu0
    %v3247 = vadd.f32 0.0, %v3246
    %v3248 = vpop.f32.mrb[0].mxu0
    %v3249 = vadd.f32 0.0, %v3248
    %3250 = vdwg.mxu0
    %v3251 = vadd.f32 %v3105, %v3176
    %v3252 = vadd.f32 %v3106, %v3178
    %v3253 = vadd.f32 %v3107, %v3247
    %v3254 = vadd.f32 %v3108, %v3249
    %v3255 = vxor.u32 %v3251, 2147483648
    %v3256 = vxor.u32 %v3252, 2147483648
    %v3257 = vxor.u32 %v3253, 2147483648
    %v3258 = vmul.f32 %v3255, 1.442695
    %v3259 = vpow.pop %v3258
    %v3260 = vmul.f32 %v3256, 1.442695
    %v3261 = vpow.pop %v3260
    %v3262 = vmul.f32 %v3257, 1.442695
    %v3263 = vpow.pop %v3262
    %v3264 = vadd.f32 %v3259, 1.0
    %v3265 = vadd.f32 %v3261, 1.0
    %v3266 = vadd.f32 %v3263, 1.0
    %v3267 = vrcp.pop %v3264
    %v3268 = vmul.f32 1.0, %v3267
    %v3269 = vrcp.pop %v3265
    %v3270 = vmul.f32 1.0, %v3269
    %v3271 = vrcp.pop %v3266
    %v3272 = vmul.f32 1.0, %v3271
    %v3273 = vtanh.pop %v3254
    %v3274 = vmul.f32 %v3270, %v3097
    %v3275 = vmul.f32 %v3268, %v3273
    %v3276 = vadd.f32 %v3274, %v3275
    %v3277 = vtanh.pop %v3276
    %v3278 = vmul.f32 %v3272, %v3277
    %s3279 = scalar_lea.vmem [#allocation8], 112
    %3280 = vst [vmem:[%s3279] sm:$0xff] %v3278
    %s3281 = smul.u32 15, 4
    %s3282 = smul.addr %s3281, 8
    %s3283 = scalar_lea.vmem [#allocation4], %s3282
    %v3284 = vld [vmem:[%s3283] sm:$0xff]
    %v3285 = vld [vmem:[%s3283 + $0x8] sm:$0xff]
    %v3286 = vld [vmem:[%s3283 + $0x10] sm:$0xff]
    %v3287 = vld [vmem:[%s3283 + $0x18] sm:$0xff]
    %3288 = vmatprep.subr.mxu0 %v532
    %3289 = vmatpush1.msra.mxu0 %v531
    %3290 = vmatprep.subr.mxu0 %v536
    %3291 = vmatpush1.msra.mxu0 %v535
    %3292 = vmatprep.subr.mxu0 %v540
    %3293 = vmatpush1.msra.mxu0 %v539
    %3294 = vmatprep.subr.mxu0 %v544
    %3295 = vmatpush1.msra.mxu0 %v543
    %3296 = vmatprep.subr.mxu0 %v548
    %3297 = vmatpush1.msra.mxu0 %v547
    %3298 = vmatprep.subr.mxu0 %v552
    %3299 = vmatpush1.msra.mxu0 %v551
    %3300 = vmatprep.subr.mxu0 %v556
    %3301 = vmatpush1.msra.mxu0 %v555
    %3302 = vmatprep.subr.mxu0 %v560
    %3303 = vmatpush1.msra.mxu0 %v559
    %3304 = vmatprep.subr.mxu0 %v564
    %3305 = vmatpush1.msra.mxu0 %v563
    %3306 = vmatprep.subr.mxu0 %v568
    %3307 = vmatpush1.msra.mxu0 %v567
    %3308 = vmatprep.subr.mxu0 %v572
    %3309 = vmatpush1.msra.mxu0 %v571
    %3310 = vmatprep.subr.mxu0 %v576
    %3311 = vmatpush1.msra.mxu0 %v575
    %3312 = vmatprep.subr.mxu0 %v580
    %3313 = vmatpush1.msra.mxu0 %v579
    %3314 = vmatprep.subr.mxu0 %v584
    %3315 = vmatpush1.msra.mxu0 %v583
    %3316 = vmatprep.subr.mxu0 %v588
    %3317 = vmatpush1.msra.mxu0 %v587
    %3318 = vmatprep.subr.mxu0 %v592
    %3319 = vmatpush1.msra.mxu0 %v591
    %3320 = vmatprep.subr.mxu0 0.0
    %3321 = vmatpush1.msra.mxu0 0.0
    %3322 = vmatprep.subr.mxu0 0.0
    %3323 = vmatpush1.msra.mxu0 0.0
    %3324 = vmatprep.subr.mxu0 0.0
    %3325 = vmatpush1.msra.mxu0 0.0
    %3326 = vmatprep.subr.mxu0 0.0
    %3327 = vmatpush1.msra.mxu0 0.0
    %3328 = vmatprep.subr.mxu0 0.0
    %3329 = vmatpush1.msra.mxu0 0.0
    %3330 = vmatprep.subr.mxu0 0.0
    %3331 = vmatpush1.msra.mxu0 0.0
    %3332 = vmatprep.subr.mxu0 0.0
    %3333 = vmatpush1.msra.mxu0 0.0
    %3334 = vmatprep.subr.mxu0 0.0
    %3335 = vmatpush1.msra.mxu0 0.0
    %3336 = vmatprep.subr.mxu0 0.0
    %3337 = vmatpush1.msra.mxu0 0.0
    %3338 = vmatprep.subr.mxu0 0.0
    %3339 = vmatpush1.msra.mxu0 0.0
    %3340 = vmatprep.subr.mxu0 0.0
    %3341 = vmatpush1.msra.mxu0 0.0
    %3342 = vmatprep.subr.mxu0 0.0
    %3343 = vmatpush1.msra.mxu0 0.0
    %3344 = vmatprep.subr.mxu0 0.0
    %3345 = vmatpush1.msra.mxu0 0.0
    %3346 = vmatprep.subr.mxu0 0.0
    %3347 = vmatpush1.msra.mxu0 0.0
    %3348 = vmatprep.subr.mxu0 0.0
    %3349 = vmatpush1.msra.mxu0 0.0
    %3350 = vmatprep.subr.mxu0 0.0
    %3351 = vmatpush1.msra.mxu0 0.0
    %3352 = vmatprep.mubr.f32.mxu0 0.0
    %3353 = vmatmul.mubr.f32.gmra.mrb[0].mxu0 %v3278
    %v3354 = vpop.f32.mrb[0].mxu0
    %v3355 = vadd.f32 0.0, %v3354
    %v3356 = vpop.f32.mrb[0].mxu0
    %v3357 = vadd.f32 0.0, %v3356
    %3358 = vdwg.mxu0
    %3359 = vmatprep.subr.mxu0 %v534
    %3360 = vmatpush1.msra.mxu0 %v533
    %3361 = vmatprep.subr.mxu0 %v538
    %3362 = vmatpush1.msra.mxu0 %v537
    %3363 = vmatprep.subr.mxu0 %v542
    %3364 = vmatpush1.msra.mxu0 %v541
    %3365 = vmatprep.subr.mxu0 %v546
    %3366 = vmatpush1.msra.mxu0 %v545
    %3367 = vmatprep.subr.mxu0 %v550
    %3368 = vmatpush1.msra.mxu0 %v549
    %3369 = vmatprep.subr.mxu0 %v554
    %3370 = vmatpush1.msra.mxu0 %v553
    %3371 = vmatprep.subr.mxu0 %v558
    %3372 = vmatpush1.msra.mxu0 %v557
    %3373 = vmatprep.subr.mxu0 %v562
    %3374 = vmatpush1.msra.mxu0 %v561
    %3375 = vmatprep.subr.mxu0 %v566
    %3376 = vmatpush1.msra.mxu0 %v565
    %3377 = vmatprep.subr.mxu0 %v570
    %3378 = vmatpush1.msra.mxu0 %v569
    %3379 = vmatprep.subr.mxu0 %v574
    %3380 = vmatpush1.msra.mxu0 %v573
    %3381 = vmatprep.subr.mxu0 %v578
    %3382 = vmatpush1.msra.mxu0 %v577
    %3383 = vmatprep.subr.mxu0 %v582
    %3384 = vmatpush1.msra.mxu0 %v581
    %3385 = vmatprep.subr.mxu0 %v586
    %3386 = vmatpush1.msra.mxu0 %v585
    %3387 = vmatprep.subr.mxu0 %v590
    %3388 = vmatpush1.msra.mxu0 %v589
    %3389 = vmatprep.subr.mxu0 %v594
    %3390 = vmatpush1.msra.mxu0 %v593
    %3391 = vmatprep.subr.mxu0 0.0
    %3392 = vmatpush1.msra.mxu0 0.0
    %3393 = vmatprep.subr.mxu0 0.0
    %3394 = vmatpush1.msra.mxu0 0.0
    %3395 = vmatprep.subr.mxu0 0.0
    %3396 = vmatpush1.msra.mxu0 0.0
    %3397 = vmatprep.subr.mxu0 0.0
    %3398 = vmatpush1.msra.mxu0 0.0
    %3399 = vmatprep.subr.mxu0 0.0
    %3400 = vmatpush1.msra.mxu0 0.0
    %3401 = vmatprep.subr.mxu0 0.0
    %3402 = vmatpush1.msra.mxu0 0.0
    %3403 = vmatprep.subr.mxu0 0.0
    %3404 = vmatpush1.msra.mxu0 0.0
    %3405 = vmatprep.subr.mxu0 0.0
    %3406 = vmatpush1.msra.mxu0 0.0
    %3407 = vmatprep.subr.mxu0 0.0
    %3408 = vmatpush1.msra.mxu0 0.0
    %3409 = vmatprep.subr.mxu0 0.0
    %3410 = vmatpush1.msra.mxu0 0.0
    %3411 = vmatprep.subr.mxu0 0.0
    %3412 = vmatpush1.msra.mxu0 0.0
    %3413 = vmatprep.subr.mxu0 0.0
    %3414 = vmatpush1.msra.mxu0 0.0
    %3415 = vmatprep.subr.mxu0 0.0
    %3416 = vmatpush1.msra.mxu0 0.0
    %3417 = vmatprep.subr.mxu0 0.0
    %3418 = vmatpush1.msra.mxu0 0.0
    %3419 = vmatprep.subr.mxu0 0.0
    %3420 = vmatpush1.msra.mxu0 0.0
    %3421 = vmatprep.subr.mxu0 0.0
    %3422 = vmatpush1.msra.mxu0 0.0
    %3423 = vmatprep.mubr.f32.mxu0 0.0
    %3424 = vmatmul.mubr.f32.gmra.mrb[0].mxu0 %v3278
    %v3425 = vpop.f32.mrb[0].mxu0
    %v3426 = vadd.f32 0.0, %v3425
    %v3427 = vpop.f32.mrb[0].mxu0
    %v3428 = vadd.f32 0.0, %v3427
    %3429 = vdwg.mxu0
    %v3430 = vadd.f32 %v3284, %v3355
    %v3431 = vadd.f32 %v3285, %v3357
    %v3432 = vadd.f32 %v3286, %v3426
    %v3433 = vadd.f32 %v3287, %v3428
    %v3434 = vxor.u32 %v3430, 2147483648
    %v3435 = vxor.u32 %v3431, 2147483648
    %v3436 = vxor.u32 %v3432, 2147483648
    %v3437 = vmul.f32 %v3434, 1.442695
    %v3438 = vpow.pop %v3437
    %v3439 = vmul.f32 %v3435, 1.442695
    %v3440 = vpow.pop %v3439
    %v3441 = vmul.f32 %v3436, 1.442695
    %v3442 = vpow.pop %v3441
    %v3443 = vadd.f32 %v3438, 1.0
    %v3444 = vadd.f32 %v3440, 1.0
    %v3445 = vadd.f32 %v3442, 1.0
    %v3446 = vrcp.pop %v3443
    %v3447 = vmul.f32 1.0, %v3446
    %v3448 = vrcp.pop %v3444
    %v3449 = vmul.f32 1.0, %v3448
    %v3450 = vrcp.pop %v3445
    %v3451 = vmul.f32 1.0, %v3450
    %v3452 = vtanh.pop %v3433
    %v3453 = vmul.f32 %v3449, %v3276
    %v3454 = vmul.f32 %v3447, %v3452
    %v3455 = vadd.f32 %v3453, %v3454
    %v3456 = vtanh.pop %v3455
    %v3457 = vmul.f32 %v3451, %v3456
    %s3458 = scalar_lea.vmem [#allocation8], 120
    %3459 = vst [vmem:[%s3458] sm:$0xff] %v3457
    %3460 = vst [vmem:[#allocation2] sm:$0xff] %v3457
    %3461 = vst [vmem:[#allocation3] sm:$0xff] %v3455
    // Predicated region
    $region34: #{tpu_custom_call.1} parent=1 // pred_check
      %p3462 = pneg %p42
    $region35: #{tpu_custom_call.1} parent=1 // pred_check_branch
      %3464 = sbr.rel (%p3462) target = $region37
    $region36: #{tpu_custom_call.1} parent=1 // pred_region
      %v3465 = vld [vmem:[#allocation2] sm:$0xff]
      %3466 = vst [vmem:[#allocation9] sm:$0xff] %v3465
      %v3467 = vld [vmem:[#allocation3] sm:$0xff]
      %3468 = vst [vmem:[#allocation11] sm:$0xff] %v3467
    $region37: #{tpu_custom_call.1} parent=1 // pred_fallthru
      _
    // Predicated region
    $region38: #{tpu_custom_call.1} parent=1 // pred_check
      _
    $region39: #{tpu_custom_call.1} parent=1 // pred_check_branch
      %3470 = sbr.rel (0) target = $region41
    $region40: #{tpu_custom_call.1} parent=1 // pred_region
      %s3472 = ssub.s32 2048, 2048
      %3473 = vsyncadd [#allocation7], %s3472
      %s3474 = sshll.u32 [#allocation8], 4
      %s3475 = int_to_ptr.vmem [resolvable:$true] %s3474
      %3480 = dma.vmem_to_hbm [thread:$0]  %s3475, 2048, %s6, [#allocation7], 128, 128, 8
    $region41: #{tpu_custom_call.1} parent=1 // pred_fallthru
      _
    // Predicated region
    $region42: #{tpu_custom_call.1} parent=1 // pred_check
      _
    $region43: #{tpu_custom_call.1} parent=1 // pred_check_branch
      %3482 = sbr.rel (0) target = $region45
    $region44: #{tpu_custom_call.1} parent=1 // pred_region
      %s3484 = ssub.s32 128, 128
      %3485 = vsyncadd [#allocation10], %s3484
      %s3487 = sshll.u32 [#allocation9], 4
      %s3488 = int_to_ptr.vmem [resolvable:$true] %s3487
      %3490 = dma.vmem_to_hbm [thread:$0]  %s3488, 128, %s7, [#allocation10]
    $region45: #{tpu_custom_call.1} parent=1 // pred_fallthru
      _
    // Predicated region
    $region46: #{tpu_custom_call.1} parent=1 // pred_check
      _
    $region47: #{tpu_custom_call.1} parent=1 // pred_check_branch
      %3492 = sbr.rel (0) target = $region49
    $region48: #{tpu_custom_call.1} parent=1 // pred_region
      %s3494 = ssub.s32 128, 128
      %3495 = vsyncadd [#allocation10], %s3494
      %s3497 = sshll.u32 [#allocation11], 4
      %s3498 = int_to_ptr.vmem [resolvable:$true] %s3497
      %3500 = dma.vmem_to_hbm [thread:$0]  %s3498, 128, %s8, [#allocation10]
    $region49: #{tpu_custom_call.1} parent=1 // pred_fallthru
      _
    // Predicated region
    $region50: #{tpu_custom_call.1} parent=1 // pred_check
      _
    $region51: #{tpu_custom_call.1} parent=1 // pred_check_branch
      %3502 = sbr.rel (0) target = $region53
    $region52: #{tpu_custom_call.1} parent=1 // pred_region
      %3503 = dma.done [#allocation7], 2048
    $region53: #{tpu_custom_call.1} parent=1 // pred_fallthru
      _
    // Predicated region
    $region54: #{tpu_custom_call.1} parent=1 // pred_check
      _
    $region55: #{tpu_custom_call.1} parent=1 // pred_check_branch
      %3505 = sbr.rel (0) target = $region57
    $region56: #{tpu_custom_call.1} parent=1 // pred_region
      %3506 = dma.done [#allocation10], 128
    $region57: #{tpu_custom_call.1} parent=1 // pred_fallthru
      _
    // Predicated region
    $region58: #{tpu_custom_call.1} parent=1 // pred_check
      _
    $region59: #{tpu_custom_call.1} parent=1 // pred_check_branch
      %3508 = sbr.rel (0) target = $region61
    $region60: #{tpu_custom_call.1} parent=1 // pred_region
      %3509 = dma.done [#allocation10], 128
    $region61: #{tpu_custom_call.1} parent=1 // pred_fallthru
      _
    %3510 = vsyncpa [#allocation6], 1
    %3511 = vsyncpa [#allocation7], 1
    %3512 = vsyncpa [#allocation10], 1

</llo_original>
